<compile_context>
chip_gen: v7x
topology: tpu7x:2x2x1
jax: 0.10.0
libtpu: 0.0.40
codegen_flags: <defaults>
</compile_context>

<pallas_src>
import numpy as np
import jax
import jax.numpy as jnp
from jax.experimental import pallas as pl
from jax.experimental.pallas import tpu as pltpu

_BN_EPS = 1e-5


# ----------------------------------------------------------------------------------
# deterministic synthetic parameter init (PyTorch-like fan-in bounds)
# ----------------------------------------------------------------------------------
def _padding(l_in, l_out, kernel_size, stride, dilation):
    return int(np.ceil((stride * (l_out - 1) - l_in + dilation * (kernel_size - 1) + 1) / 2))


def _init_conv(key, c_out, c_in, k):
    kw, kb = jax.random.split(key)
    bound = 1.0 / np.sqrt(c_in * k)
    w = jax.random.uniform(kw, (c_out, c_in, k), jnp.float32, -bound, bound)
    b = jax.random.uniform(kb, (c_out,), jnp.float32, -bound, bound)
    return w, b


def _init_bn(key, c):
    k1, k2, k3, k4 = jax.random.split(key, 4)
    gamma = 1.0 + 0.1 * jax.random.normal(k1, (c,), jnp.float32)
    beta = 0.1 * jax.random.normal(k2, (c,), jnp.float32)
    mean = 0.1 * jax.random.normal(k3, (c,), jnp.float32)
    var = jax.random.uniform(k4, (c,), jnp.float32, 0.5, 1.5)
    return gamma, beta, mean, var


def _init_linear(key, f_out, f_in):
    kw, kb = jax.random.split(key)
    bound = 1.0 / np.sqrt(f_in)
    w = jax.random.uniform(kw, (f_out, f_in), jnp.float32, -bound, bound)
    b = jax.random.uniform(kb, (f_out,), jnp.float32, -bound, bound)
    return w, b


# ----------------------------------------------------------------------------------
# model
# ----------------------------------------------------------------------------------
class ModelArrhythmiaPallas:
    """Inference-mode forward of ModelArrhythmia as one fused Pallas TPU kernel."""

    def __init__(self, input_shape, output_shape, n_blocks, init_channel,
                 kernel_size, dilation, key):
        self.output_shape = output_shape
        self.n_layers = n_blocks
        self.stride_inc = 2
        self.channel_inc = 4
        self.fcchannel = [1024, 256]
        K, D = kernel_size, dilation
        self.K, self.D = K, D
        self.input_shape = input_shape
        channel = init_channel

        keys = iter(jax.random.split(key, 64 + 16 * n_blocks))

        affine_rows = []      # packed per-layer (scale / shift) vectors
        conv_slabs = []       # packed (K*C_in, C_out) conv weight slabs
        self._scratch = []    # (rows, cols) of per-sample activation buffers (batch added at call)
        self._scratch_idx = {}

        def add_scratch(name, rows, cols):
            self._scratch_idx[name] = len(self._scratch)
            self._scratch.append((int(rows), int(cols)))

        def make_conv(c_in, c_out, stride, padding, bn, l_in):
            """Conv1d(+folded bias/BN)+ReLU params; weight stored as (K*C_in, C_out)."""
            w, b = _init_conv(next(keys), c_out, c_in, K)
            if bn:
                gamma, beta, mean, var = _init_bn(next(keys), c_out)
                s = gamma / jnp.sqrt(var + _BN_EPS)
                scale, shift = s, beta - mean * s + b * s
            else:
                scale, shift = jnp.ones((c_out,), jnp.float32), b
            wmat = jnp.transpose(w, (2, 1, 0)).reshape(K * c_in, c_out)  # row = k*C_in + c_in
            w_idx = len(conv_slabs)
            conv_slabs.append(np.asarray(wmat, np.float32))
            aff_row = len(affine_rows)
            affine_rows.append(np.asarray(scale, np.float32))
            affine_rows.append(np.asarray(shift, np.float32))
            l_out = (l_in + 2 * padding - D * (K - 1) - 1) // stride + 1
            return dict(stride=stride, padding=padding, c_in=c_in, c_out=c_out,
                        l_in=l_in, l_out=l_out, w_idx=w_idx, aff_row=aff_row)

        # ---------------- base block (mirrors ModelArrhythmia._base_block) ----------------
        l_in_plan = input_shape[1]
        l_out_plan = int(l_in_plan / 1)
        pad = _padding(l_in_plan, l_out_plan, K, 1, D)
        cfg0 = make_conv(input_shape[0], channel, 1, pad, True, input_shape[1])
        add_scratch("in", input_shape[1] + 2 * pad, input_shape[0])

        pool_pad = int(np.ceil((2 * (l_out_plan / 2 - 1) - l_out_plan + 2) / 2))
        assert pool_pad == 0, "TODO(synk): MaxPool1d padding>0 path not implemented"

        l_in_plan = l_out_plan
        l_out_plan = int(l_in_plan / 2)
        pad = _padding(l_in_plan, l_out_plan, K, 2, D)
        cfg1 = make_conv(channel, channel, 2, pad, True, cfg0["l_out"])
        add_scratch("a0", cfg0["l_out"] + 2 * pad, channel)

        l_in_plan = l_out_plan
        l_out_plan = int(l_in_plan / 1)
        pad = _padding(l_in_plan, l_out_plan, K, 1, D)
        cfg2 = make_conv(channel, channel, 1, pad, False, cfg1["l_out"])
        add_scratch("a1", cfg1["l_out"] + 2 * pad, channel)

        self._base = (cfg0, cfg1, cfg2)
        self._base_pool = dict(offset=cfg1["padding"], l_in=cfg0["l_out"])

        # ---------------- main blocks (mirrors ModelArrhythmia._main_block) ----------------
        self._blocks = []
        self._pad_mats = []
        cur_len = cfg2["l_out"]
        for i in range(n_blocks):
            gamma, beta, mean, var = _init_bn(next(keys), channel)
            s = gamma / jnp.sqrt(var + _BN_EPS)
            bn_row = len(affine_rows)
            affine_rows.append(np.asarray(s, np.float32))
            affine_rows.append(np.asarray(beta - mean * s, np.float32))

            in_channels = channel
            if i % self.channel_inc == 0:
                channel *= 2
            stride = 2 if i % self.stride_inc == 0 else 1
            ori_len = cur_len
            l_out_p = int(cur_len / stride)
            pad1 = _padding(cur_len, l_out_p, K, stride, D)
            c1 = make_conv(in_channels, channel, stride, pad1, True, cur_len)
            add_scratch("b%d" % i, cur_len + 2 * pad1, in_channels)

            pad2 = _padding(l_out_p, l_out_p, K, 1, D)
            c2 = make_conv(channel, channel, 1, pad2, False, c1["l_out"])
            add_scratch("c%d" % i, c1["l_out"] + 2 * pad2, channel)

            pool_k = 2 if i % self.stride_inc == 0 else 1
            ppad = _padding(ori_len, int(ori_len / pool_k), pool_k, pool_k, 1)
            assert ppad == 0, "TODO(synk): MaxPool1d padding>0 path not implemented"
            if pool_k == 2:
                add_scratch("r%d" % i, cur_len, in_channels)

            channel_pad = (i % self.channel_inc == 0)
            pad_idx = -1
            if channel_pad:
                # torch.cat((skip, zeros), dim=-2) realized as a matmul with [I | 0]
                pad_idx = len(self._pad_mats)
                self._pad_mats.append(jnp.asarray(np.eye(in_channels, channel, dtype=np.float32)))

            self._blocks.append(dict(conv1=c1, conv2=c2, pool_k=pool_k, l_in=cur_len,
                                     in_channels=in_channels, bn_row=bn_row,
                                     channel_pad=channel_pad, pad_idx=pad_idx))
            cur_len = c2["l_out"]

        # ---------------- classifier ----------------
        gamma, beta, mean, var = _init_bn(next(keys), channel)
        s = gamma / jnp.sqrt(var + _BN_EPS)
        self._cls_row = len(affine_rows)
        affine_rows.append(np.asarray(s, np.float32))
        affine_rows.append(np.asarray(beta - mean * s, np.float32))

        self._L_f, self._C_f = cur_len, channel
        f1, f2 = self.fcchannel
        w1, b1 = _init_linear(next(keys), f1, cur_len * channel)
        w2, b2 = _init_linear(next(keys), f2, f1)
        w3, b3 = _init_linear(next(keys), output_shape, f2)
        # PyTorch flattens (C, L) channel-major; store fc1 as a per-position (L, C, f1) table
        # so the in-kernel contraction needs no flatten at all.  bf16 halves the HBM bytes
        # of the two big FC weights (they are also DMA-overlapped behind the conv stack).
        self._fc1_w = jnp.transpose(w1.reshape(f1, channel, cur_len), (2, 1, 0)).astype(jnp.bfloat16)
        self._fc2_w = jnp.transpose(w2).astype(jnp.bfloat16)
        self._fc3_w = jnp.transpose(w3)                      # (f2, out), tiny, stays f32
        self._fc1_b = b1.reshape(1, -1)
        self._fc2_b = b2.reshape(1, -1)
        self._fc3_b = b3.reshape(1, -1)

        # pack the tiny per-layer scale/shift vectors into one array
        c_max = max(int(r.shape[0]) for r in affine_rows)
        aff = np.zeros((len(affine_rows), c_max), np.float32)
        for ri, r in enumerate(affine_rows):
            aff[ri, :r.shape[0]] = r
        self._affine = jnp.asarray(aff)

        # pack the small conv weight slabs into one (n_conv, K*Cmax, Cmax) array
        rmax = max(w.shape[0] for w in conv_slabs)
        cmax = max(w.shape[1] for w in conv_slabs)
        cw = np.zeros((len(conv_slabs), rmax, cmax), np.float32)
        for ci, w in enumerate(conv_slabs):
            cw[ci, :w.shape[0], :w.shape[1]] = w
        self._convw = jnp.asarray(cw)
        # NOTE: total VMEM (activation scratch + bf16 FC weights ~1.5 MB) is far below even
        # v7x's 64 MiB; re-check here if n_blocks / init_channel grow a lot.

    # ------------------------------------------------------------------
    def __call__(self, x_ncl, grid_steps=1):
        n, c_in, l0 = x_ncl.shape
        assert n % grid_steps == 0, "batch must divide grid_steps"
        bs = n // grid_steps                                  # samples folded per grid step
        x_nlc = jnp.transpose(x_ncl, (0, 2, 1)).astype(jnp.float32)   # boundary layout glue

        K, D = self.K, self.D
        cfg0, cfg1, cfg2 = self._base
        base_pool = self._base_pool
        blocks = self._blocks
        out_dim = self.output_shape
        L_f, C_f = self._L_f, self._C_f
        f1, f2 = self.fcchannel
        scratch_idx = self._scratch_idx
        n_scr = len(self._scratch)
        n_pad = len(self._pad_mats)
        cls_row = self._cls_row
        f32, bf16 = jnp.float32, jnp.bfloat16

        def kernel(*refs):
            x_ref, aff_ref, cw_ref = refs[0:3]
            pad_refs = refs[3:3 + n_pad]
            fc1b_ref, fc2b_ref, fc3b_ref, fc3w_ref = refs[3 + n_pad:7 + n_pad]
            fc1_hbm, fc2_hbm = refs[7 + n_pad], refs[8 + n_pad]
            out_ref = refs[9 + n_pad]
            scratch = refs[10 + n_pad:]
            sbuf = scratch[:n_scr]
            fc1_vmem, fc2_vmem, dma_sem = scratch[n_scr], scratch[n_scr + 1], scratch[n_scr + 2]

            # Kick off the big FC-weight DMAs immediately so they overlap the conv stack.
            cp1 = pltpu.make_async_copy(fc1_hbm, fc1_vmem, dma_sem.at[0])
            cp2 = pltpu.make_async_copy(fc2_hbm, fc2_vmem, dma_sem.at[1])
            cp1.start()
            cp2.start()

            def buf(name):
                return sbuf[scratch_idx[name]]

            def scale_shift(y2d, row, c):
                s = aff_ref[row:row + 1, 0:c]
                t = aff_ref[row + 1:row + 2, 0:c]
                return y2d * s + t

            def write_padded(ref, val2d, pad, l, c):
                # zero only the pad rows, then one interior store
                if pad > 0:
                    ref[:, 0:pad, :] = jnp.zeros((bs, pad, c), f32)
                    ref[:, pad + l:pad + l + pad, :] = jnp.zeros((bs, pad, c), f32)
                ref[:, pad:pad + l, :] = val2d.reshape(bs, l, c)

            def conv(src_name, cfg):
                # Conv1d + folded bias/BN + ReLU as K per-tap matmuls (batch folded into M)
                st, l_out = cfg["stride"], cfg["l_out"]
                ci, co = cfg["c_in"], cfg["c_out"]
                src = buf(src_name)
                acc = jnp.zeros((bs * l_out, co), f32)
                for k in range(K):
                    start = k * D
                    if st == 1:
                        tap = src[:, start:start + l_out, :]
                    else:
                        tap = src[:, pl.ds(start, l_out, stride=st), :]
                    w_k = cw_ref[cfg["w_idx"], k * ci:(k + 1) * ci, 0:co]
                    acc = acc + jnp.dot(tap.reshape(bs * l_out, ci), w_k,
                                        preferred_element_type=f32)
                return jnp.maximum(scale_shift(acc, cfg["aff_row"], co), 0.0)

            def maxpool2(src_ref, offset, l_in, c):
                # MaxPool1d(kernel=2, stride=2, padding=0)
                l_out = (l_in - 2) // 2 + 1
                a = src_ref[:, pl.ds(offset, l_out, stride=2), :]
                b = src_ref[:, pl.ds(offset + 1, l_out, stride=2), :]
                return jnp.maximum(a, b).reshape(bs * l_out, c)

            # ---- stage input into its padded buffer ----
            p0 = cfg0["padding"]
            in_buf = buf("in")
            if p0 > 0:
                in_buf[:, 0:p0, :] = jnp.zeros((bs, p0, cfg0["c_in"]), f32)
                in_buf[:, p0 + l0:p0 + l0 + p0, :] = jnp.zeros((bs, p0, cfg0["c_in"]), f32)
            in_buf[:, p0:p0 + l0, :] = x_ref[...]

            # ---- base block ----
            a0 = conv("in", cfg0)                                              # (bs*L0, ch)
            write_padded(buf("a0"), a0, cfg1["padding"], cfg1["l_in"], cfg1["c_in"])
            skip = maxpool2(buf("a0"), base_pool["offset"], base_pool["l_in"], cfg0["c_out"])
            a1 = conv("a0", cfg1)
            write_padded(buf("a1"), a1, cfg2["padding"], cfg2["l_in"], cfg2["c_in"])
            r = conv("a1", cfg2) + skip                                        # (bs*L, ch)

            # ---- residual blocks ----
            for i, blk in enumerate(blocks):
                c1_cfg, c2_cfg = blk["conv1"], blk["conv2"]
                l_in, in_c = blk["l_in"], blk["in_channels"]
                if blk["pool_k"] == 1:
                    skip = r                                                   # identity pool
                else:
                    rbuf = buf("r%d" % i)
                    rbuf[...] = r.reshape(bs, l_in, in_c)
                    skip = maxpool2(rbuf, 0, l_in, in_c)
                h = jnp.maximum(scale_shift(r, blk["bn_row"], in_c), 0.0)      # BN(eval)+ReLU
                write_padded(buf("b%d" % i), h, c1_cfg["padding"], l_in, in_c)
                c1 = conv("b%d" % i, c1_cfg)
                write_padded(buf("c%d" % i), c1, c2_cfg["padding"], c2_cfg["l_in"], c2_cfg["c_in"])
                c2 = conv("c%d" % i, c2_cfg)
                if blk["channel_pad"]:
                    # zero channel concat == skip @ [I | 0]
                    skip = jnp.dot(skip, pad_refs[blk["pad_idx"]][...],
                                   preferred_element_type=f32)
                r = c2 + skip

            # ---- classifier: BN+ReLU -> (implicit flatten) -> 3x Linear (Dropout == id) ----
            h = jnp.maximum(scale_shift(r, cls_row, C_f), 0.0)                 # (bs*L_f, C_f)
            cp1.wait()                                                         # FC weights ready
            cp2.wait()
            h3 = h.reshape(bs, L_f, C_f)
            acc = jnp.zeros((bs, f1), f32)
            for l in range(L_f):                                               # flatten folded
                acc = acc + jnp.dot(h3[:, l, :].astype(bf16), fc1_vmem[l],
                                    preferred_element_type=f32)
            y = acc + fc1b_ref[...]
            y = jnp.dot(y.astype(bf16), fc2_vmem[...], preferred_element_type=f32) + fc2b_ref[...]
            y = jnp.dot(y, fc3w_ref[...], preferred_element_type=f32) + fc3b_ref[...]
            out_ref[0] = y                                                     # one (bs,out) store

        # ---------------- specs ----------------
        params = [self._affine, self._convw] + list(self._pad_mats) + \
                 [self._fc1_b, self._fc2_b, self._fc3_b, self._fc3_w]

        def const_spec(arr):
            return pl.BlockSpec(arr.shape, lambda g, nd=arr.ndim: (0,) * nd)

        in_specs = [pl.BlockSpec((bs, l0, c_in), lambda g: (g, 0, 0))]
        in_specs += [const_spec(a) for a in params]
        in_specs += [pl.BlockSpec(memory_space=pl.ANY),        # fc1_w (manual DMA)
                     pl.BlockSpec(memory_space=pl.ANY)]        # fc2_w (manual DMA)

        scratch_shapes = [pltpu.VMEM((bs, rows, cols), jnp.float32)
                          for (rows, cols) in self._scratch]
        scratch_shapes += [pltpu.VMEM(self._fc1_w.shape, jnp.bfloat16),
                           pltpu.VMEM(self._fc2_w.shape, jnp.bfloat16),
                           pltpu.SemaphoreType.DMA((2,))]

        out = pl.pallas_call(
            kernel,
            out_shape=jax.ShapeDtypeStruct((grid_steps, bs, out_dim), jnp.float32),
            grid=(grid_steps,),
            in_specs=in_specs,
            out_specs=pl.BlockSpec((1, bs, out_dim), lambda g: (g, 0, 0)),
            scratch_shapes=scratch_shapes,
            compiler_params=pltpu.CompilerParams(dimension_semantics=("parallel",)),
        )(x_nlc, self._affine, self._convw, *self._pad_mats,
          self._fc1_b, self._fc2_b, self._fc3_b, self._fc3_w,
          self._fc1_w, self._fc2_w)
        return out.reshape(n, out_dim)


# ----------------------------------------------------------------------------------
if __name__ == "__main__":
    input_shape = (4, 64)        # (C_in, L)
    output_shape = 5
    n_blocks = 2
    init_channel = 8
    kernel_size = 3
    dilation = 1
    batch = 2

    key = jax.random.PRNGKey(0)
    kx, kp = jax.random.split(key)
    x = jax.random.normal(kx, (batch, input_shape[0], input_shape[1]), jnp.float32)

    model = ModelArrhythmiaPallas(input_shape, output_shape, n_blocks,
                                  init_channel, kernel_size, dilation, kp)
    out = jax.block_until_ready(model(x))   # grid_steps=1; use grid_steps=2 on v7x (2 TCs)
    assert out.shape == (batch, output_shape), out.shape
    assert bool(jnp.all(jnp.isfinite(out)))
    print("KERNEL_OK")
</pallas_src>

<mosaic_0001>
module attributes {stable_mosaic.version = 11 : i64} {
  func.func @kernel(%arg0: i32, %arg1: memref<2x64x4xf32, #tpu.memory_space<vmem>>, %arg2: memref<20x16xf32, #tpu.memory_space<vmem>>, %arg3: memref<7x48x16xf32, #tpu.memory_space<vmem>>, %arg4: memref<8x16xf32, #tpu.memory_space<vmem>>, %arg5: memref<1x1024xf32, #tpu.memory_space<vmem>>, %arg6: memref<1x256xf32, #tpu.memory_space<vmem>>, %arg7: memref<1x5xf32, #tpu.memory_space<vmem>>, %arg8: memref<256x5xf32, #tpu.memory_space<vmem>>, %arg9: memref<16x16x1024xbf16, #tpu.memory_space<any>>, %arg10: memref<1024x256xbf16, #tpu.memory_space<any>>, %arg11: memref<1x2x5xf32, #tpu.memory_space<vmem>>, %arg12: memref<2x66x4xf32, #tpu.memory_space<vmem>>, %arg13: memref<2x66x8xf32, #tpu.memory_space<vmem>>, %arg14: memref<2x34x8xf32, #tpu.memory_space<vmem>>, %arg15: memref<2x34x8xf32, #tpu.memory_space<vmem>>, %arg16: memref<2x18x16xf32, #tpu.memory_space<vmem>>, %arg17: memref<2x32x8xf32, #tpu.memory_space<vmem>>, %arg18: memref<2x18x16xf32, #tpu.memory_space<vmem>>, %arg19: memref<2x18x16xf32, #tpu.memory_space<vmem>>, %arg20: memref<16x16x1024xbf16, #tpu.memory_space<vmem>>, %arg21: memref<1024x256xbf16, #tpu.memory_space<vmem>>, %arg22: memref<2x!tpu.dma_semaphore, #tpu.memory_space<semaphore_mem>>) attributes {dimension_semantics = [#tpu.dimension_semantics<parallel>], iteration_bounds = array<i64: 1>, scalar_prefetch = 0 : i64, scratch_operands = 11 : i64, tpu.core_type = #tpu.core_type<tc>, window_params = [{transform_indices = @transform_0, window_bounds = array<i64: 2, 64, 4>}, {pipeline_mode = #tpu.pipeline_mode<synchronous>, transform_indices = @transform_1, window_bounds = array<i64: 20, 16>}, {pipeline_mode = #tpu.pipeline_mode<synchronous>, transform_indices = @transform_2, window_bounds = array<i64: 7, 48, 16>}, {pipeline_mode = #tpu.pipeline_mode<synchronous>, transform_indices = @transform_3, window_bounds = array<i64: 8, 16>}, {pipeline_mode = #tpu.pipeline_mode<synchronous>, transform_indices = @transform_4, window_bounds = array<i64: 1, 1024>}, {pipeline_mode = #tpu.pipeline_mode<synchronous>, transform_indices = @transform_5, window_bounds = array<i64: 1, 256>}, {pipeline_mode = #tpu.pipeline_mode<synchronous>, transform_indices = @transform_6, window_bounds = array<i64: 1, 5>}, {pipeline_mode = #tpu.pipeline_mode<synchronous>, transform_indices = @transform_7, window_bounds = array<i64: 256, 5>}, {}, {}, {transform_indices = @transform_10, window_bounds = array<i64: 1, 2, 5>}]} {
    %c0_i32 = arith.constant 0 : i32
    %0 = tpu.memref_slice %arg22[%c0_i32] : memref<2x!tpu.dma_semaphore, #tpu.memory_space<semaphore_mem>> -> memref<1x!tpu.dma_semaphore, #tpu.memory_space<semaphore_mem>>
    %1 = tpu.memref_squeeze %0 : memref<1x!tpu.dma_semaphore, #tpu.memory_space<semaphore_mem>> -> memref<!tpu.dma_semaphore, #tpu.memory_space<semaphore_mem>>
    tpu.enqueue_dma source(%arg9 : memref<16x16x1024xbf16, #tpu.memory_space<any>>) target(%arg20 : memref<16x16x1024xbf16, #tpu.memory_space<vmem>>) target_semaphore(%1 : memref<!tpu.dma_semaphore, #tpu.memory_space<semaphore_mem>>)
    %c1_i32 = arith.constant 1 : i32
    %2 = tpu.memref_slice %arg22[%c1_i32] : memref<2x!tpu.dma_semaphore, #tpu.memory_space<semaphore_mem>> -> memref<1x!tpu.dma_semaphore, #tpu.memory_space<semaphore_mem>>
    %3 = tpu.memref_squeeze %2 : memref<1x!tpu.dma_semaphore, #tpu.memory_space<semaphore_mem>> -> memref<!tpu.dma_semaphore, #tpu.memory_space<semaphore_mem>>
    tpu.enqueue_dma source(%arg10 : memref<1024x256xbf16, #tpu.memory_space<any>>) target(%arg21 : memref<1024x256xbf16, #tpu.memory_space<vmem>>) target_semaphore(%3 : memref<!tpu.dma_semaphore, #tpu.memory_space<semaphore_mem>>)
    %cst = arith.constant 0.000000e+00 : f32
    %4 = vector.broadcast %cst : f32 to vector<2x1x4xf32>
    %c0 = arith.constant 0 : index
    %c0_0 = arith.constant 0 : index
    %c0_1 = arith.constant 0 : index
    %5 = vector.load %arg12[%c0, %c0_0, %c0_1] : memref<2x66x4xf32, #tpu.memory_space<vmem>>, vector<2x1x4xf32>
    tpu.vector_store %arg12[%c0, %c0_0, %c0_1], %4 {strides = array<i32>} : memref<2x66x4xf32, #tpu.memory_space<vmem>>, vector<2x1x4xf32>,
    %cst_2 = arith.constant 0.000000e+00 : f32
    %6 = vector.broadcast %cst_2 : f32 to vector<2x1x4xf32>
    %c0_3 = arith.constant 0 : index
    %c65 = arith.constant 65 : index
    %c0_4 = arith.constant 0 : index
    %7 = vector.load %arg12[%c0_3, %c65, %c0_4] : memref<2x66x4xf32, #tpu.memory_space<vmem>>, vector<2x1x4xf32>
    tpu.vector_store %arg12[%c0_3, %c65, %c0_4], %6 {strides = array<i32>} : memref<2x66x4xf32, #tpu.memory_space<vmem>>, vector<2x1x4xf32>,
    %c0_5 = arith.constant 0 : index
    %c0_6 = arith.constant 0 : index
    %c0_7 = arith.constant 0 : index
    %8 = vector.load %arg1[%c0_5, %c0_6, %c0_7] : memref<2x64x4xf32, #tpu.memory_space<vmem>>, vector<2x64x4xf32>
    %c0_8 = arith.constant 0 : index
    %c1 = arith.constant 1 : index
    %c0_9 = arith.constant 0 : index
    %9 = vector.load %arg12[%c0_8, %c1, %c0_9] : memref<2x66x4xf32, #tpu.memory_space<vmem>>, vector<2x64x4xf32>
    tpu.vector_store %arg12[%c0_8, %c1, %c0_9], %8 {strides = array<i32>} : memref<2x66x4xf32, #tpu.memory_space<vmem>>, vector<2x64x4xf32>,
    %cst_10 = arith.constant 0.000000e+00 : f32
    %10 = vector.broadcast %cst_10 : f32 to vector<128x8xf32>
    %c0_11 = arith.constant 0 : index
    %c0_12 = arith.constant 0 : index
    %c0_13 = arith.constant 0 : index
    %11 = vector.load %arg12[%c0_11, %c0_12, %c0_13] : memref<2x66x4xf32, #tpu.memory_space<vmem>>, vector<2x64x4xf32>
    %c0_14 = arith.constant 0 : index
    %c0_15 = arith.constant 0 : index
    %c0_16 = arith.constant 0 : index
    %12 = vector.load %arg3[%c0_14, %c0_15, %c0_16] : memref<7x48x16xf32, #tpu.memory_space<vmem>>, vector<1x4x8xf32>
    %13 = vector.shape_cast %12 : vector<1x4x8xf32> to vector<4x8xf32>
    %14 = vector.shape_cast %11 : vector<2x64x4xf32> to vector<128x4xf32>
    %cst_17 = arith.constant dense<0.000000e+00> : vector<128x8xf32>
    %15 = tpu.matmul %14, %13, %cst_17 {dimension_numbers = #tpu.dot_dimension_numbers<[1], [0], [0], [1], [0, 0, 1, 1], [], []>} : vector<128x4xf32>, vector<4x8xf32>, vector<128x8xf32> -> vector<128x8xf32>
    %16 = arith.addf %10, %15 : vector<128x8xf32>
    %c0_18 = arith.constant 0 : index
    %c1_19 = arith.constant 1 : index
    %c0_20 = arith.constant 0 : index
    %17 = vector.load %arg12[%c0_18, %c1_19, %c0_20] : memref<2x66x4xf32, #tpu.memory_space<vmem>>, vector<2x64x4xf32>
    %c0_21 = arith.constant 0 : index
    %c4 = arith.constant 4 : index
    %c0_22 = arith.constant 0 : index
    %18 = vector.load %arg3[%c0_21, %c4, %c0_22] : memref<7x48x16xf32, #tpu.memory_space<vmem>>, vector<1x4x8xf32>
    %19 = vector.shape_cast %18 : vector<1x4x8xf32> to vector<4x8xf32>
    %20 = vector.shape_cast %17 : vector<2x64x4xf32> to vector<128x4xf32>
    %cst_23 = arith.constant dense<0.000000e+00> : vector<128x8xf32>
    %21 = tpu.matmul %20, %19, %cst_23 {dimension_numbers = #tpu.dot_dimension_numbers<[1], [0], [0], [1], [0, 0, 1, 1], [], []>} : vector<128x4xf32>, vector<4x8xf32>, vector<128x8xf32> -> vector<128x8xf32>
    %22 = arith.addf %16, %21 : vector<128x8xf32>
    %c0_24 = arith.constant 0 : index
    %c2 = arith.constant 2 : index
    %c0_25 = arith.constant 0 : index
    %23 = vector.load %arg12[%c0_24, %c2, %c0_25] : memref<2x66x4xf32, #tpu.memory_space<vmem>>, vector<2x64x4xf32>
    %c0_26 = arith.constant 0 : index
    %c8 = arith.constant 8 : index
    %c0_27 = arith.constant 0 : index
    %24 = vector.load %arg3[%c0_26, %c8, %c0_27] : memref<7x48x16xf32, #tpu.memory_space<vmem>>, vector<1x4x8xf32>
    %25 = vector.shape_cast %24 : vector<1x4x8xf32> to vector<4x8xf32>
    %26 = vector.shape_cast %23 : vector<2x64x4xf32> to vector<128x4xf32>
    %cst_28 = arith.constant dense<0.000000e+00> : vector<128x8xf32>
    %27 = tpu.matmul %26, %25, %cst_28 {dimension_numbers = #tpu.dot_dimension_numbers<[1], [0], [0], [1], [0, 0, 1, 1], [], []>} : vector<128x4xf32>, vector<4x8xf32>, vector<128x8xf32> -> vector<128x8xf32>
    %28 = arith.addf %22, %27 : vector<128x8xf32>
    %c0_29 = arith.constant 0 : index
    %c0_30 = arith.constant 0 : index
    %29 = vector.load %arg2[%c0_29, %c0_30] : memref<20x16xf32, #tpu.memory_space<vmem>>, vector<1x8xf32>
    %c1_31 = arith.constant 1 : index
    %c0_32 = arith.constant 0 : index
    %30 = vector.load %arg2[%c1_31, %c0_32] : memref<20x16xf32, #tpu.memory_space<vmem>>, vector<1x8xf32>
    %31 = vector.broadcast %29 : vector<1x8xf32> to vector<128x8xf32>
    %32 = arith.mulf %28, %31 : vector<128x8xf32>
    %33 = vector.broadcast %30 : vector<1x8xf32> to vector<128x8xf32>
    %34 = arith.addf %32, %33 : vector<128x8xf32>
    %cst_33 = arith.constant 0.000000e+00 : f32
    %35 = vector.broadcast %cst_33 : f32 to vector<128x8xf32>
    %36 = arith.maximumf %34, %35 : vector<128x8xf32>
    %cst_34 = arith.constant 0.000000e+00 : f32
    %37 = vector.broadcast %cst_34 : f32 to vector<2x1x8xf32>
    %c0_35 = arith.constant 0 : index
    %c0_36 = arith.constant 0 : index
    %c0_37 = arith.constant 0 : index
    %38 = vector.load %arg13[%c0_35, %c0_36, %c0_37] : memref<2x66x8xf32, #tpu.memory_space<vmem>>, vector<2x1x8xf32>
    tpu.vector_store %arg13[%c0_35, %c0_36, %c0_37], %37 {strides = array<i32>} : memref<2x66x8xf32, #tpu.memory_space<vmem>>, vector<2x1x8xf32>,
    %cst_38 = arith.constant 0.000000e+00 : f32
    %39 = vector.broadcast %cst_38 : f32 to vector<2x1x8xf32>
    %c0_39 = arith.constant 0 : index
    %c65_40 = arith.constant 65 : index
    %c0_41 = arith.constant 0 : index
    %40 = vector.load %arg13[%c0_39, %c65_40, %c0_41] : memref<2x66x8xf32, #tpu.memory_space<vmem>>, vector<2x1x8xf32>
    tpu.vector_store %arg13[%c0_39, %c65_40, %c0_41], %39 {strides = array<i32>} : memref<2x66x8xf32, #tpu.memory_space<vmem>>, vector<2x1x8xf32>,
    %41 = vector.shape_cast %36 : vector<128x8xf32> to vector<2x64x8xf32>
    %c0_42 = arith.constant 0 : index
    %c1_43 = arith.constant 1 : index
    %c0_44 = arith.constant 0 : index
    %42 = vector.load %arg13[%c0_42, %c1_43, %c0_44] : memref<2x66x8xf32, #tpu.memory_space<vmem>>, vector<2x64x8xf32>
    tpu.vector_store %arg13[%c0_42, %c1_43, %c0_44], %41 {strides = array<i32>} : memref<2x66x8xf32, #tpu.memory_space<vmem>>, vector<2x64x8xf32>,
    %c0_45 = arith.constant 0 : index
    %c1_46 = arith.constant 1 : index
    %c0_47 = arith.constant 0 : index
    %43 = tpu.strided_load %arg13[%c0_45, %c1_46, %c0_47] {strides = array<i32: 1, 2, 1>} : memref<2x66x8xf32, #tpu.memory_space<vmem>>, vector<2x32x8xf32>
    %c0_48 = arith.constant 0 : index
    %c2_49 = arith.constant 2 : index
    %c0_50 = arith.constant 0 : index
    %44 = tpu.strided_load %arg13[%c0_48, %c2_49, %c0_50] {strides = array<i32: 1, 2, 1>} : memref<2x66x8xf32, #tpu.memory_space<vmem>>, vector<2x32x8xf32>
    %45 = arith.maximumf %43, %44 : vector<2x32x8xf32>
    %46 = vector.shape_cast %45 : vector<2x32x8xf32> to vector<64x8xf32>
    %cst_51 = arith.constant 0.000000e+00 : f32
    %47 = vector.broadcast %cst_51 : f32 to vector<64x8xf32>
    %c0_52 = arith.constant 0 : index
    %c0_53 = arith.constant 0 : index
    %c0_54 = arith.constant 0 : index
    %48 = tpu.strided_load %arg13[%c0_52, %c0_53, %c0_54] {strides = array<i32: 1, 2, 1>} : memref<2x66x8xf32, #tpu.memory_space<vmem>>, vector<2x32x8xf32>
    %c1_55 = arith.constant 1 : index
    %c0_56 = arith.constant 0 : index
    %c0_57 = arith.constant 0 : index
    %49 = vector.load %arg3[%c1_55, %c0_56, %c0_57] : memref<7x48x16xf32, #tpu.memory_space<vmem>>, vector<1x8x8xf32>
    %50 = vector.shape_cast %49 : vector<1x8x8xf32> to vector<8x8xf32>
    %51 = vector.shape_cast %48 : vector<2x32x8xf32> to vector<64x8xf32>
    %cst_58 = arith.constant dense<0.000000e+00> : vector<64x8xf32>
    %52 = tpu.matmul %51, %50, %cst_58 {dimension_numbers = #tpu.dot_dimension_numbers<[1], [0], [0], [1], [0, 0, 1, 1], [], []>} : vector<64x8xf32>, vector<8x8xf32>, vector<64x8xf32> -> vector<64x8xf32>
    %53 = arith.addf %47, %52 : vector<64x8xf32>
    %c0_59 = arith.constant 0 : index
    %c1_60 = arith.constant 1 : index
    %c0_61 = arith.constant 0 : index
    %54 = tpu.strided_load %arg13[%c0_59, %c1_60, %c0_61] {strides = array<i32: 1, 2, 1>} : memref<2x66x8xf32, #tpu.memory_space<vmem>>, vector<2x32x8xf32>
    %c1_62 = arith.constant 1 : index
    %c8_63 = arith.constant 8 : index
    %c0_64 = arith.constant 0 : index
    %55 = vector.load %arg3[%c1_62, %c8_63, %c0_64] : memref<7x48x16xf32, #tpu.memory_space<vmem>>, vector<1x8x8xf32>
    %56 = vector.shape_cast %55 : vector<1x8x8xf32> to vector<8x8xf32>
    %57 = vector.shape_cast %54 : vector<2x32x8xf32> to vector<64x8xf32>
    %cst_65 = arith.constant dense<0.000000e+00> : vector<64x8xf32>
    %58 = tpu.matmul %57, %56, %cst_65 {dimension_numbers = #tpu.dot_dimension_numbers<[1], [0], [0], [1], [0, 0, 1, 1], [], []>} : vector<64x8xf32>, vector<8x8xf32>, vector<64x8xf32> -> vector<64x8xf32>
    %59 = arith.addf %53, %58 : vector<64x8xf32>
    %c0_66 = arith.constant 0 : index
    %c2_67 = arith.constant 2 : index
    %c0_68 = arith.constant 0 : index
    %60 = tpu.strided_load %arg13[%c0_66, %c2_67, %c0_68] {strides = array<i32: 1, 2, 1>} : memref<2x66x8xf32, #tpu.memory_space<vmem>>, vector<2x32x8xf32>
    %c1_69 = arith.constant 1 : index
    %c16 = arith.constant 16 : index
    %c0_70 = arith.constant 0 : index
    %61 = vector.load %arg3[%c1_69, %c16, %c0_70] : memref<7x48x16xf32, #tpu.memory_space<vmem>>, vector<1x8x8xf32>
    %62 = vector.shape_cast %61 : vector<1x8x8xf32> to vector<8x8xf32>
    %63 = vector.shape_cast %60 : vector<2x32x8xf32> to vector<64x8xf32>
    %cst_71 = arith.constant dense<0.000000e+00> : vector<64x8xf32>
    %64 = tpu.matmul %63, %62, %cst_71 {dimension_numbers = #tpu.dot_dimension_numbers<[1], [0], [0], [1], [0, 0, 1, 1], [], []>} : vector<64x8xf32>, vector<8x8xf32>, vector<64x8xf32> -> vector<64x8xf32>
    %65 = arith.addf %59, %64 : vector<64x8xf32>
    %c2_72 = arith.constant 2 : index
    %c0_73 = arith.constant 0 : index
    %66 = vector.load %arg2[%c2_72, %c0_73] : memref<20x16xf32, #tpu.memory_space<vmem>>, vector<1x8xf32>
    %c3 = arith.constant 3 : index
    %c0_74 = arith.constant 0 : index
    %67 = vector.load %arg2[%c3, %c0_74] : memref<20x16xf32, #tpu.memory_space<vmem>>, vector<1x8xf32>
    %68 = vector.broadcast %66 : vector<1x8xf32> to vector<64x8xf32>
    %69 = arith.mulf %65, %68 : vector<64x8xf32>
    %70 = vector.broadcast %67 : vector<1x8xf32> to vector<64x8xf32>
    %71 = arith.addf %69, %70 : vector<64x8xf32>
    %cst_75 = arith.constant 0.000000e+00 : f32
    %72 = vector.broadcast %cst_75 : f32 to vector<64x8xf32>
    %73 = arith.maximumf %71, %72 : vector<64x8xf32>
    %cst_76 = arith.constant 0.000000e+00 : f32
    %74 = vector.broadcast %cst_76 : f32 to vector<2x1x8xf32>
    %c0_77 = arith.constant 0 : index
    %c0_78 = arith.constant 0 : index
    %c0_79 = arith.constant 0 : index
    %75 = vector.load %arg14[%c0_77, %c0_78, %c0_79] : memref<2x34x8xf32, #tpu.memory_space<vmem>>, vector<2x1x8xf32>
    tpu.vector_store %arg14[%c0_77, %c0_78, %c0_79], %74 {strides = array<i32>} : memref<2x34x8xf32, #tpu.memory_space<vmem>>, vector<2x1x8xf32>,
    %cst_80 = arith.constant 0.000000e+00 : f32
    %76 = vector.broadcast %cst_80 : f32 to vector<2x1x8xf32>
    %c0_81 = arith.constant 0 : index
    %c33 = arith.constant 33 : index
    %c0_82 = arith.constant 0 : index
    %77 = vector.load %arg14[%c0_81, %c33, %c0_82] : memref<2x34x8xf32, #tpu.memory_space<vmem>>, vector<2x1x8xf32>
    tpu.vector_store %arg14[%c0_81, %c33, %c0_82], %76 {strides = array<i32>} : memref<2x34x8xf32, #tpu.memory_space<vmem>>, vector<2x1x8xf32>,
    %78 = vector.shape_cast %73 : vector<64x8xf32> to vector<2x32x8xf32>
    %c0_83 = arith.constant 0 : index
    %c1_84 = arith.constant 1 : index
    %c0_85 = arith.constant 0 : index
    %79 = vector.load %arg14[%c0_83, %c1_84, %c0_85] : memref<2x34x8xf32, #tpu.memory_space<vmem>>, vector<2x32x8xf32>
    tpu.vector_store %arg14[%c0_83, %c1_84, %c0_85], %78 {strides = array<i32>} : memref<2x34x8xf32, #tpu.memory_space<vmem>>, vector<2x32x8xf32>,
    %cst_86 = arith.constant 0.000000e+00 : f32
    %80 = vector.broadcast %cst_86 : f32 to vector<64x8xf32>
    %c0_87 = arith.constant 0 : index
    %c0_88 = arith.constant 0 : index
    %c0_89 = arith.constant 0 : index
    %81 = vector.load %arg14[%c0_87, %c0_88, %c0_89] : memref<2x34x8xf32, #tpu.memory_space<vmem>>, vector<2x32x8xf32>
    %c2_90 = arith.constant 2 : index
    %c0_91 = arith.constant 0 : index
    %c0_92 = arith.constant 0 : index
    %82 = vector.load %arg3[%c2_90, %c0_91, %c0_92] : memref<7x48x16xf32, #tpu.memory_space<vmem>>, vector<1x8x8xf32>
    %83 = vector.shape_cast %82 : vector<1x8x8xf32> to vector<8x8xf32>
    %84 = vector.shape_cast %81 : vector<2x32x8xf32> to vector<64x8xf32>
    %cst_93 = arith.constant dense<0.000000e+00> : vector<64x8xf32>
    %85 = tpu.matmul %84, %83, %cst_93 {dimension_numbers = #tpu.dot_dimension_numbers<[1], [0], [0], [1], [0, 0, 1, 1], [], []>} : vector<64x8xf32>, vector<8x8xf32>, vector<64x8xf32> -> vector<64x8xf32>
    %86 = arith.addf %80, %85 : vector<64x8xf32>
    %c0_94 = arith.constant 0 : index
    %c1_95 = arith.constant 1 : index
    %c0_96 = arith.constant 0 : index
    %87 = vector.load %arg14[%c0_94, %c1_95, %c0_96] : memref<2x34x8xf32, #tpu.memory_space<vmem>>, vector<2x32x8xf32>
    %c2_97 = arith.constant 2 : index
    %c8_98 = arith.constant 8 : index
    %c0_99 = arith.constant 0 : index
    %88 = vector.load %arg3[%c2_97, %c8_98, %c0_99] : memref<7x48x16xf32, #tpu.memory_space<vmem>>, vector<1x8x8xf32>
    %89 = vector.shape_cast %88 : vector<1x8x8xf32> to vector<8x8xf32>
    %90 = vector.shape_cast %87 : vector<2x32x8xf32> to vector<64x8xf32>
    %cst_100 = arith.constant dense<0.000000e+00> : vector<64x8xf32>
    %91 = tpu.matmul %90, %89, %cst_100 {dimension_numbers = #tpu.dot_dimension_numbers<[1], [0], [0], [1], [0, 0, 1, 1], [], []>} : vector<64x8xf32>, vector<8x8xf32>, vector<64x8xf32> -> vector<64x8xf32>
    %92 = arith.addf %86, %91 : vector<64x8xf32>
    %c0_101 = arith.constant 0 : index
    %c2_102 = arith.constant 2 : index
    %c0_103 = arith.constant 0 : index
    %93 = vector.load %arg14[%c0_101, %c2_102, %c0_103] : memref<2x34x8xf32, #tpu.memory_space<vmem>>, vector<2x32x8xf32>
    %c2_104 = arith.constant 2 : index
    %c16_105 = arith.constant 16 : index
    %c0_106 = arith.constant 0 : index
    %94 = vector.load %arg3[%c2_104, %c16_105, %c0_106] : memref<7x48x16xf32, #tpu.memory_space<vmem>>, vector<1x8x8xf32>
    %95 = vector.shape_cast %94 : vector<1x8x8xf32> to vector<8x8xf32>
    %96 = vector.shape_cast %93 : vector<2x32x8xf32> to vector<64x8xf32>
    %cst_107 = arith.constant dense<0.000000e+00> : vector<64x8xf32>
    %97 = tpu.matmul %96, %95, %cst_107 {dimension_numbers = #tpu.dot_dimension_numbers<[1], [0], [0], [1], [0, 0, 1, 1], [], []>} : vector<64x8xf32>, vector<8x8xf32>, vector<64x8xf32> -> vector<64x8xf32>
    %98 = arith.addf %92, %97 : vector<64x8xf32>
    %c4_108 = arith.constant 4 : index
    %c0_109 = arith.constant 0 : index
    %99 = vector.load %arg2[%c4_108, %c0_109] : memref<20x16xf32, #tpu.memory_space<vmem>>, vector<1x8xf32>
    %c5 = arith.constant 5 : index
    %c0_110 = arith.constant 0 : index
    %100 = vector.load %arg2[%c5, %c0_110] : memref<20x16xf32, #tpu.memory_space<vmem>>, vector<1x8xf32>
    %101 = vector.broadcast %99 : vector<1x8xf32> to vector<64x8xf32>
    %102 = arith.mulf %98, %101 : vector<64x8xf32>
    %103 = vector.broadcast %100 : vector<1x8xf32> to vector<64x8xf32>
    %104 = arith.addf %102, %103 : vector<64x8xf32>
    %cst_111 = arith.constant 0.000000e+00 : f32
    %105 = vector.broadcast %cst_111 : f32 to vector<64x8xf32>
    %106 = arith.maximumf %104, %105 : vector<64x8xf32>
    %107 = arith.addf %106, %46 : vector<64x8xf32>
    %108 = vector.shape_cast %107 : vector<64x8xf32> to vector<2x32x8xf32>
    %c0_112 = arith.constant 0 : index
    %c0_113 = arith.constant 0 : index
    %c0_114 = arith.constant 0 : index
    %109 = vector.load %arg17[%c0_112, %c0_113, %c0_114] : memref<2x32x8xf32, #tpu.memory_space<vmem>>, vector<2x32x8xf32>
    tpu.vector_store %arg17[%c0_112, %c0_113, %c0_114], %108 {strides = array<i32>} : memref<2x32x8xf32, #tpu.memory_space<vmem>>, vector<2x32x8xf32>,
    %c0_115 = arith.constant 0 : index
    %c0_116 = arith.constant 0 : index
    %c0_117 = arith.constant 0 : index
    %110 = tpu.strided_load %arg17[%c0_115, %c0_116, %c0_117] {strides = array<i32: 1, 2, 1>} : memref<2x32x8xf32, #tpu.memory_space<vmem>>, vector<2x16x8xf32>
    %c0_118 = arith.constant 0 : index
    %c1_119 = arith.constant 1 : index
    %c0_120 = arith.constant 0 : index
    %111 = tpu.strided_load %arg17[%c0_118, %c1_119, %c0_120] {strides = array<i32: 1, 2, 1>} : memref<2x32x8xf32, #tpu.memory_space<vmem>>, vector<2x16x8xf32>
    %112 = arith.maximumf %110, %111 : vector<2x16x8xf32>
    %113 = vector.shape_cast %112 : vector<2x16x8xf32> to vector<32x8xf32>
    %c6 = arith.constant 6 : index
    %c0_121 = arith.constant 0 : index
    %114 = vector.load %arg2[%c6, %c0_121] : memref<20x16xf32, #tpu.memory_space<vmem>>, vector<1x8xf32>
    %c7 = arith.constant 7 : index
    %c0_122 = arith.constant 0 : index
    %115 = vector.load %arg2[%c7, %c0_122] : memref<20x16xf32, #tpu.memory_space<vmem>>, vector<1x8xf32>
    %116 = vector.broadcast %114 : vector<1x8xf32> to vector<64x8xf32>
    %117 = arith.mulf %107, %116 : vector<64x8xf32>
    %118 = vector.broadcast %115 : vector<1x8xf32> to vector<64x8xf32>
    %119 = arith.addf %117, %118 : vector<64x8xf32>
    %cst_123 = arith.constant 0.000000e+00 : f32
    %120 = vector.broadcast %cst_123 : f32 to vector<64x8xf32>
    %121 = arith.maximumf %119, %120 : vector<64x8xf32>
    %cst_124 = arith.constant 0.000000e+00 : f32
    %122 = vector.broadcast %cst_124 : f32 to vector<2x1x8xf32>
    %c0_125 = arith.constant 0 : index
    %c0_126 = arith.constant 0 : index
    %c0_127 = arith.constant 0 : index
    %123 = vector.load %arg15[%c0_125, %c0_126, %c0_127] : memref<2x34x8xf32, #tpu.memory_space<vmem>>, vector<2x1x8xf32>
    tpu.vector_store %arg15[%c0_125, %c0_126, %c0_127], %122 {strides = array<i32>} : memref<2x34x8xf32, #tpu.memory_space<vmem>>, vector<2x1x8xf32>,
    %cst_128 = arith.constant 0.000000e+00 : f32
    %124 = vector.broadcast %cst_128 : f32 to vector<2x1x8xf32>
    %c0_129 = arith.constant 0 : index
    %c33_130 = arith.constant 33 : index
    %c0_131 = arith.constant 0 : index
    %125 = vector.load %arg15[%c0_129, %c33_130, %c0_131] : memref<2x34x8xf32, #tpu.memory_space<vmem>>, vector<2x1x8xf32>
    tpu.vector_store %arg15[%c0_129, %c33_130, %c0_131], %124 {strides = array<i32>} : memref<2x34x8xf32, #tpu.memory_space<vmem>>, vector<2x1x8xf32>,
    %126 = vector.shape_cast %121 : vector<64x8xf32> to vector<2x32x8xf32>
    %c0_132 = arith.constant 0 : index
    %c1_133 = arith.constant 1 : index
    %c0_134 = arith.constant 0 : index
    %127 = vector.load %arg15[%c0_132, %c1_133, %c0_134] : memref<2x34x8xf32, #tpu.memory_space<vmem>>, vector<2x32x8xf32>
    tpu.vector_store %arg15[%c0_132, %c1_133, %c0_134], %126 {strides = array<i32>} : memref<2x34x8xf32, #tpu.memory_space<vmem>>, vector<2x32x8xf32>,
    %cst_135 = arith.constant 0.000000e+00 : f32
    %128 = vector.broadcast %cst_135 : f32 to vector<32x16xf32>
    %c0_136 = arith.constant 0 : index
    %c0_137 = arith.constant 0 : index
    %c0_138 = arith.constant 0 : index
    %129 = tpu.strided_load %arg15[%c0_136, %c0_137, %c0_138] {strides = array<i32: 1, 2, 1>} : memref<2x34x8xf32, #tpu.memory_space<vmem>>, vector<2x16x8xf32>
    %c3_139 = arith.constant 3 : index
    %c0_140 = arith.constant 0 : index
    %c0_141 = arith.constant 0 : index
    %130 = vector.load %arg3[%c3_139, %c0_140, %c0_141] : memref<7x48x16xf32, #tpu.memory_space<vmem>>, vector<1x8x16xf32>
    %131 = vector.shape_cast %130 : vector<1x8x16xf32> to vector<8x16xf32>
    %132 = vector.shape_cast %129 : vector<2x16x8xf32> to vector<32x8xf32>
    %cst_142 = arith.constant dense<0.000000e+00> : vector<32x16xf32>
    %133 = tpu.matmul %132, %131, %cst_142 {dimension_numbers = #tpu.dot_dimension_numbers<[1], [0], [0], [1], [0, 0, 1, 1], [], []>} : vector<32x8xf32>, vector<8x16xf32>, vector<32x16xf32> -> vector<32x16xf32>
    %134 = arith.addf %128, %133 : vector<32x16xf32>
    %c0_143 = arith.constant 0 : index
    %c1_144 = arith.constant 1 : index
    %c0_145 = arith.constant 0 : index
    %135 = tpu.strided_load %arg15[%c0_143, %c1_144, %c0_145] {strides = array<i32: 1, 2, 1>} : memref<2x34x8xf32, #tpu.memory_space<vmem>>, vector<2x16x8xf32>
    %c3_146 = arith.constant 3 : index
    %c8_147 = arith.constant 8 : index
    %c0_148 = arith.constant 0 : index
    %136 = vector.load %arg3[%c3_146, %c8_147, %c0_148] : memref<7x48x16xf32, #tpu.memory_space<vmem>>, vector<1x8x16xf32>
    %137 = vector.shape_cast %136 : vector<1x8x16xf32> to vector<8x16xf32>
    %138 = vector.shape_cast %135 : vector<2x16x8xf32> to vector<32x8xf32>
    %cst_149 = arith.constant dense<0.000000e+00> : vector<32x16xf32>
    %139 = tpu.matmul %138, %137, %cst_149 {dimension_numbers = #tpu.dot_dimension_numbers<[1], [0], [0], [1], [0, 0, 1, 1], [], []>} : vector<32x8xf32>, vector<8x16xf32>, vector<32x16xf32> -> vector<32x16xf32>
    %140 = arith.addf %134, %139 : vector<32x16xf32>
    %c0_150 = arith.constant 0 : index
    %c2_151 = arith.constant 2 : index
    %c0_152 = arith.constant 0 : index
    %141 = tpu.strided_load %arg15[%c0_150, %c2_151, %c0_152] {strides = array<i32: 1, 2, 1>} : memref<2x34x8xf32, #tpu.memory_space<vmem>>, vector<2x16x8xf32>
    %c3_153 = arith.constant 3 : index
    %c16_154 = arith.constant 16 : index
    %c0_155 = arith.constant 0 : index
    %142 = vector.load %arg3[%c3_153, %c16_154, %c0_155] : memref<7x48x16xf32, #tpu.memory_space<vmem>>, vector<1x8x16xf32>
    %143 = vector.shape_cast %142 : vector<1x8x16xf32> to vector<8x16xf32>
    %144 = vector.shape_cast %141 : vector<2x16x8xf32> to vector<32x8xf32>
    %cst_156 = arith.constant dense<0.000000e+00> : vector<32x16xf32>
    %145 = tpu.matmul %144, %143, %cst_156 {dimension_numbers = #tpu.dot_dimension_numbers<[1], [0], [0], [1], [0, 0, 1, 1], [], []>} : vector<32x8xf32>, vector<8x16xf32>, vector<32x16xf32> -> vector<32x16xf32>
    %146 = arith.addf %140, %145 : vector<32x16xf32>
    %c8_157 = arith.constant 8 : index
    %c0_158 = arith.constant 0 : index
    %147 = vector.load %arg2[%c8_157, %c0_158] : memref<20x16xf32, #tpu.memory_space<vmem>>, vector<1x16xf32>
    %c9 = arith.constant 9 : index
    %c0_159 = arith.constant 0 : index
    %148 = vector.load %arg2[%c9, %c0_159] : memref<20x16xf32, #tpu.memory_space<vmem>>, vector<1x16xf32>
    %149 = vector.broadcast %147 : vector<1x16xf32> to vector<32x16xf32>
    %150 = arith.mulf %146, %149 : vector<32x16xf32>
    %151 = vector.broadcast %148 : vector<1x16xf32> to vector<32x16xf32>
    %152 = arith.addf %150, %151 : vector<32x16xf32>
    %cst_160 = arith.constant 0.000000e+00 : f32
    %153 = vector.broadcast %cst_160 : f32 to vector<32x16xf32>
    %154 = arith.maximumf %152, %153 : vector<32x16xf32>
    %cst_161 = arith.constant 0.000000e+00 : f32
    %155 = vector.broadcast %cst_161 : f32 to vector<2x1x16xf32>
    %c0_162 = arith.constant 0 : index
    %c0_163 = arith.constant 0 : index
    %c0_164 = arith.constant 0 : index
    %156 = vector.load %arg16[%c0_162, %c0_163, %c0_164] : memref<2x18x16xf32, #tpu.memory_space<vmem>>, vector<2x1x16xf32>
    tpu.vector_store %arg16[%c0_162, %c0_163, %c0_164], %155 {strides = array<i32>} : memref<2x18x16xf32, #tpu.memory_space<vmem>>, vector<2x1x16xf32>,
    %cst_165 = arith.constant 0.000000e+00 : f32
    %157 = vector.broadcast %cst_165 : f32 to vector<2x1x16xf32>
    %c0_166 = arith.constant 0 : index
    %c17 = arith.constant 17 : index
    %c0_167 = arith.constant 0 : index
    %158 = vector.load %arg16[%c0_166, %c17, %c0_167] : memref<2x18x16xf32, #tpu.memory_space<vmem>>, vector<2x1x16xf32>
    tpu.vector_store %arg16[%c0_166, %c17, %c0_167], %157 {strides = array<i32>} : memref<2x18x16xf32, #tpu.memory_space<vmem>>, vector<2x1x16xf32>,
    %159 = vector.shape_cast %154 : vector<32x16xf32> to vector<2x16x16xf32>
    %c0_168 = arith.constant 0 : index
    %c1_169 = arith.constant 1 : index
    %c0_170 = arith.constant 0 : index
    %160 = vector.load %arg16[%c0_168, %c1_169, %c0_170] : memref<2x18x16xf32, #tpu.memory_space<vmem>>, vector<2x16x16xf32>
    tpu.vector_store %arg16[%c0_168, %c1_169, %c0_170], %159 {strides = array<i32>} : memref<2x18x16xf32, #tpu.memory_space<vmem>>, vector<2x16x16xf32>,
    %cst_171 = arith.constant 0.000000e+00 : f32
    %161 = vector.broadcast %cst_171 : f32 to vector<32x16xf32>
    %c0_172 = arith.constant 0 : index
    %c0_173 = arith.constant 0 : index
    %c0_174 = arith.constant 0 : index
    %162 = vector.load %arg16[%c0_172, %c0_173, %c0_174] : memref<2x18x16xf32, #tpu.memory_space<vmem>>, vector<2x16x16xf32>
    %c4_175 = arith.constant 4 : index
    %c0_176 = arith.constant 0 : index
    %c0_177 = arith.constant 0 : index
    %163 = vector.load %arg3[%c4_175, %c0_176, %c0_177] : memref<7x48x16xf32, #tpu.memory_space<vmem>>, vector<1x16x16xf32>
    %164 = vector.shape_cast %163 : vector<1x16x16xf32> to vector<16x16xf32>
    %165 = vector.shape_cast %162 : vector<2x16x16xf32> to vector<32x16xf32>
    %cst_178 = arith.constant dense<0.000000e+00> : vector<32x16xf32>
    %166 = tpu.matmul %165, %164, %cst_178 {dimension_numbers = #tpu.dot_dimension_numbers<[1], [0], [0], [1], [0, 0, 1, 1], [], []>} : vector<32x16xf32>, vector<16x16xf32>, vector<32x16xf32> -> vector<32x16xf32>
    %167 = arith.addf %161, %166 : vector<32x16xf32>
    %c0_179 = arith.constant 0 : index
    %c1_180 = arith.constant 1 : index
    %c0_181 = arith.constant 0 : index
    %168 = vector.load %arg16[%c0_179, %c1_180, %c0_181] : memref<2x18x16xf32, #tpu.memory_space<vmem>>, vector<2x16x16xf32>
    %c4_182 = arith.constant 4 : index
    %c16_183 = arith.constant 16 : index
    %c0_184 = arith.constant 0 : index
    %169 = vector.load %arg3[%c4_182, %c16_183, %c0_184] : memref<7x48x16xf32, #tpu.memory_space<vmem>>, vector<1x16x16xf32>
    %170 = vector.shape_cast %169 : vector<1x16x16xf32> to vector<16x16xf32>
    %171 = vector.shape_cast %168 : vector<2x16x16xf32> to vector<32x16xf32>
    %cst_185 = arith.constant dense<0.000000e+00> : vector<32x16xf32>
    %172 = tpu.matmul %171, %170, %cst_185 {dimension_numbers = #tpu.dot_dimension_numbers<[1], [0], [0], [1], [0, 0, 1, 1], [], []>} : vector<32x16xf32>, vector<16x16xf32>, vector<32x16xf32> -> vector<32x16xf32>
    %173 = arith.addf %167, %172 : vector<32x16xf32>
    %c0_186 = arith.constant 0 : index
    %c2_187 = arith.constant 2 : index
    %c0_188 = arith.constant 0 : index
    %174 = vector.load %arg16[%c0_186, %c2_187, %c0_188] : memref<2x18x16xf32, #tpu.memory_space<vmem>>, vector<2x16x16xf32>
    %c4_189 = arith.constant 4 : index
    %c32 = arith.constant 32 : index
    %c0_190 = arith.constant 0 : index
    %175 = vector.load %arg3[%c4_189, %c32, %c0_190] : memref<7x48x16xf32, #tpu.memory_space<vmem>>, vector<1x16x16xf32>
    %176 = vector.shape_cast %175 : vector<1x16x16xf32> to vector<16x16xf32>
    %177 = vector.shape_cast %174 : vector<2x16x16xf32> to vector<32x16xf32>
    %cst_191 = arith.constant dense<0.000000e+00> : vector<32x16xf32>
    %178 = tpu.matmul %177, %176, %cst_191 {dimension_numbers = #tpu.dot_dimension_numbers<[1], [0], [0], [1], [0, 0, 1, 1], [], []>} : vector<32x16xf32>, vector<16x16xf32>, vector<32x16xf32> -> vector<32x16xf32>
    %179 = arith.addf %173, %178 : vector<32x16xf32>
    %c10 = arith.constant 10 : index
    %c0_192 = arith.constant 0 : index
    %180 = vector.load %arg2[%c10, %c0_192] : memref<20x16xf32, #tpu.memory_space<vmem>>, vector<1x16xf32>
    %c11 = arith.constant 11 : index
    %c0_193 = arith.constant 0 : index
    %181 = vector.load %arg2[%c11, %c0_193] : memref<20x16xf32, #tpu.memory_space<vmem>>, vector<1x16xf32>
    %182 = vector.broadcast %180 : vector<1x16xf32> to vector<32x16xf32>
    %183 = arith.mulf %179, %182 : vector<32x16xf32>
    %184 = vector.broadcast %181 : vector<1x16xf32> to vector<32x16xf32>
    %185 = arith.addf %183, %184 : vector<32x16xf32>
    %cst_194 = arith.constant 0.000000e+00 : f32
    %186 = vector.broadcast %cst_194 : f32 to vector<32x16xf32>
    %187 = arith.maximumf %185, %186 : vector<32x16xf32>
    %c0_195 = arith.constant 0 : index
    %c0_196 = arith.constant 0 : index
    %188 = vector.load %arg4[%c0_195, %c0_196] : memref<8x16xf32, #tpu.memory_space<vmem>>, vector<8x16xf32>
    %cst_197 = arith.constant dense<0.000000e+00> : vector<32x16xf32>
    %189 = tpu.matmul %113, %188, %cst_197 {dimension_numbers = #tpu.dot_dimension_numbers<[1], [0], [0], [1], [0, 0, 1, 1], [], []>} : vector<32x8xf32>, vector<8x16xf32>, vector<32x16xf32> -> vector<32x16xf32>
    %190 = arith.addf %187, %189 : vector<32x16xf32>
    %c12 = arith.constant 12 : index
    %c0_198 = arith.constant 0 : index
    %191 = vector.load %arg2[%c12, %c0_198] : memref<20x16xf32, #tpu.memory_space<vmem>>, vector<1x16xf32>
    %c13 = arith.constant 13 : index
    %c0_199 = arith.constant 0 : index
    %192 = vector.load %arg2[%c13, %c0_199] : memref<20x16xf32, #tpu.memory_space<vmem>>, vector<1x16xf32>
    %193 = vector.broadcast %191 : vector<1x16xf32> to vector<32x16xf32>
    %194 = arith.mulf %190, %193 : vector<32x16xf32>
    %195 = vector.broadcast %192 : vector<1x16xf32> to vector<32x16xf32>
    %196 = arith.addf %194, %195 : vector<32x16xf32>
    %cst_200 = arith.constant 0.000000e+00 : f32
    %197 = vector.broadcast %cst_200 : f32 to vector<32x16xf32>
    %198 = arith.maximumf %196, %197 : vector<32x16xf32>
    %cst_201 = arith.constant 0.000000e+00 : f32
    %199 = vector.broadcast %cst_201 : f32 to vector<2x1x16xf32>
    %c0_202 = arith.constant 0 : index
    %c0_203 = arith.constant 0 : index
    %c0_204 = arith.constant 0 : index
    %200 = vector.load %arg18[%c0_202, %c0_203, %c0_204] : memref<2x18x16xf32, #tpu.memory_space<vmem>>, vector<2x1x16xf32>
    tpu.vector_store %arg18[%c0_202, %c0_203, %c0_204], %199 {strides = array<i32>} : memref<2x18x16xf32, #tpu.memory_space<vmem>>, vector<2x1x16xf32>,
    %cst_205 = arith.constant 0.000000e+00 : f32
    %201 = vector.broadcast %cst_205 : f32 to vector<2x1x16xf32>
    %c0_206 = arith.constant 0 : index
    %c17_207 = arith.constant 17 : index
    %c0_208 = arith.constant 0 : index
    %202 = vector.load %arg18[%c0_206, %c17_207, %c0_208] : memref<2x18x16xf32, #tpu.memory_space<vmem>>, vector<2x1x16xf32>
    tpu.vector_store %arg18[%c0_206, %c17_207, %c0_208], %201 {strides = array<i32>} : memref<2x18x16xf32, #tpu.memory_space<vmem>>, vector<2x1x16xf32>,
    %203 = vector.shape_cast %198 : vector<32x16xf32> to vector<2x16x16xf32>
    %c0_209 = arith.constant 0 : index
    %c1_210 = arith.constant 1 : index
    %c0_211 = arith.constant 0 : index
    %204 = vector.load %arg18[%c0_209, %c1_210, %c0_211] : memref<2x18x16xf32, #tpu.memory_space<vmem>>, vector<2x16x16xf32>
    tpu.vector_store %arg18[%c0_209, %c1_210, %c0_211], %203 {strides = array<i32>} : memref<2x18x16xf32, #tpu.memory_space<vmem>>, vector<2x16x16xf32>,
    %cst_212 = arith.constant 0.000000e+00 : f32
    %205 = vector.broadcast %cst_212 : f32 to vector<32x16xf32>
    %c0_213 = arith.constant 0 : index
    %c0_214 = arith.constant 0 : index
    %c0_215 = arith.constant 0 : index
    %206 = vector.load %arg18[%c0_213, %c0_214, %c0_215] : memref<2x18x16xf32, #tpu.memory_space<vmem>>, vector<2x16x16xf32>
    %c5_216 = arith.constant 5 : index
    %c0_217 = arith.constant 0 : index
    %c0_218 = arith.constant 0 : index
    %207 = vector.load %arg3[%c5_216, %c0_217, %c0_218] : memref<7x48x16xf32, #tpu.memory_space<vmem>>, vector<1x16x16xf32>
    %208 = vector.shape_cast %207 : vector<1x16x16xf32> to vector<16x16xf32>
    %209 = vector.shape_cast %206 : vector<2x16x16xf32> to vector<32x16xf32>
    %cst_219 = arith.constant dense<0.000000e+00> : vector<32x16xf32>
    %210 = tpu.matmul %209, %208, %cst_219 {dimension_numbers = #tpu.dot_dimension_numbers<[1], [0], [0], [1], [0, 0, 1, 1], [], []>} : vector<32x16xf32>, vector<16x16xf32>, vector<32x16xf32> -> vector<32x16xf32>
    %211 = arith.addf %205, %210 : vector<32x16xf32>
    %c0_220 = arith.constant 0 : index
    %c1_221 = arith.constant 1 : index
    %c0_222 = arith.constant 0 : index
    %212 = vector.load %arg18[%c0_220, %c1_221, %c0_222] : memref<2x18x16xf32, #tpu.memory_space<vmem>>, vector<2x16x16xf32>
    %c5_223 = arith.constant 5 : index
    %c16_224 = arith.constant 16 : index
    %c0_225 = arith.constant 0 : index
    %213 = vector.load %arg3[%c5_223, %c16_224, %c0_225] : memref<7x48x16xf32, #tpu.memory_space<vmem>>, vector<1x16x16xf32>
    %214 = vector.shape_cast %213 : vector<1x16x16xf32> to vector<16x16xf32>
    %215 = vector.shape_cast %212 : vector<2x16x16xf32> to vector<32x16xf32>
    %cst_226 = arith.constant dense<0.000000e+00> : vector<32x16xf32>
    %216 = tpu.matmul %215, %214, %cst_226 {dimension_numbers = #tpu.dot_dimension_numbers<[1], [0], [0], [1], [0, 0, 1, 1], [], []>} : vector<32x16xf32>, vector<16x16xf32>, vector<32x16xf32> -> vector<32x16xf32>
    %217 = arith.addf %211, %216 : vector<32x16xf32>
    %c0_227 = arith.constant 0 : index
    %c2_228 = arith.constant 2 : index
    %c0_229 = arith.constant 0 : index
    %218 = vector.load %arg18[%c0_227, %c2_228, %c0_229] : memref<2x18x16xf32, #tpu.memory_space<vmem>>, vector<2x16x16xf32>
    %c5_230 = arith.constant 5 : index
    %c32_231 = arith.constant 32 : index
    %c0_232 = arith.constant 0 : index
    %219 = vector.load %arg3[%c5_230, %c32_231, %c0_232] : memref<7x48x16xf32, #tpu.memory_space<vmem>>, vector<1x16x16xf32>
    %220 = vector.shape_cast %219 : vector<1x16x16xf32> to vector<16x16xf32>
    %221 = vector.shape_cast %218 : vector<2x16x16xf32> to vector<32x16xf32>
    %cst_233 = arith.constant dense<0.000000e+00> : vector<32x16xf32>
    %222 = tpu.matmul %221, %220, %cst_233 {dimension_numbers = #tpu.dot_dimension_numbers<[1], [0], [0], [1], [0, 0, 1, 1], [], []>} : vector<32x16xf32>, vector<16x16xf32>, vector<32x16xf32> -> vector<32x16xf32>
    %223 = arith.addf %217, %222 : vector<32x16xf32>
    %c14 = arith.constant 14 : index
    %c0_234 = arith.constant 0 : index
    %224 = vector.load %arg2[%c14, %c0_234] : memref<20x16xf32, #tpu.memory_space<vmem>>, vector<1x16xf32>
    %c15 = arith.constant 15 : index
    %c0_235 = arith.constant 0 : index
    %225 = vector.load %arg2[%c15, %c0_235] : memref<20x16xf32, #tpu.memory_space<vmem>>, vector<1x16xf32>
    %226 = vector.broadcast %224 : vector<1x16xf32> to vector<32x16xf32>
    %227 = arith.mulf %223, %226 : vector<32x16xf32>
    %228 = vector.broadcast %225 : vector<1x16xf32> to vector<32x16xf32>
    %229 = arith.addf %227, %228 : vector<32x16xf32>
    %cst_236 = arith.constant 0.000000e+00 : f32
    %230 = vector.broadcast %cst_236 : f32 to vector<32x16xf32>
    %231 = arith.maximumf %229, %230 : vector<32x16xf32>
    %cst_237 = arith.constant 0.000000e+00 : f32
    %232 = vector.broadcast %cst_237 : f32 to vector<2x1x16xf32>
    %c0_238 = arith.constant 0 : index
    %c0_239 = arith.constant 0 : index
    %c0_240 = arith.constant 0 : index
    %233 = vector.load %arg19[%c0_238, %c0_239, %c0_240] : memref<2x18x16xf32, #tpu.memory_space<vmem>>, vector<2x1x16xf32>
    tpu.vector_store %arg19[%c0_238, %c0_239, %c0_240], %232 {strides = array<i32>} : memref<2x18x16xf32, #tpu.memory_space<vmem>>, vector<2x1x16xf32>,
    %cst_241 = arith.constant 0.000000e+00 : f32
    %234 = vector.broadcast %cst_241 : f32 to vector<2x1x16xf32>
    %c0_242 = arith.constant 0 : index
    %c17_243 = arith.constant 17 : index
    %c0_244 = arith.constant 0 : index
    %235 = vector.load %arg19[%c0_242, %c17_243, %c0_244] : memref<2x18x16xf32, #tpu.memory_space<vmem>>, vector<2x1x16xf32>
    tpu.vector_store %arg19[%c0_242, %c17_243, %c0_244], %234 {strides = array<i32>} : memref<2x18x16xf32, #tpu.memory_space<vmem>>, vector<2x1x16xf32>,
    %236 = vector.shape_cast %231 : vector<32x16xf32> to vector<2x16x16xf32>
    %c0_245 = arith.constant 0 : index
    %c1_246 = arith.constant 1 : index
    %c0_247 = arith.constant 0 : index
    %237 = vector.load %arg19[%c0_245, %c1_246, %c0_247] : memref<2x18x16xf32, #tpu.memory_space<vmem>>, vector<2x16x16xf32>
    tpu.vector_store %arg19[%c0_245, %c1_246, %c0_247], %236 {strides = array<i32>} : memref<2x18x16xf32, #tpu.memory_space<vmem>>, vector<2x16x16xf32>,
    %cst_248 = arith.constant 0.000000e+00 : f32
    %238 = vector.broadcast %cst_248 : f32 to vector<32x16xf32>
    %c0_249 = arith.constant 0 : index
    %c0_250 = arith.constant 0 : index
    %c0_251 = arith.constant 0 : index
    %239 = vector.load %arg19[%c0_249, %c0_250, %c0_251] : memref<2x18x16xf32, #tpu.memory_space<vmem>>, vector<2x16x16xf32>
    %c6_252 = arith.constant 6 : index
    %c0_253 = arith.constant 0 : index
    %c0_254 = arith.constant 0 : index
    %240 = vector.load %arg3[%c6_252, %c0_253, %c0_254] : memref<7x48x16xf32, #tpu.memory_space<vmem>>, vector<1x16x16xf32>
    %241 = vector.shape_cast %240 : vector<1x16x16xf32> to vector<16x16xf32>
    %242 = vector.shape_cast %239 : vector<2x16x16xf32> to vector<32x16xf32>
    %cst_255 = arith.constant dense<0.000000e+00> : vector<32x16xf32>
    %243 = tpu.matmul %242, %241, %cst_255 {dimension_numbers = #tpu.dot_dimension_numbers<[1], [0], [0], [1], [0, 0, 1, 1], [], []>} : vector<32x16xf32>, vector<16x16xf32>, vector<32x16xf32> -> vector<32x16xf32>
    %244 = arith.addf %238, %243 : vector<32x16xf32>
    %c0_256 = arith.constant 0 : index
    %c1_257 = arith.constant 1 : index
    %c0_258 = arith.constant 0 : index
    %245 = vector.load %arg19[%c0_256, %c1_257, %c0_258] : memref<2x18x16xf32, #tpu.memory_space<vmem>>, vector<2x16x16xf32>
    %c6_259 = arith.constant 6 : index
    %c16_260 = arith.constant 16 : index
    %c0_261 = arith.constant 0 : index
    %246 = vector.load %arg3[%c6_259, %c16_260, %c0_261] : memref<7x48x16xf32, #tpu.memory_space<vmem>>, vector<1x16x16xf32>
    %247 = vector.shape_cast %246 : vector<1x16x16xf32> to vector<16x16xf32>
    %248 = vector.shape_cast %245 : vector<2x16x16xf32> to vector<32x16xf32>
    %cst_262 = arith.constant dense<0.000000e+00> : vector<32x16xf32>
    %249 = tpu.matmul %248, %247, %cst_262 {dimension_numbers = #tpu.dot_dimension_numbers<[1], [0], [0], [1], [0, 0, 1, 1], [], []>} : vector<32x16xf32>, vector<16x16xf32>, vector<32x16xf32> -> vector<32x16xf32>
    %250 = arith.addf %244, %249 : vector<32x16xf32>
    %c0_263 = arith.constant 0 : index
    %c2_264 = arith.constant 2 : index
    %c0_265 = arith.constant 0 : index
    %251 = vector.load %arg19[%c0_263, %c2_264, %c0_265] : memref<2x18x16xf32, #tpu.memory_space<vmem>>, vector<2x16x16xf32>
    %c6_266 = arith.constant 6 : index
    %c32_267 = arith.constant 32 : index
    %c0_268 = arith.constant 0 : index
    %252 = vector.load %arg3[%c6_266, %c32_267, %c0_268] : memref<7x48x16xf32, #tpu.memory_space<vmem>>, vector<1x16x16xf32>
    %253 = vector.shape_cast %252 : vector<1x16x16xf32> to vector<16x16xf32>
    %254 = vector.shape_cast %251 : vector<2x16x16xf32> to vector<32x16xf32>
    %cst_269 = arith.constant dense<0.000000e+00> : vector<32x16xf32>
    %255 = tpu.matmul %254, %253, %cst_269 {dimension_numbers = #tpu.dot_dimension_numbers<[1], [0], [0], [1], [0, 0, 1, 1], [], []>} : vector<32x16xf32>, vector<16x16xf32>, vector<32x16xf32> -> vector<32x16xf32>
    %256 = arith.addf %250, %255 : vector<32x16xf32>
    %c16_270 = arith.constant 16 : index
    %c0_271 = arith.constant 0 : index
    %257 = vector.load %arg2[%c16_270, %c0_271] : memref<20x16xf32, #tpu.memory_space<vmem>>, vector<1x16xf32>
    %c17_272 = arith.constant 17 : index
    %c0_273 = arith.constant 0 : index
    %258 = vector.load %arg2[%c17_272, %c0_273] : memref<20x16xf32, #tpu.memory_space<vmem>>, vector<1x16xf32>
    %259 = vector.broadcast %257 : vector<1x16xf32> to vector<32x16xf32>
    %260 = arith.mulf %256, %259 : vector<32x16xf32>
    %261 = vector.broadcast %258 : vector<1x16xf32> to vector<32x16xf32>
    %262 = arith.addf %260, %261 : vector<32x16xf32>
    %cst_274 = arith.constant 0.000000e+00 : f32
    %263 = vector.broadcast %cst_274 : f32 to vector<32x16xf32>
    %264 = arith.maximumf %262, %263 : vector<32x16xf32>
    %265 = arith.addf %264, %190 : vector<32x16xf32>
    %c18 = arith.constant 18 : index
    %c0_275 = arith.constant 0 : index
    %266 = vector.load %arg2[%c18, %c0_275] : memref<20x16xf32, #tpu.memory_space<vmem>>, vector<1x16xf32>
    %c19 = arith.constant 19 : index
    %c0_276 = arith.constant 0 : index
    %267 = vector.load %arg2[%c19, %c0_276] : memref<20x16xf32, #tpu.memory_space<vmem>>, vector<1x16xf32>
    %268 = vector.broadcast %266 : vector<1x16xf32> to vector<32x16xf32>
    %269 = arith.mulf %265, %268 : vector<32x16xf32>
    %270 = vector.broadcast %267 : vector<1x16xf32> to vector<32x16xf32>
    %271 = arith.addf %269, %270 : vector<32x16xf32>
    %cst_277 = arith.constant 0.000000e+00 : f32
    %272 = vector.broadcast %cst_277 : f32 to vector<32x16xf32>
    %273 = arith.maximumf %271, %272 : vector<32x16xf32>
    %c0_i32_278 = arith.constant 0 : i32
    %274 = tpu.memref_slice %arg22[%c0_i32_278] : memref<2x!tpu.dma_semaphore, #tpu.memory_space<semaphore_mem>> -> memref<1x!tpu.dma_semaphore, #tpu.memory_space<semaphore_mem>>
    %275 = tpu.memref_squeeze %274 : memref<1x!tpu.dma_semaphore, #tpu.memory_space<semaphore_mem>> -> memref<!tpu.dma_semaphore, #tpu.memory_space<semaphore_mem>>
    tpu.wait_dma2 semaphore(%275 : memref<!tpu.dma_semaphore, #tpu.memory_space<semaphore_mem>>) src(%arg9 : memref<16x16x1024xbf16, #tpu.memory_space<any>>) dst(%arg20 : memref<16x16x1024xbf16, #tpu.memory_space<vmem>>)
    %c1_i32_279 = arith.constant 1 : i32
    %276 = tpu.memref_slice %arg22[%c1_i32_279] : memref<2x!tpu.dma_semaphore, #tpu.memory_space<semaphore_mem>> -> memref<1x!tpu.dma_semaphore, #tpu.memory_space<semaphore_mem>>
    %277 = tpu.memref_squeeze %276 : memref<1x!tpu.dma_semaphore, #tpu.memory_space<semaphore_mem>> -> memref<!tpu.dma_semaphore, #tpu.memory_space<semaphore_mem>>
    tpu.wait_dma2 semaphore(%277 : memref<!tpu.dma_semaphore, #tpu.memory_space<semaphore_mem>>) src(%arg10 : memref<1024x256xbf16, #tpu.memory_space<any>>) dst(%arg21 : memref<1024x256xbf16, #tpu.memory_space<vmem>>)
    %278 = vector.shape_cast %273 : vector<32x16xf32> to vector<2x16x16xf32>
    %cst_280 = arith.constant 0.000000e+00 : f32
    %279 = vector.broadcast %cst_280 : f32 to vector<2x1024xf32>
    %280 = vector.extract_strided_slice %278 {offsets = [0, 0, 0], sizes = [2, 1, 16], strides = [1, 1, 1]} : vector<2x16x16xf32> to vector<2x1x16xf32>
    %281 = vector.shape_cast %280 : vector<2x1x16xf32> to vector<2x16xf32>
    %282 = arith.truncf %281 : vector<2x16xf32> to vector<2x16xbf16>
    %c0_281 = arith.constant 0 : index
    %c0_282 = arith.constant 0 : index
    %c0_283 = arith.constant 0 : index
    %283 = vector.load %arg20[%c0_281, %c0_282, %c0_283] : memref<16x16x1024xbf16, #tpu.memory_space<vmem>>, vector<1x16x1024xbf16>
    %284 = vector.shape_cast %283 : vector<1x16x1024xbf16> to vector<16x1024xbf16>
    %cst_284 = arith.constant dense<0.000000e+00> : vector<2x1024xf32>
    %285 = tpu.matmul %282, %284, %cst_284 {dimension_numbers = #tpu.dot_dimension_numbers<[1], [0], [0], [1], [0, 0, 1, 1], [], []>} : vector<2x16xbf16>, vector<16x1024xbf16>, vector<2x1024xf32> -> vector<2x1024xf32>
    %286 = arith.addf %279, %285 : vector<2x1024xf32>
    %287 = vector.extract_strided_slice %278 {offsets = [0, 1, 0], sizes = [2, 1, 16], strides = [1, 1, 1]} : vector<2x16x16xf32> to vector<2x1x16xf32>
    %288 = vector.shape_cast %287 : vector<2x1x16xf32> to vector<2x16xf32>
    %289 = arith.truncf %288 : vector<2x16xf32> to vector<2x16xbf16>
    %c1_285 = arith.constant 1 : index
    %c0_286 = arith.constant 0 : index
    %c0_287 = arith.constant 0 : index
    %290 = vector.load %arg20[%c1_285, %c0_286, %c0_287] : memref<16x16x1024xbf16, #tpu.memory_space<vmem>>, vector<1x16x1024xbf16>
    %291 = vector.shape_cast %290 : vector<1x16x1024xbf16> to vector<16x1024xbf16>
    %cst_288 = arith.constant dense<0.000000e+00> : vector<2x1024xf32>
    %292 = tpu.matmul %289, %291, %cst_288 {dimension_numbers = #tpu.dot_dimension_numbers<[1], [0], [0], [1], [0, 0, 1, 1], [], []>} : vector<2x16xbf16>, vector<16x1024xbf16>, vector<2x1024xf32> -> vector<2x1024xf32>
    %293 = arith.addf %286, %292 : vector<2x1024xf32>
    %294 = vector.extract_strided_slice %278 {offsets = [0, 2, 0], sizes = [2, 1, 16], strides = [1, 1, 1]} : vector<2x16x16xf32> to vector<2x1x16xf32>
    %295 = vector.shape_cast %294 : vector<2x1x16xf32> to vector<2x16xf32>
    %296 = arith.truncf %295 : vector<2x16xf32> to vector<2x16xbf16>
    %c2_289 = arith.constant 2 : index
    %c0_290 = arith.constant 0 : index
    %c0_291 = arith.constant 0 : index
    %297 = vector.load %arg20[%c2_289, %c0_290, %c0_291] : memref<16x16x1024xbf16, #tpu.memory_space<vmem>>, vector<1x16x1024xbf16>
    %298 = vector.shape_cast %297 : vector<1x16x1024xbf16> to vector<16x1024xbf16>
    %cst_292 = arith.constant dense<0.000000e+00> : vector<2x1024xf32>
    %299 = tpu.matmul %296, %298, %cst_292 {dimension_numbers = #tpu.dot_dimension_numbers<[1], [0], [0], [1], [0, 0, 1, 1], [], []>} : vector<2x16xbf16>, vector<16x1024xbf16>, vector<2x1024xf32> -> vector<2x1024xf32>
    %300 = arith.addf %293, %299 : vector<2x1024xf32>
    %301 = vector.extract_strided_slice %278 {offsets = [0, 3, 0], sizes = [2, 1, 16], strides = [1, 1, 1]} : vector<2x16x16xf32> to vector<2x1x16xf32>
    %302 = vector.shape_cast %301 : vector<2x1x16xf32> to vector<2x16xf32>
    %303 = arith.truncf %302 : vector<2x16xf32> to vector<2x16xbf16>
    %c3_293 = arith.constant 3 : index
    %c0_294 = arith.constant 0 : index
    %c0_295 = arith.constant 0 : index
    %304 = vector.load %arg20[%c3_293, %c0_294, %c0_295] : memref<16x16x1024xbf16, #tpu.memory_space<vmem>>, vector<1x16x1024xbf16>
    %305 = vector.shape_cast %304 : vector<1x16x1024xbf16> to vector<16x1024xbf16>
    %cst_296 = arith.constant dense<0.000000e+00> : vector<2x1024xf32>
    %306 = tpu.matmul %303, %305, %cst_296 {dimension_numbers = #tpu.dot_dimension_numbers<[1], [0], [0], [1], [0, 0, 1, 1], [], []>} : vector<2x16xbf16>, vector<16x1024xbf16>, vector<2x1024xf32> -> vector<2x1024xf32>
    %307 = arith.addf %300, %306 : vector<2x1024xf32>
    %308 = vector.extract_strided_slice %278 {offsets = [0, 4, 0], sizes = [2, 1, 16], strides = [1, 1, 1]} : vector<2x16x16xf32> to vector<2x1x16xf32>
    %309 = vector.shape_cast %308 : vector<2x1x16xf32> to vector<2x16xf32>
    %310 = arith.truncf %309 : vector<2x16xf32> to vector<2x16xbf16>
    %c4_297 = arith.constant 4 : index
    %c0_298 = arith.constant 0 : index
    %c0_299 = arith.constant 0 : index
    %311 = vector.load %arg20[%c4_297, %c0_298, %c0_299] : memref<16x16x1024xbf16, #tpu.memory_space<vmem>>, vector<1x16x1024xbf16>
    %312 = vector.shape_cast %311 : vector<1x16x1024xbf16> to vector<16x1024xbf16>
    %cst_300 = arith.constant dense<0.000000e+00> : vector<2x1024xf32>
    %313 = tpu.matmul %310, %312, %cst_300 {dimension_numbers = #tpu.dot_dimension_numbers<[1], [0], [0], [1], [0, 0, 1, 1], [], []>} : vector<2x16xbf16>, vector<16x1024xbf16>, vector<2x1024xf32> -> vector<2x1024xf32>
    %314 = arith.addf %307, %313 : vector<2x1024xf32>
    %315 = vector.extract_strided_slice %278 {offsets = [0, 5, 0], sizes = [2, 1, 16], strides = [1, 1, 1]} : vector<2x16x16xf32> to vector<2x1x16xf32>
    %316 = vector.shape_cast %315 : vector<2x1x16xf32> to vector<2x16xf32>
    %317 = arith.truncf %316 : vector<2x16xf32> to vector<2x16xbf16>
    %c5_301 = arith.constant 5 : index
    %c0_302 = arith.constant 0 : index
    %c0_303 = arith.constant 0 : index
    %318 = vector.load %arg20[%c5_301, %c0_302, %c0_303] : memref<16x16x1024xbf16, #tpu.memory_space<vmem>>, vector<1x16x1024xbf16>
    %319 = vector.shape_cast %318 : vector<1x16x1024xbf16> to vector<16x1024xbf16>
    %cst_304 = arith.constant dense<0.000000e+00> : vector<2x1024xf32>
    %320 = tpu.matmul %317, %319, %cst_304 {dimension_numbers = #tpu.dot_dimension_numbers<[1], [0], [0], [1], [0, 0, 1, 1], [], []>} : vector<2x16xbf16>, vector<16x1024xbf16>, vector<2x1024xf32> -> vector<2x1024xf32>
    %321 = arith.addf %314, %320 : vector<2x1024xf32>
    %322 = vector.extract_strided_slice %278 {offsets = [0, 6, 0], sizes = [2, 1, 16], strides = [1, 1, 1]} : vector<2x16x16xf32> to vector<2x1x16xf32>
    %323 = vector.shape_cast %322 : vector<2x1x16xf32> to vector<2x16xf32>
    %324 = arith.truncf %323 : vector<2x16xf32> to vector<2x16xbf16>
    %c6_305 = arith.constant 6 : index
    %c0_306 = arith.constant 0 : index
    %c0_307 = arith.constant 0 : index
    %325 = vector.load %arg20[%c6_305, %c0_306, %c0_307] : memref<16x16x1024xbf16, #tpu.memory_space<vmem>>, vector<1x16x1024xbf16>
    %326 = vector.shape_cast %325 : vector<1x16x1024xbf16> to vector<16x1024xbf16>
    %cst_308 = arith.constant dense<0.000000e+00> : vector<2x1024xf32>
    %327 = tpu.matmul %324, %326, %cst_308 {dimension_numbers = #tpu.dot_dimension_numbers<[1], [0], [0], [1], [0, 0, 1, 1], [], []>} : vector<2x16xbf16>, vector<16x1024xbf16>, vector<2x1024xf32> -> vector<2x1024xf32>
    %328 = arith.addf %321, %327 : vector<2x1024xf32>
    %329 = vector.extract_strided_slice %278 {offsets = [0, 7, 0], sizes = [2, 1, 16], strides = [1, 1, 1]} : vector<2x16x16xf32> to vector<2x1x16xf32>
    %330 = vector.shape_cast %329 : vector<2x1x16xf32> to vector<2x16xf32>
    %331 = arith.truncf %330 : vector<2x16xf32> to vector<2x16xbf16>
    %c7_309 = arith.constant 7 : index
    %c0_310 = arith.constant 0 : index
    %c0_311 = arith.constant 0 : index
    %332 = vector.load %arg20[%c7_309, %c0_310, %c0_311] : memref<16x16x1024xbf16, #tpu.memory_space<vmem>>, vector<1x16x1024xbf16>
    %333 = vector.shape_cast %332 : vector<1x16x1024xbf16> to vector<16x1024xbf16>
    %cst_312 = arith.constant dense<0.000000e+00> : vector<2x1024xf32>
    %334 = tpu.matmul %331, %333, %cst_312 {dimension_numbers = #tpu.dot_dimension_numbers<[1], [0], [0], [1], [0, 0, 1, 1], [], []>} : vector<2x16xbf16>, vector<16x1024xbf16>, vector<2x1024xf32> -> vector<2x1024xf32>
    %335 = arith.addf %328, %334 : vector<2x1024xf32>
    %336 = vector.extract_strided_slice %278 {offsets = [0, 8, 0], sizes = [2, 1, 16], strides = [1, 1, 1]} : vector<2x16x16xf32> to vector<2x1x16xf32>
    %337 = vector.shape_cast %336 : vector<2x1x16xf32> to vector<2x16xf32>
    %338 = arith.truncf %337 : vector<2x16xf32> to vector<2x16xbf16>
    %c8_313 = arith.constant 8 : index
    %c0_314 = arith.constant 0 : index
    %c0_315 = arith.constant 0 : index
    %339 = vector.load %arg20[%c8_313, %c0_314, %c0_315] : memref<16x16x1024xbf16, #tpu.memory_space<vmem>>, vector<1x16x1024xbf16>
    %340 = vector.shape_cast %339 : vector<1x16x1024xbf16> to vector<16x1024xbf16>
    %cst_316 = arith.constant dense<0.000000e+00> : vector<2x1024xf32>
    %341 = tpu.matmul %338, %340, %cst_316 {dimension_numbers = #tpu.dot_dimension_numbers<[1], [0], [0], [1], [0, 0, 1, 1], [], []>} : vector<2x16xbf16>, vector<16x1024xbf16>, vector<2x1024xf32> -> vector<2x1024xf32>
    %342 = arith.addf %335, %341 : vector<2x1024xf32>
    %343 = vector.extract_strided_slice %278 {offsets = [0, 9, 0], sizes = [2, 1, 16], strides = [1, 1, 1]} : vector<2x16x16xf32> to vector<2x1x16xf32>
    %344 = vector.shape_cast %343 : vector<2x1x16xf32> to vector<2x16xf32>
    %345 = arith.truncf %344 : vector<2x16xf32> to vector<2x16xbf16>
    %c9_317 = arith.constant 9 : index
    %c0_318 = arith.constant 0 : index
    %c0_319 = arith.constant 0 : index
    %346 = vector.load %arg20[%c9_317, %c0_318, %c0_319] : memref<16x16x1024xbf16, #tpu.memory_space<vmem>>, vector<1x16x1024xbf16>
    %347 = vector.shape_cast %346 : vector<1x16x1024xbf16> to vector<16x1024xbf16>
    %cst_320 = arith.constant dense<0.000000e+00> : vector<2x1024xf32>
    %348 = tpu.matmul %345, %347, %cst_320 {dimension_numbers = #tpu.dot_dimension_numbers<[1], [0], [0], [1], [0, 0, 1, 1], [], []>} : vector<2x16xbf16>, vector<16x1024xbf16>, vector<2x1024xf32> -> vector<2x1024xf32>
    %349 = arith.addf %342, %348 : vector<2x1024xf32>
    %350 = vector.extract_strided_slice %278 {offsets = [0, 10, 0], sizes = [2, 1, 16], strides = [1, 1, 1]} : vector<2x16x16xf32> to vector<2x1x16xf32>
    %351 = vector.shape_cast %350 : vector<2x1x16xf32> to vector<2x16xf32>
    %352 = arith.truncf %351 : vector<2x16xf32> to vector<2x16xbf16>
    %c10_321 = arith.constant 10 : index
    %c0_322 = arith.constant 0 : index
    %c0_323 = arith.constant 0 : index
    %353 = vector.load %arg20[%c10_321, %c0_322, %c0_323] : memref<16x16x1024xbf16, #tpu.memory_space<vmem>>, vector<1x16x1024xbf16>
    %354 = vector.shape_cast %353 : vector<1x16x1024xbf16> to vector<16x1024xbf16>
    %cst_324 = arith.constant dense<0.000000e+00> : vector<2x1024xf32>
    %355 = tpu.matmul %352, %354, %cst_324 {dimension_numbers = #tpu.dot_dimension_numbers<[1], [0], [0], [1], [0, 0, 1, 1], [], []>} : vector<2x16xbf16>, vector<16x1024xbf16>, vector<2x1024xf32> -> vector<2x1024xf32>
    %356 = arith.addf %349, %355 : vector<2x1024xf32>
    %357 = vector.extract_strided_slice %278 {offsets = [0, 11, 0], sizes = [2, 1, 16], strides = [1, 1, 1]} : vector<2x16x16xf32> to vector<2x1x16xf32>
    %358 = vector.shape_cast %357 : vector<2x1x16xf32> to vector<2x16xf32>
    %359 = arith.truncf %358 : vector<2x16xf32> to vector<2x16xbf16>
    %c11_325 = arith.constant 11 : index
    %c0_326 = arith.constant 0 : index
    %c0_327 = arith.constant 0 : index
    %360 = vector.load %arg20[%c11_325, %c0_326, %c0_327] : memref<16x16x1024xbf16, #tpu.memory_space<vmem>>, vector<1x16x1024xbf16>
    %361 = vector.shape_cast %360 : vector<1x16x1024xbf16> to vector<16x1024xbf16>
    %cst_328 = arith.constant dense<0.000000e+00> : vector<2x1024xf32>
    %362 = tpu.matmul %359, %361, %cst_328 {dimension_numbers = #tpu.dot_dimension_numbers<[1], [0], [0], [1], [0, 0, 1, 1], [], []>} : vector<2x16xbf16>, vector<16x1024xbf16>, vector<2x1024xf32> -> vector<2x1024xf32>
    %363 = arith.addf %356, %362 : vector<2x1024xf32>
    %364 = vector.extract_strided_slice %278 {offsets = [0, 12, 0], sizes = [2, 1, 16], strides = [1, 1, 1]} : vector<2x16x16xf32> to vector<2x1x16xf32>
    %365 = vector.shape_cast %364 : vector<2x1x16xf32> to vector<2x16xf32>
    %366 = arith.truncf %365 : vector<2x16xf32> to vector<2x16xbf16>
    %c12_329 = arith.constant 12 : index
    %c0_330 = arith.constant 0 : index
    %c0_331 = arith.constant 0 : index
    %367 = vector.load %arg20[%c12_329, %c0_330, %c0_331] : memref<16x16x1024xbf16, #tpu.memory_space<vmem>>, vector<1x16x1024xbf16>
    %368 = vector.shape_cast %367 : vector<1x16x1024xbf16> to vector<16x1024xbf16>
    %cst_332 = arith.constant dense<0.000000e+00> : vector<2x1024xf32>
    %369 = tpu.matmul %366, %368, %cst_332 {dimension_numbers = #tpu.dot_dimension_numbers<[1], [0], [0], [1], [0, 0, 1, 1], [], []>} : vector<2x16xbf16>, vector<16x1024xbf16>, vector<2x1024xf32> -> vector<2x1024xf32>
    %370 = arith.addf %363, %369 : vector<2x1024xf32>
    %371 = vector.extract_strided_slice %278 {offsets = [0, 13, 0], sizes = [2, 1, 16], strides = [1, 1, 1]} : vector<2x16x16xf32> to vector<2x1x16xf32>
    %372 = vector.shape_cast %371 : vector<2x1x16xf32> to vector<2x16xf32>
    %373 = arith.truncf %372 : vector<2x16xf32> to vector<2x16xbf16>
    %c13_333 = arith.constant 13 : index
    %c0_334 = arith.constant 0 : index
    %c0_335 = arith.constant 0 : index
    %374 = vector.load %arg20[%c13_333, %c0_334, %c0_335] : memref<16x16x1024xbf16, #tpu.memory_space<vmem>>, vector<1x16x1024xbf16>
    %375 = vector.shape_cast %374 : vector<1x16x1024xbf16> to vector<16x1024xbf16>
    %cst_336 = arith.constant dense<0.000000e+00> : vector<2x1024xf32>
    %376 = tpu.matmul %373, %375, %cst_336 {dimension_numbers = #tpu.dot_dimension_numbers<[1], [0], [0], [1], [0, 0, 1, 1], [], []>} : vector<2x16xbf16>, vector<16x1024xbf16>, vector<2x1024xf32> -> vector<2x1024xf32>
    %377 = arith.addf %370, %376 : vector<2x1024xf32>
    %378 = vector.extract_strided_slice %278 {offsets = [0, 14, 0], sizes = [2, 1, 16], strides = [1, 1, 1]} : vector<2x16x16xf32> to vector<2x1x16xf32>
    %379 = vector.shape_cast %378 : vector<2x1x16xf32> to vector<2x16xf32>
    %380 = arith.truncf %379 : vector<2x16xf32> to vector<2x16xbf16>
    %c14_337 = arith.constant 14 : index
    %c0_338 = arith.constant 0 : index
    %c0_339 = arith.constant 0 : index
    %381 = vector.load %arg20[%c14_337, %c0_338, %c0_339] : memref<16x16x1024xbf16, #tpu.memory_space<vmem>>, vector<1x16x1024xbf16>
    %382 = vector.shape_cast %381 : vector<1x16x1024xbf16> to vector<16x1024xbf16>
    %cst_340 = arith.constant dense<0.000000e+00> : vector<2x1024xf32>
    %383 = tpu.matmul %380, %382, %cst_340 {dimension_numbers = #tpu.dot_dimension_numbers<[1], [0], [0], [1], [0, 0, 1, 1], [], []>} : vector<2x16xbf16>, vector<16x1024xbf16>, vector<2x1024xf32> -> vector<2x1024xf32>
    %384 = arith.addf %377, %383 : vector<2x1024xf32>
    %385 = vector.extract_strided_slice %278 {offsets = [0, 15, 0], sizes = [2, 1, 16], strides = [1, 1, 1]} : vector<2x16x16xf32> to vector<2x1x16xf32>
    %386 = vector.shape_cast %385 : vector<2x1x16xf32> to vector<2x16xf32>
    %387 = arith.truncf %386 : vector<2x16xf32> to vector<2x16xbf16>
    %c15_341 = arith.constant 15 : index
    %c0_342 = arith.constant 0 : index
    %c0_343 = arith.constant 0 : index
    %388 = vector.load %arg20[%c15_341, %c0_342, %c0_343] : memref<16x16x1024xbf16, #tpu.memory_space<vmem>>, vector<1x16x1024xbf16>
    %389 = vector.shape_cast %388 : vector<1x16x1024xbf16> to vector<16x1024xbf16>
    %cst_344 = arith.constant dense<0.000000e+00> : vector<2x1024xf32>
    %390 = tpu.matmul %387, %389, %cst_344 {dimension_numbers = #tpu.dot_dimension_numbers<[1], [0], [0], [1], [0, 0, 1, 1], [], []>} : vector<2x16xbf16>, vector<16x1024xbf16>, vector<2x1024xf32> -> vector<2x1024xf32>
    %391 = arith.addf %384, %390 : vector<2x1024xf32>
    %c0_345 = arith.constant 0 : index
    %c0_346 = arith.constant 0 : index
    %392 = vector.load %arg5[%c0_345, %c0_346] : memref<1x1024xf32, #tpu.memory_space<vmem>>, vector<1x1024xf32>
    %393 = vector.broadcast %392 : vector<1x1024xf32> to vector<2x1024xf32>
    %394 = arith.addf %391, %393 : vector<2x1024xf32>
    %395 = arith.truncf %394 : vector<2x1024xf32> to vector<2x1024xbf16>
    %c0_347 = arith.constant 0 : index
    %c0_348 = arith.constant 0 : index
    %396 = vector.load %arg21[%c0_347, %c0_348] : memref<1024x256xbf16, #tpu.memory_space<vmem>>, vector<1024x256xbf16>
    %cst_349 = arith.constant dense<0.000000e+00> : vector<2x256xf32>
    %397 = tpu.matmul %395, %396, %cst_349 {dimension_numbers = #tpu.dot_dimension_numbers<[1], [0], [0], [1], [0, 0, 1, 1], [], []>} : vector<2x1024xbf16>, vector<1024x256xbf16>, vector<2x256xf32> -> vector<2x256xf32>
    %c0_350 = arith.constant 0 : index
    %c0_351 = arith.constant 0 : index
    %398 = vector.load %arg6[%c0_350, %c0_351] : memref<1x256xf32, #tpu.memory_space<vmem>>, vector<1x256xf32>
    %399 = vector.broadcast %398 : vector<1x256xf32> to vector<2x256xf32>
    %400 = arith.addf %397, %399 : vector<2x256xf32>
    %c0_352 = arith.constant 0 : index
    %c0_353 = arith.constant 0 : index
    %401 = vector.load %arg8[%c0_352, %c0_353] : memref<256x5xf32, #tpu.memory_space<vmem>>, vector<256x5xf32>
    %cst_354 = arith.constant dense<0.000000e+00> : vector<2x5xf32>
    %402 = tpu.matmul %400, %401, %cst_354 {dimension_numbers = #tpu.dot_dimension_numbers<[1], [0], [0], [1], [0, 0, 1, 1], [], []>} : vector<2x256xf32>, vector<256x5xf32>, vector<2x5xf32> -> vector<2x5xf32>
    %c0_355 = arith.constant 0 : index
    %c0_356 = arith.constant 0 : index
    %403 = vector.load %arg7[%c0_355, %c0_356] : memref<1x5xf32, #tpu.memory_space<vmem>>, vector<1x5xf32>
    %404 = vector.broadcast %403 : vector<1x5xf32> to vector<2x5xf32>
    %405 = arith.addf %402, %404 : vector<2x5xf32>
    %c0_357 = arith.constant 0 : index
    %c0_358 = arith.constant 0 : index
    %c0_359 = arith.constant 0 : index
    %406 = vector.load %arg11[%c0_357, %c0_358, %c0_359] : memref<1x2x5xf32, #tpu.memory_space<vmem>>, vector<1x2x5xf32>
    %407 = vector.shape_cast %406 : vector<1x2x5xf32> to vector<2x5xf32>
    %408 = vector.shape_cast %405 : vector<2x5xf32> to vector<1x2x5xf32>
    tpu.vector_store %arg11[%c0_357, %c0_358, %c0_359], %408 {strides = array<i32>} : memref<1x2x5xf32, #tpu.memory_space<vmem>>, vector<1x2x5xf32>,
    return
  }
  func.func @transform_0(%arg0: i32) -> (i32, i32, i32) {
    %c0_i32 = arith.constant 0 : i32
    %c0_i32_0 = arith.constant 0 : i32
    %c0_i32_1 = arith.constant 0 : i32
    return %arg0, %c0_i32, %c0_i32_0 : i32, i32, i32
  }
  func.func @transform_1(%arg0: i32) -> (i32, i32) {
    %c0_i32 = arith.constant 0 : i32
    %c0_i32_0 = arith.constant 0 : i32
    %c0_i32_1 = arith.constant 0 : i32
    return %c0_i32, %c0_i32_0 : i32, i32
  }
  func.func @transform_2(%arg0: i32) -> (i32, i32, i32) {
    %c0_i32 = arith.constant 0 : i32
    %c0_i32_0 = arith.constant 0 : i32
    %c0_i32_1 = arith.constant 0 : i32
    %c0_i32_2 = arith.constant 0 : i32
    return %c0_i32, %c0_i32_0, %c0_i32_1 : i32, i32, i32
  }
  func.func @transform_3(%arg0: i32) -> (i32, i32) {
    %c0_i32 = arith.constant 0 : i32
    %c0_i32_0 = arith.constant 0 : i32
    %c0_i32_1 = arith.constant 0 : i32
    return %c0_i32, %c0_i32_0 : i32, i32
  }
  func.func @transform_4(%arg0: i32) -> (i32, i32) {
    %c0_i32 = arith.constant 0 : i32
    %c0_i32_0 = arith.constant 0 : i32
    %c0_i32_1 = arith.constant 0 : i32
    return %c0_i32, %c0_i32_0 : i32, i32
  }
  func.func @transform_5(%arg0: i32) -> (i32, i32) {
    %c0_i32 = arith.constant 0 : i32
    %c0_i32_0 = arith.constant 0 : i32
    %c0_i32_1 = arith.constant 0 : i32
    return %c0_i32, %c0_i32_0 : i32, i32
  }
  func.func @transform_6(%arg0: i32) -> (i32, i32) {
    %c0_i32 = arith.constant 0 : i32
    %c0_i32_0 = arith.constant 0 : i32
    %c0_i32_1 = arith.constant 0 : i32
    return %c0_i32, %c0_i32_0 : i32, i32
  }
  func.func @transform_7(%arg0: i32) -> (i32, i32) {
    %c0_i32 = arith.constant 0 : i32
    %c0_i32_0 = arith.constant 0 : i32
    %c0_i32_1 = arith.constant 0 : i32
    return %c0_i32, %c0_i32_0 : i32, i32
  }
  func.func @transform_10(%arg0: i32) -> (i32, i32, i32) {
    %c0_i32 = arith.constant 0 : i32
    %c0_i32_0 = arith.constant 0 : i32
    %c0_i32_1 = arith.constant 0 : i32
    return %arg0, %c0_i32, %c0_i32_0 : i32, i32, i32
  }
}

</mosaic_0001>

<llo_original>
// kernel: tpu_custom_call.1
$region0: #{tpu_custom_call.1}
  #allocation0 [shape = 'u32[]', space=smem, size = 0x4, offset = 0x4, fixed_abs, tag = 'smem constant byte address 0x4 - core index']
  #allocation1 [shape = 'u32[144,128]{1,0:T(1,128)}', space=vmem, size = 0x12000, scoped, tag = 'internal scratch']
  #allocation2 [shape = 'f32[2,66,4]{2,1,0:T(8,128)}', space=vmem, size = 0x12000, scoped, tag = 'scratch operand']
  #allocation3 [shape = 'f32[2,66,8]{2,1,0:T(8,128)}', space=vmem, size = 0x12000, scoped, tag = 'scratch operand']
  #allocation4 [shape = 'f32[2,34,8]{2,1,0:T(8,128)}', space=vmem, size = 0xa000, scoped, tag = 'scratch operand']
  #allocation5 [shape = 'f32[2,34,8]{2,1,0:T(8,128)}', space=vmem, size = 0xa000, scoped, tag = 'scratch operand']
  #allocation6 [shape = 'f32[2,18,16]{2,1,0:T(8,128)}', space=vmem, size = 0x6000, scoped, tag = 'scratch operand']
  #allocation7 [shape = 'f32[2,32,8]{2,1,0:T(8,128)}', space=vmem, size = 0x8000, scoped, tag = 'scratch operand']
  #allocation8 [shape = 'f32[2,18,16]{2,1,0:T(8,128)}', space=vmem, size = 0x6000, scoped, tag = 'scratch operand']
  #allocation9 [shape = 'f32[2,18,16]{2,1,0:T(8,128)}', space=vmem, size = 0x6000, scoped, tag = 'scratch operand']
  #allocation10 [shape = 'bf16[16,16,1024]{2,1,0:T(16,128)(2,1)}', space=vmem, size = 0x80000, scoped, tag = 'scratch operand']
  #allocation11 [shape = 'bf16[1024,256]{1,0:T(16,128)(2,1)}', space=vmem, size = 0x80000, scoped, tag = 'scratch operand']
  #allocation12 [shape = 's32[2]{0}', space=sflag, size = 0x8, scoped, tag = 'scratch operand']
  #allocation15 [shape = 's32[]', space=sflag, size = 0x4, offset = 0, fixed_abs, tag = 'sflag constant byte address 0x0 - dummy sync flag']
  #allocation17 [shape = 's32[]', space=sflag, size = 0x4, offset = 0, fixed_abs, tag = 'sflag constant byte address 0x0 - dummy sync flag']
  %s0 = inlined_call_operand.vmem [shape: f32[2,64,4], index: 0, kind: input, shape index: {}]
  %s1 = inlined_call_operand.vmem [shape: f32[20,16], index: 1, kind: input, shape index: {}]
  %s2 = inlined_call_operand.vmem [shape: f32[7,48,16], index: 2, kind: input, shape index: {}]
  %s3 = inlined_call_operand.vmem [shape: f32[8,16], index: 3, kind: input, shape index: {}]
  %s4 = inlined_call_operand.vmem [shape: f32[1,1024], index: 4, kind: input, shape index: {}]
  %s5 = inlined_call_operand.vmem [shape: f32[1,256], index: 5, kind: input, shape index: {}]
  %s6 = inlined_call_operand.vmem [shape: f32[1,5], index: 6, kind: input, shape index: {}]
  %s7 = inlined_call_operand.vmem [shape: f32[256,5], index: 7, kind: input, shape index: {}]
  %s8 = inlined_call_operand.hbm [shape: bf16[16,16,1024], index: 8, kind: input, shape index: {}]
  %s9 = inlined_call_operand.hbm [shape: bf16[1024,256], index: 9, kind: input, shape index: {}]
  %s10 = inlined_call_operand.hbm [shape: f32[1,2,5], index: 10, kind: output, shape index: {}]
  %s11 = sld [smem:[#allocation0]]
  $region42: #{tpu_custom_call.1} parent=0
    _
  %s13 = ssub.s32 1, %s11
  %s14 = scalar_select 0, %s13, %s11
  $region1: #{tpu_custom_call.1} parent=0
    #allocation13 [shape = 'u8[1024]{0}', space=vmem, size = 0x400, scoped, tag = 'output window, operand 0, single buffered']
    #allocation14 [shape = 's32[1]{0}', space=sflag, size = 0x4, scoped, tag = 'scoped memory for tpu_custom_call.1']
    #allocation16 [shape = 'u32[9]{0}', space=smem, size = 0x24, scoped, tag = 'DMA stride descriptor']
    #allocation18 [shape = 'u32[9]{0}', space=smem, size = 0x24, scoped, tag = 'DMA stride descriptor']
    %15 = vsyncpa [#allocation14], 0
    // Predicated region
    $region2: #{tpu_custom_call.1} parent=1 // pred_check
      _
    $region3: #{tpu_custom_call.1} parent=1 // pred_check_branch
      %17 = sbr.rel (0) target = $region5
    $region4: #{tpu_custom_call.1} parent=1 // pred_region
      _
    $region5: #{tpu_custom_call.1} parent=1 // pred_fallthru
      _
    // Predicated region
    $region6: #{tpu_custom_call.1} parent=1 // pred_check
      _
    $region7: #{tpu_custom_call.1} parent=1 // pred_check_branch
      %19 = sbr.rel (0) target = $region9
    $region8: #{tpu_custom_call.1} parent=1 // pred_region
      _
    $region9: #{tpu_custom_call.1} parent=1 // pred_fallthru
      _
    // Predicated region
    $region10: #{tpu_custom_call.1} parent=1 // pred_check
      _
    $region11: #{tpu_custom_call.1} parent=1 // pred_check_branch
      %21 = sbr.rel (0) target = $region13
    $region12: #{tpu_custom_call.1} parent=1 // pred_region
      _
    $region13: #{tpu_custom_call.1} parent=1 // pred_fallthru
      _
    // Predicated region
    $region14: #{tpu_custom_call.1} parent=1 // pred_check
      _
    $region15: #{tpu_custom_call.1} parent=1 // pred_check_branch
      %23 = sbr.rel (0) target = $region17
    $region16: #{tpu_custom_call.1} parent=1 // pred_region
      _
    $region17: #{tpu_custom_call.1} parent=1 // pred_fallthru
      _
    // Predicated region
    $region18: #{tpu_custom_call.1} parent=1 // pred_check
      _
    $region19: #{tpu_custom_call.1} parent=1 // pred_check_branch
      %25 = sbr.rel (0) target = $region21
    $region20: #{tpu_custom_call.1} parent=1 // pred_region
      _
    $region21: #{tpu_custom_call.1} parent=1 // pred_fallthru
      _
    // Predicated region
    $region22: #{tpu_custom_call.1} parent=1 // pred_check
      _
    $region23: #{tpu_custom_call.1} parent=1 // pred_check_branch
      %27 = sbr.rel (0) target = $region25
    $region24: #{tpu_custom_call.1} parent=1 // pred_region
      _
    $region25: #{tpu_custom_call.1} parent=1 // pred_fallthru
      _
    // Predicated region
    $region26: #{tpu_custom_call.1} parent=1 // pred_check
      _
    $region27: #{tpu_custom_call.1} parent=1 // pred_check_branch
      %29 = sbr.rel (0) target = $region29
    $region28: #{tpu_custom_call.1} parent=1 // pred_region
      _
    $region29: #{tpu_custom_call.1} parent=1 // pred_fallthru
      _
    // Predicated region
    $region30: #{tpu_custom_call.1} parent=1 // pred_check
      _
    $region31: #{tpu_custom_call.1} parent=1 // pred_check_branch
      %31 = sbr.rel (0) target = $region33
    $region32: #{tpu_custom_call.1} parent=1 // pred_region
      _
    $region33: #{tpu_custom_call.1} parent=1 // pred_fallthru
      _
    %s34 = sshll.u32 1, 14
    %s35 = sxor.u32 4294967295, %s34
    %s37 = sld [smem:[#allocation0]]
    %s38 = sadd.s32 2, %s37
    %s40 = sshll.u32 7, 26
    %s41 = sxor.u32 4294967295, %s40
    %s42 = sand.u32 0, %s41
    %s43 = sshll.u32 %s38, 26
    %s44 = sor.u32 %s42, %s43
    %s45 = sshll.u32 [#allocation10], 4
    %s46 = int_to_ptr.vmem [resolvable:$true] %s45
    %49 = sst [smem:[#allocation16]] 1024
    %s50 = scalar_lea.smem [#allocation16], 1
    %51 = sst [smem:[%s50]] 1024
    %s52 = scalar_lea.smem [#allocation16], 2
    %53 = sst [smem:[%s52]] 8
    %s54 = scalar_lea.smem [#allocation16], 3
    %55 = sst [smem:[%s54]] 64
    %s56 = scalar_lea.smem [#allocation16], 4
    %57 = sst [smem:[%s56]] 128
    %s58 = scalar_lea.smem [#allocation16], 5
    %59 = sst [smem:[%s58]] 2
    %s60 = scalar_lea.smem [#allocation16], 6
    %61 = sst [smem:[%s60]] 512
    %s62 = scalar_lea.smem [#allocation16], 7
    %63 = sst [smem:[%s62]] 64
    %s64 = scalar_lea.smem [#allocation16], 8
    %65 = sst [smem:[%s64]] 4
    %67 = dma.general %s8, 16384, %s46, [#allocation12], [#allocation15], [#allocation16], %s44, 0
    %s68 = scalar_lea.sflag [#allocation12], 1
    %s70 = sshll.u32 1, 14
    %s71 = sxor.u32 4294967295, %s70
    %s73 = sadd.s32 2, %s37
    %s75 = sshll.u32 7, 26
    %s76 = sxor.u32 4294967295, %s75
    %s77 = sand.u32 0, %s76
    %s78 = sshll.u32 %s73, 26
    %s79 = sor.u32 %s77, %s78
    %s80 = sshll.u32 [#allocation11], 4
    %s81 = int_to_ptr.vmem [resolvable:$true] %s80
    %84 = sst [smem:[#allocation18]] 256
    %s85 = scalar_lea.smem [#allocation18], 1
    %86 = sst [smem:[%s85]] 256
    %s87 = scalar_lea.smem [#allocation18], 2
    %88 = sst [smem:[%s87]] 2
    %s89 = scalar_lea.smem [#allocation18], 3
    %90 = sst [smem:[%s89]] 64
    %s91 = scalar_lea.smem [#allocation18], 4
    %92 = sst [smem:[%s91]] 128
    %s93 = scalar_lea.smem [#allocation18], 5
    %94 = sst [smem:[%s93]] 2
    %s95 = scalar_lea.smem [#allocation18], 6
    %96 = sst [smem:[%s95]] 128
    %s97 = scalar_lea.smem [#allocation18], 7
    %98 = sst [smem:[%s97]] 64
    %s99 = scalar_lea.smem [#allocation18], 8
    %100 = sst [smem:[%s99]] 4
    %102 = dma.general %s9, 16384, %s81, %s68, [#allocation17], [#allocation18], %s79, 0
    %vm103 = vcmask 24576
    %104 = vst.msk [vmem:[#allocation2] sm:$0x1] %vm103, 0.0
    %105 = vst.msk [vmem:[#allocation2 + $0x48] sm:$0x1] %vm103, 0.0
    %106 = vst.msk [vmem:[#allocation2 + $0x41] sm:$0x1] %vm103, 0.0
    %107 = vst.msk [vmem:[#allocation2 + $0x89] sm:$0x1] %vm103, 0.0
    %v108 = vld [vmem:[%s0] sm:$0xff]
    %v109 = vld [vmem:[%s0 + $0x8] sm:$0xff]
    %v110 = vld [vmem:[%s0 + $0x10] sm:$0xff]
    %v111 = vld [vmem:[%s0 + $0x18] sm:$0xff]
    %v112 = vld [vmem:[%s0 + $0x20] sm:$0xff]
    %v113 = vld [vmem:[%s0 + $0x28] sm:$0xff]
    %v114 = vld [vmem:[%s0 + $0x30] sm:$0xff]
    %v115 = vld [vmem:[%s0 + $0x38] sm:$0xff]
    %v116 = vld [vmem:[%s0 + $0x40] sm:$0xff]
    %v117 = vld [vmem:[%s0 + $0x48] sm:$0xff]
    %v118 = vld [vmem:[%s0 + $0x50] sm:$0xff]
    %v119 = vld [vmem:[%s0 + $0x58] sm:$0xff]
    %v120 = vld [vmem:[%s0 + $0x60] sm:$0xff]
    %v121 = vld [vmem:[%s0 + $0x68] sm:$0xff]
    %v122 = vld [vmem:[%s0 + $0x70] sm:$0xff]
    %v123 = vld [vmem:[%s0 + $0x78] sm:$0xff]
    %vm124 = vcmask 31744
    %125 = vst.msk [vmem:[#allocation2 + $0x1] sm:$0xff] %vm124, %v108
    %126 = vst.msk [vmem:[#allocation2 + $0x9] sm:$0xff] %vm124, %v109
    %127 = vst.msk [vmem:[#allocation2 + $0x11] sm:$0xff] %vm124, %v110
    %128 = vst.msk [vmem:[#allocation2 + $0x19] sm:$0xff] %vm124, %v111
    %129 = vst.msk [vmem:[#allocation2 + $0x21] sm:$0xff] %vm124, %v112
    %130 = vst.msk [vmem:[#allocation2 + $0x29] sm:$0xff] %vm124, %v113
    %131 = vst.msk [vmem:[#allocation2 + $0x31] sm:$0xff] %vm124, %v114
    %132 = vst.msk [vmem:[#allocation2 + $0x39] sm:$0xff] %vm124, %v115
    %133 = vst.msk [vmem:[#allocation2 + $0x49] sm:$0xff] %vm124, %v116
    %134 = vst.msk [vmem:[#allocation2 + $0x51] sm:$0xff] %vm124, %v117
    %135 = vst.msk [vmem:[#allocation2 + $0x59] sm:$0xff] %vm124, %v118
    %136 = vst.msk [vmem:[#allocation2 + $0x61] sm:$0xff] %vm124, %v119
    %137 = vst.msk [vmem:[#allocation2 + $0x69] sm:$0xff] %vm124, %v120
    %138 = vst.msk [vmem:[#allocation2 + $0x71] sm:$0xff] %vm124, %v121
    %139 = vst.msk [vmem:[#allocation2 + $0x79] sm:$0xff] %vm124, %v122
    %140 = vst.msk [vmem:[#allocation2 + $0x81] sm:$0xff] %vm124, %v123
    %v141 = vld [vmem:[#allocation2] sm:$0xff]
    %v142 = vld [vmem:[#allocation2 + $0x8] sm:$0xff]
    %v143 = vld [vmem:[#allocation2 + $0x10] sm:$0xff]
    %v144 = vld [vmem:[#allocation2 + $0x18] sm:$0xff]
    %v145 = vld [vmem:[#allocation2 + $0x20] sm:$0xff]
    %v146 = vld [vmem:[#allocation2 + $0x28] sm:$0xff]
    %v147 = vld [vmem:[#allocation2 + $0x30] sm:$0xff]
    %v148 = vld [vmem:[#allocation2 + $0x38] sm:$0xff]
    %v149 = vld [vmem:[#allocation2 + $0x48] sm:$0xff]
    %v150 = vld [vmem:[#allocation2 + $0x50] sm:$0xff]
    %v151 = vld [vmem:[#allocation2 + $0x58] sm:$0xff]
    %v152 = vld [vmem:[#allocation2 + $0x60] sm:$0xff]
    %v153 = vld [vmem:[#allocation2 + $0x68] sm:$0xff]
    %v154 = vld [vmem:[#allocation2 + $0x70] sm:$0xff]
    %v155 = vld [vmem:[#allocation2 + $0x78] sm:$0xff]
    %v156 = vld [vmem:[#allocation2 + $0x80] sm:$0xff]
    %v157 = vld [vmem:[%s2] sm:$0xf]
    %v158 = vld [vmem:[#allocation2 + $0x1] sm:$0xff]
    %v159 = vld [vmem:[#allocation2 + $0x9] sm:$0xff]
    %v160 = vld [vmem:[#allocation2 + $0x11] sm:$0xff]
    %v161 = vld [vmem:[#allocation2 + $0x19] sm:$0xff]
    %v162 = vld [vmem:[#allocation2 + $0x21] sm:$0xff]
    %v163 = vld [vmem:[#allocation2 + $0x29] sm:$0xff]
    %v164 = vld [vmem:[#allocation2 + $0x31] sm:$0xff]
    %v165 = vld [vmem:[#allocation2 + $0x39] sm:$0xff]
    %v166 = vld [vmem:[#allocation2 + $0x49] sm:$0xff]
    %v167 = vld [vmem:[#allocation2 + $0x51] sm:$0xff]
    %v168 = vld [vmem:[#allocation2 + $0x59] sm:$0xff]
    %v169 = vld [vmem:[#allocation2 + $0x61] sm:$0xff]
    %v170 = vld [vmem:[#allocation2 + $0x69] sm:$0xff]
    %v171 = vld [vmem:[#allocation2 + $0x71] sm:$0xff]
    %v172 = vld [vmem:[#allocation2 + $0x79] sm:$0xff]
    %v173 = vld [vmem:[#allocation2 + $0x81] sm:$0xff]
    %v174 = vld [vmem:[%s2 + $0x4] sm:$0xf]
    %v176 = vsel %vm124, %v158, 0
    %v179 = vsel %vm124, %v159, 0
    %v182 = vsel %vm124, %v160, 0
    %v185 = vsel %vm124, %v161, 0
    %v188 = vsel %vm124, %v162, 0
    %v191 = vsel %vm124, %v163, 0
    %v194 = vsel %vm124, %v164, 0
    %v197 = vsel %vm124, %v165, 0
    %v200 = vsel %vm124, %v166, 0
    %v203 = vsel %vm124, %v167, 0
    %v206 = vsel %vm124, %v168, 0
    %v209 = vsel %vm124, %v169, 0
    %v212 = vsel %vm124, %v170, 0
    %v215 = vsel %vm124, %v171, 0
    %v218 = vsel %vm124, %v172, 0
    %v221 = vsel %vm124, %v173, 0
    %vm223 = vcmask 1043456
    %v225 = vsel %vm223, %v174, 0
    %227 = vmatprep.subr.mxu0 0.0
    %228 = vmatpush1.msra.mxu0 %v225
    %229 = vmatprep.subr.mxu0 0.0
    %230 = vmatpush1.msra.mxu0 0.0
    %231 = vmatprep.subr.mxu0 0.0
    %232 = vmatpush1.msra.mxu0 0.0
    %233 = vmatprep.subr.mxu0 0.0
    %234 = vmatpush1.msra.mxu0 0.0
    %235 = vmatprep.subr.mxu0 0.0
    %236 = vmatpush1.msra.mxu0 0.0
    %237 = vmatprep.subr.mxu0 0.0
    %238 = vmatpush1.msra.mxu0 0.0
    %239 = vmatprep.subr.mxu0 0.0
    %240 = vmatpush1.msra.mxu0 0.0
    %241 = vmatprep.subr.mxu0 0.0
    %242 = vmatpush1.msra.mxu0 0.0
    %243 = vmatprep.subr.mxu0 0.0
    %244 = vmatpush1.msra.mxu0 0.0
    %245 = vmatprep.subr.mxu0 0.0
    %246 = vmatpush1.msra.mxu0 0.0
    %247 = vmatprep.subr.mxu0 0.0
    %248 = vmatpush1.msra.mxu0 0.0
    %249 = vmatprep.subr.mxu0 0.0
    %250 = vmatpush1.msra.mxu0 0.0
    %251 = vmatprep.subr.mxu0 0.0
    %252 = vmatpush1.msra.mxu0 0.0
    %253 = vmatprep.subr.mxu0 0.0
    %254 = vmatpush1.msra.mxu0 0.0
    %255 = vmatprep.subr.mxu0 0.0
    %256 = vmatpush1.msra.mxu0 0.0
    %257 = vmatprep.subr.mxu0 0.0
    %258 = vmatpush1.msra.mxu0 0.0
    %259 = vmatprep.subr.mxu0 0.0
    %260 = vmatpush1.msra.mxu0 0.0
    %261 = vmatprep.subr.mxu0 0.0
    %262 = vmatpush1.msra.mxu0 0.0
    %263 = vmatprep.subr.mxu0 0.0
    %264 = vmatpush1.msra.mxu0 0.0
    %265 = vmatprep.subr.mxu0 0.0
    %266 = vmatpush1.msra.mxu0 0.0
    %267 = vmatprep.subr.mxu0 0.0
    %268 = vmatpush1.msra.mxu0 0.0
    %269 = vmatprep.subr.mxu0 0.0
    %270 = vmatpush1.msra.mxu0 0.0
    %271 = vmatprep.subr.mxu0 0.0
    %272 = vmatpush1.msra.mxu0 0.0
    %273 = vmatprep.subr.mxu0 0.0
    %274 = vmatpush1.msra.mxu0 0.0
    %275 = vmatprep.subr.mxu0 0.0
    %276 = vmatpush1.msra.mxu0 0.0
    %277 = vmatprep.subr.mxu0 0.0
    %278 = vmatpush1.msra.mxu0 0.0
    %279 = vmatprep.subr.mxu0 0.0
    %280 = vmatpush1.msra.mxu0 0.0
    %281 = vmatprep.subr.mxu0 0.0
    %282 = vmatpush1.msra.mxu0 0.0
    %283 = vmatprep.subr.mxu0 0.0
    %284 = vmatpush1.msra.mxu0 0.0
    %285 = vmatprep.subr.mxu0 0.0
    %286 = vmatpush1.msra.mxu0 0.0
    %287 = vmatprep.subr.mxu0 0.0
    %288 = vmatpush1.msra.mxu0 0.0
    %289 = vmatprep.subr.mxu0 0.0
    %290 = vmatpush1.msra.mxu0 0.0
    %291 = vmatprep.mubr.f32.mxu0 0.0
    %292 = vmatmul.mubr.f32.gmra.mrb[0].mxu0 %v176
    %v293 = vpop.f32.mrb[0].mxu0
    %v294 = vadd.f32 0.0, %v293
    %v295 = vpop.f32.mrb[0].mxu0
    %296 = vmatprep.mubr.f32.mxu0 0.0
    %297 = vmatmul.mubr.f32.gmra.mrb[0].mxu0 %v179
    %v298 = vpop.f32.mrb[0].mxu0
    %v299 = vadd.f32 0.0, %v298
    %v300 = vpop.f32.mrb[0].mxu0
    %301 = vmatprep.mubr.f32.mxu0 0.0
    %302 = vmatmul.mubr.f32.gmra.mrb[0].mxu0 %v182
    %v303 = vpop.f32.mrb[0].mxu0
    %v304 = vadd.f32 0.0, %v303
    %v305 = vpop.f32.mrb[0].mxu0
    %306 = vmatprep.mubr.f32.mxu0 0.0
    %307 = vmatmul.mubr.f32.gmra.mrb[0].mxu0 %v185
    %v308 = vpop.f32.mrb[0].mxu0
    %v309 = vadd.f32 0.0, %v308
    %v310 = vpop.f32.mrb[0].mxu0
    %311 = vmatprep.mubr.f32.mxu0 0.0
    %312 = vmatmul.mubr.f32.gmra.mrb[0].mxu0 %v188
    %v313 = vpop.f32.mrb[0].mxu0
    %v314 = vadd.f32 0.0, %v313
    %v315 = vpop.f32.mrb[0].mxu0
    %316 = vmatprep.mubr.f32.mxu0 0.0
    %317 = vmatmul.mubr.f32.gmra.mrb[0].mxu0 %v191
    %v318 = vpop.f32.mrb[0].mxu0
    %v319 = vadd.f32 0.0, %v318
    %v320 = vpop.f32.mrb[0].mxu0
    %321 = vmatprep.mubr.f32.mxu0 0.0
    %322 = vmatmul.mubr.f32.gmra.mrb[0].mxu0 %v194
    %v323 = vpop.f32.mrb[0].mxu0
    %v324 = vadd.f32 0.0, %v323
    %v325 = vpop.f32.mrb[0].mxu0
    %326 = vmatprep.mubr.f32.mxu0 0.0
    %327 = vmatmul.mubr.f32.gmra.mrb[0].mxu0 %v197
    %v328 = vpop.f32.mrb[0].mxu0
    %v329 = vadd.f32 0.0, %v328
    %v330 = vpop.f32.mrb[0].mxu0
    %331 = vmatprep.mubr.f32.mxu0 0.0
    %332 = vmatmul.mubr.f32.gmra.mrb[0].mxu0 %v200
    %v333 = vpop.f32.mrb[0].mxu0
    %v334 = vadd.f32 0.0, %v333
    %v335 = vpop.f32.mrb[0].mxu0
    %336 = vmatprep.mubr.f32.mxu0 0.0
    %337 = vmatmul.mubr.f32.gmra.mrb[0].mxu0 %v203
    %v338 = vpop.f32.mrb[0].mxu0
    %v339 = vadd.f32 0.0, %v338
    %v340 = vpop.f32.mrb[0].mxu0
    %341 = vmatprep.mubr.f32.mxu0 0.0
    %342 = vmatmul.mubr.f32.gmra.mrb[0].mxu0 %v206
    %v343 = vpop.f32.mrb[0].mxu0
    %v344 = vadd.f32 0.0, %v343
    %v345 = vpop.f32.mrb[0].mxu0
    %346 = vmatprep.mubr.f32.mxu0 0.0
    %347 = vmatmul.mubr.f32.gmra.mrb[0].mxu0 %v209
    %v348 = vpop.f32.mrb[0].mxu0
    %v349 = vadd.f32 0.0, %v348
    %v350 = vpop.f32.mrb[0].mxu0
    %351 = vmatprep.mubr.f32.mxu0 0.0
    %352 = vmatmul.mubr.f32.gmra.mrb[0].mxu0 %v212
    %v353 = vpop.f32.mrb[0].mxu0
    %v354 = vadd.f32 0.0, %v353
    %v355 = vpop.f32.mrb[0].mxu0
    %356 = vmatprep.mubr.f32.mxu0 0.0
    %357 = vmatmul.mubr.f32.gmra.mrb[0].mxu0 %v215
    %v358 = vpop.f32.mrb[0].mxu0
    %v359 = vadd.f32 0.0, %v358
    %v360 = vpop.f32.mrb[0].mxu0
    %361 = vmatprep.mubr.f32.mxu0 0.0
    %362 = vmatmul.mubr.f32.gmra.mrb[0].mxu0 %v218
    %v363 = vpop.f32.mrb[0].mxu0
    %v364 = vadd.f32 0.0, %v363
    %v365 = vpop.f32.mrb[0].mxu0
    %366 = vmatprep.mubr.f32.mxu0 0.0
    %367 = vmatmul.mubr.f32.gmra.mrb[0].mxu0 %v221
    %v368 = vpop.f32.mrb[0].mxu0
    %v369 = vadd.f32 0.0, %v368
    %v370 = vpop.f32.mrb[0].mxu0
    %371 = vdwg.mxu0
    %v373 = vsel %vm124, %v141, 0
    %v376 = vsel %vm124, %v142, 0
    %v379 = vsel %vm124, %v143, 0
    %v382 = vsel %vm124, %v144, 0
    %v385 = vsel %vm124, %v145, 0
    %v388 = vsel %vm124, %v146, 0
    %v391 = vsel %vm124, %v147, 0
    %v394 = vsel %vm124, %v148, 0
    %v397 = vsel %vm124, %v149, 0
    %v400 = vsel %vm124, %v150, 0
    %v403 = vsel %vm124, %v151, 0
    %v406 = vsel %vm124, %v152, 0
    %v409 = vsel %vm124, %v153, 0
    %v412 = vsel %vm124, %v154, 0
    %v415 = vsel %vm124, %v155, 0
    %v418 = vsel %vm124, %v156, 0
    %v421 = vsel %vm223, %v157, 0
    %423 = vmatprep.subr.mxu0 0.0
    %424 = vmatpush1.msra.mxu0 %v421
    %425 = vmatprep.subr.mxu0 0.0
    %426 = vmatpush1.msra.mxu0 0.0
    %427 = vmatprep.subr.mxu0 0.0
    %428 = vmatpush1.msra.mxu0 0.0
    %429 = vmatprep.subr.mxu0 0.0
    %430 = vmatpush1.msra.mxu0 0.0
    %431 = vmatprep.subr.mxu0 0.0
    %432 = vmatpush1.msra.mxu0 0.0
    %433 = vmatprep.subr.mxu0 0.0
    %434 = vmatpush1.msra.mxu0 0.0
    %435 = vmatprep.subr.mxu0 0.0
    %436 = vmatpush1.msra.mxu0 0.0
    %437 = vmatprep.subr.mxu0 0.0
    %438 = vmatpush1.msra.mxu0 0.0
    %439 = vmatprep.subr.mxu0 0.0
    %440 = vmatpush1.msra.mxu0 0.0
    %441 = vmatprep.subr.mxu0 0.0
    %442 = vmatpush1.msra.mxu0 0.0
    %443 = vmatprep.subr.mxu0 0.0
    %444 = vmatpush1.msra.mxu0 0.0
    %445 = vmatprep.subr.mxu0 0.0
    %446 = vmatpush1.msra.mxu0 0.0
    %447 = vmatprep.subr.mxu0 0.0
    %448 = vmatpush1.msra.mxu0 0.0
    %449 = vmatprep.subr.mxu0 0.0
    %450 = vmatpush1.msra.mxu0 0.0
    %451 = vmatprep.subr.mxu0 0.0
    %452 = vmatpush1.msra.mxu0 0.0
    %453 = vmatprep.subr.mxu0 0.0
    %454 = vmatpush1.msra.mxu0 0.0
    %455 = vmatprep.subr.mxu0 0.0
    %456 = vmatpush1.msra.mxu0 0.0
    %457 = vmatprep.subr.mxu0 0.0
    %458 = vmatpush1.msra.mxu0 0.0
    %459 = vmatprep.subr.mxu0 0.0
    %460 = vmatpush1.msra.mxu0 0.0
    %461 = vmatprep.subr.mxu0 0.0
    %462 = vmatpush1.msra.mxu0 0.0
    %463 = vmatprep.subr.mxu0 0.0
    %464 = vmatpush1.msra.mxu0 0.0
    %465 = vmatprep.subr.mxu0 0.0
    %466 = vmatpush1.msra.mxu0 0.0
    %467 = vmatprep.subr.mxu0 0.0
    %468 = vmatpush1.msra.mxu0 0.0
    %469 = vmatprep.subr.mxu0 0.0
    %470 = vmatpush1.msra.mxu0 0.0
    %471 = vmatprep.subr.mxu0 0.0
    %472 = vmatpush1.msra.mxu0 0.0
    %473 = vmatprep.subr.mxu0 0.0
    %474 = vmatpush1.msra.mxu0 0.0
    %475 = vmatprep.subr.mxu0 0.0
    %476 = vmatpush1.msra.mxu0 0.0
    %477 = vmatprep.subr.mxu0 0.0
    %478 = vmatpush1.msra.mxu0 0.0
    %479 = vmatprep.subr.mxu0 0.0
    %480 = vmatpush1.msra.mxu0 0.0
    %481 = vmatprep.subr.mxu0 0.0
    %482 = vmatpush1.msra.mxu0 0.0
    %483 = vmatprep.subr.mxu0 0.0
    %484 = vmatpush1.msra.mxu0 0.0
    %485 = vmatprep.subr.mxu0 0.0
    %486 = vmatpush1.msra.mxu0 0.0
    %487 = vmatprep.mubr.f32.mxu0 0.0
    %488 = vmatmul.mubr.f32.gmra.mrb[0].mxu0 %v373
    %v489 = vpop.f32.mrb[0].mxu0
    %v490 = vadd.f32 %v294, %v489
    %v491 = vpop.f32.mrb[0].mxu0
    %492 = vmatprep.mubr.f32.mxu0 0.0
    %493 = vmatmul.mubr.f32.gmra.mrb[0].mxu0 %v376
    %v494 = vpop.f32.mrb[0].mxu0
    %v495 = vadd.f32 %v299, %v494
    %v496 = vpop.f32.mrb[0].mxu0
    %497 = vmatprep.mubr.f32.mxu0 0.0
    %498 = vmatmul.mubr.f32.gmra.mrb[0].mxu0 %v379
    %v499 = vpop.f32.mrb[0].mxu0
    %v500 = vadd.f32 %v304, %v499
    %v501 = vpop.f32.mrb[0].mxu0
    %502 = vmatprep.mubr.f32.mxu0 0.0
    %503 = vmatmul.mubr.f32.gmra.mrb[0].mxu0 %v382
    %v504 = vpop.f32.mrb[0].mxu0
    %v505 = vadd.f32 %v309, %v504
    %v506 = vpop.f32.mrb[0].mxu0
    %507 = vmatprep.mubr.f32.mxu0 0.0
    %508 = vmatmul.mubr.f32.gmra.mrb[0].mxu0 %v385
    %v509 = vpop.f32.mrb[0].mxu0
    %v510 = vadd.f32 %v314, %v509
    %v511 = vpop.f32.mrb[0].mxu0
    %512 = vmatprep.mubr.f32.mxu0 0.0
    %513 = vmatmul.mubr.f32.gmra.mrb[0].mxu0 %v388
    %v514 = vpop.f32.mrb[0].mxu0
    %v515 = vadd.f32 %v319, %v514
    %v516 = vpop.f32.mrb[0].mxu0
    %517 = vmatprep.mubr.f32.mxu0 0.0
    %518 = vmatmul.mubr.f32.gmra.mrb[0].mxu0 %v391
    %v519 = vpop.f32.mrb[0].mxu0
    %v520 = vadd.f32 %v324, %v519
    %v521 = vpop.f32.mrb[0].mxu0
    %522 = vmatprep.mubr.f32.mxu0 0.0
    %523 = vmatmul.mubr.f32.gmra.mrb[0].mxu0 %v394
    %v524 = vpop.f32.mrb[0].mxu0
    %v525 = vadd.f32 %v329, %v524
    %v526 = vpop.f32.mrb[0].mxu0
    %527 = vmatprep.mubr.f32.mxu0 0.0
    %528 = vmatmul.mubr.f32.gmra.mrb[0].mxu0 %v397
    %v529 = vpop.f32.mrb[0].mxu0
    %v530 = vadd.f32 %v334, %v529
    %v531 = vpop.f32.mrb[0].mxu0
    %532 = vmatprep.mubr.f32.mxu0 0.0
    %533 = vmatmul.mubr.f32.gmra.mrb[0].mxu0 %v400
    %v534 = vpop.f32.mrb[0].mxu0
    %v535 = vadd.f32 %v339, %v534
    %v536 = vpop.f32.mrb[0].mxu0
    %537 = vmatprep.mubr.f32.mxu0 0.0
    %538 = vmatmul.mubr.f32.gmra.mrb[0].mxu0 %v403
    %v539 = vpop.f32.mrb[0].mxu0
    %v540 = vadd.f32 %v344, %v539
    %v541 = vpop.f32.mrb[0].mxu0
    %542 = vmatprep.mubr.f32.mxu0 0.0
    %543 = vmatmul.mubr.f32.gmra.mrb[0].mxu0 %v406
    %v544 = vpop.f32.mrb[0].mxu0
    %v545 = vadd.f32 %v349, %v544
    %v546 = vpop.f32.mrb[0].mxu0
    %547 = vmatprep.mubr.f32.mxu0 0.0
    %548 = vmatmul.mubr.f32.gmra.mrb[0].mxu0 %v409
    %v549 = vpop.f32.mrb[0].mxu0
    %v550 = vadd.f32 %v354, %v549
    %v551 = vpop.f32.mrb[0].mxu0
    %552 = vmatprep.mubr.f32.mxu0 0.0
    %553 = vmatmul.mubr.f32.gmra.mrb[0].mxu0 %v412
    %v554 = vpop.f32.mrb[0].mxu0
    %v555 = vadd.f32 %v359, %v554
    %v556 = vpop.f32.mrb[0].mxu0
    %557 = vmatprep.mubr.f32.mxu0 0.0
    %558 = vmatmul.mubr.f32.gmra.mrb[0].mxu0 %v415
    %v559 = vpop.f32.mrb[0].mxu0
    %v560 = vadd.f32 %v364, %v559
    %v561 = vpop.f32.mrb[0].mxu0
    %562 = vmatprep.mubr.f32.mxu0 0.0
    %563 = vmatmul.mubr.f32.gmra.mrb[0].mxu0 %v418
    %v564 = vpop.f32.mrb[0].mxu0
    %v565 = vadd.f32 %v369, %v564
    %v566 = vpop.f32.mrb[0].mxu0
    %567 = vdwg.mxu0
    %v568 = vld [vmem:[#allocation2 + $0x2] sm:$0xff]
    %v569 = vld [vmem:[#allocation2 + $0xa] sm:$0xff]
    %v570 = vld [vmem:[#allocation2 + $0x12] sm:$0xff]
    %v571 = vld [vmem:[#allocation2 + $0x1a] sm:$0xff]
    %v572 = vld [vmem:[#allocation2 + $0x22] sm:$0xff]
    %v573 = vld [vmem:[#allocation2 + $0x2a] sm:$0xff]
    %v574 = vld [vmem:[#allocation2 + $0x32] sm:$0xff]
    %v575 = vld [vmem:[#allocation2 + $0x3a] sm:$0xff]
    %v576 = vld [vmem:[#allocation2 + $0x4a] sm:$0xff]
    %v577 = vld [vmem:[#allocation2 + $0x52] sm:$0xff]
    %v578 = vld [vmem:[#allocation2 + $0x5a] sm:$0xff]
    %v579 = vld [vmem:[#allocation2 + $0x62] sm:$0xff]
    %v580 = vld [vmem:[#allocation2 + $0x6a] sm:$0xff]
    %v581 = vld [vmem:[#allocation2 + $0x72] sm:$0xff]
    %v582 = vld [vmem:[#allocation2 + $0x7a] sm:$0xff]
    %v583 = vld [vmem:[#allocation2 + $0x82] sm:$0xff]
    %v584 = vld [vmem:[%s2 + $0x8] sm:$0xf]
    %v586 = vsel %vm124, %v568, 0
    %v589 = vsel %vm124, %v569, 0
    %v592 = vsel %vm124, %v570, 0
    %v595 = vsel %vm124, %v571, 0
    %v598 = vsel %vm124, %v572, 0
    %v601 = vsel %vm124, %v573, 0
    %v604 = vsel %vm124, %v574, 0
    %v607 = vsel %vm124, %v575, 0
    %v610 = vsel %vm124, %v576, 0
    %v613 = vsel %vm124, %v577, 0
    %v616 = vsel %vm124, %v578, 0
    %v619 = vsel %vm124, %v579, 0
    %v622 = vsel %vm124, %v580, 0
    %v625 = vsel %vm124, %v581, 0
    %v628 = vsel %vm124, %v582, 0
    %v631 = vsel %vm124, %v583, 0
    %v634 = vsel %vm223, %v584, 0
    %636 = vmatprep.subr.mxu0 0.0
    %637 = vmatpush1.msra.mxu0 %v634
    %638 = vmatprep.subr.mxu0 0.0
    %639 = vmatpush1.msra.mxu0 0.0
    %640 = vmatprep.subr.mxu0 0.0
    %641 = vmatpush1.msra.mxu0 0.0
    %642 = vmatprep.subr.mxu0 0.0
    %643 = vmatpush1.msra.mxu0 0.0
    %644 = vmatprep.subr.mxu0 0.0
    %645 = vmatpush1.msra.mxu0 0.0
    %646 = vmatprep.subr.mxu0 0.0
    %647 = vmatpush1.msra.mxu0 0.0
    %648 = vmatprep.subr.mxu0 0.0
    %649 = vmatpush1.msra.mxu0 0.0
    %650 = vmatprep.subr.mxu0 0.0
    %651 = vmatpush1.msra.mxu0 0.0
    %652 = vmatprep.subr.mxu0 0.0
    %653 = vmatpush1.msra.mxu0 0.0
    %654 = vmatprep.subr.mxu0 0.0
    %655 = vmatpush1.msra.mxu0 0.0
    %656 = vmatprep.subr.mxu0 0.0
    %657 = vmatpush1.msra.mxu0 0.0
    %658 = vmatprep.subr.mxu0 0.0
    %659 = vmatpush1.msra.mxu0 0.0
    %660 = vmatprep.subr.mxu0 0.0
    %661 = vmatpush1.msra.mxu0 0.0
    %662 = vmatprep.subr.mxu0 0.0
    %663 = vmatpush1.msra.mxu0 0.0
    %664 = vmatprep.subr.mxu0 0.0
    %665 = vmatpush1.msra.mxu0 0.0
    %666 = vmatprep.subr.mxu0 0.0
    %667 = vmatpush1.msra.mxu0 0.0
    %668 = vmatprep.subr.mxu0 0.0
    %669 = vmatpush1.msra.mxu0 0.0
    %670 = vmatprep.subr.mxu0 0.0
    %671 = vmatpush1.msra.mxu0 0.0
    %672 = vmatprep.subr.mxu0 0.0
    %673 = vmatpush1.msra.mxu0 0.0
    %674 = vmatprep.subr.mxu0 0.0
    %675 = vmatpush1.msra.mxu0 0.0
    %676 = vmatprep.subr.mxu0 0.0
    %677 = vmatpush1.msra.mxu0 0.0
    %678 = vmatprep.subr.mxu0 0.0
    %679 = vmatpush1.msra.mxu0 0.0
    %680 = vmatprep.subr.mxu0 0.0
    %681 = vmatpush1.msra.mxu0 0.0
    %682 = vmatprep.subr.mxu0 0.0
    %683 = vmatpush1.msra.mxu0 0.0
    %684 = vmatprep.subr.mxu0 0.0
    %685 = vmatpush1.msra.mxu0 0.0
    %686 = vmatprep.subr.mxu0 0.0
    %687 = vmatpush1.msra.mxu0 0.0
    %688 = vmatprep.subr.mxu0 0.0
    %689 = vmatpush1.msra.mxu0 0.0
    %690 = vmatprep.subr.mxu0 0.0
    %691 = vmatpush1.msra.mxu0 0.0
    %692 = vmatprep.subr.mxu0 0.0
    %693 = vmatpush1.msra.mxu0 0.0
    %694 = vmatprep.subr.mxu0 0.0
    %695 = vmatpush1.msra.mxu0 0.0
    %696 = vmatprep.subr.mxu0 0.0
    %697 = vmatpush1.msra.mxu0 0.0
    %698 = vmatprep.subr.mxu0 0.0
    %699 = vmatpush1.msra.mxu0 0.0
    %700 = vmatprep.mubr.f32.mxu0 0.0
    %701 = vmatmul.mubr.f32.gmra.mrb[0].mxu0 %v586
    %v702 = vpop.f32.mrb[0].mxu0
    %v703 = vadd.f32 0.0, %v702
    %v704 = vpop.f32.mrb[0].mxu0
    %705 = vmatprep.mubr.f32.mxu0 0.0
    %706 = vmatmul.mubr.f32.gmra.mrb[0].mxu0 %v589
    %v707 = vpop.f32.mrb[0].mxu0
    %v708 = vadd.f32 0.0, %v707
    %v709 = vpop.f32.mrb[0].mxu0
    %710 = vmatprep.mubr.f32.mxu0 0.0
    %711 = vmatmul.mubr.f32.gmra.mrb[0].mxu0 %v592
    %v712 = vpop.f32.mrb[0].mxu0
    %v713 = vadd.f32 0.0, %v712
    %v714 = vpop.f32.mrb[0].mxu0
    %715 = vmatprep.mubr.f32.mxu0 0.0
    %716 = vmatmul.mubr.f32.gmra.mrb[0].mxu0 %v595
    %v717 = vpop.f32.mrb[0].mxu0
    %v718 = vadd.f32 0.0, %v717
    %v719 = vpop.f32.mrb[0].mxu0
    %720 = vmatprep.mubr.f32.mxu0 0.0
    %721 = vmatmul.mubr.f32.gmra.mrb[0].mxu0 %v598
    %v722 = vpop.f32.mrb[0].mxu0
    %v723 = vadd.f32 0.0, %v722
    %v724 = vpop.f32.mrb[0].mxu0
    %725 = vmatprep.mubr.f32.mxu0 0.0
    %726 = vmatmul.mubr.f32.gmra.mrb[0].mxu0 %v601
    %v727 = vpop.f32.mrb[0].mxu0
    %v728 = vadd.f32 0.0, %v727
    %v729 = vpop.f32.mrb[0].mxu0
    %730 = vmatprep.mubr.f32.mxu0 0.0
    %731 = vmatmul.mubr.f32.gmra.mrb[0].mxu0 %v604
    %v732 = vpop.f32.mrb[0].mxu0
    %v733 = vadd.f32 0.0, %v732
    %v734 = vpop.f32.mrb[0].mxu0
    %735 = vmatprep.mubr.f32.mxu0 0.0
    %736 = vmatmul.mubr.f32.gmra.mrb[0].mxu0 %v607
    %v737 = vpop.f32.mrb[0].mxu0
    %v738 = vadd.f32 0.0, %v737
    %v739 = vpop.f32.mrb[0].mxu0
    %740 = vmatprep.mubr.f32.mxu0 0.0
    %741 = vmatmul.mubr.f32.gmra.mrb[0].mxu0 %v610
    %v742 = vpop.f32.mrb[0].mxu0
    %v743 = vadd.f32 0.0, %v742
    %v744 = vpop.f32.mrb[0].mxu0
    %745 = vmatprep.mubr.f32.mxu0 0.0
    %746 = vmatmul.mubr.f32.gmra.mrb[0].mxu0 %v613
    %v747 = vpop.f32.mrb[0].mxu0
    %v748 = vadd.f32 0.0, %v747
    %v749 = vpop.f32.mrb[0].mxu0
    %750 = vmatprep.mubr.f32.mxu0 0.0
    %751 = vmatmul.mubr.f32.gmra.mrb[0].mxu0 %v616
    %v752 = vpop.f32.mrb[0].mxu0
    %v753 = vadd.f32 0.0, %v752
    %v754 = vpop.f32.mrb[0].mxu0
    %755 = vmatprep.mubr.f32.mxu0 0.0
    %756 = vmatmul.mubr.f32.gmra.mrb[0].mxu0 %v619
    %v757 = vpop.f32.mrb[0].mxu0
    %v758 = vadd.f32 0.0, %v757
    %v759 = vpop.f32.mrb[0].mxu0
    %760 = vmatprep.mubr.f32.mxu0 0.0
    %761 = vmatmul.mubr.f32.gmra.mrb[0].mxu0 %v622
    %v762 = vpop.f32.mrb[0].mxu0
    %v763 = vadd.f32 0.0, %v762
    %v764 = vpop.f32.mrb[0].mxu0
    %765 = vmatprep.mubr.f32.mxu0 0.0
    %766 = vmatmul.mubr.f32.gmra.mrb[0].mxu0 %v625
    %v767 = vpop.f32.mrb[0].mxu0
    %v768 = vadd.f32 0.0, %v767
    %v769 = vpop.f32.mrb[0].mxu0
    %770 = vmatprep.mubr.f32.mxu0 0.0
    %771 = vmatmul.mubr.f32.gmra.mrb[0].mxu0 %v628
    %v772 = vpop.f32.mrb[0].mxu0
    %v773 = vadd.f32 0.0, %v772
    %v774 = vpop.f32.mrb[0].mxu0
    %775 = vmatprep.mubr.f32.mxu0 0.0
    %776 = vmatmul.mubr.f32.gmra.mrb[0].mxu0 %v631
    %v777 = vpop.f32.mrb[0].mxu0
    %v778 = vadd.f32 0.0, %v777
    %v779 = vpop.f32.mrb[0].mxu0
    %780 = vdwg.mxu0
    %v781 = vadd.f32 %v490, %v703
    %v782 = vadd.f32 %v495, %v708
    %v783 = vadd.f32 %v500, %v713
    %v784 = vadd.f32 %v505, %v718
    %v785 = vadd.f32 %v510, %v723
    %v786 = vadd.f32 %v515, %v728
    %v787 = vadd.f32 %v520, %v733
    %v788 = vadd.f32 %v525, %v738
    %v789 = vadd.f32 %v530, %v743
    %v790 = vadd.f32 %v535, %v748
    %v791 = vadd.f32 %v540, %v753
    %v792 = vadd.f32 %v545, %v758
    %v793 = vadd.f32 %v550, %v763
    %v794 = vadd.f32 %v555, %v768
    %v795 = vadd.f32 %v560, %v773
    %v796 = vadd.f32 %v565, %v778
    %v797 = vld [vmem:[%s1] sm:$0x1]
    %v798 = vld [vmem:[%s1 + $0x1] sm:$0x1]
    %v799 = vlaneseq
    %v800 = vshrl.u32 %v799, 7
    %v801 = vsub.s32 0, %v800
    %v802 = vrot.slane %v797, %v801
    %v803 = vmul.f32 %v781, %v802
    %v804 = vmul.f32 %v782, %v802
    %v805 = vmul.f32 %v783, %v802
    %v806 = vmul.f32 %v784, %v802
    %v807 = vmul.f32 %v785, %v802
    %v808 = vmul.f32 %v786, %v802
    %v809 = vmul.f32 %v787, %v802
    %v810 = vmul.f32 %v788, %v802
    %v811 = vmul.f32 %v789, %v802
    %v812 = vmul.f32 %v790, %v802
    %v813 = vmul.f32 %v791, %v802
    %v814 = vmul.f32 %v792, %v802
    %v815 = vmul.f32 %v793, %v802
    %v816 = vmul.f32 %v794, %v802
    %v817 = vmul.f32 %v795, %v802
    %v818 = vmul.f32 %v796, %v802
    %v819 = vlaneseq
    %v820 = vshrl.u32 %v819, 7
    %v821 = vsub.s32 0, %v820
    %v822 = vrot.slane %v798, %v821
    %v823 = vadd.f32 %v803, %v822
    %v824 = vadd.f32 %v804, %v822
    %v825 = vadd.f32 %v805, %v822
    %v826 = vadd.f32 %v806, %v822
    %v827 = vadd.f32 %v807, %v822
    %v828 = vadd.f32 %v808, %v822
    %v829 = vadd.f32 %v809, %v822
    %v830 = vadd.f32 %v810, %v822
    %v831 = vadd.f32 %v811, %v822
    %v832 = vadd.f32 %v812, %v822
    %v833 = vadd.f32 %v813, %v822
    %v834 = vadd.f32 %v814, %v822
    %v835 = vadd.f32 %v815, %v822
    %v836 = vadd.f32 %v816, %v822
    %v837 = vadd.f32 %v817, %v822
    %v838 = vadd.f32 %v818, %v822
    %v839 = vmax.f32 %v823, 0.0
    %v840 = vmax.f32 %v824, 0.0
    %v841 = vmax.f32 %v825, 0.0
    %v842 = vmax.f32 %v826, 0.0
    %v843 = vmax.f32 %v827, 0.0
    %v844 = vmax.f32 %v828, 0.0
    %v845 = vmax.f32 %v829, 0.0
    %v846 = vmax.f32 %v830, 0.0
    %v847 = vmax.f32 %v831, 0.0
    %v848 = vmax.f32 %v832, 0.0
    %v849 = vmax.f32 %v833, 0.0
    %v850 = vmax.f32 %v834, 0.0
    %v851 = vmax.f32 %v835, 0.0
    %v852 = vmax.f32 %v836, 0.0
    %v853 = vmax.f32 %v837, 0.0
    %v854 = vmax.f32 %v838, 0.0
    %vm855 = vcmask 57344
    %856 = vst.msk [vmem:[#allocation3] sm:$0x1] %vm855, 0.0
    %857 = vst.msk [vmem:[#allocation3 + $0x48] sm:$0x1] %vm855, 0.0
    %858 = vst.msk [vmem:[#allocation3 + $0x41] sm:$0x1] %vm855, 0.0
    %859 = vst.msk [vmem:[#allocation3 + $0x89] sm:$0x1] %vm855, 0.0
    %vm860 = vcmask 64512
    %861 = vst.msk [vmem:[#allocation3 + $0x1] sm:$0xff] %vm860, %v839
    %862 = vst.msk [vmem:[#allocation3 + $0x9] sm:$0xff] %vm860, %v840
    %863 = vst.msk [vmem:[#allocation3 + $0x11] sm:$0xff] %vm860, %v841
    %864 = vst.msk [vmem:[#allocation3 + $0x19] sm:$0xff] %vm860, %v842
    %865 = vst.msk [vmem:[#allocation3 + $0x21] sm:$0xff] %vm860, %v843
    %866 = vst.msk [vmem:[#allocation3 + $0x29] sm:$0xff] %vm860, %v844
    %867 = vst.msk [vmem:[#allocation3 + $0x31] sm:$0xff] %vm860, %v845
    %868 = vst.msk [vmem:[#allocation3 + $0x39] sm:$0xff] %vm860, %v846
    %869 = vst.msk [vmem:[#allocation3 + $0x49] sm:$0xff] %vm860, %v847
    %870 = vst.msk [vmem:[#allocation3 + $0x51] sm:$0xff] %vm860, %v848
    %871 = vst.msk [vmem:[#allocation3 + $0x59] sm:$0xff] %vm860, %v849
    %872 = vst.msk [vmem:[#allocation3 + $0x61] sm:$0xff] %vm860, %v850
    %873 = vst.msk [vmem:[#allocation3 + $0x69] sm:$0xff] %vm860, %v851
    %874 = vst.msk [vmem:[#allocation3 + $0x71] sm:$0xff] %vm860, %v852
    %875 = vst.msk [vmem:[#allocation3 + $0x79] sm:$0xff] %vm860, %v853
    %876 = vst.msk [vmem:[#allocation3 + $0x81] sm:$0xff] %vm860, %v854
    %s877 = scalar_lea.vmem [#allocation3], 1
    %v878 = vld [vmem:[%s877] ss:$2 sm:$0xff]
    %s879 = scalar_lea.vmem [#allocation3], 17
    %v880 = vld [vmem:[%s879] ss:$2 sm:$0xff]
    %s881 = scalar_lea.vmem [#allocation3], 33
    %v882 = vld [vmem:[%s881] ss:$2 sm:$0xff]
    %s883 = scalar_lea.vmem [#allocation3], 49
    %v884 = vld [vmem:[%s883] ss:$2 sm:$0xff]
    %s885 = scalar_lea.vmem [#allocation3], 73
    %v886 = vld [vmem:[%s885] ss:$2 sm:$0xff]
    %s887 = scalar_lea.vmem [#allocation3], 89
    %v888 = vld [vmem:[%s887] ss:$2 sm:$0xff]
    %s889 = scalar_lea.vmem [#allocation3], 105
    %v890 = vld [vmem:[%s889] ss:$2 sm:$0xff]
    %s891 = scalar_lea.vmem [#allocation3], 121
    %v892 = vld [vmem:[%s891] ss:$2 sm:$0xff]
    %s893 = scalar_lea.vmem [#allocation3], 2
    %v894 = vld [vmem:[%s893] ss:$2 sm:$0xff]
    %s895 = scalar_lea.vmem [#allocation3], 18
    %v896 = vld [vmem:[%s895] ss:$2 sm:$0xff]
    %s897 = scalar_lea.vmem [#allocation3], 34
    %v898 = vld [vmem:[%s897] ss:$2 sm:$0xff]
    %s899 = scalar_lea.vmem [#allocation3], 50
    %v900 = vld [vmem:[%s899] ss:$2 sm:$0xff]
    %s901 = scalar_lea.vmem [#allocation3], 74
    %v902 = vld [vmem:[%s901] ss:$2 sm:$0xff]
    %s903 = scalar_lea.vmem [#allocation3], 90
    %v904 = vld [vmem:[%s903] ss:$2 sm:$0xff]
    %s905 = scalar_lea.vmem [#allocation3], 106
    %v906 = vld [vmem:[%s905] ss:$2 sm:$0xff]
    %s907 = scalar_lea.vmem [#allocation3], 122
    %v908 = vld [vmem:[%s907] ss:$2 sm:$0xff]
    %v909 = vmax.f32 %v878, %v894
    %v910 = vmax.f32 %v880, %v896
    %v911 = vmax.f32 %v882, %v898
    %v912 = vmax.f32 %v884, %v900
    %v913 = vmax.f32 %v886, %v902
    %v914 = vmax.f32 %v888, %v904
    %v915 = vmax.f32 %v890, %v906
    %v916 = vmax.f32 %v892, %v908
    %v917 = vld [vmem:[#allocation3] ss:$2 sm:$0xff]
    %s918 = scalar_lea.vmem [#allocation3], 16
    %v919 = vld [vmem:[%s918] ss:$2 sm:$0xff]
    %s920 = scalar_lea.vmem [#allocation3], 32
    %v921 = vld [vmem:[%s920] ss:$2 sm:$0xff]
    %s922 = scalar_lea.vmem [#allocation3], 48
    %v923 = vld [vmem:[%s922] ss:$2 sm:$0xff]
    %s924 = scalar_lea.vmem [#allocation3], 72
    %v925 = vld [vmem:[%s924] ss:$2 sm:$0xff]
    %s926 = scalar_lea.vmem [#allocation3], 88
    %v927 = vld [vmem:[%s926] ss:$2 sm:$0xff]
    %s928 = scalar_lea.vmem [#allocation3], 104
    %v929 = vld [vmem:[%s928] ss:$2 sm:$0xff]
    %s930 = scalar_lea.vmem [#allocation3], 120
    %v931 = vld [vmem:[%s930] ss:$2 sm:$0xff]
    %s932 = scalar_lea.vmem %s2, 48
    %v933 = vld [vmem:[%s932] sm:$0xff]
    %v934 = vld [vmem:[%s932 + $0x8] sm:$0xff]
    %v936 = vsel %vm860, %v878, 0
    %v939 = vsel %vm860, %v880, 0
    %v942 = vsel %vm860, %v882, 0
    %v945 = vsel %vm860, %v884, 0
    %v948 = vsel %vm860, %v886, 0
    %v951 = vsel %vm860, %v888, 0
    %v954 = vsel %vm860, %v890, 0
    %v957 = vsel %vm860, %v892, 0
    %959 = vmatprep.subr.mxu0 0.0
    %960 = vmatpush1.msra.mxu0 %v934
    %961 = vmatprep.subr.mxu0 0.0
    %962 = vmatpush1.msra.mxu0 0.0
    %963 = vmatprep.subr.mxu0 0.0
    %964 = vmatpush1.msra.mxu0 0.0
    %965 = vmatprep.subr.mxu0 0.0
    %966 = vmatpush1.msra.mxu0 0.0
    %967 = vmatprep.subr.mxu0 0.0
    %968 = vmatpush1.msra.mxu0 0.0
    %969 = vmatprep.subr.mxu0 0.0
    %970 = vmatpush1.msra.mxu0 0.0
    %971 = vmatprep.subr.mxu0 0.0
    %972 = vmatpush1.msra.mxu0 0.0
    %973 = vmatprep.subr.mxu0 0.0
    %974 = vmatpush1.msra.mxu0 0.0
    %975 = vmatprep.subr.mxu0 0.0
    %976 = vmatpush1.msra.mxu0 0.0
    %977 = vmatprep.subr.mxu0 0.0
    %978 = vmatpush1.msra.mxu0 0.0
    %979 = vmatprep.subr.mxu0 0.0
    %980 = vmatpush1.msra.mxu0 0.0
    %981 = vmatprep.subr.mxu0 0.0
    %982 = vmatpush1.msra.mxu0 0.0
    %983 = vmatprep.subr.mxu0 0.0
    %984 = vmatpush1.msra.mxu0 0.0
    %985 = vmatprep.subr.mxu0 0.0
    %986 = vmatpush1.msra.mxu0 0.0
    %987 = vmatprep.subr.mxu0 0.0
    %988 = vmatpush1.msra.mxu0 0.0
    %989 = vmatprep.subr.mxu0 0.0
    %990 = vmatpush1.msra.mxu0 0.0
    %991 = vmatprep.subr.mxu0 0.0
    %992 = vmatpush1.msra.mxu0 0.0
    %993 = vmatprep.subr.mxu0 0.0
    %994 = vmatpush1.msra.mxu0 0.0
    %995 = vmatprep.subr.mxu0 0.0
    %996 = vmatpush1.msra.mxu0 0.0
    %997 = vmatprep.subr.mxu0 0.0
    %998 = vmatpush1.msra.mxu0 0.0
    %999 = vmatprep.subr.mxu0 0.0
    %1000 = vmatpush1.msra.mxu0 0.0
    %1001 = vmatprep.subr.mxu0 0.0
    %1002 = vmatpush1.msra.mxu0 0.0
    %1003 = vmatprep.subr.mxu0 0.0
    %1004 = vmatpush1.msra.mxu0 0.0
    %1005 = vmatprep.subr.mxu0 0.0
    %1006 = vmatpush1.msra.mxu0 0.0
    %1007 = vmatprep.subr.mxu0 0.0
    %1008 = vmatpush1.msra.mxu0 0.0
    %1009 = vmatprep.subr.mxu0 0.0
    %1010 = vmatpush1.msra.mxu0 0.0
    %1011 = vmatprep.subr.mxu0 0.0
    %1012 = vmatpush1.msra.mxu0 0.0
    %1013 = vmatprep.subr.mxu0 0.0
    %1014 = vmatpush1.msra.mxu0 0.0
    %1015 = vmatprep.subr.mxu0 0.0
    %1016 = vmatpush1.msra.mxu0 0.0
    %1017 = vmatprep.subr.mxu0 0.0
    %1018 = vmatpush1.msra.mxu0 0.0
    %1019 = vmatprep.subr.mxu0 0.0
    %1020 = vmatpush1.msra.mxu0 0.0
    %1021 = vmatprep.subr.mxu0 0.0
    %1022 = vmatpush1.msra.mxu0 0.0
    %1023 = vmatprep.mubr.f32.mxu0 0.0
    %1024 = vmatmul.mubr.f32.gmra.mrb[0].mxu0 %v936
    %v1025 = vpop.f32.mrb[0].mxu0
    %v1026 = vadd.f32 0.0, %v1025
    %v1027 = vpop.f32.mrb[0].mxu0
    %1028 = vmatprep.mubr.f32.mxu0 0.0
    %1029 = vmatmul.mubr.f32.gmra.mrb[0].mxu0 %v939
    %v1030 = vpop.f32.mrb[0].mxu0
    %v1031 = vadd.f32 0.0, %v1030
    %v1032 = vpop.f32.mrb[0].mxu0
    %1033 = vmatprep.mubr.f32.mxu0 0.0
    %1034 = vmatmul.mubr.f32.gmra.mrb[0].mxu0 %v942
    %v1035 = vpop.f32.mrb[0].mxu0
    %v1036 = vadd.f32 0.0, %v1035
    %v1037 = vpop.f32.mrb[0].mxu0
    %1038 = vmatprep.mubr.f32.mxu0 0.0
    %1039 = vmatmul.mubr.f32.gmra.mrb[0].mxu0 %v945
    %v1040 = vpop.f32.mrb[0].mxu0
    %v1041 = vadd.f32 0.0, %v1040
    %v1042 = vpop.f32.mrb[0].mxu0
    %1043 = vmatprep.mubr.f32.mxu0 0.0
    %1044 = vmatmul.mubr.f32.gmra.mrb[0].mxu0 %v948
    %v1045 = vpop.f32.mrb[0].mxu0
    %v1046 = vadd.f32 0.0, %v1045
    %v1047 = vpop.f32.mrb[0].mxu0
    %1048 = vmatprep.mubr.f32.mxu0 0.0
    %1049 = vmatmul.mubr.f32.gmra.mrb[0].mxu0 %v951
    %v1050 = vpop.f32.mrb[0].mxu0
    %v1051 = vadd.f32 0.0, %v1050
    %v1052 = vpop.f32.mrb[0].mxu0
    %1053 = vmatprep.mubr.f32.mxu0 0.0
    %1054 = vmatmul.mubr.f32.gmra.mrb[0].mxu0 %v954
    %v1055 = vpop.f32.mrb[0].mxu0
    %v1056 = vadd.f32 0.0, %v1055
    %v1057 = vpop.f32.mrb[0].mxu0
    %1058 = vmatprep.mubr.f32.mxu0 0.0
    %1059 = vmatmul.mubr.f32.gmra.mrb[0].mxu0 %v957
    %v1060 = vpop.f32.mrb[0].mxu0
    %v1061 = vadd.f32 0.0, %v1060
    %v1062 = vpop.f32.mrb[0].mxu0
    %1063 = vdwg.mxu0
    %v1065 = vsel %vm860, %v917, 0
    %v1068 = vsel %vm860, %v919, 0
    %v1071 = vsel %vm860, %v921, 0
    %v1074 = vsel %vm860, %v923, 0
    %v1077 = vsel %vm860, %v925, 0
    %v1080 = vsel %vm860, %v927, 0
    %v1083 = vsel %vm860, %v929, 0
    %v1086 = vsel %vm860, %v931, 0
    %1088 = vmatprep.subr.mxu0 0.0
    %1089 = vmatpush1.msra.mxu0 %v933
    %1090 = vmatprep.subr.mxu0 0.0
    %1091 = vmatpush1.msra.mxu0 0.0
    %1092 = vmatprep.subr.mxu0 0.0
    %1093 = vmatpush1.msra.mxu0 0.0
    %1094 = vmatprep.subr.mxu0 0.0
    %1095 = vmatpush1.msra.mxu0 0.0
    %1096 = vmatprep.subr.mxu0 0.0
    %1097 = vmatpush1.msra.mxu0 0.0
    %1098 = vmatprep.subr.mxu0 0.0
    %1099 = vmatpush1.msra.mxu0 0.0
    %1100 = vmatprep.subr.mxu0 0.0
    %1101 = vmatpush1.msra.mxu0 0.0
    %1102 = vmatprep.subr.mxu0 0.0
    %1103 = vmatpush1.msra.mxu0 0.0
    %1104 = vmatprep.subr.mxu0 0.0
    %1105 = vmatpush1.msra.mxu0 0.0
    %1106 = vmatprep.subr.mxu0 0.0
    %1107 = vmatpush1.msra.mxu0 0.0
    %1108 = vmatprep.subr.mxu0 0.0
    %1109 = vmatpush1.msra.mxu0 0.0
    %1110 = vmatprep.subr.mxu0 0.0
    %1111 = vmatpush1.msra.mxu0 0.0
    %1112 = vmatprep.subr.mxu0 0.0
    %1113 = vmatpush1.msra.mxu0 0.0
    %1114 = vmatprep.subr.mxu0 0.0
    %1115 = vmatpush1.msra.mxu0 0.0
    %1116 = vmatprep.subr.mxu0 0.0
    %1117 = vmatpush1.msra.mxu0 0.0
    %1118 = vmatprep.subr.mxu0 0.0
    %1119 = vmatpush1.msra.mxu0 0.0
    %1120 = vmatprep.subr.mxu0 0.0
    %1121 = vmatpush1.msra.mxu0 0.0
    %1122 = vmatprep.subr.mxu0 0.0
    %1123 = vmatpush1.msra.mxu0 0.0
    %1124 = vmatprep.subr.mxu0 0.0
    %1125 = vmatpush1.msra.mxu0 0.0
    %1126 = vmatprep.subr.mxu0 0.0
    %1127 = vmatpush1.msra.mxu0 0.0
    %1128 = vmatprep.subr.mxu0 0.0
    %1129 = vmatpush1.msra.mxu0 0.0
    %1130 = vmatprep.subr.mxu0 0.0
    %1131 = vmatpush1.msra.mxu0 0.0
    %1132 = vmatprep.subr.mxu0 0.0
    %1133 = vmatpush1.msra.mxu0 0.0
    %1134 = vmatprep.subr.mxu0 0.0
    %1135 = vmatpush1.msra.mxu0 0.0
    %1136 = vmatprep.subr.mxu0 0.0
    %1137 = vmatpush1.msra.mxu0 0.0
    %1138 = vmatprep.subr.mxu0 0.0
    %1139 = vmatpush1.msra.mxu0 0.0
    %1140 = vmatprep.subr.mxu0 0.0
    %1141 = vmatpush1.msra.mxu0 0.0
    %1142 = vmatprep.subr.mxu0 0.0
    %1143 = vmatpush1.msra.mxu0 0.0
    %1144 = vmatprep.subr.mxu0 0.0
    %1145 = vmatpush1.msra.mxu0 0.0
    %1146 = vmatprep.subr.mxu0 0.0
    %1147 = vmatpush1.msra.mxu0 0.0
    %1148 = vmatprep.subr.mxu0 0.0
    %1149 = vmatpush1.msra.mxu0 0.0
    %1150 = vmatprep.subr.mxu0 0.0
    %1151 = vmatpush1.msra.mxu0 0.0
    %1152 = vmatprep.mubr.f32.mxu0 0.0
    %1153 = vmatmul.mubr.f32.gmra.mrb[0].mxu0 %v1065
    %v1154 = vpop.f32.mrb[0].mxu0
    %v1155 = vadd.f32 %v1026, %v1154
    %v1156 = vpop.f32.mrb[0].mxu0
    %1157 = vmatprep.mubr.f32.mxu0 0.0
    %1158 = vmatmul.mubr.f32.gmra.mrb[0].mxu0 %v1068
    %v1159 = vpop.f32.mrb[0].mxu0
    %v1160 = vadd.f32 %v1031, %v1159
    %v1161 = vpop.f32.mrb[0].mxu0
    %1162 = vmatprep.mubr.f32.mxu0 0.0
    %1163 = vmatmul.mubr.f32.gmra.mrb[0].mxu0 %v1071
    %v1164 = vpop.f32.mrb[0].mxu0
    %v1165 = vadd.f32 %v1036, %v1164
    %v1166 = vpop.f32.mrb[0].mxu0
    %1167 = vmatprep.mubr.f32.mxu0 0.0
    %1168 = vmatmul.mubr.f32.gmra.mrb[0].mxu0 %v1074
    %v1169 = vpop.f32.mrb[0].mxu0
    %v1170 = vadd.f32 %v1041, %v1169
    %v1171 = vpop.f32.mrb[0].mxu0
    %1172 = vmatprep.mubr.f32.mxu0 0.0
    %1173 = vmatmul.mubr.f32.gmra.mrb[0].mxu0 %v1077
    %v1174 = vpop.f32.mrb[0].mxu0
    %v1175 = vadd.f32 %v1046, %v1174
    %v1176 = vpop.f32.mrb[0].mxu0
    %1177 = vmatprep.mubr.f32.mxu0 0.0
    %1178 = vmatmul.mubr.f32.gmra.mrb[0].mxu0 %v1080
    %v1179 = vpop.f32.mrb[0].mxu0
    %v1180 = vadd.f32 %v1051, %v1179
    %v1181 = vpop.f32.mrb[0].mxu0
    %1182 = vmatprep.mubr.f32.mxu0 0.0
    %1183 = vmatmul.mubr.f32.gmra.mrb[0].mxu0 %v1083
    %v1184 = vpop.f32.mrb[0].mxu0
    %v1185 = vadd.f32 %v1056, %v1184
    %v1186 = vpop.f32.mrb[0].mxu0
    %1187 = vmatprep.mubr.f32.mxu0 0.0
    %1188 = vmatmul.mubr.f32.gmra.mrb[0].mxu0 %v1086
    %v1189 = vpop.f32.mrb[0].mxu0
    %v1190 = vadd.f32 %v1061, %v1189
    %v1191 = vpop.f32.mrb[0].mxu0
    %1192 = vdwg.mxu0
    %v1193 = vld [vmem:[%s932 + $0x10] sm:$0xff]
    %v1195 = vsel %vm860, %v894, 0
    %v1198 = vsel %vm860, %v896, 0
    %v1201 = vsel %vm860, %v898, 0
    %v1204 = vsel %vm860, %v900, 0
    %v1207 = vsel %vm860, %v902, 0
    %v1210 = vsel %vm860, %v904, 0
    %v1213 = vsel %vm860, %v906, 0
    %v1216 = vsel %vm860, %v908, 0
    %1218 = vmatprep.subr.mxu0 0.0
    %1219 = vmatpush1.msra.mxu0 %v1193
    %1220 = vmatprep.subr.mxu0 0.0
    %1221 = vmatpush1.msra.mxu0 0.0
    %1222 = vmatprep.subr.mxu0 0.0
    %1223 = vmatpush1.msra.mxu0 0.0
    %1224 = vmatprep.subr.mxu0 0.0
    %1225 = vmatpush1.msra.mxu0 0.0
    %1226 = vmatprep.subr.mxu0 0.0
    %1227 = vmatpush1.msra.mxu0 0.0
    %1228 = vmatprep.subr.mxu0 0.0
    %1229 = vmatpush1.msra.mxu0 0.0
    %1230 = vmatprep.subr.mxu0 0.0
    %1231 = vmatpush1.msra.mxu0 0.0
    %1232 = vmatprep.subr.mxu0 0.0
    %1233 = vmatpush1.msra.mxu0 0.0
    %1234 = vmatprep.subr.mxu0 0.0
    %1235 = vmatpush1.msra.mxu0 0.0
    %1236 = vmatprep.subr.mxu0 0.0
    %1237 = vmatpush1.msra.mxu0 0.0
    %1238 = vmatprep.subr.mxu0 0.0
    %1239 = vmatpush1.msra.mxu0 0.0
    %1240 = vmatprep.subr.mxu0 0.0
    %1241 = vmatpush1.msra.mxu0 0.0
    %1242 = vmatprep.subr.mxu0 0.0
    %1243 = vmatpush1.msra.mxu0 0.0
    %1244 = vmatprep.subr.mxu0 0.0
    %1245 = vmatpush1.msra.mxu0 0.0
    %1246 = vmatprep.subr.mxu0 0.0
    %1247 = vmatpush1.msra.mxu0 0.0
    %1248 = vmatprep.subr.mxu0 0.0
    %1249 = vmatpush1.msra.mxu0 0.0
    %1250 = vmatprep.subr.mxu0 0.0
    %1251 = vmatpush1.msra.mxu0 0.0
    %1252 = vmatprep.subr.mxu0 0.0
    %1253 = vmatpush1.msra.mxu0 0.0
    %1254 = vmatprep.subr.mxu0 0.0
    %1255 = vmatpush1.msra.mxu0 0.0
    %1256 = vmatprep.subr.mxu0 0.0
    %1257 = vmatpush1.msra.mxu0 0.0
    %1258 = vmatprep.subr.mxu0 0.0
    %1259 = vmatpush1.msra.mxu0 0.0
    %1260 = vmatprep.subr.mxu0 0.0
    %1261 = vmatpush1.msra.mxu0 0.0
    %1262 = vmatprep.subr.mxu0 0.0
    %1263 = vmatpush1.msra.mxu0 0.0
    %1264 = vmatprep.subr.mxu0 0.0
    %1265 = vmatpush1.msra.mxu0 0.0
    %1266 = vmatprep.subr.mxu0 0.0
    %1267 = vmatpush1.msra.mxu0 0.0
    %1268 = vmatprep.subr.mxu0 0.0
    %1269 = vmatpush1.msra.mxu0 0.0
    %1270 = vmatprep.subr.mxu0 0.0
    %1271 = vmatpush1.msra.mxu0 0.0
    %1272 = vmatprep.subr.mxu0 0.0
    %1273 = vmatpush1.msra.mxu0 0.0
    %1274 = vmatprep.subr.mxu0 0.0
    %1275 = vmatpush1.msra.mxu0 0.0
    %1276 = vmatprep.subr.mxu0 0.0
    %1277 = vmatpush1.msra.mxu0 0.0
    %1278 = vmatprep.subr.mxu0 0.0
    %1279 = vmatpush1.msra.mxu0 0.0
    %1280 = vmatprep.subr.mxu0 0.0
    %1281 = vmatpush1.msra.mxu0 0.0
    %1282 = vmatprep.mubr.f32.mxu0 0.0
    %1283 = vmatmul.mubr.f32.gmra.mrb[0].mxu0 %v1195
    %v1284 = vpop.f32.mrb[0].mxu0
    %v1285 = vadd.f32 0.0, %v1284
    %v1286 = vpop.f32.mrb[0].mxu0
    %1287 = vmatprep.mubr.f32.mxu0 0.0
    %1288 = vmatmul.mubr.f32.gmra.mrb[0].mxu0 %v1198
    %v1289 = vpop.f32.mrb[0].mxu0
    %v1290 = vadd.f32 0.0, %v1289
    %v1291 = vpop.f32.mrb[0].mxu0
    %1292 = vmatprep.mubr.f32.mxu0 0.0
    %1293 = vmatmul.mubr.f32.gmra.mrb[0].mxu0 %v1201
    %v1294 = vpop.f32.mrb[0].mxu0
    %v1295 = vadd.f32 0.0, %v1294
    %v1296 = vpop.f32.mrb[0].mxu0
    %1297 = vmatprep.mubr.f32.mxu0 0.0
    %1298 = vmatmul.mubr.f32.gmra.mrb[0].mxu0 %v1204
    %v1299 = vpop.f32.mrb[0].mxu0
    %v1300 = vadd.f32 0.0, %v1299
    %v1301 = vpop.f32.mrb[0].mxu0
    %1302 = vmatprep.mubr.f32.mxu0 0.0
    %1303 = vmatmul.mubr.f32.gmra.mrb[0].mxu0 %v1207
    %v1304 = vpop.f32.mrb[0].mxu0
    %v1305 = vadd.f32 0.0, %v1304
    %v1306 = vpop.f32.mrb[0].mxu0
    %1307 = vmatprep.mubr.f32.mxu0 0.0
    %1308 = vmatmul.mubr.f32.gmra.mrb[0].mxu0 %v1210
    %v1309 = vpop.f32.mrb[0].mxu0
    %v1310 = vadd.f32 0.0, %v1309
    %v1311 = vpop.f32.mrb[0].mxu0
    %1312 = vmatprep.mubr.f32.mxu0 0.0
    %1313 = vmatmul.mubr.f32.gmra.mrb[0].mxu0 %v1213
    %v1314 = vpop.f32.mrb[0].mxu0
    %v1315 = vadd.f32 0.0, %v1314
    %v1316 = vpop.f32.mrb[0].mxu0
    %1317 = vmatprep.mubr.f32.mxu0 0.0
    %1318 = vmatmul.mubr.f32.gmra.mrb[0].mxu0 %v1216
    %v1319 = vpop.f32.mrb[0].mxu0
    %v1320 = vadd.f32 0.0, %v1319
    %v1321 = vpop.f32.mrb[0].mxu0
    %1322 = vdwg.mxu0
    %v1323 = vadd.f32 %v1155, %v1285
    %v1324 = vadd.f32 %v1160, %v1290
    %v1325 = vadd.f32 %v1165, %v1295
    %v1326 = vadd.f32 %v1170, %v1300
    %v1327 = vadd.f32 %v1175, %v1305
    %v1328 = vadd.f32 %v1180, %v1310
    %v1329 = vadd.f32 %v1185, %v1315
    %v1330 = vadd.f32 %v1190, %v1320
    %v1331 = vld [vmem:[%s1 + $0x2] sm:$0x1]
    %v1332 = vld [vmem:[%s1 + $0x3] sm:$0x1]
    %v1333 = vlaneseq
    %v1334 = vshrl.u32 %v1333, 7
    %v1335 = vsub.s32 0, %v1334
    %v1336 = vrot.slane %v1331, %v1335
    %v1337 = vmul.f32 %v1323, %v1336
    %v1338 = vmul.f32 %v1324, %v1336
    %v1339 = vmul.f32 %v1325, %v1336
    %v1340 = vmul.f32 %v1326, %v1336
    %v1341 = vmul.f32 %v1327, %v1336
    %v1342 = vmul.f32 %v1328, %v1336
    %v1343 = vmul.f32 %v1329, %v1336
    %v1344 = vmul.f32 %v1330, %v1336
    %v1345 = vlaneseq
    %v1346 = vshrl.u32 %v1345, 7
    %v1347 = vsub.s32 0, %v1346
    %v1348 = vrot.slane %v1332, %v1347
    %v1349 = vadd.f32 %v1337, %v1348
    %v1350 = vadd.f32 %v1338, %v1348
    %v1351 = vadd.f32 %v1339, %v1348
    %v1352 = vadd.f32 %v1340, %v1348
    %v1353 = vadd.f32 %v1341, %v1348
    %v1354 = vadd.f32 %v1342, %v1348
    %v1355 = vadd.f32 %v1343, %v1348
    %v1356 = vadd.f32 %v1344, %v1348
    %v1357 = vmax.f32 %v1349, 0.0
    %v1358 = vmax.f32 %v1350, 0.0
    %v1359 = vmax.f32 %v1351, 0.0
    %v1360 = vmax.f32 %v1352, 0.0
    %v1361 = vmax.f32 %v1353, 0.0
    %v1362 = vmax.f32 %v1354, 0.0
    %v1363 = vmax.f32 %v1355, 0.0
    %v1364 = vmax.f32 %v1356, 0.0
    %1365 = vst.msk [vmem:[#allocation4] sm:$0x1] %vm855, 0.0
    %1366 = vst.msk [vmem:[#allocation4 + $0x28] sm:$0x1] %vm855, 0.0
    %1367 = vst.msk [vmem:[#allocation4 + $0x21] sm:$0x1] %vm855, 0.0
    %1368 = vst.msk [vmem:[#allocation4 + $0x49] sm:$0x1] %vm855, 0.0
    %1369 = vst.msk [vmem:[#allocation4 + $0x1] sm:$0xff] %vm860, %v1357
    %1370 = vst.msk [vmem:[#allocation4 + $0x9] sm:$0xff] %vm860, %v1358
    %1371 = vst.msk [vmem:[#allocation4 + $0x11] sm:$0xff] %vm860, %v1359
    %1372 = vst.msk [vmem:[#allocation4 + $0x19] sm:$0xff] %vm860, %v1360
    %1373 = vst.msk [vmem:[#allocation4 + $0x29] sm:$0xff] %vm860, %v1361
    %1374 = vst.msk [vmem:[#allocation4 + $0x31] sm:$0xff] %vm860, %v1362
    %1375 = vst.msk [vmem:[#allocation4 + $0x39] sm:$0xff] %vm860, %v1363
    %1376 = vst.msk [vmem:[#allocation4 + $0x41] sm:$0xff] %vm860, %v1364
    %v1377 = vld [vmem:[#allocation4] sm:$0xff]
    %v1378 = vld [vmem:[#allocation4 + $0x8] sm:$0xff]
    %v1379 = vld [vmem:[#allocation4 + $0x10] sm:$0xff]
    %v1380 = vld [vmem:[#allocation4 + $0x18] sm:$0xff]
    %v1381 = vld [vmem:[#allocation4 + $0x28] sm:$0xff]
    %v1382 = vld [vmem:[#allocation4 + $0x30] sm:$0xff]
    %v1383 = vld [vmem:[#allocation4 + $0x38] sm:$0xff]
    %v1384 = vld [vmem:[#allocation4 + $0x40] sm:$0xff]
    %s1385 = scalar_lea.vmem %s2, 96
    %v1386 = vld [vmem:[%s1385] sm:$0xff]
    %v1387 = vld [vmem:[#allocation4 + $0x1] sm:$0xff]
    %v1388 = vld [vmem:[#allocation4 + $0x9] sm:$0xff]
    %v1389 = vld [vmem:[#allocation4 + $0x11] sm:$0xff]
    %v1390 = vld [vmem:[#allocation4 + $0x19] sm:$0xff]
    %v1391 = vld [vmem:[#allocation4 + $0x29] sm:$0xff]
    %v1392 = vld [vmem:[#allocation4 + $0x31] sm:$0xff]
    %v1393 = vld [vmem:[#allocation4 + $0x39] sm:$0xff]
    %v1394 = vld [vmem:[#allocation4 + $0x41] sm:$0xff]
    %v1395 = vld [vmem:[%s1385 + $0x8] sm:$0xff]
    %v1397 = vsel %vm860, %v1387, 0
    %v1400 = vsel %vm860, %v1388, 0
    %v1403 = vsel %vm860, %v1389, 0
    %v1406 = vsel %vm860, %v1390, 0
    %v1409 = vsel %vm860, %v1391, 0
    %v1412 = vsel %vm860, %v1392, 0
    %v1415 = vsel %vm860, %v1393, 0
    %v1418 = vsel %vm860, %v1394, 0
    %1420 = vmatprep.subr.mxu0 0.0
    %1421 = vmatpush1.msra.mxu0 %v1395
    %1422 = vmatprep.subr.mxu0 0.0
    %1423 = vmatpush1.msra.mxu0 0.0
    %1424 = vmatprep.subr.mxu0 0.0
    %1425 = vmatpush1.msra.mxu0 0.0
    %1426 = vmatprep.subr.mxu0 0.0
    %1427 = vmatpush1.msra.mxu0 0.0
    %1428 = vmatprep.subr.mxu0 0.0
    %1429 = vmatpush1.msra.mxu0 0.0
    %1430 = vmatprep.subr.mxu0 0.0
    %1431 = vmatpush1.msra.mxu0 0.0
    %1432 = vmatprep.subr.mxu0 0.0
    %1433 = vmatpush1.msra.mxu0 0.0
    %1434 = vmatprep.subr.mxu0 0.0
    %1435 = vmatpush1.msra.mxu0 0.0
    %1436 = vmatprep.subr.mxu0 0.0
    %1437 = vmatpush1.msra.mxu0 0.0
    %1438 = vmatprep.subr.mxu0 0.0
    %1439 = vmatpush1.msra.mxu0 0.0
    %1440 = vmatprep.subr.mxu0 0.0
    %1441 = vmatpush1.msra.mxu0 0.0
    %1442 = vmatprep.subr.mxu0 0.0
    %1443 = vmatpush1.msra.mxu0 0.0
    %1444 = vmatprep.subr.mxu0 0.0
    %1445 = vmatpush1.msra.mxu0 0.0
    %1446 = vmatprep.subr.mxu0 0.0
    %1447 = vmatpush1.msra.mxu0 0.0
    %1448 = vmatprep.subr.mxu0 0.0
    %1449 = vmatpush1.msra.mxu0 0.0
    %1450 = vmatprep.subr.mxu0 0.0
    %1451 = vmatpush1.msra.mxu0 0.0
    %1452 = vmatprep.subr.mxu0 0.0
    %1453 = vmatpush1.msra.mxu0 0.0
    %1454 = vmatprep.subr.mxu0 0.0
    %1455 = vmatpush1.msra.mxu0 0.0
    %1456 = vmatprep.subr.mxu0 0.0
    %1457 = vmatpush1.msra.mxu0 0.0
    %1458 = vmatprep.subr.mxu0 0.0
    %1459 = vmatpush1.msra.mxu0 0.0
    %1460 = vmatprep.subr.mxu0 0.0
    %1461 = vmatpush1.msra.mxu0 0.0
    %1462 = vmatprep.subr.mxu0 0.0
    %1463 = vmatpush1.msra.mxu0 0.0
    %1464 = vmatprep.subr.mxu0 0.0
    %1465 = vmatpush1.msra.mxu0 0.0
    %1466 = vmatprep.subr.mxu0 0.0
    %1467 = vmatpush1.msra.mxu0 0.0
    %1468 = vmatprep.subr.mxu0 0.0
    %1469 = vmatpush1.msra.mxu0 0.0
    %1470 = vmatprep.subr.mxu0 0.0
    %1471 = vmatpush1.msra.mxu0 0.0
    %1472 = vmatprep.subr.mxu0 0.0
    %1473 = vmatpush1.msra.mxu0 0.0
    %1474 = vmatprep.subr.mxu0 0.0
    %1475 = vmatpush1.msra.mxu0 0.0
    %1476 = vmatprep.subr.mxu0 0.0
    %1477 = vmatpush1.msra.mxu0 0.0
    %1478 = vmatprep.subr.mxu0 0.0
    %1479 = vmatpush1.msra.mxu0 0.0
    %1480 = vmatprep.subr.mxu0 0.0
    %1481 = vmatpush1.msra.mxu0 0.0
    %1482 = vmatprep.subr.mxu0 0.0
    %1483 = vmatpush1.msra.mxu0 0.0
    %1484 = vmatprep.mubr.f32.mxu0 0.0
    %1485 = vmatmul.mubr.f32.gmra.mrb[0].mxu0 %v1397
    %v1486 = vpop.f32.mrb[0].mxu0
    %v1487 = vadd.f32 0.0, %v1486
    %v1488 = vpop.f32.mrb[0].mxu0
    %1489 = vmatprep.mubr.f32.mxu0 0.0
    %1490 = vmatmul.mubr.f32.gmra.mrb[0].mxu0 %v1400
    %v1491 = vpop.f32.mrb[0].mxu0
    %v1492 = vadd.f32 0.0, %v1491
    %v1493 = vpop.f32.mrb[0].mxu0
    %1494 = vmatprep.mubr.f32.mxu0 0.0
    %1495 = vmatmul.mubr.f32.gmra.mrb[0].mxu0 %v1403
    %v1496 = vpop.f32.mrb[0].mxu0
    %v1497 = vadd.f32 0.0, %v1496
    %v1498 = vpop.f32.mrb[0].mxu0
    %1499 = vmatprep.mubr.f32.mxu0 0.0
    %1500 = vmatmul.mubr.f32.gmra.mrb[0].mxu0 %v1406
    %v1501 = vpop.f32.mrb[0].mxu0
    %v1502 = vadd.f32 0.0, %v1501
    %v1503 = vpop.f32.mrb[0].mxu0
    %1504 = vmatprep.mubr.f32.mxu0 0.0
    %1505 = vmatmul.mubr.f32.gmra.mrb[0].mxu0 %v1409
    %v1506 = vpop.f32.mrb[0].mxu0
    %v1507 = vadd.f32 0.0, %v1506
    %v1508 = vpop.f32.mrb[0].mxu0
    %1509 = vmatprep.mubr.f32.mxu0 0.0
    %1510 = vmatmul.mubr.f32.gmra.mrb[0].mxu0 %v1412
    %v1511 = vpop.f32.mrb[0].mxu0
    %v1512 = vadd.f32 0.0, %v1511
    %v1513 = vpop.f32.mrb[0].mxu0
    %1514 = vmatprep.mubr.f32.mxu0 0.0
    %1515 = vmatmul.mubr.f32.gmra.mrb[0].mxu0 %v1415
    %v1516 = vpop.f32.mrb[0].mxu0
    %v1517 = vadd.f32 0.0, %v1516
    %v1518 = vpop.f32.mrb[0].mxu0
    %1519 = vmatprep.mubr.f32.mxu0 0.0
    %1520 = vmatmul.mubr.f32.gmra.mrb[0].mxu0 %v1418
    %v1521 = vpop.f32.mrb[0].mxu0
    %v1522 = vadd.f32 0.0, %v1521
    %v1523 = vpop.f32.mrb[0].mxu0
    %1524 = vdwg.mxu0
    %v1526 = vsel %vm860, %v1377, 0
    %v1529 = vsel %vm860, %v1378, 0
    %v1532 = vsel %vm860, %v1379, 0
    %v1535 = vsel %vm860, %v1380, 0
    %v1538 = vsel %vm860, %v1381, 0
    %v1541 = vsel %vm860, %v1382, 0
    %v1544 = vsel %vm860, %v1383, 0
    %v1547 = vsel %vm860, %v1384, 0
    %1549 = vmatprep.subr.mxu0 0.0
    %1550 = vmatpush1.msra.mxu0 %v1386
    %1551 = vmatprep.subr.mxu0 0.0
    %1552 = vmatpush1.msra.mxu0 0.0
    %1553 = vmatprep.subr.mxu0 0.0
    %1554 = vmatpush1.msra.mxu0 0.0
    %1555 = vmatprep.subr.mxu0 0.0
    %1556 = vmatpush1.msra.mxu0 0.0
    %1557 = vmatprep.subr.mxu0 0.0
    %1558 = vmatpush1.msra.mxu0 0.0
    %1559 = vmatprep.subr.mxu0 0.0
    %1560 = vmatpush1.msra.mxu0 0.0
    %1561 = vmatprep.subr.mxu0 0.0
    %1562 = vmatpush1.msra.mxu0 0.0
    %1563 = vmatprep.subr.mxu0 0.0
    %1564 = vmatpush1.msra.mxu0 0.0
    %1565 = vmatprep.subr.mxu0 0.0
    %1566 = vmatpush1.msra.mxu0 0.0
    %1567 = vmatprep.subr.mxu0 0.0
    %1568 = vmatpush1.msra.mxu0 0.0
    %1569 = vmatprep.subr.mxu0 0.0
    %1570 = vmatpush1.msra.mxu0 0.0
    %1571 = vmatprep.subr.mxu0 0.0
    %1572 = vmatpush1.msra.mxu0 0.0
    %1573 = vmatprep.subr.mxu0 0.0
    %1574 = vmatpush1.msra.mxu0 0.0
    %1575 = vmatprep.subr.mxu0 0.0
    %1576 = vmatpush1.msra.mxu0 0.0
    %1577 = vmatprep.subr.mxu0 0.0
    %1578 = vmatpush1.msra.mxu0 0.0
    %1579 = vmatprep.subr.mxu0 0.0
    %1580 = vmatpush1.msra.mxu0 0.0
    %1581 = vmatprep.subr.mxu0 0.0
    %1582 = vmatpush1.msra.mxu0 0.0
    %1583 = vmatprep.subr.mxu0 0.0
    %1584 = vmatpush1.msra.mxu0 0.0
    %1585 = vmatprep.subr.mxu0 0.0
    %1586 = vmatpush1.msra.mxu0 0.0
    %1587 = vmatprep.subr.mxu0 0.0
    %1588 = vmatpush1.msra.mxu0 0.0
    %1589 = vmatprep.subr.mxu0 0.0
    %1590 = vmatpush1.msra.mxu0 0.0
    %1591 = vmatprep.subr.mxu0 0.0
    %1592 = vmatpush1.msra.mxu0 0.0
    %1593 = vmatprep.subr.mxu0 0.0
    %1594 = vmatpush1.msra.mxu0 0.0
    %1595 = vmatprep.subr.mxu0 0.0
    %1596 = vmatpush1.msra.mxu0 0.0
    %1597 = vmatprep.subr.mxu0 0.0
    %1598 = vmatpush1.msra.mxu0 0.0
    %1599 = vmatprep.subr.mxu0 0.0
    %1600 = vmatpush1.msra.mxu0 0.0
    %1601 = vmatprep.subr.mxu0 0.0
    %1602 = vmatpush1.msra.mxu0 0.0
    %1603 = vmatprep.subr.mxu0 0.0
    %1604 = vmatpush1.msra.mxu0 0.0
    %1605 = vmatprep.subr.mxu0 0.0
    %1606 = vmatpush1.msra.mxu0 0.0
    %1607 = vmatprep.subr.mxu0 0.0
    %1608 = vmatpush1.msra.mxu0 0.0
    %1609 = vmatprep.subr.mxu0 0.0
    %1610 = vmatpush1.msra.mxu0 0.0
    %1611 = vmatprep.subr.mxu0 0.0
    %1612 = vmatpush1.msra.mxu0 0.0
    %1613 = vmatprep.mubr.f32.mxu0 0.0
    %1614 = vmatmul.mubr.f32.gmra.mrb[0].mxu0 %v1526
    %v1615 = vpop.f32.mrb[0].mxu0
    %v1616 = vadd.f32 %v1487, %v1615
    %v1617 = vpop.f32.mrb[0].mxu0
    %1618 = vmatprep.mubr.f32.mxu0 0.0
    %1619 = vmatmul.mubr.f32.gmra.mrb[0].mxu0 %v1529
    %v1620 = vpop.f32.mrb[0].mxu0
    %v1621 = vadd.f32 %v1492, %v1620
    %v1622 = vpop.f32.mrb[0].mxu0
    %1623 = vmatprep.mubr.f32.mxu0 0.0
    %1624 = vmatmul.mubr.f32.gmra.mrb[0].mxu0 %v1532
    %v1625 = vpop.f32.mrb[0].mxu0
    %v1626 = vadd.f32 %v1497, %v1625
    %v1627 = vpop.f32.mrb[0].mxu0
    %1628 = vmatprep.mubr.f32.mxu0 0.0
    %1629 = vmatmul.mubr.f32.gmra.mrb[0].mxu0 %v1535
    %v1630 = vpop.f32.mrb[0].mxu0
    %v1631 = vadd.f32 %v1502, %v1630
    %v1632 = vpop.f32.mrb[0].mxu0
    %1633 = vmatprep.mubr.f32.mxu0 0.0
    %1634 = vmatmul.mubr.f32.gmra.mrb[0].mxu0 %v1538
    %v1635 = vpop.f32.mrb[0].mxu0
    %v1636 = vadd.f32 %v1507, %v1635
    %v1637 = vpop.f32.mrb[0].mxu0
    %1638 = vmatprep.mubr.f32.mxu0 0.0
    %1639 = vmatmul.mubr.f32.gmra.mrb[0].mxu0 %v1541
    %v1640 = vpop.f32.mrb[0].mxu0
    %v1641 = vadd.f32 %v1512, %v1640
    %v1642 = vpop.f32.mrb[0].mxu0
    %1643 = vmatprep.mubr.f32.mxu0 0.0
    %1644 = vmatmul.mubr.f32.gmra.mrb[0].mxu0 %v1544
    %v1645 = vpop.f32.mrb[0].mxu0
    %v1646 = vadd.f32 %v1517, %v1645
    %v1647 = vpop.f32.mrb[0].mxu0
    %1648 = vmatprep.mubr.f32.mxu0 0.0
    %1649 = vmatmul.mubr.f32.gmra.mrb[0].mxu0 %v1547
    %v1650 = vpop.f32.mrb[0].mxu0
    %v1651 = vadd.f32 %v1522, %v1650
    %v1652 = vpop.f32.mrb[0].mxu0
    %1653 = vdwg.mxu0
    %v1654 = vld [vmem:[#allocation4 + $0x2] sm:$0xff]
    %v1655 = vld [vmem:[#allocation4 + $0xa] sm:$0xff]
    %v1656 = vld [vmem:[#allocation4 + $0x12] sm:$0xff]
    %v1657 = vld [vmem:[#allocation4 + $0x1a] sm:$0xff]
    %v1658 = vld [vmem:[#allocation4 + $0x2a] sm:$0xff]
    %v1659 = vld [vmem:[#allocation4 + $0x32] sm:$0xff]
    %v1660 = vld [vmem:[#allocation4 + $0x3a] sm:$0xff]
    %v1661 = vld [vmem:[#allocation4 + $0x42] sm:$0xff]
    %v1662 = vld [vmem:[%s1385 + $0x10] sm:$0xff]
    %v1664 = vsel %vm860, %v1654, 0
    %v1667 = vsel %vm860, %v1655, 0
    %v1670 = vsel %vm860, %v1656, 0
    %v1673 = vsel %vm860, %v1657, 0
    %v1676 = vsel %vm860, %v1658, 0
    %v1679 = vsel %vm860, %v1659, 0
    %v1682 = vsel %vm860, %v1660, 0
    %v1685 = vsel %vm860, %v1661, 0
    %1687 = vmatprep.subr.mxu0 0.0
    %1688 = vmatpush1.msra.mxu0 %v1662
    %1689 = vmatprep.subr.mxu0 0.0
    %1690 = vmatpush1.msra.mxu0 0.0
    %1691 = vmatprep.subr.mxu0 0.0
    %1692 = vmatpush1.msra.mxu0 0.0
    %1693 = vmatprep.subr.mxu0 0.0
    %1694 = vmatpush1.msra.mxu0 0.0
    %1695 = vmatprep.subr.mxu0 0.0
    %1696 = vmatpush1.msra.mxu0 0.0
    %1697 = vmatprep.subr.mxu0 0.0
    %1698 = vmatpush1.msra.mxu0 0.0
    %1699 = vmatprep.subr.mxu0 0.0
    %1700 = vmatpush1.msra.mxu0 0.0
    %1701 = vmatprep.subr.mxu0 0.0
    %1702 = vmatpush1.msra.mxu0 0.0
    %1703 = vmatprep.subr.mxu0 0.0
    %1704 = vmatpush1.msra.mxu0 0.0
    %1705 = vmatprep.subr.mxu0 0.0
    %1706 = vmatpush1.msra.mxu0 0.0
    %1707 = vmatprep.subr.mxu0 0.0
    %1708 = vmatpush1.msra.mxu0 0.0
    %1709 = vmatprep.subr.mxu0 0.0
    %1710 = vmatpush1.msra.mxu0 0.0
    %1711 = vmatprep.subr.mxu0 0.0
    %1712 = vmatpush1.msra.mxu0 0.0
    %1713 = vmatprep.subr.mxu0 0.0
    %1714 = vmatpush1.msra.mxu0 0.0
    %1715 = vmatprep.subr.mxu0 0.0
    %1716 = vmatpush1.msra.mxu0 0.0
    %1717 = vmatprep.subr.mxu0 0.0
    %1718 = vmatpush1.msra.mxu0 0.0
    %1719 = vmatprep.subr.mxu0 0.0
    %1720 = vmatpush1.msra.mxu0 0.0
    %1721 = vmatprep.subr.mxu0 0.0
    %1722 = vmatpush1.msra.mxu0 0.0
    %1723 = vmatprep.subr.mxu0 0.0
    %1724 = vmatpush1.msra.mxu0 0.0
    %1725 = vmatprep.subr.mxu0 0.0
    %1726 = vmatpush1.msra.mxu0 0.0
    %1727 = vmatprep.subr.mxu0 0.0
    %1728 = vmatpush1.msra.mxu0 0.0
    %1729 = vmatprep.subr.mxu0 0.0
    %1730 = vmatpush1.msra.mxu0 0.0
    %1731 = vmatprep.subr.mxu0 0.0
    %1732 = vmatpush1.msra.mxu0 0.0
    %1733 = vmatprep.subr.mxu0 0.0
    %1734 = vmatpush1.msra.mxu0 0.0
    %1735 = vmatprep.subr.mxu0 0.0
    %1736 = vmatpush1.msra.mxu0 0.0
    %1737 = vmatprep.subr.mxu0 0.0
    %1738 = vmatpush1.msra.mxu0 0.0
    %1739 = vmatprep.subr.mxu0 0.0
    %1740 = vmatpush1.msra.mxu0 0.0
    %1741 = vmatprep.subr.mxu0 0.0
    %1742 = vmatpush1.msra.mxu0 0.0
    %1743 = vmatprep.subr.mxu0 0.0
    %1744 = vmatpush1.msra.mxu0 0.0
    %1745 = vmatprep.subr.mxu0 0.0
    %1746 = vmatpush1.msra.mxu0 0.0
    %1747 = vmatprep.subr.mxu0 0.0
    %1748 = vmatpush1.msra.mxu0 0.0
    %1749 = vmatprep.subr.mxu0 0.0
    %1750 = vmatpush1.msra.mxu0 0.0
    %1751 = vmatprep.mubr.f32.mxu0 0.0
    %1752 = vmatmul.mubr.f32.gmra.mrb[0].mxu0 %v1664
    %v1753 = vpop.f32.mrb[0].mxu0
    %v1754 = vadd.f32 0.0, %v1753
    %v1755 = vpop.f32.mrb[0].mxu0
    %1756 = vmatprep.mubr.f32.mxu0 0.0
    %1757 = vmatmul.mubr.f32.gmra.mrb[0].mxu0 %v1667
    %v1758 = vpop.f32.mrb[0].mxu0
    %v1759 = vadd.f32 0.0, %v1758
    %v1760 = vpop.f32.mrb[0].mxu0
    %1761 = vmatprep.mubr.f32.mxu0 0.0
    %1762 = vmatmul.mubr.f32.gmra.mrb[0].mxu0 %v1670
    %v1763 = vpop.f32.mrb[0].mxu0
    %v1764 = vadd.f32 0.0, %v1763
    %v1765 = vpop.f32.mrb[0].mxu0
    %1766 = vmatprep.mubr.f32.mxu0 0.0
    %1767 = vmatmul.mubr.f32.gmra.mrb[0].mxu0 %v1673
    %v1768 = vpop.f32.mrb[0].mxu0
    %v1769 = vadd.f32 0.0, %v1768
    %v1770 = vpop.f32.mrb[0].mxu0
    %1771 = vmatprep.mubr.f32.mxu0 0.0
    %1772 = vmatmul.mubr.f32.gmra.mrb[0].mxu0 %v1676
    %v1773 = vpop.f32.mrb[0].mxu0
    %v1774 = vadd.f32 0.0, %v1773
    %v1775 = vpop.f32.mrb[0].mxu0
    %1776 = vmatprep.mubr.f32.mxu0 0.0
    %1777 = vmatmul.mubr.f32.gmra.mrb[0].mxu0 %v1679
    %v1778 = vpop.f32.mrb[0].mxu0
    %v1779 = vadd.f32 0.0, %v1778
    %v1780 = vpop.f32.mrb[0].mxu0
    %1781 = vmatprep.mubr.f32.mxu0 0.0
    %1782 = vmatmul.mubr.f32.gmra.mrb[0].mxu0 %v1682
    %v1783 = vpop.f32.mrb[0].mxu0
    %v1784 = vadd.f32 0.0, %v1783
    %v1785 = vpop.f32.mrb[0].mxu0
    %1786 = vmatprep.mubr.f32.mxu0 0.0
    %1787 = vmatmul.mubr.f32.gmra.mrb[0].mxu0 %v1685
    %v1788 = vpop.f32.mrb[0].mxu0
    %v1789 = vadd.f32 0.0, %v1788
    %v1790 = vpop.f32.mrb[0].mxu0
    %1791 = vdwg.mxu0
    %v1792 = vadd.f32 %v1616, %v1754
    %v1793 = vadd.f32 %v1621, %v1759
    %v1794 = vadd.f32 %v1626, %v1764
    %v1795 = vadd.f32 %v1631, %v1769
    %v1796 = vadd.f32 %v1636, %v1774
    %v1797 = vadd.f32 %v1641, %v1779
    %v1798 = vadd.f32 %v1646, %v1784
    %v1799 = vadd.f32 %v1651, %v1789
    %v1800 = vld [vmem:[%s1 + $0x4] sm:$0x1]
    %v1801 = vld [vmem:[%s1 + $0x5] sm:$0x1]
    %v1802 = vlaneseq
    %v1803 = vshrl.u32 %v1802, 7
    %v1804 = vsub.s32 0, %v1803
    %v1805 = vrot.slane %v1800, %v1804
    %v1806 = vmul.f32 %v1792, %v1805
    %v1807 = vmul.f32 %v1793, %v1805
    %v1808 = vmul.f32 %v1794, %v1805
    %v1809 = vmul.f32 %v1795, %v1805
    %v1810 = vmul.f32 %v1796, %v1805
    %v1811 = vmul.f32 %v1797, %v1805
    %v1812 = vmul.f32 %v1798, %v1805
    %v1813 = vmul.f32 %v1799, %v1805
    %v1814 = vlaneseq
    %v1815 = vshrl.u32 %v1814, 7
    %v1816 = vsub.s32 0, %v1815
    %v1817 = vrot.slane %v1801, %v1816
    %v1818 = vadd.f32 %v1806, %v1817
    %v1819 = vadd.f32 %v1807, %v1817
    %v1820 = vadd.f32 %v1808, %v1817
    %v1821 = vadd.f32 %v1809, %v1817
    %v1822 = vadd.f32 %v1810, %v1817
    %v1823 = vadd.f32 %v1811, %v1817
    %v1824 = vadd.f32 %v1812, %v1817
    %v1825 = vadd.f32 %v1813, %v1817
    %v1826 = vmax.f32 %v1818, 0.0
    %v1827 = vmax.f32 %v1819, 0.0
    %v1828 = vmax.f32 %v1820, 0.0
    %v1829 = vmax.f32 %v1821, 0.0
    %v1830 = vmax.f32 %v1822, 0.0
    %v1831 = vmax.f32 %v1823, 0.0
    %v1832 = vmax.f32 %v1824, 0.0
    %v1833 = vmax.f32 %v1825, 0.0
    %v1834 = vadd.f32 %v1826, %v909
    %v1835 = vadd.f32 %v1827, %v910
    %v1836 = vadd.f32 %v1828, %v911
    %v1837 = vadd.f32 %v1829, %v912
    %v1838 = vadd.f32 %v1830, %v913
    %v1839 = vadd.f32 %v1831, %v914
    %v1840 = vadd.f32 %v1832, %v915
    %v1841 = vadd.f32 %v1833, %v916
    %1842 = vst.msk [vmem:[#allocation7] sm:$0xff] %vm860, %v1834
    %1843 = vst.msk [vmem:[#allocation7 + $0x8] sm:$0xff] %vm860, %v1835
    %1844 = vst.msk [vmem:[#allocation7 + $0x10] sm:$0xff] %vm860, %v1836
    %1845 = vst.msk [vmem:[#allocation7 + $0x18] sm:$0xff] %vm860, %v1837
    %1846 = vst.msk [vmem:[#allocation7 + $0x20] sm:$0xff] %vm860, %v1838
    %1847 = vst.msk [vmem:[#allocation7 + $0x28] sm:$0xff] %vm860, %v1839
    %1848 = vst.msk [vmem:[#allocation7 + $0x30] sm:$0xff] %vm860, %v1840
    %1849 = vst.msk [vmem:[#allocation7 + $0x38] sm:$0xff] %vm860, %v1841
    %v1850 = vld [vmem:[#allocation7] ss:$2 sm:$0xff]
    %s1851 = scalar_lea.vmem [#allocation7], 16
    %v1852 = vld [vmem:[%s1851] ss:$2 sm:$0xff]
    %s1853 = scalar_lea.vmem [#allocation7], 32
    %v1854 = vld [vmem:[%s1853] ss:$2 sm:$0xff]
    %s1855 = scalar_lea.vmem [#allocation7], 48
    %v1856 = vld [vmem:[%s1855] ss:$2 sm:$0xff]
    %s1857 = scalar_lea.vmem [#allocation7], 1
    %v1858 = vld [vmem:[%s1857] ss:$2 sm:$0xff]
    %s1859 = scalar_lea.vmem [#allocation7], 17
    %v1860 = vld [vmem:[%s1859] ss:$2 sm:$0xff]
    %s1861 = scalar_lea.vmem [#allocation7], 33
    %v1862 = vld [vmem:[%s1861] ss:$2 sm:$0xff]
    %s1863 = scalar_lea.vmem [#allocation7], 49
    %v1864 = vld [vmem:[%s1863] ss:$2 sm:$0xff]
    %v1865 = vmax.f32 %v1850, %v1858
    %v1866 = vmax.f32 %v1852, %v1860
    %v1867 = vmax.f32 %v1854, %v1862
    %v1868 = vmax.f32 %v1856, %v1864
    %v1869 = vld [vmem:[%s1 + $0x6] sm:$0x1]
    %v1870 = vld [vmem:[%s1 + $0x7] sm:$0x1]
    %v1871 = vlaneseq
    %v1872 = vshrl.u32 %v1871, 7
    %v1873 = vsub.s32 0, %v1872
    %v1874 = vrot.slane %v1869, %v1873
    %v1875 = vmul.f32 %v1834, %v1874
    %v1876 = vmul.f32 %v1835, %v1874
    %v1877 = vmul.f32 %v1836, %v1874
    %v1878 = vmul.f32 %v1837, %v1874
    %v1879 = vmul.f32 %v1838, %v1874
    %v1880 = vmul.f32 %v1839, %v1874
    %v1881 = vmul.f32 %v1840, %v1874
    %v1882 = vmul.f32 %v1841, %v1874
    %v1883 = vlaneseq
    %v1884 = vshrl.u32 %v1883, 7
    %v1885 = vsub.s32 0, %v1884
    %v1886 = vrot.slane %v1870, %v1885
    %v1887 = vadd.f32 %v1875, %v1886
    %v1888 = vadd.f32 %v1876, %v1886
    %v1889 = vadd.f32 %v1877, %v1886
    %v1890 = vadd.f32 %v1878, %v1886
    %v1891 = vadd.f32 %v1879, %v1886
    %v1892 = vadd.f32 %v1880, %v1886
    %v1893 = vadd.f32 %v1881, %v1886
    %v1894 = vadd.f32 %v1882, %v1886
    %v1895 = vmax.f32 %v1887, 0.0
    %v1896 = vmax.f32 %v1888, 0.0
    %v1897 = vmax.f32 %v1889, 0.0
    %v1898 = vmax.f32 %v1890, 0.0
    %v1899 = vmax.f32 %v1891, 0.0
    %v1900 = vmax.f32 %v1892, 0.0
    %v1901 = vmax.f32 %v1893, 0.0
    %v1902 = vmax.f32 %v1894, 0.0
    %1903 = vst.msk [vmem:[#allocation5] sm:$0x1] %vm855, 0.0
    %1904 = vst.msk [vmem:[#allocation5 + $0x28] sm:$0x1] %vm855, 0.0
    %1905 = vst.msk [vmem:[#allocation5 + $0x21] sm:$0x1] %vm855, 0.0
    %1906 = vst.msk [vmem:[#allocation5 + $0x49] sm:$0x1] %vm855, 0.0
    %1907 = vst.msk [vmem:[#allocation5 + $0x1] sm:$0xff] %vm860, %v1895
    %1908 = vst.msk [vmem:[#allocation5 + $0x9] sm:$0xff] %vm860, %v1896
    %1909 = vst.msk [vmem:[#allocation5 + $0x11] sm:$0xff] %vm860, %v1897
    %1910 = vst.msk [vmem:[#allocation5 + $0x19] sm:$0xff] %vm860, %v1898
    %1911 = vst.msk [vmem:[#allocation5 + $0x29] sm:$0xff] %vm860, %v1899
    %1912 = vst.msk [vmem:[#allocation5 + $0x31] sm:$0xff] %vm860, %v1900
    %1913 = vst.msk [vmem:[#allocation5 + $0x39] sm:$0xff] %vm860, %v1901
    %1914 = vst.msk [vmem:[#allocation5 + $0x41] sm:$0xff] %vm860, %v1902
    %v1915 = vld [vmem:[#allocation5] ss:$2 sm:$0xff]
    %s1916 = scalar_lea.vmem [#allocation5], 16
    %v1917 = vld [vmem:[%s1916] ss:$2 sm:$0xff]
    %s1918 = scalar_lea.vmem [#allocation5], 40
    %v1919 = vld [vmem:[%s1918] ss:$2 sm:$0xff]
    %s1920 = scalar_lea.vmem [#allocation5], 56
    %v1921 = vld [vmem:[%s1920] ss:$2 sm:$0xff]
    %s1922 = scalar_lea.vmem %s2, 144
    %v1923 = vld [vmem:[%s1922] sm:$0xff]
    %s1924 = scalar_lea.vmem [#allocation5], 1
    %v1925 = vld [vmem:[%s1924] ss:$2 sm:$0xff]
    %s1926 = scalar_lea.vmem [#allocation5], 17
    %v1927 = vld [vmem:[%s1926] ss:$2 sm:$0xff]
    %s1928 = scalar_lea.vmem [#allocation5], 41
    %v1929 = vld [vmem:[%s1928] ss:$2 sm:$0xff]
    %s1930 = scalar_lea.vmem [#allocation5], 57
    %v1931 = vld [vmem:[%s1930] ss:$2 sm:$0xff]
    %v1932 = vld [vmem:[%s1922 + $0x8] sm:$0xff]
    %v1934 = vsel %vm860, %v1925, 0
    %v1937 = vsel %vm860, %v1927, 0
    %v1940 = vsel %vm860, %v1929, 0
    %v1943 = vsel %vm860, %v1931, 0
    %1945 = vmatprep.subr.mxu0 0.0
    %1946 = vmatpush1.msra.mxu0 %v1932
    %1947 = vmatprep.subr.mxu0 0.0
    %1948 = vmatpush1.msra.mxu0 0.0
    %1949 = vmatprep.subr.mxu0 0.0
    %1950 = vmatpush1.msra.mxu0 0.0
    %1951 = vmatprep.subr.mxu0 0.0
    %1952 = vmatpush1.msra.mxu0 0.0
    %1953 = vmatprep.subr.mxu0 0.0
    %1954 = vmatpush1.msra.mxu0 0.0
    %1955 = vmatprep.subr.mxu0 0.0
    %1956 = vmatpush1.msra.mxu0 0.0
    %1957 = vmatprep.subr.mxu0 0.0
    %1958 = vmatpush1.msra.mxu0 0.0
    %1959 = vmatprep.subr.mxu0 0.0
    %1960 = vmatpush1.msra.mxu0 0.0
    %1961 = vmatprep.subr.mxu0 0.0
    %1962 = vmatpush1.msra.mxu0 0.0
    %1963 = vmatprep.subr.mxu0 0.0
    %1964 = vmatpush1.msra.mxu0 0.0
    %1965 = vmatprep.subr.mxu0 0.0
    %1966 = vmatpush1.msra.mxu0 0.0
    %1967 = vmatprep.subr.mxu0 0.0
    %1968 = vmatpush1.msra.mxu0 0.0
    %1969 = vmatprep.subr.mxu0 0.0
    %1970 = vmatpush1.msra.mxu0 0.0
    %1971 = vmatprep.subr.mxu0 0.0
    %1972 = vmatpush1.msra.mxu0 0.0
    %1973 = vmatprep.subr.mxu0 0.0
    %1974 = vmatpush1.msra.mxu0 0.0
    %1975 = vmatprep.subr.mxu0 0.0
    %1976 = vmatpush1.msra.mxu0 0.0
    %1977 = vmatprep.subr.mxu0 0.0
    %1978 = vmatpush1.msra.mxu0 0.0
    %1979 = vmatprep.subr.mxu0 0.0
    %1980 = vmatpush1.msra.mxu0 0.0
    %1981 = vmatprep.subr.mxu0 0.0
    %1982 = vmatpush1.msra.mxu0 0.0
    %1983 = vmatprep.subr.mxu0 0.0
    %1984 = vmatpush1.msra.mxu0 0.0
    %1985 = vmatprep.subr.mxu0 0.0
    %1986 = vmatpush1.msra.mxu0 0.0
    %1987 = vmatprep.subr.mxu0 0.0
    %1988 = vmatpush1.msra.mxu0 0.0
    %1989 = vmatprep.subr.mxu0 0.0
    %1990 = vmatpush1.msra.mxu0 0.0
    %1991 = vmatprep.subr.mxu0 0.0
    %1992 = vmatpush1.msra.mxu0 0.0
    %1993 = vmatprep.subr.mxu0 0.0
    %1994 = vmatpush1.msra.mxu0 0.0
    %1995 = vmatprep.subr.mxu0 0.0
    %1996 = vmatpush1.msra.mxu0 0.0
    %1997 = vmatprep.subr.mxu0 0.0
    %1998 = vmatpush1.msra.mxu0 0.0
    %1999 = vmatprep.subr.mxu0 0.0
    %2000 = vmatpush1.msra.mxu0 0.0
    %2001 = vmatprep.subr.mxu0 0.0
    %2002 = vmatpush1.msra.mxu0 0.0
    %2003 = vmatprep.subr.mxu0 0.0
    %2004 = vmatpush1.msra.mxu0 0.0
    %2005 = vmatprep.subr.mxu0 0.0
    %2006 = vmatpush1.msra.mxu0 0.0
    %2007 = vmatprep.subr.mxu0 0.0
    %2008 = vmatpush1.msra.mxu0 0.0
    %2009 = vmatprep.mubr.f32.mxu0 0.0
    %2010 = vmatmul.mubr.f32.gmra.mrb[0].mxu0 %v1934
    %v2011 = vpop.f32.mrb[0].mxu0
    %v2012 = vadd.f32 0.0, %v2011
    %v2013 = vpop.f32.mrb[0].mxu0
    %2014 = vmatprep.mubr.f32.mxu0 0.0
    %2015 = vmatmul.mubr.f32.gmra.mrb[0].mxu0 %v1937
    %v2016 = vpop.f32.mrb[0].mxu0
    %v2017 = vadd.f32 0.0, %v2016
    %v2018 = vpop.f32.mrb[0].mxu0
    %2019 = vmatprep.mubr.f32.mxu0 0.0
    %2020 = vmatmul.mubr.f32.gmra.mrb[0].mxu0 %v1940
    %v2021 = vpop.f32.mrb[0].mxu0
    %v2022 = vadd.f32 0.0, %v2021
    %v2023 = vpop.f32.mrb[0].mxu0
    %2024 = vmatprep.mubr.f32.mxu0 0.0
    %2025 = vmatmul.mubr.f32.gmra.mrb[0].mxu0 %v1943
    %v2026 = vpop.f32.mrb[0].mxu0
    %v2027 = vadd.f32 0.0, %v2026
    %v2028 = vpop.f32.mrb[0].mxu0
    %2029 = vdwg.mxu0
    %v2031 = vsel %vm860, %v1915, 0
    %v2034 = vsel %vm860, %v1917, 0
    %v2037 = vsel %vm860, %v1919, 0
    %v2040 = vsel %vm860, %v1921, 0
    %2042 = vmatprep.subr.mxu0 0.0
    %2043 = vmatpush1.msra.mxu0 %v1923
    %2044 = vmatprep.subr.mxu0 0.0
    %2045 = vmatpush1.msra.mxu0 0.0
    %2046 = vmatprep.subr.mxu0 0.0
    %2047 = vmatpush1.msra.mxu0 0.0
    %2048 = vmatprep.subr.mxu0 0.0
    %2049 = vmatpush1.msra.mxu0 0.0
    %2050 = vmatprep.subr.mxu0 0.0
    %2051 = vmatpush1.msra.mxu0 0.0
    %2052 = vmatprep.subr.mxu0 0.0
    %2053 = vmatpush1.msra.mxu0 0.0
    %2054 = vmatprep.subr.mxu0 0.0
    %2055 = vmatpush1.msra.mxu0 0.0
    %2056 = vmatprep.subr.mxu0 0.0
    %2057 = vmatpush1.msra.mxu0 0.0
    %2058 = vmatprep.subr.mxu0 0.0
    %2059 = vmatpush1.msra.mxu0 0.0
    %2060 = vmatprep.subr.mxu0 0.0
    %2061 = vmatpush1.msra.mxu0 0.0
    %2062 = vmatprep.subr.mxu0 0.0
    %2063 = vmatpush1.msra.mxu0 0.0
    %2064 = vmatprep.subr.mxu0 0.0
    %2065 = vmatpush1.msra.mxu0 0.0
    %2066 = vmatprep.subr.mxu0 0.0
    %2067 = vmatpush1.msra.mxu0 0.0
    %2068 = vmatprep.subr.mxu0 0.0
    %2069 = vmatpush1.msra.mxu0 0.0
    %2070 = vmatprep.subr.mxu0 0.0
    %2071 = vmatpush1.msra.mxu0 0.0
    %2072 = vmatprep.subr.mxu0 0.0
    %2073 = vmatpush1.msra.mxu0 0.0
    %2074 = vmatprep.subr.mxu0 0.0
    %2075 = vmatpush1.msra.mxu0 0.0
    %2076 = vmatprep.subr.mxu0 0.0
    %2077 = vmatpush1.msra.mxu0 0.0
    %2078 = vmatprep.subr.mxu0 0.0
    %2079 = vmatpush1.msra.mxu0 0.0
    %2080 = vmatprep.subr.mxu0 0.0
    %2081 = vmatpush1.msra.mxu0 0.0
    %2082 = vmatprep.subr.mxu0 0.0
    %2083 = vmatpush1.msra.mxu0 0.0
    %2084 = vmatprep.subr.mxu0 0.0
    %2085 = vmatpush1.msra.mxu0 0.0
    %2086 = vmatprep.subr.mxu0 0.0
    %2087 = vmatpush1.msra.mxu0 0.0
    %2088 = vmatprep.subr.mxu0 0.0
    %2089 = vmatpush1.msra.mxu0 0.0
    %2090 = vmatprep.subr.mxu0 0.0
    %2091 = vmatpush1.msra.mxu0 0.0
    %2092 = vmatprep.subr.mxu0 0.0
    %2093 = vmatpush1.msra.mxu0 0.0
    %2094 = vmatprep.subr.mxu0 0.0
    %2095 = vmatpush1.msra.mxu0 0.0
    %2096 = vmatprep.subr.mxu0 0.0
    %2097 = vmatpush1.msra.mxu0 0.0
    %2098 = vmatprep.subr.mxu0 0.0
    %2099 = vmatpush1.msra.mxu0 0.0
    %2100 = vmatprep.subr.mxu0 0.0
    %2101 = vmatpush1.msra.mxu0 0.0
    %2102 = vmatprep.subr.mxu0 0.0
    %2103 = vmatpush1.msra.mxu0 0.0
    %2104 = vmatprep.subr.mxu0 0.0
    %2105 = vmatpush1.msra.mxu0 0.0
    %2106 = vmatprep.mubr.f32.mxu0 0.0
    %2107 = vmatmul.mubr.f32.gmra.mrb[0].mxu0 %v2031
    %v2108 = vpop.f32.mrb[0].mxu0
    %v2109 = vadd.f32 %v2012, %v2108
    %v2110 = vpop.f32.mrb[0].mxu0
    %2111 = vmatprep.mubr.f32.mxu0 0.0
    %2112 = vmatmul.mubr.f32.gmra.mrb[0].mxu0 %v2034
    %v2113 = vpop.f32.mrb[0].mxu0
    %v2114 = vadd.f32 %v2017, %v2113
    %v2115 = vpop.f32.mrb[0].mxu0
    %2116 = vmatprep.mubr.f32.mxu0 0.0
    %2117 = vmatmul.mubr.f32.gmra.mrb[0].mxu0 %v2037
    %v2118 = vpop.f32.mrb[0].mxu0
    %v2119 = vadd.f32 %v2022, %v2118
    %v2120 = vpop.f32.mrb[0].mxu0
    %2121 = vmatprep.mubr.f32.mxu0 0.0
    %2122 = vmatmul.mubr.f32.gmra.mrb[0].mxu0 %v2040
    %v2123 = vpop.f32.mrb[0].mxu0
    %v2124 = vadd.f32 %v2027, %v2123
    %v2125 = vpop.f32.mrb[0].mxu0
    %2126 = vdwg.mxu0
    %s2127 = scalar_lea.vmem [#allocation5], 2
    %v2128 = vld [vmem:[%s2127] ss:$2 sm:$0xff]
    %s2129 = scalar_lea.vmem [#allocation5], 18
    %v2130 = vld [vmem:[%s2129] ss:$2 sm:$0xff]
    %s2131 = scalar_lea.vmem [#allocation5], 42
    %v2132 = vld [vmem:[%s2131] ss:$2 sm:$0xff]
    %s2133 = scalar_lea.vmem [#allocation5], 58
    %v2134 = vld [vmem:[%s2133] ss:$2 sm:$0xff]
    %v2135 = vld [vmem:[%s1922 + $0x10] sm:$0xff]
    %v2137 = vsel %vm860, %v2128, 0
    %v2140 = vsel %vm860, %v2130, 0
    %v2143 = vsel %vm860, %v2132, 0
    %v2146 = vsel %vm860, %v2134, 0
    %2148 = vmatprep.subr.mxu0 0.0
    %2149 = vmatpush1.msra.mxu0 %v2135
    %2150 = vmatprep.subr.mxu0 0.0
    %2151 = vmatpush1.msra.mxu0 0.0
    %2152 = vmatprep.subr.mxu0 0.0
    %2153 = vmatpush1.msra.mxu0 0.0
    %2154 = vmatprep.subr.mxu0 0.0
    %2155 = vmatpush1.msra.mxu0 0.0
    %2156 = vmatprep.subr.mxu0 0.0
    %2157 = vmatpush1.msra.mxu0 0.0
    %2158 = vmatprep.subr.mxu0 0.0
    %2159 = vmatpush1.msra.mxu0 0.0
    %2160 = vmatprep.subr.mxu0 0.0
    %2161 = vmatpush1.msra.mxu0 0.0
    %2162 = vmatprep.subr.mxu0 0.0
    %2163 = vmatpush1.msra.mxu0 0.0
    %2164 = vmatprep.subr.mxu0 0.0
    %2165 = vmatpush1.msra.mxu0 0.0
    %2166 = vmatprep.subr.mxu0 0.0
    %2167 = vmatpush1.msra.mxu0 0.0
    %2168 = vmatprep.subr.mxu0 0.0
    %2169 = vmatpush1.msra.mxu0 0.0
    %2170 = vmatprep.subr.mxu0 0.0
    %2171 = vmatpush1.msra.mxu0 0.0
    %2172 = vmatprep.subr.mxu0 0.0
    %2173 = vmatpush1.msra.mxu0 0.0
    %2174 = vmatprep.subr.mxu0 0.0
    %2175 = vmatpush1.msra.mxu0 0.0
    %2176 = vmatprep.subr.mxu0 0.0
    %2177 = vmatpush1.msra.mxu0 0.0
    %2178 = vmatprep.subr.mxu0 0.0
    %2179 = vmatpush1.msra.mxu0 0.0
    %2180 = vmatprep.subr.mxu0 0.0
    %2181 = vmatpush1.msra.mxu0 0.0
    %2182 = vmatprep.subr.mxu0 0.0
    %2183 = vmatpush1.msra.mxu0 0.0
    %2184 = vmatprep.subr.mxu0 0.0
    %2185 = vmatpush1.msra.mxu0 0.0
    %2186 = vmatprep.subr.mxu0 0.0
    %2187 = vmatpush1.msra.mxu0 0.0
    %2188 = vmatprep.subr.mxu0 0.0
    %2189 = vmatpush1.msra.mxu0 0.0
    %2190 = vmatprep.subr.mxu0 0.0
    %2191 = vmatpush1.msra.mxu0 0.0
    %2192 = vmatprep.subr.mxu0 0.0
    %2193 = vmatpush1.msra.mxu0 0.0
    %2194 = vmatprep.subr.mxu0 0.0
    %2195 = vmatpush1.msra.mxu0 0.0
    %2196 = vmatprep.subr.mxu0 0.0
    %2197 = vmatpush1.msra.mxu0 0.0
    %2198 = vmatprep.subr.mxu0 0.0
    %2199 = vmatpush1.msra.mxu0 0.0
    %2200 = vmatprep.subr.mxu0 0.0
    %2201 = vmatpush1.msra.mxu0 0.0
    %2202 = vmatprep.subr.mxu0 0.0
    %2203 = vmatpush1.msra.mxu0 0.0
    %2204 = vmatprep.subr.mxu0 0.0
    %2205 = vmatpush1.msra.mxu0 0.0
    %2206 = vmatprep.subr.mxu0 0.0
    %2207 = vmatpush1.msra.mxu0 0.0
    %2208 = vmatprep.subr.mxu0 0.0
    %2209 = vmatpush1.msra.mxu0 0.0
    %2210 = vmatprep.subr.mxu0 0.0
    %2211 = vmatpush1.msra.mxu0 0.0
    %2212 = vmatprep.mubr.f32.mxu0 0.0
    %2213 = vmatmul.mubr.f32.gmra.mrb[0].mxu0 %v2137
    %v2214 = vpop.f32.mrb[0].mxu0
    %v2215 = vadd.f32 0.0, %v2214
    %v2216 = vpop.f32.mrb[0].mxu0
    %2217 = vmatprep.mubr.f32.mxu0 0.0
    %2218 = vmatmul.mubr.f32.gmra.mrb[0].mxu0 %v2140
    %v2219 = vpop.f32.mrb[0].mxu0
    %v2220 = vadd.f32 0.0, %v2219
    %v2221 = vpop.f32.mrb[0].mxu0
    %2222 = vmatprep.mubr.f32.mxu0 0.0
    %2223 = vmatmul.mubr.f32.gmra.mrb[0].mxu0 %v2143
    %v2224 = vpop.f32.mrb[0].mxu0
    %v2225 = vadd.f32 0.0, %v2224
    %v2226 = vpop.f32.mrb[0].mxu0
    %2227 = vmatprep.mubr.f32.mxu0 0.0
    %2228 = vmatmul.mubr.f32.gmra.mrb[0].mxu0 %v2146
    %v2229 = vpop.f32.mrb[0].mxu0
    %v2230 = vadd.f32 0.0, %v2229
    %v2231 = vpop.f32.mrb[0].mxu0
    %2232 = vdwg.mxu0
    %v2233 = vadd.f32 %v2109, %v2215
    %v2234 = vadd.f32 %v2114, %v2220
    %v2235 = vadd.f32 %v2119, %v2225
    %v2236 = vadd.f32 %v2124, %v2230
    %v2237 = vld [vmem:[%s1 + $0x8] sm:$0x1]
    %v2238 = vld [vmem:[%s1 + $0x9] sm:$0x1]
    %v2239 = vlaneseq
    %v2240 = vshrl.u32 %v2239, 7
    %v2241 = vsub.s32 0, %v2240
    %v2242 = vrot.slane %v2237, %v2241
    %v2243 = vmul.f32 %v2233, %v2242
    %v2244 = vmul.f32 %v2234, %v2242
    %v2245 = vmul.f32 %v2235, %v2242
    %v2246 = vmul.f32 %v2236, %v2242
    %v2247 = vlaneseq
    %v2248 = vshrl.u32 %v2247, 7
    %v2249 = vsub.s32 0, %v2248
    %v2250 = vrot.slane %v2238, %v2249
    %v2251 = vadd.f32 %v2243, %v2250
    %v2252 = vadd.f32 %v2244, %v2250
    %v2253 = vadd.f32 %v2245, %v2250
    %v2254 = vadd.f32 %v2246, %v2250
    %v2255 = vmax.f32 %v2251, 0.0
    %v2256 = vmax.f32 %v2252, 0.0
    %v2257 = vmax.f32 %v2253, 0.0
    %v2258 = vmax.f32 %v2254, 0.0
    %vm2259 = vcmask 122880
    %2260 = vst.msk [vmem:[#allocation6] sm:$0x1] %vm2259, 0.0
    %2261 = vst.msk [vmem:[#allocation6 + $0x18] sm:$0x1] %vm2259, 0.0
    %2262 = vst.msk [vmem:[#allocation6 + $0x11] sm:$0x1] %vm2259, 0.0
    %2263 = vst.msk [vmem:[#allocation6 + $0x29] sm:$0x1] %vm2259, 0.0
    %vm2264 = vcmask 130048
    %2265 = vst.msk [vmem:[#allocation6 + $0x1] sm:$0xff] %vm2264, %v2255
    %2266 = vst.msk [vmem:[#allocation6 + $0x9] sm:$0xff] %vm2264, %v2256
    %2267 = vst.msk [vmem:[#allocation6 + $0x19] sm:$0xff] %vm2264, %v2257
    %2268 = vst.msk [vmem:[#allocation6 + $0x21] sm:$0xff] %vm2264, %v2258
    %v2269 = vld [vmem:[#allocation6] sm:$0xff]
    %v2270 = vld [vmem:[#allocation6 + $0x8] sm:$0xff]
    %v2271 = vld [vmem:[#allocation6 + $0x18] sm:$0xff]
    %v2272 = vld [vmem:[#allocation6 + $0x20] sm:$0xff]
    %s2273 = scalar_lea.vmem %s2, 192
    %v2274 = vld [vmem:[%s2273] sm:$0xff]
    %v2275 = vld [vmem:[%s2273 + $0x8] sm:$0xff]
    %v2276 = vld [vmem:[#allocation6 + $0x1] sm:$0xff]
    %v2277 = vld [vmem:[#allocation6 + $0x9] sm:$0xff]
    %v2278 = vld [vmem:[#allocation6 + $0x19] sm:$0xff]
    %v2279 = vld [vmem:[#allocation6 + $0x21] sm:$0xff]
    %v2280 = vld [vmem:[%s2273 + $0x10] sm:$0xff]
    %v2281 = vld [vmem:[%s2273 + $0x18] sm:$0xff]
    %v2283 = vsel %vm2264, %v2276, 0
    %v2286 = vsel %vm2264, %v2277, 0
    %v2289 = vsel %vm2264, %v2278, 0
    %v2292 = vsel %vm2264, %v2279, 0
    %2294 = vmatprep.subr.mxu0 0.0
    %2295 = vmatpush1.msra.mxu0 %v2280
    %2296 = vmatprep.subr.mxu0 0.0
    %2297 = vmatpush1.msra.mxu0 %v2281
    %2298 = vmatprep.subr.mxu0 0.0
    %2299 = vmatpush1.msra.mxu0 0.0
    %2300 = vmatprep.subr.mxu0 0.0
    %2301 = vmatpush1.msra.mxu0 0.0
    %2302 = vmatprep.subr.mxu0 0.0
    %2303 = vmatpush1.msra.mxu0 0.0
    %2304 = vmatprep.subr.mxu0 0.0
    %2305 = vmatpush1.msra.mxu0 0.0
    %2306 = vmatprep.subr.mxu0 0.0
    %2307 = vmatpush1.msra.mxu0 0.0
    %2308 = vmatprep.subr.mxu0 0.0
    %2309 = vmatpush1.msra.mxu0 0.0
    %2310 = vmatprep.subr.mxu0 0.0
    %2311 = vmatpush1.msra.mxu0 0.0
    %2312 = vmatprep.subr.mxu0 0.0
    %2313 = vmatpush1.msra.mxu0 0.0
    %2314 = vmatprep.subr.mxu0 0.0
    %2315 = vmatpush1.msra.mxu0 0.0
    %2316 = vmatprep.subr.mxu0 0.0
    %2317 = vmatpush1.msra.mxu0 0.0
    %2318 = vmatprep.subr.mxu0 0.0
    %2319 = vmatpush1.msra.mxu0 0.0
    %2320 = vmatprep.subr.mxu0 0.0
    %2321 = vmatpush1.msra.mxu0 0.0
    %2322 = vmatprep.subr.mxu0 0.0
    %2323 = vmatpush1.msra.mxu0 0.0
    %2324 = vmatprep.subr.mxu0 0.0
    %2325 = vmatpush1.msra.mxu0 0.0
    %2326 = vmatprep.subr.mxu0 0.0
    %2327 = vmatpush1.msra.mxu0 0.0
    %2328 = vmatprep.subr.mxu0 0.0
    %2329 = vmatpush1.msra.mxu0 0.0
    %2330 = vmatprep.subr.mxu0 0.0
    %2331 = vmatpush1.msra.mxu0 0.0
    %2332 = vmatprep.subr.mxu0 0.0
    %2333 = vmatpush1.msra.mxu0 0.0
    %2334 = vmatprep.subr.mxu0 0.0
    %2335 = vmatpush1.msra.mxu0 0.0
    %2336 = vmatprep.subr.mxu0 0.0
    %2337 = vmatpush1.msra.mxu0 0.0
    %2338 = vmatprep.subr.mxu0 0.0
    %2339 = vmatpush1.msra.mxu0 0.0
    %2340 = vmatprep.subr.mxu0 0.0
    %2341 = vmatpush1.msra.mxu0 0.0
    %2342 = vmatprep.subr.mxu0 0.0
    %2343 = vmatpush1.msra.mxu0 0.0
    %2344 = vmatprep.subr.mxu0 0.0
    %2345 = vmatpush1.msra.mxu0 0.0
    %2346 = vmatprep.subr.mxu0 0.0
    %2347 = vmatpush1.msra.mxu0 0.0
    %2348 = vmatprep.subr.mxu0 0.0
    %2349 = vmatpush1.msra.mxu0 0.0
    %2350 = vmatprep.subr.mxu0 0.0
    %2351 = vmatpush1.msra.mxu0 0.0
    %2352 = vmatprep.subr.mxu0 0.0
    %2353 = vmatpush1.msra.mxu0 0.0
    %2354 = vmatprep.subr.mxu0 0.0
    %2355 = vmatpush1.msra.mxu0 0.0
    %2356 = vmatprep.subr.mxu0 0.0
    %2357 = vmatpush1.msra.mxu0 0.0
    %2358 = vmatprep.mubr.f32.mxu0 0.0
    %2359 = vmatmul.mubr.f32.gmra.mrb[0].mxu0 %v2283
    %v2360 = vpop.f32.mrb[0].mxu0
    %v2361 = vadd.f32 0.0, %v2360
    %v2362 = vpop.f32.mrb[0].mxu0
    %2363 = vmatprep.mubr.f32.mxu0 0.0
    %2364 = vmatmul.mubr.f32.gmra.mrb[0].mxu0 %v2286
    %v2365 = vpop.f32.mrb[0].mxu0
    %v2366 = vadd.f32 0.0, %v2365
    %v2367 = vpop.f32.mrb[0].mxu0
    %2368 = vmatprep.mubr.f32.mxu0 0.0
    %2369 = vmatmul.mubr.f32.gmra.mrb[0].mxu0 %v2289
    %v2370 = vpop.f32.mrb[0].mxu0
    %v2371 = vadd.f32 0.0, %v2370
    %v2372 = vpop.f32.mrb[0].mxu0
    %2373 = vmatprep.mubr.f32.mxu0 0.0
    %2374 = vmatmul.mubr.f32.gmra.mrb[0].mxu0 %v2292
    %v2375 = vpop.f32.mrb[0].mxu0
    %v2376 = vadd.f32 0.0, %v2375
    %v2377 = vpop.f32.mrb[0].mxu0
    %2378 = vdwg.mxu0
    %v2380 = vsel %vm2264, %v2269, 0
    %v2383 = vsel %vm2264, %v2270, 0
    %v2386 = vsel %vm2264, %v2271, 0
    %v2389 = vsel %vm2264, %v2272, 0
    %2391 = vmatprep.subr.mxu0 0.0
    %2392 = vmatpush1.msra.mxu0 %v2274
    %2393 = vmatprep.subr.mxu0 0.0
    %2394 = vmatpush1.msra.mxu0 %v2275
    %2395 = vmatprep.subr.mxu0 0.0
    %2396 = vmatpush1.msra.mxu0 0.0
    %2397 = vmatprep.subr.mxu0 0.0
    %2398 = vmatpush1.msra.mxu0 0.0
    %2399 = vmatprep.subr.mxu0 0.0
    %2400 = vmatpush1.msra.mxu0 0.0
    %2401 = vmatprep.subr.mxu0 0.0
    %2402 = vmatpush1.msra.mxu0 0.0
    %2403 = vmatprep.subr.mxu0 0.0
    %2404 = vmatpush1.msra.mxu0 0.0
    %2405 = vmatprep.subr.mxu0 0.0
    %2406 = vmatpush1.msra.mxu0 0.0
    %2407 = vmatprep.subr.mxu0 0.0
    %2408 = vmatpush1.msra.mxu0 0.0
    %2409 = vmatprep.subr.mxu0 0.0
    %2410 = vmatpush1.msra.mxu0 0.0
    %2411 = vmatprep.subr.mxu0 0.0
    %2412 = vmatpush1.msra.mxu0 0.0
    %2413 = vmatprep.subr.mxu0 0.0
    %2414 = vmatpush1.msra.mxu0 0.0
    %2415 = vmatprep.subr.mxu0 0.0
    %2416 = vmatpush1.msra.mxu0 0.0
    %2417 = vmatprep.subr.mxu0 0.0
    %2418 = vmatpush1.msra.mxu0 0.0
    %2419 = vmatprep.subr.mxu0 0.0
    %2420 = vmatpush1.msra.mxu0 0.0
    %2421 = vmatprep.subr.mxu0 0.0
    %2422 = vmatpush1.msra.mxu0 0.0
    %2423 = vmatprep.subr.mxu0 0.0
    %2424 = vmatpush1.msra.mxu0 0.0
    %2425 = vmatprep.subr.mxu0 0.0
    %2426 = vmatpush1.msra.mxu0 0.0
    %2427 = vmatprep.subr.mxu0 0.0
    %2428 = vmatpush1.msra.mxu0 0.0
    %2429 = vmatprep.subr.mxu0 0.0
    %2430 = vmatpush1.msra.mxu0 0.0
    %2431 = vmatprep.subr.mxu0 0.0
    %2432 = vmatpush1.msra.mxu0 0.0
    %2433 = vmatprep.subr.mxu0 0.0
    %2434 = vmatpush1.msra.mxu0 0.0
    %2435 = vmatprep.subr.mxu0 0.0
    %2436 = vmatpush1.msra.mxu0 0.0
    %2437 = vmatprep.subr.mxu0 0.0
    %2438 = vmatpush1.msra.mxu0 0.0
    %2439 = vmatprep.subr.mxu0 0.0
    %2440 = vmatpush1.msra.mxu0 0.0
    %2441 = vmatprep.subr.mxu0 0.0
    %2442 = vmatpush1.msra.mxu0 0.0
    %2443 = vmatprep.subr.mxu0 0.0
    %2444 = vmatpush1.msra.mxu0 0.0
    %2445 = vmatprep.subr.mxu0 0.0
    %2446 = vmatpush1.msra.mxu0 0.0
    %2447 = vmatprep.subr.mxu0 0.0
    %2448 = vmatpush1.msra.mxu0 0.0
    %2449 = vmatprep.subr.mxu0 0.0
    %2450 = vmatpush1.msra.mxu0 0.0
    %2451 = vmatprep.subr.mxu0 0.0
    %2452 = vmatpush1.msra.mxu0 0.0
    %2453 = vmatprep.subr.mxu0 0.0
    %2454 = vmatpush1.msra.mxu0 0.0
    %2455 = vmatprep.mubr.f32.mxu0 0.0
    %2456 = vmatmul.mubr.f32.gmra.mrb[0].mxu0 %v2380
    %v2457 = vpop.f32.mrb[0].mxu0
    %v2458 = vadd.f32 %v2361, %v2457
    %v2459 = vpop.f32.mrb[0].mxu0
    %2460 = vmatprep.mubr.f32.mxu0 0.0
    %2461 = vmatmul.mubr.f32.gmra.mrb[0].mxu0 %v2383
    %v2462 = vpop.f32.mrb[0].mxu0
    %v2463 = vadd.f32 %v2366, %v2462
    %v2464 = vpop.f32.mrb[0].mxu0
    %2465 = vmatprep.mubr.f32.mxu0 0.0
    %2466 = vmatmul.mubr.f32.gmra.mrb[0].mxu0 %v2386
    %v2467 = vpop.f32.mrb[0].mxu0
    %v2468 = vadd.f32 %v2371, %v2467
    %v2469 = vpop.f32.mrb[0].mxu0
    %2470 = vmatprep.mubr.f32.mxu0 0.0
    %2471 = vmatmul.mubr.f32.gmra.mrb[0].mxu0 %v2389
    %v2472 = vpop.f32.mrb[0].mxu0
    %v2473 = vadd.f32 %v2376, %v2472
    %v2474 = vpop.f32.mrb[0].mxu0
    %2475 = vdwg.mxu0
    %v2476 = vld [vmem:[#allocation6 + $0x2] sm:$0xff]
    %v2477 = vld [vmem:[#allocation6 + $0xa] sm:$0xff]
    %v2478 = vld [vmem:[#allocation6 + $0x1a] sm:$0xff]
    %v2479 = vld [vmem:[#allocation6 + $0x22] sm:$0xff]
    %v2480 = vld [vmem:[%s2273 + $0x20] sm:$0xff]
    %v2481 = vld [vmem:[%s2273 + $0x28] sm:$0xff]
    %v2483 = vsel %vm2264, %v2476, 0
    %v2486 = vsel %vm2264, %v2477, 0
    %v2489 = vsel %vm2264, %v2478, 0
    %v2492 = vsel %vm2264, %v2479, 0
    %2494 = vmatprep.subr.mxu0 0.0
    %2495 = vmatpush1.msra.mxu0 %v2480
    %2496 = vmatprep.subr.mxu0 0.0
    %2497 = vmatpush1.msra.mxu0 %v2481
    %2498 = vmatprep.subr.mxu0 0.0
    %2499 = vmatpush1.msra.mxu0 0.0
    %2500 = vmatprep.subr.mxu0 0.0
    %2501 = vmatpush1.msra.mxu0 0.0
    %2502 = vmatprep.subr.mxu0 0.0
    %2503 = vmatpush1.msra.mxu0 0.0
    %2504 = vmatprep.subr.mxu0 0.0
    %2505 = vmatpush1.msra.mxu0 0.0
    %2506 = vmatprep.subr.mxu0 0.0
    %2507 = vmatpush1.msra.mxu0 0.0
    %2508 = vmatprep.subr.mxu0 0.0
    %2509 = vmatpush1.msra.mxu0 0.0
    %2510 = vmatprep.subr.mxu0 0.0
    %2511 = vmatpush1.msra.mxu0 0.0
    %2512 = vmatprep.subr.mxu0 0.0
    %2513 = vmatpush1.msra.mxu0 0.0
    %2514 = vmatprep.subr.mxu0 0.0
    %2515 = vmatpush1.msra.mxu0 0.0
    %2516 = vmatprep.subr.mxu0 0.0
    %2517 = vmatpush1.msra.mxu0 0.0
    %2518 = vmatprep.subr.mxu0 0.0
    %2519 = vmatpush1.msra.mxu0 0.0
    %2520 = vmatprep.subr.mxu0 0.0
    %2521 = vmatpush1.msra.mxu0 0.0
    %2522 = vmatprep.subr.mxu0 0.0
    %2523 = vmatpush1.msra.mxu0 0.0
    %2524 = vmatprep.subr.mxu0 0.0
    %2525 = vmatpush1.msra.mxu0 0.0
    %2526 = vmatprep.subr.mxu0 0.0
    %2527 = vmatpush1.msra.mxu0 0.0
    %2528 = vmatprep.subr.mxu0 0.0
    %2529 = vmatpush1.msra.mxu0 0.0
    %2530 = vmatprep.subr.mxu0 0.0
    %2531 = vmatpush1.msra.mxu0 0.0
    %2532 = vmatprep.subr.mxu0 0.0
    %2533 = vmatpush1.msra.mxu0 0.0
    %2534 = vmatprep.subr.mxu0 0.0
    %2535 = vmatpush1.msra.mxu0 0.0
    %2536 = vmatprep.subr.mxu0 0.0
    %2537 = vmatpush1.msra.mxu0 0.0
    %2538 = vmatprep.subr.mxu0 0.0
    %2539 = vmatpush1.msra.mxu0 0.0
    %2540 = vmatprep.subr.mxu0 0.0
    %2541 = vmatpush1.msra.mxu0 0.0
    %2542 = vmatprep.subr.mxu0 0.0
    %2543 = vmatpush1.msra.mxu0 0.0
    %2544 = vmatprep.subr.mxu0 0.0
    %2545 = vmatpush1.msra.mxu0 0.0
    %2546 = vmatprep.subr.mxu0 0.0
    %2547 = vmatpush1.msra.mxu0 0.0
    %2548 = vmatprep.subr.mxu0 0.0
    %2549 = vmatpush1.msra.mxu0 0.0
    %2550 = vmatprep.subr.mxu0 0.0
    %2551 = vmatpush1.msra.mxu0 0.0
    %2552 = vmatprep.subr.mxu0 0.0
    %2553 = vmatpush1.msra.mxu0 0.0
    %2554 = vmatprep.subr.mxu0 0.0
    %2555 = vmatpush1.msra.mxu0 0.0
    %2556 = vmatprep.subr.mxu0 0.0
    %2557 = vmatpush1.msra.mxu0 0.0
    %2558 = vmatprep.mubr.f32.mxu0 0.0
    %2559 = vmatmul.mubr.f32.gmra.mrb[0].mxu0 %v2483
    %v2560 = vpop.f32.mrb[0].mxu0
    %v2561 = vadd.f32 0.0, %v2560
    %v2562 = vpop.f32.mrb[0].mxu0
    %2563 = vmatprep.mubr.f32.mxu0 0.0
    %2564 = vmatmul.mubr.f32.gmra.mrb[0].mxu0 %v2486
    %v2565 = vpop.f32.mrb[0].mxu0
    %v2566 = vadd.f32 0.0, %v2565
    %v2567 = vpop.f32.mrb[0].mxu0
    %2568 = vmatprep.mubr.f32.mxu0 0.0
    %2569 = vmatmul.mubr.f32.gmra.mrb[0].mxu0 %v2489
    %v2570 = vpop.f32.mrb[0].mxu0
    %v2571 = vadd.f32 0.0, %v2570
    %v2572 = vpop.f32.mrb[0].mxu0
    %2573 = vmatprep.mubr.f32.mxu0 0.0
    %2574 = vmatmul.mubr.f32.gmra.mrb[0].mxu0 %v2492
    %v2575 = vpop.f32.mrb[0].mxu0
    %v2576 = vadd.f32 0.0, %v2575
    %v2577 = vpop.f32.mrb[0].mxu0
    %2578 = vdwg.mxu0
    %v2579 = vadd.f32 %v2458, %v2561
    %v2580 = vadd.f32 %v2463, %v2566
    %v2581 = vadd.f32 %v2468, %v2571
    %v2582 = vadd.f32 %v2473, %v2576
    %v2583 = vld [vmem:[%s1 + $0xa] sm:$0x1]
    %v2584 = vld [vmem:[%s1 + $0xb] sm:$0x1]
    %v2585 = vlaneseq
    %v2586 = vshrl.u32 %v2585, 7
    %v2587 = vsub.s32 0, %v2586
    %v2588 = vrot.slane %v2583, %v2587
    %v2589 = vmul.f32 %v2579, %v2588
    %v2590 = vmul.f32 %v2580, %v2588
    %v2591 = vmul.f32 %v2581, %v2588
    %v2592 = vmul.f32 %v2582, %v2588
    %v2593 = vlaneseq
    %v2594 = vshrl.u32 %v2593, 7
    %v2595 = vsub.s32 0, %v2594
    %v2596 = vrot.slane %v2584, %v2595
    %v2597 = vadd.f32 %v2589, %v2596
    %v2598 = vadd.f32 %v2590, %v2596
    %v2599 = vadd.f32 %v2591, %v2596
    %v2600 = vadd.f32 %v2592, %v2596
    %v2601 = vmax.f32 %v2597, 0.0
    %v2602 = vmax.f32 %v2598, 0.0
    %v2603 = vmax.f32 %v2599, 0.0
    %v2604 = vmax.f32 %v2600, 0.0
    %v2605 = vld [vmem:[%s3] sm:$0xff]
    %v2607 = vsel %vm860, %v1865, 0
    %v2610 = vsel %vm860, %v1866, 0
    %v2613 = vsel %vm860, %v1867, 0
    %v2616 = vsel %vm860, %v1868, 0
    %2618 = vmatprep.subr.mxu0 0.0
    %2619 = vmatpush1.msra.mxu0 %v2605
    %2620 = vmatprep.subr.mxu0 0.0
    %2621 = vmatpush1.msra.mxu0 0.0
    %2622 = vmatprep.subr.mxu0 0.0
    %2623 = vmatpush1.msra.mxu0 0.0
    %2624 = vmatprep.subr.mxu0 0.0
    %2625 = vmatpush1.msra.mxu0 0.0
    %2626 = vmatprep.subr.mxu0 0.0
    %2627 = vmatpush1.msra.mxu0 0.0
    %2628 = vmatprep.subr.mxu0 0.0
    %2629 = vmatpush1.msra.mxu0 0.0
    %2630 = vmatprep.subr.mxu0 0.0
    %2631 = vmatpush1.msra.mxu0 0.0
    %2632 = vmatprep.subr.mxu0 0.0
    %2633 = vmatpush1.msra.mxu0 0.0
    %2634 = vmatprep.subr.mxu0 0.0
    %2635 = vmatpush1.msra.mxu0 0.0
    %2636 = vmatprep.subr.mxu0 0.0
    %2637 = vmatpush1.msra.mxu0 0.0
    %2638 = vmatprep.subr.mxu0 0.0
    %2639 = vmatpush1.msra.mxu0 0.0
    %2640 = vmatprep.subr.mxu0 0.0
    %2641 = vmatpush1.msra.mxu0 0.0
    %2642 = vmatprep.subr.mxu0 0.0
    %2643 = vmatpush1.msra.mxu0 0.0
    %2644 = vmatprep.subr.mxu0 0.0
    %2645 = vmatpush1.msra.mxu0 0.0
    %2646 = vmatprep.subr.mxu0 0.0
    %2647 = vmatpush1.msra.mxu0 0.0
    %2648 = vmatprep.subr.mxu0 0.0
    %2649 = vmatpush1.msra.mxu0 0.0
    %2650 = vmatprep.subr.mxu0 0.0
    %2651 = vmatpush1.msra.mxu0 0.0
    %2652 = vmatprep.subr.mxu0 0.0
    %2653 = vmatpush1.msra.mxu0 0.0
    %2654 = vmatprep.subr.mxu0 0.0
    %2655 = vmatpush1.msra.mxu0 0.0
    %2656 = vmatprep.subr.mxu0 0.0
    %2657 = vmatpush1.msra.mxu0 0.0
    %2658 = vmatprep.subr.mxu0 0.0
    %2659 = vmatpush1.msra.mxu0 0.0
    %2660 = vmatprep.subr.mxu0 0.0
    %2661 = vmatpush1.msra.mxu0 0.0
    %2662 = vmatprep.subr.mxu0 0.0
    %2663 = vmatpush1.msra.mxu0 0.0
    %2664 = vmatprep.subr.mxu0 0.0
    %2665 = vmatpush1.msra.mxu0 0.0
    %2666 = vmatprep.subr.mxu0 0.0
    %2667 = vmatpush1.msra.mxu0 0.0
    %2668 = vmatprep.subr.mxu0 0.0
    %2669 = vmatpush1.msra.mxu0 0.0
    %2670 = vmatprep.subr.mxu0 0.0
    %2671 = vmatpush1.msra.mxu0 0.0
    %2672 = vmatprep.subr.mxu0 0.0
    %2673 = vmatpush1.msra.mxu0 0.0
    %2674 = vmatprep.subr.mxu0 0.0
    %2675 = vmatpush1.msra.mxu0 0.0
    %2676 = vmatprep.subr.mxu0 0.0
    %2677 = vmatpush1.msra.mxu0 0.0
    %2678 = vmatprep.subr.mxu0 0.0
    %2679 = vmatpush1.msra.mxu0 0.0
    %2680 = vmatprep.subr.mxu0 0.0
    %2681 = vmatpush1.msra.mxu0 0.0
    %2682 = vmatprep.mubr.f32.mxu0 0.0
    %2683 = vmatmul.mubr.f32.gmra.mrb[0].mxu0 %v2607
    %v2684 = vpop.f32.mrb[0].mxu0
    %v2685 = vadd.f32 0.0, %v2684
    %v2686 = vpop.f32.mrb[0].mxu0
    %2687 = vmatprep.mubr.f32.mxu0 0.0
    %2688 = vmatmul.mubr.f32.gmra.mrb[0].mxu0 %v2610
    %v2689 = vpop.f32.mrb[0].mxu0
    %v2690 = vadd.f32 0.0, %v2689
    %v2691 = vpop.f32.mrb[0].mxu0
    %2692 = vmatprep.mubr.f32.mxu0 0.0
    %2693 = vmatmul.mubr.f32.gmra.mrb[0].mxu0 %v2613
    %v2694 = vpop.f32.mrb[0].mxu0
    %v2695 = vadd.f32 0.0, %v2694
    %v2696 = vpop.f32.mrb[0].mxu0
    %2697 = vmatprep.mubr.f32.mxu0 0.0
    %2698 = vmatmul.mubr.f32.gmra.mrb[0].mxu0 %v2616
    %v2699 = vpop.f32.mrb[0].mxu0
    %v2700 = vadd.f32 0.0, %v2699
    %v2701 = vpop.f32.mrb[0].mxu0
    %2702 = vdwg.mxu0
    %v2703 = vadd.f32 %v2601, %v2685
    %v2704 = vadd.f32 %v2602, %v2690
    %v2705 = vadd.f32 %v2603, %v2695
    %v2706 = vadd.f32 %v2604, %v2700
    %v2707 = vld [vmem:[%s1 + $0xc] sm:$0x1]
    %v2708 = vld [vmem:[%s1 + $0xd] sm:$0x1]
    %v2709 = vlaneseq
    %v2710 = vshrl.u32 %v2709, 7
    %v2711 = vsub.s32 0, %v2710
    %v2712 = vrot.slane %v2707, %v2711
    %v2713 = vmul.f32 %v2703, %v2712
    %v2714 = vmul.f32 %v2704, %v2712
    %v2715 = vmul.f32 %v2705, %v2712
    %v2716 = vmul.f32 %v2706, %v2712
    %v2717 = vlaneseq
    %v2718 = vshrl.u32 %v2717, 7
    %v2719 = vsub.s32 0, %v2718
    %v2720 = vrot.slane %v2708, %v2719
    %v2721 = vadd.f32 %v2713, %v2720
    %v2722 = vadd.f32 %v2714, %v2720
    %v2723 = vadd.f32 %v2715, %v2720
    %v2724 = vadd.f32 %v2716, %v2720
    %v2725 = vmax.f32 %v2721, 0.0
    %v2726 = vmax.f32 %v2722, 0.0
    %v2727 = vmax.f32 %v2723, 0.0
    %v2728 = vmax.f32 %v2724, 0.0
    %2729 = vst.msk [vmem:[#allocation8] sm:$0x1] %vm2259, 0.0
    %2730 = vst.msk [vmem:[#allocation8 + $0x18] sm:$0x1] %vm2259, 0.0
    %2731 = vst.msk [vmem:[#allocation8 + $0x11] sm:$0x1] %vm2259, 0.0
    %2732 = vst.msk [vmem:[#allocation8 + $0x29] sm:$0x1] %vm2259, 0.0
    %2733 = vst.msk [vmem:[#allocation8 + $0x1] sm:$0xff] %vm2264, %v2725
    %2734 = vst.msk [vmem:[#allocation8 + $0x9] sm:$0xff] %vm2264, %v2726
    %2735 = vst.msk [vmem:[#allocation8 + $0x19] sm:$0xff] %vm2264, %v2727
    %2736 = vst.msk [vmem:[#allocation8 + $0x21] sm:$0xff] %vm2264, %v2728
    %v2737 = vld [vmem:[#allocation8] sm:$0xff]
    %v2738 = vld [vmem:[#allocation8 + $0x8] sm:$0xff]
    %v2739 = vld [vmem:[#allocation8 + $0x18] sm:$0xff]
    %v2740 = vld [vmem:[#allocation8 + $0x20] sm:$0xff]
    %s2741 = scalar_lea.vmem %s2, 240
    %v2742 = vld [vmem:[%s2741] sm:$0xff]
    %v2743 = vld [vmem:[%s2741 + $0x8] sm:$0xff]
    %v2744 = vld [vmem:[#allocation8 + $0x1] sm:$0xff]
    %v2745 = vld [vmem:[#allocation8 + $0x9] sm:$0xff]
    %v2746 = vld [vmem:[#allocation8 + $0x19] sm:$0xff]
    %v2747 = vld [vmem:[#allocation8 + $0x21] sm:$0xff]
    %v2748 = vld [vmem:[%s2741 + $0x10] sm:$0xff]
    %v2749 = vld [vmem:[%s2741 + $0x18] sm:$0xff]
    %v2751 = vsel %vm2264, %v2744, 0
    %v2754 = vsel %vm2264, %v2745, 0
    %v2757 = vsel %vm2264, %v2746, 0
    %v2760 = vsel %vm2264, %v2747, 0
    %2762 = vmatprep.subr.mxu0 0.0
    %2763 = vmatpush1.msra.mxu0 %v2748
    %2764 = vmatprep.subr.mxu0 0.0
    %2765 = vmatpush1.msra.mxu0 %v2749
    %2766 = vmatprep.subr.mxu0 0.0
    %2767 = vmatpush1.msra.mxu0 0.0
    %2768 = vmatprep.subr.mxu0 0.0
    %2769 = vmatpush1.msra.mxu0 0.0
    %2770 = vmatprep.subr.mxu0 0.0
    %2771 = vmatpush1.msra.mxu0 0.0
    %2772 = vmatprep.subr.mxu0 0.0
    %2773 = vmatpush1.msra.mxu0 0.0
    %2774 = vmatprep.subr.mxu0 0.0
    %2775 = vmatpush1.msra.mxu0 0.0
    %2776 = vmatprep.subr.mxu0 0.0
    %2777 = vmatpush1.msra.mxu0 0.0
    %2778 = vmatprep.subr.mxu0 0.0
    %2779 = vmatpush1.msra.mxu0 0.0
    %2780 = vmatprep.subr.mxu0 0.0
    %2781 = vmatpush1.msra.mxu0 0.0
    %2782 = vmatprep.subr.mxu0 0.0
    %2783 = vmatpush1.msra.mxu0 0.0
    %2784 = vmatprep.subr.mxu0 0.0
    %2785 = vmatpush1.msra.mxu0 0.0
    %2786 = vmatprep.subr.mxu0 0.0
    %2787 = vmatpush1.msra.mxu0 0.0
    %2788 = vmatprep.subr.mxu0 0.0
    %2789 = vmatpush1.msra.mxu0 0.0
    %2790 = vmatprep.subr.mxu0 0.0
    %2791 = vmatpush1.msra.mxu0 0.0
    %2792 = vmatprep.subr.mxu0 0.0
    %2793 = vmatpush1.msra.mxu0 0.0
    %2794 = vmatprep.subr.mxu0 0.0
    %2795 = vmatpush1.msra.mxu0 0.0
    %2796 = vmatprep.subr.mxu0 0.0
    %2797 = vmatpush1.msra.mxu0 0.0
    %2798 = vmatprep.subr.mxu0 0.0
    %2799 = vmatpush1.msra.mxu0 0.0
    %2800 = vmatprep.subr.mxu0 0.0
    %2801 = vmatpush1.msra.mxu0 0.0
    %2802 = vmatprep.subr.mxu0 0.0
    %2803 = vmatpush1.msra.mxu0 0.0
    %2804 = vmatprep.subr.mxu0 0.0
    %2805 = vmatpush1.msra.mxu0 0.0
    %2806 = vmatprep.subr.mxu0 0.0
    %2807 = vmatpush1.msra.mxu0 0.0
    %2808 = vmatprep.subr.mxu0 0.0
    %2809 = vmatpush1.msra.mxu0 0.0
    %2810 = vmatprep.subr.mxu0 0.0
    %2811 = vmatpush1.msra.mxu0 0.0
    %2812 = vmatprep.subr.mxu0 0.0
    %2813 = vmatpush1.msra.mxu0 0.0
    %2814 = vmatprep.subr.mxu0 0.0
    %2815 = vmatpush1.msra.mxu0 0.0
    %2816 = vmatprep.subr.mxu0 0.0
    %2817 = vmatpush1.msra.mxu0 0.0
    %2818 = vmatprep.subr.mxu0 0.0
    %2819 = vmatpush1.msra.mxu0 0.0
    %2820 = vmatprep.subr.mxu0 0.0
    %2821 = vmatpush1.msra.mxu0 0.0
    %2822 = vmatprep.subr.mxu0 0.0
    %2823 = vmatpush1.msra.mxu0 0.0
    %2824 = vmatprep.subr.mxu0 0.0
    %2825 = vmatpush1.msra.mxu0 0.0
    %2826 = vmatprep.mubr.f32.mxu0 0.0
    %2827 = vmatmul.mubr.f32.gmra.mrb[0].mxu0 %v2751
    %v2828 = vpop.f32.mrb[0].mxu0
    %v2829 = vadd.f32 0.0, %v2828
    %v2830 = vpop.f32.mrb[0].mxu0
    %2831 = vmatprep.mubr.f32.mxu0 0.0
    %2832 = vmatmul.mubr.f32.gmra.mrb[0].mxu0 %v2754
    %v2833 = vpop.f32.mrb[0].mxu0
    %v2834 = vadd.f32 0.0, %v2833
    %v2835 = vpop.f32.mrb[0].mxu0
    %2836 = vmatprep.mubr.f32.mxu0 0.0
    %2837 = vmatmul.mubr.f32.gmra.mrb[0].mxu0 %v2757
    %v2838 = vpop.f32.mrb[0].mxu0
    %v2839 = vadd.f32 0.0, %v2838
    %v2840 = vpop.f32.mrb[0].mxu0
    %2841 = vmatprep.mubr.f32.mxu0 0.0
    %2842 = vmatmul.mubr.f32.gmra.mrb[0].mxu0 %v2760
    %v2843 = vpop.f32.mrb[0].mxu0
    %v2844 = vadd.f32 0.0, %v2843
    %v2845 = vpop.f32.mrb[0].mxu0
    %2846 = vdwg.mxu0
    %v2848 = vsel %vm2264, %v2737, 0
    %v2851 = vsel %vm2264, %v2738, 0
    %v2854 = vsel %vm2264, %v2739, 0
    %v2857 = vsel %vm2264, %v2740, 0
    %2859 = vmatprep.subr.mxu0 0.0
    %2860 = vmatpush1.msra.mxu0 %v2742
    %2861 = vmatprep.subr.mxu0 0.0
    %2862 = vmatpush1.msra.mxu0 %v2743
    %2863 = vmatprep.subr.mxu0 0.0
    %2864 = vmatpush1.msra.mxu0 0.0
    %2865 = vmatprep.subr.mxu0 0.0
    %2866 = vmatpush1.msra.mxu0 0.0
    %2867 = vmatprep.subr.mxu0 0.0
    %2868 = vmatpush1.msra.mxu0 0.0
    %2869 = vmatprep.subr.mxu0 0.0
    %2870 = vmatpush1.msra.mxu0 0.0
    %2871 = vmatprep.subr.mxu0 0.0
    %2872 = vmatpush1.msra.mxu0 0.0
    %2873 = vmatprep.subr.mxu0 0.0
    %2874 = vmatpush1.msra.mxu0 0.0
    %2875 = vmatprep.subr.mxu0 0.0
    %2876 = vmatpush1.msra.mxu0 0.0
    %2877 = vmatprep.subr.mxu0 0.0
    %2878 = vmatpush1.msra.mxu0 0.0
    %2879 = vmatprep.subr.mxu0 0.0
    %2880 = vmatpush1.msra.mxu0 0.0
    %2881 = vmatprep.subr.mxu0 0.0
    %2882 = vmatpush1.msra.mxu0 0.0
    %2883 = vmatprep.subr.mxu0 0.0
    %2884 = vmatpush1.msra.mxu0 0.0
    %2885 = vmatprep.subr.mxu0 0.0
    %2886 = vmatpush1.msra.mxu0 0.0
    %2887 = vmatprep.subr.mxu0 0.0
    %2888 = vmatpush1.msra.mxu0 0.0
    %2889 = vmatprep.subr.mxu0 0.0
    %2890 = vmatpush1.msra.mxu0 0.0
    %2891 = vmatprep.subr.mxu0 0.0
    %2892 = vmatpush1.msra.mxu0 0.0
    %2893 = vmatprep.subr.mxu0 0.0
    %2894 = vmatpush1.msra.mxu0 0.0
    %2895 = vmatprep.subr.mxu0 0.0
    %2896 = vmatpush1.msra.mxu0 0.0
    %2897 = vmatprep.subr.mxu0 0.0
    %2898 = vmatpush1.msra.mxu0 0.0
    %2899 = vmatprep.subr.mxu0 0.0
    %2900 = vmatpush1.msra.mxu0 0.0
    %2901 = vmatprep.subr.mxu0 0.0
    %2902 = vmatpush1.msra.mxu0 0.0
    %2903 = vmatprep.subr.mxu0 0.0
    %2904 = vmatpush1.msra.mxu0 0.0
    %2905 = vmatprep.subr.mxu0 0.0
    %2906 = vmatpush1.msra.mxu0 0.0
    %2907 = vmatprep.subr.mxu0 0.0
    %2908 = vmatpush1.msra.mxu0 0.0
    %2909 = vmatprep.subr.mxu0 0.0
    %2910 = vmatpush1.msra.mxu0 0.0
    %2911 = vmatprep.subr.mxu0 0.0
    %2912 = vmatpush1.msra.mxu0 0.0
    %2913 = vmatprep.subr.mxu0 0.0
    %2914 = vmatpush1.msra.mxu0 0.0
    %2915 = vmatprep.subr.mxu0 0.0
    %2916 = vmatpush1.msra.mxu0 0.0
    %2917 = vmatprep.subr.mxu0 0.0
    %2918 = vmatpush1.msra.mxu0 0.0
    %2919 = vmatprep.subr.mxu0 0.0
    %2920 = vmatpush1.msra.mxu0 0.0
    %2921 = vmatprep.subr.mxu0 0.0
    %2922 = vmatpush1.msra.mxu0 0.0
    %2923 = vmatprep.mubr.f32.mxu0 0.0
    %2924 = vmatmul.mubr.f32.gmra.mrb[0].mxu0 %v2848
    %v2925 = vpop.f32.mrb[0].mxu0
    %v2926 = vadd.f32 %v2829, %v2925
    %v2927 = vpop.f32.mrb[0].mxu0
    %2928 = vmatprep.mubr.f32.mxu0 0.0
    %2929 = vmatmul.mubr.f32.gmra.mrb[0].mxu0 %v2851
    %v2930 = vpop.f32.mrb[0].mxu0
    %v2931 = vadd.f32 %v2834, %v2930
    %v2932 = vpop.f32.mrb[0].mxu0
    %2933 = vmatprep.mubr.f32.mxu0 0.0
    %2934 = vmatmul.mubr.f32.gmra.mrb[0].mxu0 %v2854
    %v2935 = vpop.f32.mrb[0].mxu0
    %v2936 = vadd.f32 %v2839, %v2935
    %v2937 = vpop.f32.mrb[0].mxu0
    %2938 = vmatprep.mubr.f32.mxu0 0.0
    %2939 = vmatmul.mubr.f32.gmra.mrb[0].mxu0 %v2857
    %v2940 = vpop.f32.mrb[0].mxu0
    %v2941 = vadd.f32 %v2844, %v2940
    %v2942 = vpop.f32.mrb[0].mxu0
    %2943 = vdwg.mxu0
    %v2944 = vld [vmem:[#allocation8 + $0x2] sm:$0xff]
    %v2945 = vld [vmem:[#allocation8 + $0xa] sm:$0xff]
    %v2946 = vld [vmem:[#allocation8 + $0x1a] sm:$0xff]
    %v2947 = vld [vmem:[#allocation8 + $0x22] sm:$0xff]
    %v2948 = vld [vmem:[%s2741 + $0x20] sm:$0xff]
    %v2949 = vld [vmem:[%s2741 + $0x28] sm:$0xff]
    %v2951 = vsel %vm2264, %v2944, 0
    %v2954 = vsel %vm2264, %v2945, 0
    %v2957 = vsel %vm2264, %v2946, 0
    %v2960 = vsel %vm2264, %v2947, 0
    %2962 = vmatprep.subr.mxu0 0.0
    %2963 = vmatpush1.msra.mxu0 %v2948
    %2964 = vmatprep.subr.mxu0 0.0
    %2965 = vmatpush1.msra.mxu0 %v2949
    %2966 = vmatprep.subr.mxu0 0.0
    %2967 = vmatpush1.msra.mxu0 0.0
    %2968 = vmatprep.subr.mxu0 0.0
    %2969 = vmatpush1.msra.mxu0 0.0
    %2970 = vmatprep.subr.mxu0 0.0
    %2971 = vmatpush1.msra.mxu0 0.0
    %2972 = vmatprep.subr.mxu0 0.0
    %2973 = vmatpush1.msra.mxu0 0.0
    %2974 = vmatprep.subr.mxu0 0.0
    %2975 = vmatpush1.msra.mxu0 0.0
    %2976 = vmatprep.subr.mxu0 0.0
    %2977 = vmatpush1.msra.mxu0 0.0
    %2978 = vmatprep.subr.mxu0 0.0
    %2979 = vmatpush1.msra.mxu0 0.0
    %2980 = vmatprep.subr.mxu0 0.0
    %2981 = vmatpush1.msra.mxu0 0.0
    %2982 = vmatprep.subr.mxu0 0.0
    %2983 = vmatpush1.msra.mxu0 0.0
    %2984 = vmatprep.subr.mxu0 0.0
    %2985 = vmatpush1.msra.mxu0 0.0
    %2986 = vmatprep.subr.mxu0 0.0
    %2987 = vmatpush1.msra.mxu0 0.0
    %2988 = vmatprep.subr.mxu0 0.0
    %2989 = vmatpush1.msra.mxu0 0.0
    %2990 = vmatprep.subr.mxu0 0.0
    %2991 = vmatpush1.msra.mxu0 0.0
    %2992 = vmatprep.subr.mxu0 0.0
    %2993 = vmatpush1.msra.mxu0 0.0
    %2994 = vmatprep.subr.mxu0 0.0
    %2995 = vmatpush1.msra.mxu0 0.0
    %2996 = vmatprep.subr.mxu0 0.0
    %2997 = vmatpush1.msra.mxu0 0.0
    %2998 = vmatprep.subr.mxu0 0.0
    %2999 = vmatpush1.msra.mxu0 0.0
    %3000 = vmatprep.subr.mxu0 0.0
    %3001 = vmatpush1.msra.mxu0 0.0
    %3002 = vmatprep.subr.mxu0 0.0
    %3003 = vmatpush1.msra.mxu0 0.0
    %3004 = vmatprep.subr.mxu0 0.0
    %3005 = vmatpush1.msra.mxu0 0.0
    %3006 = vmatprep.subr.mxu0 0.0
    %3007 = vmatpush1.msra.mxu0 0.0
    %3008 = vmatprep.subr.mxu0 0.0
    %3009 = vmatpush1.msra.mxu0 0.0
    %3010 = vmatprep.subr.mxu0 0.0
    %3011 = vmatpush1.msra.mxu0 0.0
    %3012 = vmatprep.subr.mxu0 0.0
    %3013 = vmatpush1.msra.mxu0 0.0
    %3014 = vmatprep.subr.mxu0 0.0
    %3015 = vmatpush1.msra.mxu0 0.0
    %3016 = vmatprep.subr.mxu0 0.0
    %3017 = vmatpush1.msra.mxu0 0.0
    %3018 = vmatprep.subr.mxu0 0.0
    %3019 = vmatpush1.msra.mxu0 0.0
    %3020 = vmatprep.subr.mxu0 0.0
    %3021 = vmatpush1.msra.mxu0 0.0
    %3022 = vmatprep.subr.mxu0 0.0
    %3023 = vmatpush1.msra.mxu0 0.0
    %3024 = vmatprep.subr.mxu0 0.0
    %3025 = vmatpush1.msra.mxu0 0.0
    %3026 = vmatprep.mubr.f32.mxu0 0.0
    %3027 = vmatmul.mubr.f32.gmra.mrb[0].mxu0 %v2951
    %v3028 = vpop.f32.mrb[0].mxu0
    %v3029 = vadd.f32 0.0, %v3028
    %v3030 = vpop.f32.mrb[0].mxu0
    %3031 = vmatprep.mubr.f32.mxu0 0.0
    %3032 = vmatmul.mubr.f32.gmra.mrb[0].mxu0 %v2954
    %v3033 = vpop.f32.mrb[0].mxu0
    %v3034 = vadd.f32 0.0, %v3033
    %v3035 = vpop.f32.mrb[0].mxu0
    %3036 = vmatprep.mubr.f32.mxu0 0.0
    %3037 = vmatmul.mubr.f32.gmra.mrb[0].mxu0 %v2957
    %v3038 = vpop.f32.mrb[0].mxu0
    %v3039 = vadd.f32 0.0, %v3038
    %v3040 = vpop.f32.mrb[0].mxu0
    %3041 = vmatprep.mubr.f32.mxu0 0.0
    %3042 = vmatmul.mubr.f32.gmra.mrb[0].mxu0 %v2960
    %v3043 = vpop.f32.mrb[0].mxu0
    %v3044 = vadd.f32 0.0, %v3043
    %v3045 = vpop.f32.mrb[0].mxu0
    %3046 = vdwg.mxu0
    %v3047 = vadd.f32 %v2926, %v3029
    %v3048 = vadd.f32 %v2931, %v3034
    %v3049 = vadd.f32 %v2936, %v3039
    %v3050 = vadd.f32 %v2941, %v3044
    %v3051 = vld [vmem:[%s1 + $0xe] sm:$0x1]
    %v3052 = vld [vmem:[%s1 + $0xf] sm:$0x1]
    %v3053 = vlaneseq
    %v3054 = vshrl.u32 %v3053, 7
    %v3055 = vsub.s32 0, %v3054
    %v3056 = vrot.slane %v3051, %v3055
    %v3057 = vmul.f32 %v3047, %v3056
    %v3058 = vmul.f32 %v3048, %v3056
    %v3059 = vmul.f32 %v3049, %v3056
    %v3060 = vmul.f32 %v3050, %v3056
    %v3061 = vlaneseq
    %v3062 = vshrl.u32 %v3061, 7
    %v3063 = vsub.s32 0, %v3062
    %v3064 = vrot.slane %v3052, %v3063
    %v3065 = vadd.f32 %v3057, %v3064
    %v3066 = vadd.f32 %v3058, %v3064
    %v3067 = vadd.f32 %v3059, %v3064
    %v3068 = vadd.f32 %v3060, %v3064
    %v3069 = vmax.f32 %v3065, 0.0
    %v3070 = vmax.f32 %v3066, 0.0
    %v3071 = vmax.f32 %v3067, 0.0
    %v3072 = vmax.f32 %v3068, 0.0
    %3073 = vst.msk [vmem:[#allocation9] sm:$0x1] %vm2259, 0.0
    %3074 = vst.msk [vmem:[#allocation9 + $0x18] sm:$0x1] %vm2259, 0.0
    %3075 = vst.msk [vmem:[#allocation9 + $0x11] sm:$0x1] %vm2259, 0.0
    %3076 = vst.msk [vmem:[#allocation9 + $0x29] sm:$0x1] %vm2259, 0.0
    %3077 = vst.msk [vmem:[#allocation9 + $0x1] sm:$0xff] %vm2264, %v3069
    %3078 = vst.msk [vmem:[#allocation9 + $0x9] sm:$0xff] %vm2264, %v3070
    %3079 = vst.msk [vmem:[#allocation9 + $0x19] sm:$0xff] %vm2264, %v3071
    %3080 = vst.msk [vmem:[#allocation9 + $0x21] sm:$0xff] %vm2264, %v3072
    %v3081 = vld [vmem:[#allocation9] sm:$0xff]
    %v3082 = vld [vmem:[#allocation9 + $0x8] sm:$0xff]
    %v3083 = vld [vmem:[#allocation9 + $0x18] sm:$0xff]
    %v3084 = vld [vmem:[#allocation9 + $0x20] sm:$0xff]
    %s3085 = scalar_lea.vmem %s2, 288
    %v3086 = vld [vmem:[%s3085] sm:$0xff]
    %v3087 = vld [vmem:[%s3085 + $0x8] sm:$0xff]
    %v3088 = vld [vmem:[#allocation9 + $0x1] sm:$0xff]
    %v3089 = vld [vmem:[#allocation9 + $0x9] sm:$0xff]
    %v3090 = vld [vmem:[#allocation9 + $0x19] sm:$0xff]
    %v3091 = vld [vmem:[#allocation9 + $0x21] sm:$0xff]
    %v3092 = vld [vmem:[%s3085 + $0x10] sm:$0xff]
    %v3093 = vld [vmem:[%s3085 + $0x18] sm:$0xff]
    %v3095 = vsel %vm2264, %v3088, 0
    %v3098 = vsel %vm2264, %v3089, 0
    %v3101 = vsel %vm2264, %v3090, 0
    %v3104 = vsel %vm2264, %v3091, 0
    %3106 = vmatprep.subr.mxu0 0.0
    %3107 = vmatpush1.msra.mxu0 %v3092
    %3108 = vmatprep.subr.mxu0 0.0
    %3109 = vmatpush1.msra.mxu0 %v3093
    %3110 = vmatprep.subr.mxu0 0.0
    %3111 = vmatpush1.msra.mxu0 0.0
    %3112 = vmatprep.subr.mxu0 0.0
    %3113 = vmatpush1.msra.mxu0 0.0
    %3114 = vmatprep.subr.mxu0 0.0
    %3115 = vmatpush1.msra.mxu0 0.0
    %3116 = vmatprep.subr.mxu0 0.0
    %3117 = vmatpush1.msra.mxu0 0.0
    %3118 = vmatprep.subr.mxu0 0.0
    %3119 = vmatpush1.msra.mxu0 0.0
    %3120 = vmatprep.subr.mxu0 0.0
    %3121 = vmatpush1.msra.mxu0 0.0
    %3122 = vmatprep.subr.mxu0 0.0
    %3123 = vmatpush1.msra.mxu0 0.0
    %3124 = vmatprep.subr.mxu0 0.0
    %3125 = vmatpush1.msra.mxu0 0.0
    %3126 = vmatprep.subr.mxu0 0.0
    %3127 = vmatpush1.msra.mxu0 0.0
    %3128 = vmatprep.subr.mxu0 0.0
    %3129 = vmatpush1.msra.mxu0 0.0
    %3130 = vmatprep.subr.mxu0 0.0
    %3131 = vmatpush1.msra.mxu0 0.0
    %3132 = vmatprep.subr.mxu0 0.0
    %3133 = vmatpush1.msra.mxu0 0.0
    %3134 = vmatprep.subr.mxu0 0.0
    %3135 = vmatpush1.msra.mxu0 0.0
    %3136 = vmatprep.subr.mxu0 0.0
    %3137 = vmatpush1.msra.mxu0 0.0
    %3138 = vmatprep.subr.mxu0 0.0
    %3139 = vmatpush1.msra.mxu0 0.0
    %3140 = vmatprep.subr.mxu0 0.0
    %3141 = vmatpush1.msra.mxu0 0.0
    %3142 = vmatprep.subr.mxu0 0.0
    %3143 = vmatpush1.msra.mxu0 0.0
    %3144 = vmatprep.subr.mxu0 0.0
    %3145 = vmatpush1.msra.mxu0 0.0
    %3146 = vmatprep.subr.mxu0 0.0
    %3147 = vmatpush1.msra.mxu0 0.0
    %3148 = vmatprep.subr.mxu0 0.0
    %3149 = vmatpush1.msra.mxu0 0.0
    %3150 = vmatprep.subr.mxu0 0.0
    %3151 = vmatpush1.msra.mxu0 0.0
    %3152 = vmatprep.subr.mxu0 0.0
    %3153 = vmatpush1.msra.mxu0 0.0
    %3154 = vmatprep.subr.mxu0 0.0
    %3155 = vmatpush1.msra.mxu0 0.0
    %3156 = vmatprep.subr.mxu0 0.0
    %3157 = vmatpush1.msra.mxu0 0.0
    %3158 = vmatprep.subr.mxu0 0.0
    %3159 = vmatpush1.msra.mxu0 0.0
    %3160 = vmatprep.subr.mxu0 0.0
    %3161 = vmatpush1.msra.mxu0 0.0
    %3162 = vmatprep.subr.mxu0 0.0
    %3163 = vmatpush1.msra.mxu0 0.0
    %3164 = vmatprep.subr.mxu0 0.0
    %3165 = vmatpush1.msra.mxu0 0.0
    %3166 = vmatprep.subr.mxu0 0.0
    %3167 = vmatpush1.msra.mxu0 0.0
    %3168 = vmatprep.subr.mxu0 0.0
    %3169 = vmatpush1.msra.mxu0 0.0
    %3170 = vmatprep.mubr.f32.mxu0 0.0
    %3171 = vmatmul.mubr.f32.gmra.mrb[0].mxu0 %v3095
    %v3172 = vpop.f32.mrb[0].mxu0
    %v3173 = vadd.f32 0.0, %v3172
    %v3174 = vpop.f32.mrb[0].mxu0
    %3175 = vmatprep.mubr.f32.mxu0 0.0
    %3176 = vmatmul.mubr.f32.gmra.mrb[0].mxu0 %v3098
    %v3177 = vpop.f32.mrb[0].mxu0
    %v3178 = vadd.f32 0.0, %v3177
    %v3179 = vpop.f32.mrb[0].mxu0
    %3180 = vmatprep.mubr.f32.mxu0 0.0
    %3181 = vmatmul.mubr.f32.gmra.mrb[0].mxu0 %v3101
    %v3182 = vpop.f32.mrb[0].mxu0
    %v3183 = vadd.f32 0.0, %v3182
    %v3184 = vpop.f32.mrb[0].mxu0
    %3185 = vmatprep.mubr.f32.mxu0 0.0
    %3186 = vmatmul.mubr.f32.gmra.mrb[0].mxu0 %v3104
    %v3187 = vpop.f32.mrb[0].mxu0
    %v3188 = vadd.f32 0.0, %v3187
    %v3189 = vpop.f32.mrb[0].mxu0
    %3190 = vdwg.mxu0
    %v3192 = vsel %vm2264, %v3081, 0
    %v3195 = vsel %vm2264, %v3082, 0
    %v3198 = vsel %vm2264, %v3083, 0
    %v3201 = vsel %vm2264, %v3084, 0
    %3203 = vmatprep.subr.mxu0 0.0
    %3204 = vmatpush1.msra.mxu0 %v3086
    %3205 = vmatprep.subr.mxu0 0.0
    %3206 = vmatpush1.msra.mxu0 %v3087
    %3207 = vmatprep.subr.mxu0 0.0
    %3208 = vmatpush1.msra.mxu0 0.0
    %3209 = vmatprep.subr.mxu0 0.0
    %3210 = vmatpush1.msra.mxu0 0.0
    %3211 = vmatprep.subr.mxu0 0.0
    %3212 = vmatpush1.msra.mxu0 0.0
    %3213 = vmatprep.subr.mxu0 0.0
    %3214 = vmatpush1.msra.mxu0 0.0
    %3215 = vmatprep.subr.mxu0 0.0
    %3216 = vmatpush1.msra.mxu0 0.0
    %3217 = vmatprep.subr.mxu0 0.0
    %3218 = vmatpush1.msra.mxu0 0.0
    %3219 = vmatprep.subr.mxu0 0.0
    %3220 = vmatpush1.msra.mxu0 0.0
    %3221 = vmatprep.subr.mxu0 0.0
    %3222 = vmatpush1.msra.mxu0 0.0
    %3223 = vmatprep.subr.mxu0 0.0
    %3224 = vmatpush1.msra.mxu0 0.0
    %3225 = vmatprep.subr.mxu0 0.0
    %3226 = vmatpush1.msra.mxu0 0.0
    %3227 = vmatprep.subr.mxu0 0.0
    %3228 = vmatpush1.msra.mxu0 0.0
    %3229 = vmatprep.subr.mxu0 0.0
    %3230 = vmatpush1.msra.mxu0 0.0
    %3231 = vmatprep.subr.mxu0 0.0
    %3232 = vmatpush1.msra.mxu0 0.0
    %3233 = vmatprep.subr.mxu0 0.0
    %3234 = vmatpush1.msra.mxu0 0.0
    %3235 = vmatprep.subr.mxu0 0.0
    %3236 = vmatpush1.msra.mxu0 0.0
    %3237 = vmatprep.subr.mxu0 0.0
    %3238 = vmatpush1.msra.mxu0 0.0
    %3239 = vmatprep.subr.mxu0 0.0
    %3240 = vmatpush1.msra.mxu0 0.0
    %3241 = vmatprep.subr.mxu0 0.0
    %3242 = vmatpush1.msra.mxu0 0.0
    %3243 = vmatprep.subr.mxu0 0.0
    %3244 = vmatpush1.msra.mxu0 0.0
    %3245 = vmatprep.subr.mxu0 0.0
    %3246 = vmatpush1.msra.mxu0 0.0
    %3247 = vmatprep.subr.mxu0 0.0
    %3248 = vmatpush1.msra.mxu0 0.0
    %3249 = vmatprep.subr.mxu0 0.0
    %3250 = vmatpush1.msra.mxu0 0.0
    %3251 = vmatprep.subr.mxu0 0.0
    %3252 = vmatpush1.msra.mxu0 0.0
    %3253 = vmatprep.subr.mxu0 0.0
    %3254 = vmatpush1.msra.mxu0 0.0
    %3255 = vmatprep.subr.mxu0 0.0
    %3256 = vmatpush1.msra.mxu0 0.0
    %3257 = vmatprep.subr.mxu0 0.0
    %3258 = vmatpush1.msra.mxu0 0.0
    %3259 = vmatprep.subr.mxu0 0.0
    %3260 = vmatpush1.msra.mxu0 0.0
    %3261 = vmatprep.subr.mxu0 0.0
    %3262 = vmatpush1.msra.mxu0 0.0
    %3263 = vmatprep.subr.mxu0 0.0
    %3264 = vmatpush1.msra.mxu0 0.0
    %3265 = vmatprep.subr.mxu0 0.0
    %3266 = vmatpush1.msra.mxu0 0.0
    %3267 = vmatprep.mubr.f32.mxu0 0.0
    %3268 = vmatmul.mubr.f32.gmra.mrb[0].mxu0 %v3192
    %v3269 = vpop.f32.mrb[0].mxu0
    %v3270 = vadd.f32 %v3173, %v3269
    %v3271 = vpop.f32.mrb[0].mxu0
    %3272 = vmatprep.mubr.f32.mxu0 0.0
    %3273 = vmatmul.mubr.f32.gmra.mrb[0].mxu0 %v3195
    %v3274 = vpop.f32.mrb[0].mxu0
    %v3275 = vadd.f32 %v3178, %v3274
    %v3276 = vpop.f32.mrb[0].mxu0
    %3277 = vmatprep.mubr.f32.mxu0 0.0
    %3278 = vmatmul.mubr.f32.gmra.mrb[0].mxu0 %v3198
    %v3279 = vpop.f32.mrb[0].mxu0
    %v3280 = vadd.f32 %v3183, %v3279
    %v3281 = vpop.f32.mrb[0].mxu0
    %3282 = vmatprep.mubr.f32.mxu0 0.0
    %3283 = vmatmul.mubr.f32.gmra.mrb[0].mxu0 %v3201
    %v3284 = vpop.f32.mrb[0].mxu0
    %v3285 = vadd.f32 %v3188, %v3284
    %v3286 = vpop.f32.mrb[0].mxu0
    %3287 = vdwg.mxu0
    %v3288 = vld [vmem:[#allocation9 + $0x2] sm:$0xff]
    %v3289 = vld [vmem:[#allocation9 + $0xa] sm:$0xff]
    %v3290 = vld [vmem:[#allocation9 + $0x1a] sm:$0xff]
    %v3291 = vld [vmem:[#allocation9 + $0x22] sm:$0xff]
    %v3292 = vld [vmem:[%s3085 + $0x20] sm:$0xff]
    %v3293 = vld [vmem:[%s3085 + $0x28] sm:$0xff]
    %v3295 = vsel %vm2264, %v3288, 0
    %v3298 = vsel %vm2264, %v3289, 0
    %v3301 = vsel %vm2264, %v3290, 0
    %v3304 = vsel %vm2264, %v3291, 0
    %3306 = vmatprep.subr.mxu0 0.0
    %3307 = vmatpush1.msra.mxu0 %v3292
    %3308 = vmatprep.subr.mxu0 0.0
    %3309 = vmatpush1.msra.mxu0 %v3293
    %3310 = vmatprep.subr.mxu0 0.0
    %3311 = vmatpush1.msra.mxu0 0.0
    %3312 = vmatprep.subr.mxu0 0.0
    %3313 = vmatpush1.msra.mxu0 0.0
    %3314 = vmatprep.subr.mxu0 0.0
    %3315 = vmatpush1.msra.mxu0 0.0
    %3316 = vmatprep.subr.mxu0 0.0
    %3317 = vmatpush1.msra.mxu0 0.0
    %3318 = vmatprep.subr.mxu0 0.0
    %3319 = vmatpush1.msra.mxu0 0.0
    %3320 = vmatprep.subr.mxu0 0.0
    %3321 = vmatpush1.msra.mxu0 0.0
    %3322 = vmatprep.subr.mxu0 0.0
    %3323 = vmatpush1.msra.mxu0 0.0
    %3324 = vmatprep.subr.mxu0 0.0
    %3325 = vmatpush1.msra.mxu0 0.0
    %3326 = vmatprep.subr.mxu0 0.0
    %3327 = vmatpush1.msra.mxu0 0.0
    %3328 = vmatprep.subr.mxu0 0.0
    %3329 = vmatpush1.msra.mxu0 0.0
    %3330 = vmatprep.subr.mxu0 0.0
    %3331 = vmatpush1.msra.mxu0 0.0
    %3332 = vmatprep.subr.mxu0 0.0
    %3333 = vmatpush1.msra.mxu0 0.0
    %3334 = vmatprep.subr.mxu0 0.0
    %3335 = vmatpush1.msra.mxu0 0.0
    %3336 = vmatprep.subr.mxu0 0.0
    %3337 = vmatpush1.msra.mxu0 0.0
    %3338 = vmatprep.subr.mxu0 0.0
    %3339 = vmatpush1.msra.mxu0 0.0
    %3340 = vmatprep.subr.mxu0 0.0
    %3341 = vmatpush1.msra.mxu0 0.0
    %3342 = vmatprep.subr.mxu0 0.0
    %3343 = vmatpush1.msra.mxu0 0.0
    %3344 = vmatprep.subr.mxu0 0.0
    %3345 = vmatpush1.msra.mxu0 0.0
    %3346 = vmatprep.subr.mxu0 0.0
    %3347 = vmatpush1.msra.mxu0 0.0
    %3348 = vmatprep.subr.mxu0 0.0
    %3349 = vmatpush1.msra.mxu0 0.0
    %3350 = vmatprep.subr.mxu0 0.0
    %3351 = vmatpush1.msra.mxu0 0.0
    %3352 = vmatprep.subr.mxu0 0.0
    %3353 = vmatpush1.msra.mxu0 0.0
    %3354 = vmatprep.subr.mxu0 0.0
    %3355 = vmatpush1.msra.mxu0 0.0
    %3356 = vmatprep.subr.mxu0 0.0
    %3357 = vmatpush1.msra.mxu0 0.0
    %3358 = vmatprep.subr.mxu0 0.0
    %3359 = vmatpush1.msra.mxu0 0.0
    %3360 = vmatprep.subr.mxu0 0.0
    %3361 = vmatpush1.msra.mxu0 0.0
    %3362 = vmatprep.subr.mxu0 0.0
    %3363 = vmatpush1.msra.mxu0 0.0
    %3364 = vmatprep.subr.mxu0 0.0
    %3365 = vmatpush1.msra.mxu0 0.0
    %3366 = vmatprep.subr.mxu0 0.0
    %3367 = vmatpush1.msra.mxu0 0.0
    %3368 = vmatprep.subr.mxu0 0.0
    %3369 = vmatpush1.msra.mxu0 0.0
    %3370 = vmatprep.mubr.f32.mxu0 0.0
    %3371 = vmatmul.mubr.f32.gmra.mrb[0].mxu0 %v3295
    %v3372 = vpop.f32.mrb[0].mxu0
    %v3373 = vadd.f32 0.0, %v3372
    %v3374 = vpop.f32.mrb[0].mxu0
    %3375 = vmatprep.mubr.f32.mxu0 0.0
    %3376 = vmatmul.mubr.f32.gmra.mrb[0].mxu0 %v3298
    %v3377 = vpop.f32.mrb[0].mxu0
    %v3378 = vadd.f32 0.0, %v3377
    %v3379 = vpop.f32.mrb[0].mxu0
    %3380 = vmatprep.mubr.f32.mxu0 0.0
    %3381 = vmatmul.mubr.f32.gmra.mrb[0].mxu0 %v3301
    %v3382 = vpop.f32.mrb[0].mxu0
    %v3383 = vadd.f32 0.0, %v3382
    %v3384 = vpop.f32.mrb[0].mxu0
    %3385 = vmatprep.mubr.f32.mxu0 0.0
    %3386 = vmatmul.mubr.f32.gmra.mrb[0].mxu0 %v3304
    %v3387 = vpop.f32.mrb[0].mxu0
    %v3388 = vadd.f32 0.0, %v3387
    %v3389 = vpop.f32.mrb[0].mxu0
    %3390 = vdwg.mxu0
    %v3391 = vadd.f32 %v3270, %v3373
    %v3392 = vadd.f32 %v3275, %v3378
    %v3393 = vadd.f32 %v3280, %v3383
    %v3394 = vadd.f32 %v3285, %v3388
    %v3395 = vld [vmem:[%s1 + $0x10] sm:$0x1]
    %v3396 = vld [vmem:[%s1 + $0x11] sm:$0x1]
    %v3397 = vlaneseq
    %v3398 = vshrl.u32 %v3397, 7
    %v3399 = vsub.s32 0, %v3398
    %v3400 = vrot.slane %v3395, %v3399
    %v3401 = vmul.f32 %v3391, %v3400
    %v3402 = vmul.f32 %v3392, %v3400
    %v3403 = vmul.f32 %v3393, %v3400
    %v3404 = vmul.f32 %v3394, %v3400
    %v3405 = vlaneseq
    %v3406 = vshrl.u32 %v3405, 7
    %v3407 = vsub.s32 0, %v3406
    %v3408 = vrot.slane %v3396, %v3407
    %v3409 = vadd.f32 %v3401, %v3408
    %v3410 = vadd.f32 %v3402, %v3408
    %v3411 = vadd.f32 %v3403, %v3408
    %v3412 = vadd.f32 %v3404, %v3408
    %v3413 = vmax.f32 %v3409, 0.0
    %v3414 = vmax.f32 %v3410, 0.0
    %v3415 = vmax.f32 %v3411, 0.0
    %v3416 = vmax.f32 %v3412, 0.0
    %v3417 = vadd.f32 %v3413, %v2703
    %v3418 = vadd.f32 %v3414, %v2704
    %v3419 = vadd.f32 %v3415, %v2705
    %v3420 = vadd.f32 %v3416, %v2706
    %v3421 = vld [vmem:[%s1 + $0x12] sm:$0x1]
    %v3422 = vld [vmem:[%s1 + $0x13] sm:$0x1]
    %v3423 = vlaneseq
    %v3424 = vshrl.u32 %v3423, 7
    %v3425 = vsub.s32 0, %v3424
    %v3426 = vrot.slane %v3421, %v3425
    %v3427 = vmul.f32 %v3417, %v3426
    %v3428 = vmul.f32 %v3418, %v3426
    %v3429 = vmul.f32 %v3419, %v3426
    %v3430 = vmul.f32 %v3420, %v3426
    %v3431 = vlaneseq
    %v3432 = vshrl.u32 %v3431, 7
    %v3433 = vsub.s32 0, %v3432
    %v3434 = vrot.slane %v3422, %v3433
    %v3435 = vadd.f32 %v3427, %v3434
    %v3436 = vadd.f32 %v3428, %v3434
    %v3437 = vadd.f32 %v3429, %v3434
    %v3438 = vadd.f32 %v3430, %v3434
    %v3439 = vmax.f32 %v3435, 0.0
    %v3440 = vmax.f32 %v3436, 0.0
    %v3441 = vmax.f32 %v3437, 0.0
    %v3442 = vmax.f32 %v3438, 0.0
    %s3443 = smul.u32 4, 16
    %s3444 = smul.u32 %s3443, 2
    %s3445 = smul.u32 %s3444, 8
    %s3446 = sshll.u32 %s3445, 4
    %3447 = dma.done [#allocation12], %s3446
    %s3448 = smul.u32 4, 128
    %s3449 = smul.u32 %s3448, 2
    %s3450 = sshll.u32 %s3449, 4
    %3451 = dma.done %s68, %s3450
    %v3452 = vpack.c.bf16 %v3439, %v3439
    %v3453 = vpack.c.bf16 %v3441, %v3441
    %v3454 = vld [vmem:[#allocation10] sm:$0xff]
    %v3455 = vld [vmem:[#allocation10 + $0x8] sm:$0xff]
    %v3456 = vld [vmem:[#allocation10 + $0x10] sm:$0xff]
    %v3457 = vld [vmem:[#allocation10 + $0x18] sm:$0xff]
    %v3458 = vld [vmem:[#allocation10 + $0x20] sm:$0xff]
    %v3459 = vld [vmem:[#allocation10 + $0x28] sm:$0xff]
    %v3460 = vld [vmem:[#allocation10 + $0x30] sm:$0xff]
    %v3461 = vld [vmem:[#allocation10 + $0x38] sm:$0xff]
    %s3462 = scalar_lea.vmem [#allocation10], 64
    %v3463 = vld [vmem:[%s3462] sm:$0xff]
    %v3464 = vld [vmem:[%s3462 + $0x8] sm:$0xff]
    %v3465 = vld [vmem:[%s3462 + $0x10] sm:$0xff]
    %v3466 = vld [vmem:[%s3462 + $0x18] sm:$0xff]
    %v3467 = vld [vmem:[%s3462 + $0x20] sm:$0xff]
    %v3468 = vld [vmem:[%s3462 + $0x28] sm:$0xff]
    %v3469 = vld [vmem:[%s3462 + $0x30] sm:$0xff]
    %v3470 = vld [vmem:[%s3462 + $0x38] sm:$0xff]
    %v3473 = vunpack.c.l.b16 %v3452
    %v3474 = vunpack.c.l.b16 %v3453
    %v3475 = vrot.slane %v3473, 1
    %vm3476 = vcmask 1041409
    %v3477 = vsel %vm3476, %v3474, %v3475
    %v3478 = vpack.c.b16 %v3477, %v3477
    %v3480 = vsel %vm2264, %v3478, 0
    %3482 = vmatprep.subr.bf16.mxu0 %v3464
    %3483 = vmatpush1.bf16.msra.mxu0 %v3463
    %3484 = vmatprep.subr.bf16.mxu0 0
    %3485 = vmatpush1.bf16.msra.mxu0 0
    %3486 = vmatprep.subr.bf16.mxu0 0
    %3487 = vmatpush1.bf16.msra.mxu0 0
    %3488 = vmatprep.subr.bf16.mxu0 0
    %3489 = vmatpush1.bf16.msra.mxu0 0
    %3490 = vmatprep.subr.bf16.mxu0 0
    %3491 = vmatpush1.bf16.msra.mxu0 0
    %3492 = vmatprep.subr.bf16.mxu0 0
    %3493 = vmatpush1.bf16.msra.mxu0 0
    %3494 = vmatprep.subr.bf16.mxu0 0
    %3495 = vmatpush1.bf16.msra.mxu0 0
    %3496 = vmatprep.subr.bf16.mxu0 0
    %3497 = vmatpush1.bf16.msra.mxu0 0
    %3498 = vmatprep.subr.bf16.mxu0 0
    %3499 = vmatpush1.bf16.msra.mxu0 0
    %3500 = vmatprep.subr.bf16.mxu0 0
    %3501 = vmatpush1.bf16.msra.mxu0 0
    %3502 = vmatprep.subr.bf16.mxu0 0
    %3503 = vmatpush1.bf16.msra.mxu0 0
    %3504 = vmatprep.subr.bf16.mxu0 0
    %3505 = vmatpush1.bf16.msra.mxu0 0
    %3506 = vmatprep.subr.bf16.mxu0 0
    %3507 = vmatpush1.bf16.msra.mxu0 0
    %3508 = vmatprep.subr.bf16.mxu0 0
    %3509 = vmatpush1.bf16.msra.mxu0 0
    %3510 = vmatprep.subr.bf16.mxu0 0
    %3511 = vmatpush1.bf16.msra.mxu0 0
    %3512 = vmatprep.subr.bf16.mxu0 0
    %3513 = vmatpush1.bf16.msra.mxu0 0
    %3514 = vmatprep.mubr.bf16.mxu0 0
    %3515 = vmatmul.mubr.bf16.gmra.mrb[0].mxu0 %v3480
    %v3516 = vpop.f32.mrb[0].mxu0
    %v3517 = vadd.f32 0.0, %v3516
    %v3518 = vpop.f32.mrb[0].mxu0
    %v3519 = vadd.f32 0.0, %v3518
    %v3520 = vpop.f32.mrb[0].mxu0
    %v3521 = vpop.f32.mrb[0].mxu0
    %3522 = vdwg.mxu0
    %3523 = vmatprep.subr.bf16.mxu0 %v3466
    %3524 = vmatpush1.bf16.msra.mxu0 %v3465
    %3525 = vmatprep.subr.bf16.mxu0 0
    %3526 = vmatpush1.bf16.msra.mxu0 0
    %3527 = vmatprep.subr.bf16.mxu0 0
    %3528 = vmatpush1.bf16.msra.mxu0 0
    %3529 = vmatprep.subr.bf16.mxu0 0
    %3530 = vmatpush1.bf16.msra.mxu0 0
    %3531 = vmatprep.subr.bf16.mxu0 0
    %3532 = vmatpush1.bf16.msra.mxu0 0
    %3533 = vmatprep.subr.bf16.mxu0 0
    %3534 = vmatpush1.bf16.msra.mxu0 0
    %3535 = vmatprep.subr.bf16.mxu0 0
    %3536 = vmatpush1.bf16.msra.mxu0 0
    %3537 = vmatprep.subr.bf16.mxu0 0
    %3538 = vmatpush1.bf16.msra.mxu0 0
    %3539 = vmatprep.subr.bf16.mxu0 0
    %3540 = vmatpush1.bf16.msra.mxu0 0
    %3541 = vmatprep.subr.bf16.mxu0 0
    %3542 = vmatpush1.bf16.msra.mxu0 0
    %3543 = vmatprep.subr.bf16.mxu0 0
    %3544 = vmatpush1.bf16.msra.mxu0 0
    %3545 = vmatprep.subr.bf16.mxu0 0
    %3546 = vmatpush1.bf16.msra.mxu0 0
    %3547 = vmatprep.subr.bf16.mxu0 0
    %3548 = vmatpush1.bf16.msra.mxu0 0
    %3549 = vmatprep.subr.bf16.mxu0 0
    %3550 = vmatpush1.bf16.msra.mxu0 0
    %3551 = vmatprep.subr.bf16.mxu0 0
    %3552 = vmatpush1.bf16.msra.mxu0 0
    %3553 = vmatprep.subr.bf16.mxu0 0
    %3554 = vmatpush1.bf16.msra.mxu0 0
    %3555 = vmatprep.mubr.bf16.mxu0 0
    %3556 = vmatmul.mubr.bf16.gmra.mrb[0].mxu0 %v3480
    %v3557 = vpop.f32.mrb[0].mxu0
    %v3558 = vadd.f32 0.0, %v3557
    %v3559 = vpop.f32.mrb[0].mxu0
    %v3560 = vadd.f32 0.0, %v3559
    %v3561 = vpop.f32.mrb[0].mxu0
    %v3562 = vpop.f32.mrb[0].mxu0
    %3563 = vdwg.mxu0
    %3564 = vmatprep.subr.bf16.mxu0 %v3468
    %3565 = vmatpush1.bf16.msra.mxu0 %v3467
    %3566 = vmatprep.subr.bf16.mxu0 0
    %3567 = vmatpush1.bf16.msra.mxu0 0
    %3568 = vmatprep.subr.bf16.mxu0 0
    %3569 = vmatpush1.bf16.msra.mxu0 0
    %3570 = vmatprep.subr.bf16.mxu0 0
    %3571 = vmatpush1.bf16.msra.mxu0 0
    %3572 = vmatprep.subr.bf16.mxu0 0
    %3573 = vmatpush1.bf16.msra.mxu0 0
    %3574 = vmatprep.subr.bf16.mxu0 0
    %3575 = vmatpush1.bf16.msra.mxu0 0
    %3576 = vmatprep.subr.bf16.mxu0 0
    %3577 = vmatpush1.bf16.msra.mxu0 0
    %3578 = vmatprep.subr.bf16.mxu0 0
    %3579 = vmatpush1.bf16.msra.mxu0 0
    %3580 = vmatprep.subr.bf16.mxu0 0
    %3581 = vmatpush1.bf16.msra.mxu0 0
    %3582 = vmatprep.subr.bf16.mxu0 0
    %3583 = vmatpush1.bf16.msra.mxu0 0
    %3584 = vmatprep.subr.bf16.mxu0 0
    %3585 = vmatpush1.bf16.msra.mxu0 0
    %3586 = vmatprep.subr.bf16.mxu0 0
    %3587 = vmatpush1.bf16.msra.mxu0 0
    %3588 = vmatprep.subr.bf16.mxu0 0
    %3589 = vmatpush1.bf16.msra.mxu0 0
    %3590 = vmatprep.subr.bf16.mxu0 0
    %3591 = vmatpush1.bf16.msra.mxu0 0
    %3592 = vmatprep.subr.bf16.mxu0 0
    %3593 = vmatpush1.bf16.msra.mxu0 0
    %3594 = vmatprep.subr.bf16.mxu0 0
    %3595 = vmatpush1.bf16.msra.mxu0 0
    %3596 = vmatprep.mubr.bf16.mxu0 0
    %3597 = vmatmul.mubr.bf16.gmra.mrb[0].mxu0 %v3480
    %v3598 = vpop.f32.mrb[0].mxu0
    %v3599 = vadd.f32 0.0, %v3598
    %v3600 = vpop.f32.mrb[0].mxu0
    %v3601 = vadd.f32 0.0, %v3600
    %v3602 = vpop.f32.mrb[0].mxu0
    %v3603 = vpop.f32.mrb[0].mxu0
    %3604 = vdwg.mxu0
    %3605 = vmatprep.subr.bf16.mxu0 %v3470
    %3606 = vmatpush1.bf16.msra.mxu0 %v3469
    %3607 = vmatprep.subr.bf16.mxu0 0
    %3608 = vmatpush1.bf16.msra.mxu0 0
    %3609 = vmatprep.subr.bf16.mxu0 0
    %3610 = vmatpush1.bf16.msra.mxu0 0
    %3611 = vmatprep.subr.bf16.mxu0 0
    %3612 = vmatpush1.bf16.msra.mxu0 0
    %3613 = vmatprep.subr.bf16.mxu0 0
    %3614 = vmatpush1.bf16.msra.mxu0 0
    %3615 = vmatprep.subr.bf16.mxu0 0
    %3616 = vmatpush1.bf16.msra.mxu0 0
    %3617 = vmatprep.subr.bf16.mxu0 0
    %3618 = vmatpush1.bf16.msra.mxu0 0
    %3619 = vmatprep.subr.bf16.mxu0 0
    %3620 = vmatpush1.bf16.msra.mxu0 0
    %3621 = vmatprep.subr.bf16.mxu0 0
    %3622 = vmatpush1.bf16.msra.mxu0 0
    %3623 = vmatprep.subr.bf16.mxu0 0
    %3624 = vmatpush1.bf16.msra.mxu0 0
    %3625 = vmatprep.subr.bf16.mxu0 0
    %3626 = vmatpush1.bf16.msra.mxu0 0
    %3627 = vmatprep.subr.bf16.mxu0 0
    %3628 = vmatpush1.bf16.msra.mxu0 0
    %3629 = vmatprep.subr.bf16.mxu0 0
    %3630 = vmatpush1.bf16.msra.mxu0 0
    %3631 = vmatprep.subr.bf16.mxu0 0
    %3632 = vmatpush1.bf16.msra.mxu0 0
    %3633 = vmatprep.subr.bf16.mxu0 0
    %3634 = vmatpush1.bf16.msra.mxu0 0
    %3635 = vmatprep.subr.bf16.mxu0 0
    %3636 = vmatpush1.bf16.msra.mxu0 0
    %3637 = vmatprep.mubr.bf16.mxu0 0
    %3638 = vmatmul.mubr.bf16.gmra.mrb[0].mxu0 %v3480
    %v3639 = vpop.f32.mrb[0].mxu0
    %v3640 = vadd.f32 0.0, %v3639
    %v3641 = vpop.f32.mrb[0].mxu0
    %v3642 = vadd.f32 0.0, %v3641
    %v3643 = vpop.f32.mrb[0].mxu0
    %v3644 = vpop.f32.mrb[0].mxu0
    %3645 = vdwg.mxu0
    %v3646 = vrot.slane %v3474, 7
    %v3647 = vsel %vm3476, %v3646, %v3473
    %v3648 = vpack.c.b16 %v3647, %v3647
    %v3650 = vsel %vm2264, %v3648, 0
    %3652 = vmatprep.subr.bf16.mxu0 %v3455
    %3653 = vmatpush1.bf16.msra.mxu0 %v3454
    %3654 = vmatprep.subr.bf16.mxu0 0
    %3655 = vmatpush1.bf16.msra.mxu0 0
    %3656 = vmatprep.subr.bf16.mxu0 0
    %3657 = vmatpush1.bf16.msra.mxu0 0
    %3658 = vmatprep.subr.bf16.mxu0 0
    %3659 = vmatpush1.bf16.msra.mxu0 0
    %3660 = vmatprep.subr.bf16.mxu0 0
    %3661 = vmatpush1.bf16.msra.mxu0 0
    %3662 = vmatprep.subr.bf16.mxu0 0
    %3663 = vmatpush1.bf16.msra.mxu0 0
    %3664 = vmatprep.subr.bf16.mxu0 0
    %3665 = vmatpush1.bf16.msra.mxu0 0
    %3666 = vmatprep.subr.bf16.mxu0 0
    %3667 = vmatpush1.bf16.msra.mxu0 0
    %3668 = vmatprep.subr.bf16.mxu0 0
    %3669 = vmatpush1.bf16.msra.mxu0 0
    %3670 = vmatprep.subr.bf16.mxu0 0
    %3671 = vmatpush1.bf16.msra.mxu0 0
    %3672 = vmatprep.subr.bf16.mxu0 0
    %3673 = vmatpush1.bf16.msra.mxu0 0
    %3674 = vmatprep.subr.bf16.mxu0 0
    %3675 = vmatpush1.bf16.msra.mxu0 0
    %3676 = vmatprep.subr.bf16.mxu0 0
    %3677 = vmatpush1.bf16.msra.mxu0 0
    %3678 = vmatprep.subr.bf16.mxu0 0
    %3679 = vmatpush1.bf16.msra.mxu0 0
    %3680 = vmatprep.subr.bf16.mxu0 0
    %3681 = vmatpush1.bf16.msra.mxu0 0
    %3682 = vmatprep.subr.bf16.mxu0 0
    %3683 = vmatpush1.bf16.msra.mxu0 0
    %3684 = vmatprep.mubr.bf16.mxu0 0
    %3685 = vmatmul.mubr.bf16.gmra.mrb[0].mxu0 %v3650
    %v3686 = vpop.f32.mrb[0].mxu0
    %v3687 = vadd.f32 %v3517, %v3686
    %v3688 = vpop.f32.mrb[0].mxu0
    %v3689 = vadd.f32 %v3519, %v3688
    %v3690 = vpop.f32.mrb[0].mxu0
    %v3691 = vpop.f32.mrb[0].mxu0
    %3692 = vdwg.mxu0
    %3693 = vmatprep.subr.bf16.mxu0 %v3457
    %3694 = vmatpush1.bf16.msra.mxu0 %v3456
    %3695 = vmatprep.subr.bf16.mxu0 0
    %3696 = vmatpush1.bf16.msra.mxu0 0
    %3697 = vmatprep.subr.bf16.mxu0 0
    %3698 = vmatpush1.bf16.msra.mxu0 0
    %3699 = vmatprep.subr.bf16.mxu0 0
    %3700 = vmatpush1.bf16.msra.mxu0 0
    %3701 = vmatprep.subr.bf16.mxu0 0
    %3702 = vmatpush1.bf16.msra.mxu0 0
    %3703 = vmatprep.subr.bf16.mxu0 0
    %3704 = vmatpush1.bf16.msra.mxu0 0
    %3705 = vmatprep.subr.bf16.mxu0 0
    %3706 = vmatpush1.bf16.msra.mxu0 0
    %3707 = vmatprep.subr.bf16.mxu0 0
    %3708 = vmatpush1.bf16.msra.mxu0 0
    %3709 = vmatprep.subr.bf16.mxu0 0
    %3710 = vmatpush1.bf16.msra.mxu0 0
    %3711 = vmatprep.subr.bf16.mxu0 0
    %3712 = vmatpush1.bf16.msra.mxu0 0
    %3713 = vmatprep.subr.bf16.mxu0 0
    %3714 = vmatpush1.bf16.msra.mxu0 0
    %3715 = vmatprep.subr.bf16.mxu0 0
    %3716 = vmatpush1.bf16.msra.mxu0 0
    %3717 = vmatprep.subr.bf16.mxu0 0
    %3718 = vmatpush1.bf16.msra.mxu0 0
    %3719 = vmatprep.subr.bf16.mxu0 0
    %3720 = vmatpush1.bf16.msra.mxu0 0
    %3721 = vmatprep.subr.bf16.mxu0 0
    %3722 = vmatpush1.bf16.msra.mxu0 0
    %3723 = vmatprep.subr.bf16.mxu0 0
    %3724 = vmatpush1.bf16.msra.mxu0 0
    %3725 = vmatprep.mubr.bf16.mxu0 0
    %3726 = vmatmul.mubr.bf16.gmra.mrb[0].mxu0 %v3650
    %v3727 = vpop.f32.mrb[0].mxu0
    %v3728 = vadd.f32 %v3558, %v3727
    %v3729 = vpop.f32.mrb[0].mxu0
    %v3730 = vadd.f32 %v3560, %v3729
    %v3731 = vpop.f32.mrb[0].mxu0
    %v3732 = vpop.f32.mrb[0].mxu0
    %3733 = vdwg.mxu0
    %3734 = vmatprep.subr.bf16.mxu0 %v3459
    %3735 = vmatpush1.bf16.msra.mxu0 %v3458
    %3736 = vmatprep.subr.bf16.mxu0 0
    %3737 = vmatpush1.bf16.msra.mxu0 0
    %3738 = vmatprep.subr.bf16.mxu0 0
    %3739 = vmatpush1.bf16.msra.mxu0 0
    %3740 = vmatprep.subr.bf16.mxu0 0
    %3741 = vmatpush1.bf16.msra.mxu0 0
    %3742 = vmatprep.subr.bf16.mxu0 0
    %3743 = vmatpush1.bf16.msra.mxu0 0
    %3744 = vmatprep.subr.bf16.mxu0 0
    %3745 = vmatpush1.bf16.msra.mxu0 0
    %3746 = vmatprep.subr.bf16.mxu0 0
    %3747 = vmatpush1.bf16.msra.mxu0 0
    %3748 = vmatprep.subr.bf16.mxu0 0
    %3749 = vmatpush1.bf16.msra.mxu0 0
    %3750 = vmatprep.subr.bf16.mxu0 0
    %3751 = vmatpush1.bf16.msra.mxu0 0
    %3752 = vmatprep.subr.bf16.mxu0 0
    %3753 = vmatpush1.bf16.msra.mxu0 0
    %3754 = vmatprep.subr.bf16.mxu0 0
    %3755 = vmatpush1.bf16.msra.mxu0 0
    %3756 = vmatprep.subr.bf16.mxu0 0
    %3757 = vmatpush1.bf16.msra.mxu0 0
    %3758 = vmatprep.subr.bf16.mxu0 0
    %3759 = vmatpush1.bf16.msra.mxu0 0
    %3760 = vmatprep.subr.bf16.mxu0 0
    %3761 = vmatpush1.bf16.msra.mxu0 0
    %3762 = vmatprep.subr.bf16.mxu0 0
    %3763 = vmatpush1.bf16.msra.mxu0 0
    %3764 = vmatprep.subr.bf16.mxu0 0
    %3765 = vmatpush1.bf16.msra.mxu0 0
    %3766 = vmatprep.mubr.bf16.mxu0 0
    %3767 = vmatmul.mubr.bf16.gmra.mrb[0].mxu0 %v3650
    %v3768 = vpop.f32.mrb[0].mxu0
    %v3769 = vadd.f32 %v3599, %v3768
    %v3770 = vpop.f32.mrb[0].mxu0
    %v3771 = vadd.f32 %v3601, %v3770
    %v3772 = vpop.f32.mrb[0].mxu0
    %v3773 = vpop.f32.mrb[0].mxu0
    %3774 = vdwg.mxu0
    %3775 = vmatprep.subr.bf16.mxu0 %v3461
    %3776 = vmatpush1.bf16.msra.mxu0 %v3460
    %3777 = vmatprep.subr.bf16.mxu0 0
    %3778 = vmatpush1.bf16.msra.mxu0 0
    %3779 = vmatprep.subr.bf16.mxu0 0
    %3780 = vmatpush1.bf16.msra.mxu0 0
    %3781 = vmatprep.subr.bf16.mxu0 0
    %3782 = vmatpush1.bf16.msra.mxu0 0
    %3783 = vmatprep.subr.bf16.mxu0 0
    %3784 = vmatpush1.bf16.msra.mxu0 0
    %3785 = vmatprep.subr.bf16.mxu0 0
    %3786 = vmatpush1.bf16.msra.mxu0 0
    %3787 = vmatprep.subr.bf16.mxu0 0
    %3788 = vmatpush1.bf16.msra.mxu0 0
    %3789 = vmatprep.subr.bf16.mxu0 0
    %3790 = vmatpush1.bf16.msra.mxu0 0
    %3791 = vmatprep.subr.bf16.mxu0 0
    %3792 = vmatpush1.bf16.msra.mxu0 0
    %3793 = vmatprep.subr.bf16.mxu0 0
    %3794 = vmatpush1.bf16.msra.mxu0 0
    %3795 = vmatprep.subr.bf16.mxu0 0
    %3796 = vmatpush1.bf16.msra.mxu0 0
    %3797 = vmatprep.subr.bf16.mxu0 0
    %3798 = vmatpush1.bf16.msra.mxu0 0
    %3799 = vmatprep.subr.bf16.mxu0 0
    %3800 = vmatpush1.bf16.msra.mxu0 0
    %3801 = vmatprep.subr.bf16.mxu0 0
    %3802 = vmatpush1.bf16.msra.mxu0 0
    %3803 = vmatprep.subr.bf16.mxu0 0
    %3804 = vmatpush1.bf16.msra.mxu0 0
    %3805 = vmatprep.subr.bf16.mxu0 0
    %3806 = vmatpush1.bf16.msra.mxu0 0
    %3807 = vmatprep.mubr.bf16.mxu0 0
    %3808 = vmatmul.mubr.bf16.gmra.mrb[0].mxu0 %v3650
    %v3809 = vpop.f32.mrb[0].mxu0
    %v3810 = vadd.f32 %v3640, %v3809
    %v3811 = vpop.f32.mrb[0].mxu0
    %v3812 = vadd.f32 %v3642, %v3811
    %v3813 = vpop.f32.mrb[0].mxu0
    %v3814 = vpop.f32.mrb[0].mxu0
    %3815 = vdwg.mxu0
    %s3816 = scalar_lea.vmem [#allocation10], 128
    %v3817 = vld [vmem:[%s3816] sm:$0xff]
    %v3818 = vld [vmem:[%s3816 + $0x8] sm:$0xff]
    %v3819 = vld [vmem:[%s3816 + $0x10] sm:$0xff]
    %v3820 = vld [vmem:[%s3816 + $0x18] sm:$0xff]
    %v3821 = vld [vmem:[%s3816 + $0x20] sm:$0xff]
    %v3822 = vld [vmem:[%s3816 + $0x28] sm:$0xff]
    %v3823 = vld [vmem:[%s3816 + $0x30] sm:$0xff]
    %v3824 = vld [vmem:[%s3816 + $0x38] sm:$0xff]
    %v3825 = vrot.slane %v3473, 2
    %v3826 = vrot.slane %v3474, 1
    %v3827 = vsel %vm3476, %v3826, %v3825
    %v3828 = vpack.c.b16 %v3827, %v3827
    %v3830 = vsel %vm2264, %v3828, 0
    %3832 = vmatprep.subr.bf16.mxu0 %v3818
    %3833 = vmatpush1.bf16.msra.mxu0 %v3817
    %3834 = vmatprep.subr.bf16.mxu0 0
    %3835 = vmatpush1.bf16.msra.mxu0 0
    %3836 = vmatprep.subr.bf16.mxu0 0
    %3837 = vmatpush1.bf16.msra.mxu0 0
    %3838 = vmatprep.subr.bf16.mxu0 0
    %3839 = vmatpush1.bf16.msra.mxu0 0
    %3840 = vmatprep.subr.bf16.mxu0 0
    %3841 = vmatpush1.bf16.msra.mxu0 0
    %3842 = vmatprep.subr.bf16.mxu0 0
    %3843 = vmatpush1.bf16.msra.mxu0 0
    %3844 = vmatprep.subr.bf16.mxu0 0
    %3845 = vmatpush1.bf16.msra.mxu0 0
    %3846 = vmatprep.subr.bf16.mxu0 0
    %3847 = vmatpush1.bf16.msra.mxu0 0
    %3848 = vmatprep.subr.bf16.mxu0 0
    %3849 = vmatpush1.bf16.msra.mxu0 0
    %3850 = vmatprep.subr.bf16.mxu0 0
    %3851 = vmatpush1.bf16.msra.mxu0 0
    %3852 = vmatprep.subr.bf16.mxu0 0
    %3853 = vmatpush1.bf16.msra.mxu0 0
    %3854 = vmatprep.subr.bf16.mxu0 0
    %3855 = vmatpush1.bf16.msra.mxu0 0
    %3856 = vmatprep.subr.bf16.mxu0 0
    %3857 = vmatpush1.bf16.msra.mxu0 0
    %3858 = vmatprep.subr.bf16.mxu0 0
    %3859 = vmatpush1.bf16.msra.mxu0 0
    %3860 = vmatprep.subr.bf16.mxu0 0
    %3861 = vmatpush1.bf16.msra.mxu0 0
    %3862 = vmatprep.subr.bf16.mxu0 0
    %3863 = vmatpush1.bf16.msra.mxu0 0
    %3864 = vmatprep.mubr.bf16.mxu0 0
    %3865 = vmatmul.mubr.bf16.gmra.mrb[0].mxu0 %v3830
    %v3866 = vpop.f32.mrb[0].mxu0
    %v3867 = vadd.f32 0.0, %v3866
    %v3868 = vpop.f32.mrb[0].mxu0
    %v3869 = vadd.f32 0.0, %v3868
    %v3870 = vpop.f32.mrb[0].mxu0
    %v3871 = vpop.f32.mrb[0].mxu0
    %3872 = vdwg.mxu0
    %3873 = vmatprep.subr.bf16.mxu0 %v3820
    %3874 = vmatpush1.bf16.msra.mxu0 %v3819
    %3875 = vmatprep.subr.bf16.mxu0 0
    %3876 = vmatpush1.bf16.msra.mxu0 0
    %3877 = vmatprep.subr.bf16.mxu0 0
    %3878 = vmatpush1.bf16.msra.mxu0 0
    %3879 = vmatprep.subr.bf16.mxu0 0
    %3880 = vmatpush1.bf16.msra.mxu0 0
    %3881 = vmatprep.subr.bf16.mxu0 0
    %3882 = vmatpush1.bf16.msra.mxu0 0
    %3883 = vmatprep.subr.bf16.mxu0 0
    %3884 = vmatpush1.bf16.msra.mxu0 0
    %3885 = vmatprep.subr.bf16.mxu0 0
    %3886 = vmatpush1.bf16.msra.mxu0 0
    %3887 = vmatprep.subr.bf16.mxu0 0
    %3888 = vmatpush1.bf16.msra.mxu0 0
    %3889 = vmatprep.subr.bf16.mxu0 0
    %3890 = vmatpush1.bf16.msra.mxu0 0
    %3891 = vmatprep.subr.bf16.mxu0 0
    %3892 = vmatpush1.bf16.msra.mxu0 0
    %3893 = vmatprep.subr.bf16.mxu0 0
    %3894 = vmatpush1.bf16.msra.mxu0 0
    %3895 = vmatprep.subr.bf16.mxu0 0
    %3896 = vmatpush1.bf16.msra.mxu0 0
    %3897 = vmatprep.subr.bf16.mxu0 0
    %3898 = vmatpush1.bf16.msra.mxu0 0
    %3899 = vmatprep.subr.bf16.mxu0 0
    %3900 = vmatpush1.bf16.msra.mxu0 0
    %3901 = vmatprep.subr.bf16.mxu0 0
    %3902 = vmatpush1.bf16.msra.mxu0 0
    %3903 = vmatprep.subr.bf16.mxu0 0
    %3904 = vmatpush1.bf16.msra.mxu0 0
    %3905 = vmatprep.mubr.bf16.mxu0 0
    %3906 = vmatmul.mubr.bf16.gmra.mrb[0].mxu0 %v3830
    %v3907 = vpop.f32.mrb[0].mxu0
    %v3908 = vadd.f32 0.0, %v3907
    %v3909 = vpop.f32.mrb[0].mxu0
    %v3910 = vadd.f32 0.0, %v3909
    %v3911 = vpop.f32.mrb[0].mxu0
    %v3912 = vpop.f32.mrb[0].mxu0
    %3913 = vdwg.mxu0
    %3914 = vmatprep.subr.bf16.mxu0 %v3822
    %3915 = vmatpush1.bf16.msra.mxu0 %v3821
    %3916 = vmatprep.subr.bf16.mxu0 0
    %3917 = vmatpush1.bf16.msra.mxu0 0
    %3918 = vmatprep.subr.bf16.mxu0 0
    %3919 = vmatpush1.bf16.msra.mxu0 0
    %3920 = vmatprep.subr.bf16.mxu0 0
    %3921 = vmatpush1.bf16.msra.mxu0 0
    %3922 = vmatprep.subr.bf16.mxu0 0
    %3923 = vmatpush1.bf16.msra.mxu0 0
    %3924 = vmatprep.subr.bf16.mxu0 0
    %3925 = vmatpush1.bf16.msra.mxu0 0
    %3926 = vmatprep.subr.bf16.mxu0 0
    %3927 = vmatpush1.bf16.msra.mxu0 0
    %3928 = vmatprep.subr.bf16.mxu0 0
    %3929 = vmatpush1.bf16.msra.mxu0 0
    %3930 = vmatprep.subr.bf16.mxu0 0
    %3931 = vmatpush1.bf16.msra.mxu0 0
    %3932 = vmatprep.subr.bf16.mxu0 0
    %3933 = vmatpush1.bf16.msra.mxu0 0
    %3934 = vmatprep.subr.bf16.mxu0 0
    %3935 = vmatpush1.bf16.msra.mxu0 0
    %3936 = vmatprep.subr.bf16.mxu0 0
    %3937 = vmatpush1.bf16.msra.mxu0 0
    %3938 = vmatprep.subr.bf16.mxu0 0
    %3939 = vmatpush1.bf16.msra.mxu0 0
    %3940 = vmatprep.subr.bf16.mxu0 0
    %3941 = vmatpush1.bf16.msra.mxu0 0
    %3942 = vmatprep.subr.bf16.mxu0 0
    %3943 = vmatpush1.bf16.msra.mxu0 0
    %3944 = vmatprep.subr.bf16.mxu0 0
    %3945 = vmatpush1.bf16.msra.mxu0 0
    %3946 = vmatprep.mubr.bf16.mxu0 0
    %3947 = vmatmul.mubr.bf16.gmra.mrb[0].mxu0 %v3830
    %v3948 = vpop.f32.mrb[0].mxu0
    %v3949 = vadd.f32 0.0, %v3948
    %v3950 = vpop.f32.mrb[0].mxu0
    %v3951 = vadd.f32 0.0, %v3950
    %v3952 = vpop.f32.mrb[0].mxu0
    %v3953 = vpop.f32.mrb[0].mxu0
    %3954 = vdwg.mxu0
    %3955 = vmatprep.subr.bf16.mxu0 %v3824
    %3956 = vmatpush1.bf16.msra.mxu0 %v3823
    %3957 = vmatprep.subr.bf16.mxu0 0
    %3958 = vmatpush1.bf16.msra.mxu0 0
    %3959 = vmatprep.subr.bf16.mxu0 0
    %3960 = vmatpush1.bf16.msra.mxu0 0
    %3961 = vmatprep.subr.bf16.mxu0 0
    %3962 = vmatpush1.bf16.msra.mxu0 0
    %3963 = vmatprep.subr.bf16.mxu0 0
    %3964 = vmatpush1.bf16.msra.mxu0 0
    %3965 = vmatprep.subr.bf16.mxu0 0
    %3966 = vmatpush1.bf16.msra.mxu0 0
    %3967 = vmatprep.subr.bf16.mxu0 0
    %3968 = vmatpush1.bf16.msra.mxu0 0
    %3969 = vmatprep.subr.bf16.mxu0 0
    %3970 = vmatpush1.bf16.msra.mxu0 0
    %3971 = vmatprep.subr.bf16.mxu0 0
    %3972 = vmatpush1.bf16.msra.mxu0 0
    %3973 = vmatprep.subr.bf16.mxu0 0
    %3974 = vmatpush1.bf16.msra.mxu0 0
    %3975 = vmatprep.subr.bf16.mxu0 0
    %3976 = vmatpush1.bf16.msra.mxu0 0
    %3977 = vmatprep.subr.bf16.mxu0 0
    %3978 = vmatpush1.bf16.msra.mxu0 0
    %3979 = vmatprep.subr.bf16.mxu0 0
    %3980 = vmatpush1.bf16.msra.mxu0 0
    %3981 = vmatprep.subr.bf16.mxu0 0
    %3982 = vmatpush1.bf16.msra.mxu0 0
    %3983 = vmatprep.subr.bf16.mxu0 0
    %3984 = vmatpush1.bf16.msra.mxu0 0
    %3985 = vmatprep.subr.bf16.mxu0 0
    %3986 = vmatpush1.bf16.msra.mxu0 0
    %3987 = vmatprep.mubr.bf16.mxu0 0
    %3988 = vmatmul.mubr.bf16.gmra.mrb[0].mxu0 %v3830
    %v3989 = vpop.f32.mrb[0].mxu0
    %v3990 = vadd.f32 0.0, %v3989
    %v3991 = vpop.f32.mrb[0].mxu0
    %v3992 = vadd.f32 0.0, %v3991
    %v3993 = vpop.f32.mrb[0].mxu0
    %v3994 = vpop.f32.mrb[0].mxu0
    %3995 = vdwg.mxu0
    %v3996 = vadd.f32 %v3687, %v3867
    %v3997 = vadd.f32 %v3689, %v3869
    %v3998 = vadd.f32 %v3728, %v3908
    %v3999 = vadd.f32 %v3730, %v3910
    %v4000 = vadd.f32 %v3769, %v3949
    %v4001 = vadd.f32 %v3771, %v3951
    %v4002 = vadd.f32 %v3810, %v3990
    %v4003 = vadd.f32 %v3812, %v3992
    %s4004 = scalar_lea.vmem [#allocation10], 192
    %v4005 = vld [vmem:[%s4004] sm:$0xff]
    %v4006 = vld [vmem:[%s4004 + $0x8] sm:$0xff]
    %v4007 = vld [vmem:[%s4004 + $0x10] sm:$0xff]
    %v4008 = vld [vmem:[%s4004 + $0x18] sm:$0xff]
    %v4009 = vld [vmem:[%s4004 + $0x20] sm:$0xff]
    %v4010 = vld [vmem:[%s4004 + $0x28] sm:$0xff]
    %v4011 = vld [vmem:[%s4004 + $0x30] sm:$0xff]
    %v4012 = vld [vmem:[%s4004 + $0x38] sm:$0xff]
    %v4013 = vrot.slane %v3473, 3
    %v4014 = vrot.slane %v3474, 2
    %v4015 = vsel %vm3476, %v4014, %v4013
    %v4016 = vpack.c.b16 %v4015, %v4015
    %v4018 = vsel %vm2264, %v4016, 0
    %4020 = vmatprep.subr.bf16.mxu0 %v4006
    %4021 = vmatpush1.bf16.msra.mxu0 %v4005
    %4022 = vmatprep.subr.bf16.mxu0 0
    %4023 = vmatpush1.bf16.msra.mxu0 0
    %4024 = vmatprep.subr.bf16.mxu0 0
    %4025 = vmatpush1.bf16.msra.mxu0 0
    %4026 = vmatprep.subr.bf16.mxu0 0
    %4027 = vmatpush1.bf16.msra.mxu0 0
    %4028 = vmatprep.subr.bf16.mxu0 0
    %4029 = vmatpush1.bf16.msra.mxu0 0
    %4030 = vmatprep.subr.bf16.mxu0 0
    %4031 = vmatpush1.bf16.msra.mxu0 0
    %4032 = vmatprep.subr.bf16.mxu0 0
    %4033 = vmatpush1.bf16.msra.mxu0 0
    %4034 = vmatprep.subr.bf16.mxu0 0
    %4035 = vmatpush1.bf16.msra.mxu0 0
    %4036 = vmatprep.subr.bf16.mxu0 0
    %4037 = vmatpush1.bf16.msra.mxu0 0
    %4038 = vmatprep.subr.bf16.mxu0 0
    %4039 = vmatpush1.bf16.msra.mxu0 0
    %4040 = vmatprep.subr.bf16.mxu0 0
    %4041 = vmatpush1.bf16.msra.mxu0 0
    %4042 = vmatprep.subr.bf16.mxu0 0
    %4043 = vmatpush1.bf16.msra.mxu0 0
    %4044 = vmatprep.subr.bf16.mxu0 0
    %4045 = vmatpush1.bf16.msra.mxu0 0
    %4046 = vmatprep.subr.bf16.mxu0 0
    %4047 = vmatpush1.bf16.msra.mxu0 0
    %4048 = vmatprep.subr.bf16.mxu0 0
    %4049 = vmatpush1.bf16.msra.mxu0 0
    %4050 = vmatprep.subr.bf16.mxu0 0
    %4051 = vmatpush1.bf16.msra.mxu0 0
    %4052 = vmatprep.mubr.bf16.mxu0 0
    %4053 = vmatmul.mubr.bf16.gmra.mrb[0].mxu0 %v4018
    %v4054 = vpop.f32.mrb[0].mxu0
    %v4055 = vadd.f32 0.0, %v4054
    %v4056 = vpop.f32.mrb[0].mxu0
    %v4057 = vadd.f32 0.0, %v4056
    %v4058 = vpop.f32.mrb[0].mxu0
    %v4059 = vpop.f32.mrb[0].mxu0
    %4060 = vdwg.mxu0
    %4061 = vmatprep.subr.bf16.mxu0 %v4008
    %4062 = vmatpush1.bf16.msra.mxu0 %v4007
    %4063 = vmatprep.subr.bf16.mxu0 0
    %4064 = vmatpush1.bf16.msra.mxu0 0
    %4065 = vmatprep.subr.bf16.mxu0 0
    %4066 = vmatpush1.bf16.msra.mxu0 0
    %4067 = vmatprep.subr.bf16.mxu0 0
    %4068 = vmatpush1.bf16.msra.mxu0 0
    %4069 = vmatprep.subr.bf16.mxu0 0
    %4070 = vmatpush1.bf16.msra.mxu0 0
    %4071 = vmatprep.subr.bf16.mxu0 0
    %4072 = vmatpush1.bf16.msra.mxu0 0
    %4073 = vmatprep.subr.bf16.mxu0 0
    %4074 = vmatpush1.bf16.msra.mxu0 0
    %4075 = vmatprep.subr.bf16.mxu0 0
    %4076 = vmatpush1.bf16.msra.mxu0 0
    %4077 = vmatprep.subr.bf16.mxu0 0
    %4078 = vmatpush1.bf16.msra.mxu0 0
    %4079 = vmatprep.subr.bf16.mxu0 0
    %4080 = vmatpush1.bf16.msra.mxu0 0
    %4081 = vmatprep.subr.bf16.mxu0 0
    %4082 = vmatpush1.bf16.msra.mxu0 0
    %4083 = vmatprep.subr.bf16.mxu0 0
    %4084 = vmatpush1.bf16.msra.mxu0 0
    %4085 = vmatprep.subr.bf16.mxu0 0
    %4086 = vmatpush1.bf16.msra.mxu0 0
    %4087 = vmatprep.subr.bf16.mxu0 0
    %4088 = vmatpush1.bf16.msra.mxu0 0
    %4089 = vmatprep.subr.bf16.mxu0 0
    %4090 = vmatpush1.bf16.msra.mxu0 0
    %4091 = vmatprep.subr.bf16.mxu0 0
    %4092 = vmatpush1.bf16.msra.mxu0 0
    %4093 = vmatprep.mubr.bf16.mxu0 0
    %4094 = vmatmul.mubr.bf16.gmra.mrb[0].mxu0 %v4018
    %v4095 = vpop.f32.mrb[0].mxu0
    %v4096 = vadd.f32 0.0, %v4095
    %v4097 = vpop.f32.mrb[0].mxu0
    %v4098 = vadd.f32 0.0, %v4097
    %v4099 = vpop.f32.mrb[0].mxu0
    %v4100 = vpop.f32.mrb[0].mxu0
    %4101 = vdwg.mxu0
    %4102 = vmatprep.subr.bf16.mxu0 %v4010
    %4103 = vmatpush1.bf16.msra.mxu0 %v4009
    %4104 = vmatprep.subr.bf16.mxu0 0
    %4105 = vmatpush1.bf16.msra.mxu0 0
    %4106 = vmatprep.subr.bf16.mxu0 0
    %4107 = vmatpush1.bf16.msra.mxu0 0
    %4108 = vmatprep.subr.bf16.mxu0 0
    %4109 = vmatpush1.bf16.msra.mxu0 0
    %4110 = vmatprep.subr.bf16.mxu0 0
    %4111 = vmatpush1.bf16.msra.mxu0 0
    %4112 = vmatprep.subr.bf16.mxu0 0
    %4113 = vmatpush1.bf16.msra.mxu0 0
    %4114 = vmatprep.subr.bf16.mxu0 0
    %4115 = vmatpush1.bf16.msra.mxu0 0
    %4116 = vmatprep.subr.bf16.mxu0 0
    %4117 = vmatpush1.bf16.msra.mxu0 0
    %4118 = vmatprep.subr.bf16.mxu0 0
    %4119 = vmatpush1.bf16.msra.mxu0 0
    %4120 = vmatprep.subr.bf16.mxu0 0
    %4121 = vmatpush1.bf16.msra.mxu0 0
    %4122 = vmatprep.subr.bf16.mxu0 0
    %4123 = vmatpush1.bf16.msra.mxu0 0
    %4124 = vmatprep.subr.bf16.mxu0 0
    %4125 = vmatpush1.bf16.msra.mxu0 0
    %4126 = vmatprep.subr.bf16.mxu0 0
    %4127 = vmatpush1.bf16.msra.mxu0 0
    %4128 = vmatprep.subr.bf16.mxu0 0
    %4129 = vmatpush1.bf16.msra.mxu0 0
    %4130 = vmatprep.subr.bf16.mxu0 0
    %4131 = vmatpush1.bf16.msra.mxu0 0
    %4132 = vmatprep.subr.bf16.mxu0 0
    %4133 = vmatpush1.bf16.msra.mxu0 0
    %4134 = vmatprep.mubr.bf16.mxu0 0
    %4135 = vmatmul.mubr.bf16.gmra.mrb[0].mxu0 %v4018
    %v4136 = vpop.f32.mrb[0].mxu0
    %v4137 = vadd.f32 0.0, %v4136
    %v4138 = vpop.f32.mrb[0].mxu0
    %v4139 = vadd.f32 0.0, %v4138
    %v4140 = vpop.f32.mrb[0].mxu0
    %v4141 = vpop.f32.mrb[0].mxu0
    %4142 = vdwg.mxu0
    %4143 = vmatprep.subr.bf16.mxu0 %v4012
    %4144 = vmatpush1.bf16.msra.mxu0 %v4011
    %4145 = vmatprep.subr.bf16.mxu0 0
    %4146 = vmatpush1.bf16.msra.mxu0 0
    %4147 = vmatprep.subr.bf16.mxu0 0
    %4148 = vmatpush1.bf16.msra.mxu0 0
    %4149 = vmatprep.subr.bf16.mxu0 0
    %4150 = vmatpush1.bf16.msra.mxu0 0
    %4151 = vmatprep.subr.bf16.mxu0 0
    %4152 = vmatpush1.bf16.msra.mxu0 0
    %4153 = vmatprep.subr.bf16.mxu0 0
    %4154 = vmatpush1.bf16.msra.mxu0 0
    %4155 = vmatprep.subr.bf16.mxu0 0
    %4156 = vmatpush1.bf16.msra.mxu0 0
    %4157 = vmatprep.subr.bf16.mxu0 0
    %4158 = vmatpush1.bf16.msra.mxu0 0
    %4159 = vmatprep.subr.bf16.mxu0 0
    %4160 = vmatpush1.bf16.msra.mxu0 0
    %4161 = vmatprep.subr.bf16.mxu0 0
    %4162 = vmatpush1.bf16.msra.mxu0 0
    %4163 = vmatprep.subr.bf16.mxu0 0
    %4164 = vmatpush1.bf16.msra.mxu0 0
    %4165 = vmatprep.subr.bf16.mxu0 0
    %4166 = vmatpush1.bf16.msra.mxu0 0
    %4167 = vmatprep.subr.bf16.mxu0 0
    %4168 = vmatpush1.bf16.msra.mxu0 0
    %4169 = vmatprep.subr.bf16.mxu0 0
    %4170 = vmatpush1.bf16.msra.mxu0 0
    %4171 = vmatprep.subr.bf16.mxu0 0
    %4172 = vmatpush1.bf16.msra.mxu0 0
    %4173 = vmatprep.subr.bf16.mxu0 0
    %4174 = vmatpush1.bf16.msra.mxu0 0
    %4175 = vmatprep.mubr.bf16.mxu0 0
    %4176 = vmatmul.mubr.bf16.gmra.mrb[0].mxu0 %v4018
    %v4177 = vpop.f32.mrb[0].mxu0
    %v4178 = vadd.f32 0.0, %v4177
    %v4179 = vpop.f32.mrb[0].mxu0
    %v4180 = vadd.f32 0.0, %v4179
    %v4181 = vpop.f32.mrb[0].mxu0
    %v4182 = vpop.f32.mrb[0].mxu0
    %4183 = vdwg.mxu0
    %v4184 = vadd.f32 %v3996, %v4055
    %v4185 = vadd.f32 %v3997, %v4057
    %v4186 = vadd.f32 %v3998, %v4096
    %v4187 = vadd.f32 %v3999, %v4098
    %v4188 = vadd.f32 %v4000, %v4137
    %v4189 = vadd.f32 %v4001, %v4139
    %v4190 = vadd.f32 %v4002, %v4178
    %v4191 = vadd.f32 %v4003, %v4180
    %s4192 = scalar_lea.vmem [#allocation10], 256
    %v4193 = vld [vmem:[%s4192] sm:$0xff]
    %v4194 = vld [vmem:[%s4192 + $0x8] sm:$0xff]
    %v4195 = vld [vmem:[%s4192 + $0x10] sm:$0xff]
    %v4196 = vld [vmem:[%s4192 + $0x18] sm:$0xff]
    %v4197 = vld [vmem:[%s4192 + $0x20] sm:$0xff]
    %v4198 = vld [vmem:[%s4192 + $0x28] sm:$0xff]
    %v4199 = vld [vmem:[%s4192 + $0x30] sm:$0xff]
    %v4200 = vld [vmem:[%s4192 + $0x38] sm:$0xff]
    %v4201 = vrot.slane %v3473, 4
    %v4202 = vrot.slane %v3474, 3
    %v4203 = vsel %vm3476, %v4202, %v4201
    %v4204 = vpack.c.b16 %v4203, %v4203
    %v4206 = vsel %vm2264, %v4204, 0
    %4208 = vmatprep.subr.bf16.mxu0 %v4194
    %4209 = vmatpush1.bf16.msra.mxu0 %v4193
    %4210 = vmatprep.subr.bf16.mxu0 0
    %4211 = vmatpush1.bf16.msra.mxu0 0
    %4212 = vmatprep.subr.bf16.mxu0 0
    %4213 = vmatpush1.bf16.msra.mxu0 0
    %4214 = vmatprep.subr.bf16.mxu0 0
    %4215 = vmatpush1.bf16.msra.mxu0 0
    %4216 = vmatprep.subr.bf16.mxu0 0
    %4217 = vmatpush1.bf16.msra.mxu0 0
    %4218 = vmatprep.subr.bf16.mxu0 0
    %4219 = vmatpush1.bf16.msra.mxu0 0
    %4220 = vmatprep.subr.bf16.mxu0 0
    %4221 = vmatpush1.bf16.msra.mxu0 0
    %4222 = vmatprep.subr.bf16.mxu0 0
    %4223 = vmatpush1.bf16.msra.mxu0 0
    %4224 = vmatprep.subr.bf16.mxu0 0
    %4225 = vmatpush1.bf16.msra.mxu0 0
    %4226 = vmatprep.subr.bf16.mxu0 0
    %4227 = vmatpush1.bf16.msra.mxu0 0
    %4228 = vmatprep.subr.bf16.mxu0 0
    %4229 = vmatpush1.bf16.msra.mxu0 0
    %4230 = vmatprep.subr.bf16.mxu0 0
    %4231 = vmatpush1.bf16.msra.mxu0 0
    %4232 = vmatprep.subr.bf16.mxu0 0
    %4233 = vmatpush1.bf16.msra.mxu0 0
    %4234 = vmatprep.subr.bf16.mxu0 0
    %4235 = vmatpush1.bf16.msra.mxu0 0
    %4236 = vmatprep.subr.bf16.mxu0 0
    %4237 = vmatpush1.bf16.msra.mxu0 0
    %4238 = vmatprep.subr.bf16.mxu0 0
    %4239 = vmatpush1.bf16.msra.mxu0 0
    %4240 = vmatprep.mubr.bf16.mxu0 0
    %4241 = vmatmul.mubr.bf16.gmra.mrb[0].mxu0 %v4206
    %v4242 = vpop.f32.mrb[0].mxu0
    %v4243 = vadd.f32 0.0, %v4242
    %v4244 = vpop.f32.mrb[0].mxu0
    %v4245 = vadd.f32 0.0, %v4244
    %v4246 = vpop.f32.mrb[0].mxu0
    %v4247 = vpop.f32.mrb[0].mxu0
    %4248 = vdwg.mxu0
    %4249 = vmatprep.subr.bf16.mxu0 %v4196
    %4250 = vmatpush1.bf16.msra.mxu0 %v4195
    %4251 = vmatprep.subr.bf16.mxu0 0
    %4252 = vmatpush1.bf16.msra.mxu0 0
    %4253 = vmatprep.subr.bf16.mxu0 0
    %4254 = vmatpush1.bf16.msra.mxu0 0
    %4255 = vmatprep.subr.bf16.mxu0 0
    %4256 = vmatpush1.bf16.msra.mxu0 0
    %4257 = vmatprep.subr.bf16.mxu0 0
    %4258 = vmatpush1.bf16.msra.mxu0 0
    %4259 = vmatprep.subr.bf16.mxu0 0
    %4260 = vmatpush1.bf16.msra.mxu0 0
    %4261 = vmatprep.subr.bf16.mxu0 0
    %4262 = vmatpush1.bf16.msra.mxu0 0
    %4263 = vmatprep.subr.bf16.mxu0 0
    %4264 = vmatpush1.bf16.msra.mxu0 0
    %4265 = vmatprep.subr.bf16.mxu0 0
    %4266 = vmatpush1.bf16.msra.mxu0 0
    %4267 = vmatprep.subr.bf16.mxu0 0
    %4268 = vmatpush1.bf16.msra.mxu0 0
    %4269 = vmatprep.subr.bf16.mxu0 0
    %4270 = vmatpush1.bf16.msra.mxu0 0
    %4271 = vmatprep.subr.bf16.mxu0 0
    %4272 = vmatpush1.bf16.msra.mxu0 0
    %4273 = vmatprep.subr.bf16.mxu0 0
    %4274 = vmatpush1.bf16.msra.mxu0 0
    %4275 = vmatprep.subr.bf16.mxu0 0
    %4276 = vmatpush1.bf16.msra.mxu0 0
    %4277 = vmatprep.subr.bf16.mxu0 0
    %4278 = vmatpush1.bf16.msra.mxu0 0
    %4279 = vmatprep.subr.bf16.mxu0 0
    %4280 = vmatpush1.bf16.msra.mxu0 0
    %4281 = vmatprep.mubr.bf16.mxu0 0
    %4282 = vmatmul.mubr.bf16.gmra.mrb[0].mxu0 %v4206
    %v4283 = vpop.f32.mrb[0].mxu0
    %v4284 = vadd.f32 0.0, %v4283
    %v4285 = vpop.f32.mrb[0].mxu0
    %v4286 = vadd.f32 0.0, %v4285
    %v4287 = vpop.f32.mrb[0].mxu0
    %v4288 = vpop.f32.mrb[0].mxu0
    %4289 = vdwg.mxu0
    %4290 = vmatprep.subr.bf16.mxu0 %v4198
    %4291 = vmatpush1.bf16.msra.mxu0 %v4197
    %4292 = vmatprep.subr.bf16.mxu0 0
    %4293 = vmatpush1.bf16.msra.mxu0 0
    %4294 = vmatprep.subr.bf16.mxu0 0
    %4295 = vmatpush1.bf16.msra.mxu0 0
    %4296 = vmatprep.subr.bf16.mxu0 0
    %4297 = vmatpush1.bf16.msra.mxu0 0
    %4298 = vmatprep.subr.bf16.mxu0 0
    %4299 = vmatpush1.bf16.msra.mxu0 0
    %4300 = vmatprep.subr.bf16.mxu0 0
    %4301 = vmatpush1.bf16.msra.mxu0 0
    %4302 = vmatprep.subr.bf16.mxu0 0
    %4303 = vmatpush1.bf16.msra.mxu0 0
    %4304 = vmatprep.subr.bf16.mxu0 0
    %4305 = vmatpush1.bf16.msra.mxu0 0
    %4306 = vmatprep.subr.bf16.mxu0 0
    %4307 = vmatpush1.bf16.msra.mxu0 0
    %4308 = vmatprep.subr.bf16.mxu0 0
    %4309 = vmatpush1.bf16.msra.mxu0 0
    %4310 = vmatprep.subr.bf16.mxu0 0
    %4311 = vmatpush1.bf16.msra.mxu0 0
    %4312 = vmatprep.subr.bf16.mxu0 0
    %4313 = vmatpush1.bf16.msra.mxu0 0
    %4314 = vmatprep.subr.bf16.mxu0 0
    %4315 = vmatpush1.bf16.msra.mxu0 0
    %4316 = vmatprep.subr.bf16.mxu0 0
    %4317 = vmatpush1.bf16.msra.mxu0 0
    %4318 = vmatprep.subr.bf16.mxu0 0
    %4319 = vmatpush1.bf16.msra.mxu0 0
    %4320 = vmatprep.subr.bf16.mxu0 0
    %4321 = vmatpush1.bf16.msra.mxu0 0
    %4322 = vmatprep.mubr.bf16.mxu0 0
    %4323 = vmatmul.mubr.bf16.gmra.mrb[0].mxu0 %v4206
    %v4324 = vpop.f32.mrb[0].mxu0
    %v4325 = vadd.f32 0.0, %v4324
    %v4326 = vpop.f32.mrb[0].mxu0
    %v4327 = vadd.f32 0.0, %v4326
    %v4328 = vpop.f32.mrb[0].mxu0
    %v4329 = vpop.f32.mrb[0].mxu0
    %4330 = vdwg.mxu0
    %4331 = vmatprep.subr.bf16.mxu0 %v4200
    %4332 = vmatpush1.bf16.msra.mxu0 %v4199
    %4333 = vmatprep.subr.bf16.mxu0 0
    %4334 = vmatpush1.bf16.msra.mxu0 0
    %4335 = vmatprep.subr.bf16.mxu0 0
    %4336 = vmatpush1.bf16.msra.mxu0 0
    %4337 = vmatprep.subr.bf16.mxu0 0
    %4338 = vmatpush1.bf16.msra.mxu0 0
    %4339 = vmatprep.subr.bf16.mxu0 0
    %4340 = vmatpush1.bf16.msra.mxu0 0
    %4341 = vmatprep.subr.bf16.mxu0 0
    %4342 = vmatpush1.bf16.msra.mxu0 0
    %4343 = vmatprep.subr.bf16.mxu0 0
    %4344 = vmatpush1.bf16.msra.mxu0 0
    %4345 = vmatprep.subr.bf16.mxu0 0
    %4346 = vmatpush1.bf16.msra.mxu0 0
    %4347 = vmatprep.subr.bf16.mxu0 0
    %4348 = vmatpush1.bf16.msra.mxu0 0
    %4349 = vmatprep.subr.bf16.mxu0 0
    %4350 = vmatpush1.bf16.msra.mxu0 0
    %4351 = vmatprep.subr.bf16.mxu0 0
    %4352 = vmatpush1.bf16.msra.mxu0 0
    %4353 = vmatprep.subr.bf16.mxu0 0
    %4354 = vmatpush1.bf16.msra.mxu0 0
    %4355 = vmatprep.subr.bf16.mxu0 0
    %4356 = vmatpush1.bf16.msra.mxu0 0
    %4357 = vmatprep.subr.bf16.mxu0 0
    %4358 = vmatpush1.bf16.msra.mxu0 0
    %4359 = vmatprep.subr.bf16.mxu0 0
    %4360 = vmatpush1.bf16.msra.mxu0 0
    %4361 = vmatprep.subr.bf16.mxu0 0
    %4362 = vmatpush1.bf16.msra.mxu0 0
    %4363 = vmatprep.mubr.bf16.mxu0 0
    %4364 = vmatmul.mubr.bf16.gmra.mrb[0].mxu0 %v4206
    %v4365 = vpop.f32.mrb[0].mxu0
    %v4366 = vadd.f32 0.0, %v4365
    %v4367 = vpop.f32.mrb[0].mxu0
    %v4368 = vadd.f32 0.0, %v4367
    %v4369 = vpop.f32.mrb[0].mxu0
    %v4370 = vpop.f32.mrb[0].mxu0
    %4371 = vdwg.mxu0
    %v4372 = vadd.f32 %v4184, %v4243
    %v4373 = vadd.f32 %v4185, %v4245
    %v4374 = vadd.f32 %v4186, %v4284
    %v4375 = vadd.f32 %v4187, %v4286
    %v4376 = vadd.f32 %v4188, %v4325
    %v4377 = vadd.f32 %v4189, %v4327
    %v4378 = vadd.f32 %v4190, %v4366
    %v4379 = vadd.f32 %v4191, %v4368
    %s4380 = scalar_lea.vmem [#allocation10], 320
    %v4381 = vld [vmem:[%s4380] sm:$0xff]
    %v4382 = vld [vmem:[%s4380 + $0x8] sm:$0xff]
    %v4383 = vld [vmem:[%s4380 + $0x10] sm:$0xff]
    %v4384 = vld [vmem:[%s4380 + $0x18] sm:$0xff]
    %v4385 = vld [vmem:[%s4380 + $0x20] sm:$0xff]
    %v4386 = vld [vmem:[%s4380 + $0x28] sm:$0xff]
    %v4387 = vld [vmem:[%s4380 + $0x30] sm:$0xff]
    %v4388 = vld [vmem:[%s4380 + $0x38] sm:$0xff]
    %v4389 = vrot.slane %v3473, 5
    %v4390 = vrot.slane %v3474, 4
    %v4391 = vsel %vm3476, %v4390, %v4389
    %v4392 = vpack.c.b16 %v4391, %v4391
    %v4394 = vsel %vm2264, %v4392, 0
    %4396 = vmatprep.subr.bf16.mxu0 %v4382
    %4397 = vmatpush1.bf16.msra.mxu0 %v4381
    %4398 = vmatprep.subr.bf16.mxu0 0
    %4399 = vmatpush1.bf16.msra.mxu0 0
    %4400 = vmatprep.subr.bf16.mxu0 0
    %4401 = vmatpush1.bf16.msra.mxu0 0
    %4402 = vmatprep.subr.bf16.mxu0 0
    %4403 = vmatpush1.bf16.msra.mxu0 0
    %4404 = vmatprep.subr.bf16.mxu0 0
    %4405 = vmatpush1.bf16.msra.mxu0 0
    %4406 = vmatprep.subr.bf16.mxu0 0
    %4407 = vmatpush1.bf16.msra.mxu0 0
    %4408 = vmatprep.subr.bf16.mxu0 0
    %4409 = vmatpush1.bf16.msra.mxu0 0
    %4410 = vmatprep.subr.bf16.mxu0 0
    %4411 = vmatpush1.bf16.msra.mxu0 0
    %4412 = vmatprep.subr.bf16.mxu0 0
    %4413 = vmatpush1.bf16.msra.mxu0 0
    %4414 = vmatprep.subr.bf16.mxu0 0
    %4415 = vmatpush1.bf16.msra.mxu0 0
    %4416 = vmatprep.subr.bf16.mxu0 0
    %4417 = vmatpush1.bf16.msra.mxu0 0
    %4418 = vmatprep.subr.bf16.mxu0 0
    %4419 = vmatpush1.bf16.msra.mxu0 0
    %4420 = vmatprep.subr.bf16.mxu0 0
    %4421 = vmatpush1.bf16.msra.mxu0 0
    %4422 = vmatprep.subr.bf16.mxu0 0
    %4423 = vmatpush1.bf16.msra.mxu0 0
    %4424 = vmatprep.subr.bf16.mxu0 0
    %4425 = vmatpush1.bf16.msra.mxu0 0
    %4426 = vmatprep.subr.bf16.mxu0 0
    %4427 = vmatpush1.bf16.msra.mxu0 0
    %4428 = vmatprep.mubr.bf16.mxu0 0
    %4429 = vmatmul.mubr.bf16.gmra.mrb[0].mxu0 %v4394
    %v4430 = vpop.f32.mrb[0].mxu0
    %v4431 = vadd.f32 0.0, %v4430
    %v4432 = vpop.f32.mrb[0].mxu0
    %v4433 = vadd.f32 0.0, %v4432
    %v4434 = vpop.f32.mrb[0].mxu0
    %v4435 = vpop.f32.mrb[0].mxu0
    %4436 = vdwg.mxu0
    %4437 = vmatprep.subr.bf16.mxu0 %v4384
    %4438 = vmatpush1.bf16.msra.mxu0 %v4383
    %4439 = vmatprep.subr.bf16.mxu0 0
    %4440 = vmatpush1.bf16.msra.mxu0 0
    %4441 = vmatprep.subr.bf16.mxu0 0
    %4442 = vmatpush1.bf16.msra.mxu0 0
    %4443 = vmatprep.subr.bf16.mxu0 0
    %4444 = vmatpush1.bf16.msra.mxu0 0
    %4445 = vmatprep.subr.bf16.mxu0 0
    %4446 = vmatpush1.bf16.msra.mxu0 0
    %4447 = vmatprep.subr.bf16.mxu0 0
    %4448 = vmatpush1.bf16.msra.mxu0 0
    %4449 = vmatprep.subr.bf16.mxu0 0
    %4450 = vmatpush1.bf16.msra.mxu0 0
    %4451 = vmatprep.subr.bf16.mxu0 0
    %4452 = vmatpush1.bf16.msra.mxu0 0
    %4453 = vmatprep.subr.bf16.mxu0 0
    %4454 = vmatpush1.bf16.msra.mxu0 0
    %4455 = vmatprep.subr.bf16.mxu0 0
    %4456 = vmatpush1.bf16.msra.mxu0 0
    %4457 = vmatprep.subr.bf16.mxu0 0
    %4458 = vmatpush1.bf16.msra.mxu0 0
    %4459 = vmatprep.subr.bf16.mxu0 0
    %4460 = vmatpush1.bf16.msra.mxu0 0
    %4461 = vmatprep.subr.bf16.mxu0 0
    %4462 = vmatpush1.bf16.msra.mxu0 0
    %4463 = vmatprep.subr.bf16.mxu0 0
    %4464 = vmatpush1.bf16.msra.mxu0 0
    %4465 = vmatprep.subr.bf16.mxu0 0
    %4466 = vmatpush1.bf16.msra.mxu0 0
    %4467 = vmatprep.subr.bf16.mxu0 0
    %4468 = vmatpush1.bf16.msra.mxu0 0
    %4469 = vmatprep.mubr.bf16.mxu0 0
    %4470 = vmatmul.mubr.bf16.gmra.mrb[0].mxu0 %v4394
    %v4471 = vpop.f32.mrb[0].mxu0
    %v4472 = vadd.f32 0.0, %v4471
    %v4473 = vpop.f32.mrb[0].mxu0
    %v4474 = vadd.f32 0.0, %v4473
    %v4475 = vpop.f32.mrb[0].mxu0
    %v4476 = vpop.f32.mrb[0].mxu0
    %4477 = vdwg.mxu0
    %4478 = vmatprep.subr.bf16.mxu0 %v4386
    %4479 = vmatpush1.bf16.msra.mxu0 %v4385
    %4480 = vmatprep.subr.bf16.mxu0 0
    %4481 = vmatpush1.bf16.msra.mxu0 0
    %4482 = vmatprep.subr.bf16.mxu0 0
    %4483 = vmatpush1.bf16.msra.mxu0 0
    %4484 = vmatprep.subr.bf16.mxu0 0
    %4485 = vmatpush1.bf16.msra.mxu0 0
    %4486 = vmatprep.subr.bf16.mxu0 0
    %4487 = vmatpush1.bf16.msra.mxu0 0
    %4488 = vmatprep.subr.bf16.mxu0 0
    %4489 = vmatpush1.bf16.msra.mxu0 0
    %4490 = vmatprep.subr.bf16.mxu0 0
    %4491 = vmatpush1.bf16.msra.mxu0 0
    %4492 = vmatprep.subr.bf16.mxu0 0
    %4493 = vmatpush1.bf16.msra.mxu0 0
    %4494 = vmatprep.subr.bf16.mxu0 0
    %4495 = vmatpush1.bf16.msra.mxu0 0
    %4496 = vmatprep.subr.bf16.mxu0 0
    %4497 = vmatpush1.bf16.msra.mxu0 0
    %4498 = vmatprep.subr.bf16.mxu0 0
    %4499 = vmatpush1.bf16.msra.mxu0 0
    %4500 = vmatprep.subr.bf16.mxu0 0
    %4501 = vmatpush1.bf16.msra.mxu0 0
    %4502 = vmatprep.subr.bf16.mxu0 0
    %4503 = vmatpush1.bf16.msra.mxu0 0
    %4504 = vmatprep.subr.bf16.mxu0 0
    %4505 = vmatpush1.bf16.msra.mxu0 0
    %4506 = vmatprep.subr.bf16.mxu0 0
    %4507 = vmatpush1.bf16.msra.mxu0 0
    %4508 = vmatprep.subr.bf16.mxu0 0
    %4509 = vmatpush1.bf16.msra.mxu0 0
    %4510 = vmatprep.mubr.bf16.mxu0 0
    %4511 = vmatmul.mubr.bf16.gmra.mrb[0].mxu0 %v4394
    %v4512 = vpop.f32.mrb[0].mxu0
    %v4513 = vadd.f32 0.0, %v4512
    %v4514 = vpop.f32.mrb[0].mxu0
    %v4515 = vadd.f32 0.0, %v4514
    %v4516 = vpop.f32.mrb[0].mxu0
    %v4517 = vpop.f32.mrb[0].mxu0
    %4518 = vdwg.mxu0
    %4519 = vmatprep.subr.bf16.mxu0 %v4388
    %4520 = vmatpush1.bf16.msra.mxu0 %v4387
    %4521 = vmatprep.subr.bf16.mxu0 0
    %4522 = vmatpush1.bf16.msra.mxu0 0
    %4523 = vmatprep.subr.bf16.mxu0 0
    %4524 = vmatpush1.bf16.msra.mxu0 0
    %4525 = vmatprep.subr.bf16.mxu0 0
    %4526 = vmatpush1.bf16.msra.mxu0 0
    %4527 = vmatprep.subr.bf16.mxu0 0
    %4528 = vmatpush1.bf16.msra.mxu0 0
    %4529 = vmatprep.subr.bf16.mxu0 0
    %4530 = vmatpush1.bf16.msra.mxu0 0
    %4531 = vmatprep.subr.bf16.mxu0 0
    %4532 = vmatpush1.bf16.msra.mxu0 0
    %4533 = vmatprep.subr.bf16.mxu0 0
    %4534 = vmatpush1.bf16.msra.mxu0 0
    %4535 = vmatprep.subr.bf16.mxu0 0
    %4536 = vmatpush1.bf16.msra.mxu0 0
    %4537 = vmatprep.subr.bf16.mxu0 0
    %4538 = vmatpush1.bf16.msra.mxu0 0
    %4539 = vmatprep.subr.bf16.mxu0 0
    %4540 = vmatpush1.bf16.msra.mxu0 0
    %4541 = vmatprep.subr.bf16.mxu0 0
    %4542 = vmatpush1.bf16.msra.mxu0 0
    %4543 = vmatprep.subr.bf16.mxu0 0
    %4544 = vmatpush1.bf16.msra.mxu0 0
    %4545 = vmatprep.subr.bf16.mxu0 0
    %4546 = vmatpush1.bf16.msra.mxu0 0
    %4547 = vmatprep.subr.bf16.mxu0 0
    %4548 = vmatpush1.bf16.msra.mxu0 0
    %4549 = vmatprep.subr.bf16.mxu0 0
    %4550 = vmatpush1.bf16.msra.mxu0 0
    %4551 = vmatprep.mubr.bf16.mxu0 0
    %4552 = vmatmul.mubr.bf16.gmra.mrb[0].mxu0 %v4394
    %v4553 = vpop.f32.mrb[0].mxu0
    %v4554 = vadd.f32 0.0, %v4553
    %v4555 = vpop.f32.mrb[0].mxu0
    %v4556 = vadd.f32 0.0, %v4555
    %v4557 = vpop.f32.mrb[0].mxu0
    %v4558 = vpop.f32.mrb[0].mxu0
    %4559 = vdwg.mxu0
    %v4560 = vadd.f32 %v4372, %v4431
    %v4561 = vadd.f32 %v4373, %v4433
    %v4562 = vadd.f32 %v4374, %v4472
    %v4563 = vadd.f32 %v4375, %v4474
    %v4564 = vadd.f32 %v4376, %v4513
    %v4565 = vadd.f32 %v4377, %v4515
    %v4566 = vadd.f32 %v4378, %v4554
    %v4567 = vadd.f32 %v4379, %v4556
    %s4568 = scalar_lea.vmem [#allocation10], 384
    %v4569 = vld [vmem:[%s4568] sm:$0xff]
    %v4570 = vld [vmem:[%s4568 + $0x8] sm:$0xff]
    %v4571 = vld [vmem:[%s4568 + $0x10] sm:$0xff]
    %v4572 = vld [vmem:[%s4568 + $0x18] sm:$0xff]
    %v4573 = vld [vmem:[%s4568 + $0x20] sm:$0xff]
    %v4574 = vld [vmem:[%s4568 + $0x28] sm:$0xff]
    %v4575 = vld [vmem:[%s4568 + $0x30] sm:$0xff]
    %v4576 = vld [vmem:[%s4568 + $0x38] sm:$0xff]
    %v4577 = vrot.slane %v3473, 6
    %v4578 = vrot.slane %v3474, 5
    %v4579 = vsel %vm3476, %v4578, %v4577
    %v4580 = vpack.c.b16 %v4579, %v4579
    %v4582 = vsel %vm2264, %v4580, 0
    %4584 = vmatprep.subr.bf16.mxu0 %v4570
    %4585 = vmatpush1.bf16.msra.mxu0 %v4569
    %4586 = vmatprep.subr.bf16.mxu0 0
    %4587 = vmatpush1.bf16.msra.mxu0 0
    %4588 = vmatprep.subr.bf16.mxu0 0
    %4589 = vmatpush1.bf16.msra.mxu0 0
    %4590 = vmatprep.subr.bf16.mxu0 0
    %4591 = vmatpush1.bf16.msra.mxu0 0
    %4592 = vmatprep.subr.bf16.mxu0 0
    %4593 = vmatpush1.bf16.msra.mxu0 0
    %4594 = vmatprep.subr.bf16.mxu0 0
    %4595 = vmatpush1.bf16.msra.mxu0 0
    %4596 = vmatprep.subr.bf16.mxu0 0
    %4597 = vmatpush1.bf16.msra.mxu0 0
    %4598 = vmatprep.subr.bf16.mxu0 0
    %4599 = vmatpush1.bf16.msra.mxu0 0
    %4600 = vmatprep.subr.bf16.mxu0 0
    %4601 = vmatpush1.bf16.msra.mxu0 0
    %4602 = vmatprep.subr.bf16.mxu0 0
    %4603 = vmatpush1.bf16.msra.mxu0 0
    %4604 = vmatprep.subr.bf16.mxu0 0
    %4605 = vmatpush1.bf16.msra.mxu0 0
    %4606 = vmatprep.subr.bf16.mxu0 0
    %4607 = vmatpush1.bf16.msra.mxu0 0
    %4608 = vmatprep.subr.bf16.mxu0 0
    %4609 = vmatpush1.bf16.msra.mxu0 0
    %4610 = vmatprep.subr.bf16.mxu0 0
    %4611 = vmatpush1.bf16.msra.mxu0 0
    %4612 = vmatprep.subr.bf16.mxu0 0
    %4613 = vmatpush1.bf16.msra.mxu0 0
    %4614 = vmatprep.subr.bf16.mxu0 0
    %4615 = vmatpush1.bf16.msra.mxu0 0
    %4616 = vmatprep.mubr.bf16.mxu0 0
    %4617 = vmatmul.mubr.bf16.gmra.mrb[0].mxu0 %v4582
    %v4618 = vpop.f32.mrb[0].mxu0
    %v4619 = vadd.f32 0.0, %v4618
    %v4620 = vpop.f32.mrb[0].mxu0
    %v4621 = vadd.f32 0.0, %v4620
    %v4622 = vpop.f32.mrb[0].mxu0
    %v4623 = vpop.f32.mrb[0].mxu0
    %4624 = vdwg.mxu0
    %4625 = vmatprep.subr.bf16.mxu0 %v4572
    %4626 = vmatpush1.bf16.msra.mxu0 %v4571
    %4627 = vmatprep.subr.bf16.mxu0 0
    %4628 = vmatpush1.bf16.msra.mxu0 0
    %4629 = vmatprep.subr.bf16.mxu0 0
    %4630 = vmatpush1.bf16.msra.mxu0 0
    %4631 = vmatprep.subr.bf16.mxu0 0
    %4632 = vmatpush1.bf16.msra.mxu0 0
    %4633 = vmatprep.subr.bf16.mxu0 0
    %4634 = vmatpush1.bf16.msra.mxu0 0
    %4635 = vmatprep.subr.bf16.mxu0 0
    %4636 = vmatpush1.bf16.msra.mxu0 0
    %4637 = vmatprep.subr.bf16.mxu0 0
    %4638 = vmatpush1.bf16.msra.mxu0 0
    %4639 = vmatprep.subr.bf16.mxu0 0
    %4640 = vmatpush1.bf16.msra.mxu0 0
    %4641 = vmatprep.subr.bf16.mxu0 0
    %4642 = vmatpush1.bf16.msra.mxu0 0
    %4643 = vmatprep.subr.bf16.mxu0 0
    %4644 = vmatpush1.bf16.msra.mxu0 0
    %4645 = vmatprep.subr.bf16.mxu0 0
    %4646 = vmatpush1.bf16.msra.mxu0 0
    %4647 = vmatprep.subr.bf16.mxu0 0
    %4648 = vmatpush1.bf16.msra.mxu0 0
    %4649 = vmatprep.subr.bf16.mxu0 0
    %4650 = vmatpush1.bf16.msra.mxu0 0
    %4651 = vmatprep.subr.bf16.mxu0 0
    %4652 = vmatpush1.bf16.msra.mxu0 0
    %4653 = vmatprep.subr.bf16.mxu0 0
    %4654 = vmatpush1.bf16.msra.mxu0 0
    %4655 = vmatprep.subr.bf16.mxu0 0
    %4656 = vmatpush1.bf16.msra.mxu0 0
    %4657 = vmatprep.mubr.bf16.mxu0 0
    %4658 = vmatmul.mubr.bf16.gmra.mrb[0].mxu0 %v4582
    %v4659 = vpop.f32.mrb[0].mxu0
    %v4660 = vadd.f32 0.0, %v4659
    %v4661 = vpop.f32.mrb[0].mxu0
    %v4662 = vadd.f32 0.0, %v4661
    %v4663 = vpop.f32.mrb[0].mxu0
    %v4664 = vpop.f32.mrb[0].mxu0
    %4665 = vdwg.mxu0
    %4666 = vmatprep.subr.bf16.mxu0 %v4574
    %4667 = vmatpush1.bf16.msra.mxu0 %v4573
    %4668 = vmatprep.subr.bf16.mxu0 0
    %4669 = vmatpush1.bf16.msra.mxu0 0
    %4670 = vmatprep.subr.bf16.mxu0 0
    %4671 = vmatpush1.bf16.msra.mxu0 0
    %4672 = vmatprep.subr.bf16.mxu0 0
    %4673 = vmatpush1.bf16.msra.mxu0 0
    %4674 = vmatprep.subr.bf16.mxu0 0
    %4675 = vmatpush1.bf16.msra.mxu0 0
    %4676 = vmatprep.subr.bf16.mxu0 0
    %4677 = vmatpush1.bf16.msra.mxu0 0
    %4678 = vmatprep.subr.bf16.mxu0 0
    %4679 = vmatpush1.bf16.msra.mxu0 0
    %4680 = vmatprep.subr.bf16.mxu0 0
    %4681 = vmatpush1.bf16.msra.mxu0 0
    %4682 = vmatprep.subr.bf16.mxu0 0
    %4683 = vmatpush1.bf16.msra.mxu0 0
    %4684 = vmatprep.subr.bf16.mxu0 0
    %4685 = vmatpush1.bf16.msra.mxu0 0
    %4686 = vmatprep.subr.bf16.mxu0 0
    %4687 = vmatpush1.bf16.msra.mxu0 0
    %4688 = vmatprep.subr.bf16.mxu0 0
    %4689 = vmatpush1.bf16.msra.mxu0 0
    %4690 = vmatprep.subr.bf16.mxu0 0
    %4691 = vmatpush1.bf16.msra.mxu0 0
    %4692 = vmatprep.subr.bf16.mxu0 0
    %4693 = vmatpush1.bf16.msra.mxu0 0
    %4694 = vmatprep.subr.bf16.mxu0 0
    %4695 = vmatpush1.bf16.msra.mxu0 0
    %4696 = vmatprep.subr.bf16.mxu0 0
    %4697 = vmatpush1.bf16.msra.mxu0 0
    %4698 = vmatprep.mubr.bf16.mxu0 0
    %4699 = vmatmul.mubr.bf16.gmra.mrb[0].mxu0 %v4582
    %v4700 = vpop.f32.mrb[0].mxu0
    %v4701 = vadd.f32 0.0, %v4700
    %v4702 = vpop.f32.mrb[0].mxu0
    %v4703 = vadd.f32 0.0, %v4702
    %v4704 = vpop.f32.mrb[0].mxu0
    %v4705 = vpop.f32.mrb[0].mxu0
    %4706 = vdwg.mxu0
    %4707 = vmatprep.subr.bf16.mxu0 %v4576
    %4708 = vmatpush1.bf16.msra.mxu0 %v4575
    %4709 = vmatprep.subr.bf16.mxu0 0
    %4710 = vmatpush1.bf16.msra.mxu0 0
    %4711 = vmatprep.subr.bf16.mxu0 0
    %4712 = vmatpush1.bf16.msra.mxu0 0
    %4713 = vmatprep.subr.bf16.mxu0 0
    %4714 = vmatpush1.bf16.msra.mxu0 0
    %4715 = vmatprep.subr.bf16.mxu0 0
    %4716 = vmatpush1.bf16.msra.mxu0 0
    %4717 = vmatprep.subr.bf16.mxu0 0
    %4718 = vmatpush1.bf16.msra.mxu0 0
    %4719 = vmatprep.subr.bf16.mxu0 0
    %4720 = vmatpush1.bf16.msra.mxu0 0
    %4721 = vmatprep.subr.bf16.mxu0 0
    %4722 = vmatpush1.bf16.msra.mxu0 0
    %4723 = vmatprep.subr.bf16.mxu0 0
    %4724 = vmatpush1.bf16.msra.mxu0 0
    %4725 = vmatprep.subr.bf16.mxu0 0
    %4726 = vmatpush1.bf16.msra.mxu0 0
    %4727 = vmatprep.subr.bf16.mxu0 0
    %4728 = vmatpush1.bf16.msra.mxu0 0
    %4729 = vmatprep.subr.bf16.mxu0 0
    %4730 = vmatpush1.bf16.msra.mxu0 0
    %4731 = vmatprep.subr.bf16.mxu0 0
    %4732 = vmatpush1.bf16.msra.mxu0 0
    %4733 = vmatprep.subr.bf16.mxu0 0
    %4734 = vmatpush1.bf16.msra.mxu0 0
    %4735 = vmatprep.subr.bf16.mxu0 0
    %4736 = vmatpush1.bf16.msra.mxu0 0
    %4737 = vmatprep.subr.bf16.mxu0 0
    %4738 = vmatpush1.bf16.msra.mxu0 0
    %4739 = vmatprep.mubr.bf16.mxu0 0
    %4740 = vmatmul.mubr.bf16.gmra.mrb[0].mxu0 %v4582
    %v4741 = vpop.f32.mrb[0].mxu0
    %v4742 = vadd.f32 0.0, %v4741
    %v4743 = vpop.f32.mrb[0].mxu0
    %v4744 = vadd.f32 0.0, %v4743
    %v4745 = vpop.f32.mrb[0].mxu0
    %v4746 = vpop.f32.mrb[0].mxu0
    %4747 = vdwg.mxu0
    %v4748 = vadd.f32 %v4560, %v4619
    %v4749 = vadd.f32 %v4561, %v4621
    %v4750 = vadd.f32 %v4562, %v4660
    %v4751 = vadd.f32 %v4563, %v4662
    %v4752 = vadd.f32 %v4564, %v4701
    %v4753 = vadd.f32 %v4565, %v4703
    %v4754 = vadd.f32 %v4566, %v4742
    %v4755 = vadd.f32 %v4567, %v4744
    %s4756 = scalar_lea.vmem [#allocation10], 448
    %v4757 = vld [vmem:[%s4756] sm:$0xff]
    %v4758 = vld [vmem:[%s4756 + $0x8] sm:$0xff]
    %v4759 = vld [vmem:[%s4756 + $0x10] sm:$0xff]
    %v4760 = vld [vmem:[%s4756 + $0x18] sm:$0xff]
    %v4761 = vld [vmem:[%s4756 + $0x20] sm:$0xff]
    %v4762 = vld [vmem:[%s4756 + $0x28] sm:$0xff]
    %v4763 = vld [vmem:[%s4756 + $0x30] sm:$0xff]
    %v4764 = vld [vmem:[%s4756 + $0x38] sm:$0xff]
    %v4765 = vrot.slane %v3473, 7
    %v4766 = vrot.slane %v3474, 6
    %v4767 = vsel %vm3476, %v4766, %v4765
    %v4768 = vpack.c.b16 %v4767, %v4767
    %v4770 = vsel %vm2264, %v4768, 0
    %4772 = vmatprep.subr.bf16.mxu0 %v4758
    %4773 = vmatpush1.bf16.msra.mxu0 %v4757
    %4774 = vmatprep.subr.bf16.mxu0 0
    %4775 = vmatpush1.bf16.msra.mxu0 0
    %4776 = vmatprep.subr.bf16.mxu0 0
    %4777 = vmatpush1.bf16.msra.mxu0 0
    %4778 = vmatprep.subr.bf16.mxu0 0
    %4779 = vmatpush1.bf16.msra.mxu0 0
    %4780 = vmatprep.subr.bf16.mxu0 0
    %4781 = vmatpush1.bf16.msra.mxu0 0
    %4782 = vmatprep.subr.bf16.mxu0 0
    %4783 = vmatpush1.bf16.msra.mxu0 0
    %4784 = vmatprep.subr.bf16.mxu0 0
    %4785 = vmatpush1.bf16.msra.mxu0 0
    %4786 = vmatprep.subr.bf16.mxu0 0
    %4787 = vmatpush1.bf16.msra.mxu0 0
    %4788 = vmatprep.subr.bf16.mxu0 0
    %4789 = vmatpush1.bf16.msra.mxu0 0
    %4790 = vmatprep.subr.bf16.mxu0 0
    %4791 = vmatpush1.bf16.msra.mxu0 0
    %4792 = vmatprep.subr.bf16.mxu0 0
    %4793 = vmatpush1.bf16.msra.mxu0 0
    %4794 = vmatprep.subr.bf16.mxu0 0
    %4795 = vmatpush1.bf16.msra.mxu0 0
    %4796 = vmatprep.subr.bf16.mxu0 0
    %4797 = vmatpush1.bf16.msra.mxu0 0
    %4798 = vmatprep.subr.bf16.mxu0 0
    %4799 = vmatpush1.bf16.msra.mxu0 0
    %4800 = vmatprep.subr.bf16.mxu0 0
    %4801 = vmatpush1.bf16.msra.mxu0 0
    %4802 = vmatprep.subr.bf16.mxu0 0
    %4803 = vmatpush1.bf16.msra.mxu0 0
    %4804 = vmatprep.mubr.bf16.mxu0 0
    %4805 = vmatmul.mubr.bf16.gmra.mrb[0].mxu0 %v4770
    %v4806 = vpop.f32.mrb[0].mxu0
    %v4807 = vadd.f32 0.0, %v4806
    %v4808 = vpop.f32.mrb[0].mxu0
    %v4809 = vadd.f32 0.0, %v4808
    %v4810 = vpop.f32.mrb[0].mxu0
    %v4811 = vpop.f32.mrb[0].mxu0
    %4812 = vdwg.mxu0
    %4813 = vmatprep.subr.bf16.mxu0 %v4760
    %4814 = vmatpush1.bf16.msra.mxu0 %v4759
    %4815 = vmatprep.subr.bf16.mxu0 0
    %4816 = vmatpush1.bf16.msra.mxu0 0
    %4817 = vmatprep.subr.bf16.mxu0 0
    %4818 = vmatpush1.bf16.msra.mxu0 0
    %4819 = vmatprep.subr.bf16.mxu0 0
    %4820 = vmatpush1.bf16.msra.mxu0 0
    %4821 = vmatprep.subr.bf16.mxu0 0
    %4822 = vmatpush1.bf16.msra.mxu0 0
    %4823 = vmatprep.subr.bf16.mxu0 0
    %4824 = vmatpush1.bf16.msra.mxu0 0
    %4825 = vmatprep.subr.bf16.mxu0 0
    %4826 = vmatpush1.bf16.msra.mxu0 0
    %4827 = vmatprep.subr.bf16.mxu0 0
    %4828 = vmatpush1.bf16.msra.mxu0 0
    %4829 = vmatprep.subr.bf16.mxu0 0
    %4830 = vmatpush1.bf16.msra.mxu0 0
    %4831 = vmatprep.subr.bf16.mxu0 0
    %4832 = vmatpush1.bf16.msra.mxu0 0
    %4833 = vmatprep.subr.bf16.mxu0 0
    %4834 = vmatpush1.bf16.msra.mxu0 0
    %4835 = vmatprep.subr.bf16.mxu0 0
    %4836 = vmatpush1.bf16.msra.mxu0 0
    %4837 = vmatprep.subr.bf16.mxu0 0
    %4838 = vmatpush1.bf16.msra.mxu0 0
    %4839 = vmatprep.subr.bf16.mxu0 0
    %4840 = vmatpush1.bf16.msra.mxu0 0
    %4841 = vmatprep.subr.bf16.mxu0 0
    %4842 = vmatpush1.bf16.msra.mxu0 0
    %4843 = vmatprep.subr.bf16.mxu0 0
    %4844 = vmatpush1.bf16.msra.mxu0 0
    %4845 = vmatprep.mubr.bf16.mxu0 0
    %4846 = vmatmul.mubr.bf16.gmra.mrb[0].mxu0 %v4770
    %v4847 = vpop.f32.mrb[0].mxu0
    %v4848 = vadd.f32 0.0, %v4847
    %v4849 = vpop.f32.mrb[0].mxu0
    %v4850 = vadd.f32 0.0, %v4849
    %v4851 = vpop.f32.mrb[0].mxu0
    %v4852 = vpop.f32.mrb[0].mxu0
    %4853 = vdwg.mxu0
    %4854 = vmatprep.subr.bf16.mxu0 %v4762
    %4855 = vmatpush1.bf16.msra.mxu0 %v4761
    %4856 = vmatprep.subr.bf16.mxu0 0
    %4857 = vmatpush1.bf16.msra.mxu0 0
    %4858 = vmatprep.subr.bf16.mxu0 0
    %4859 = vmatpush1.bf16.msra.mxu0 0
    %4860 = vmatprep.subr.bf16.mxu0 0
    %4861 = vmatpush1.bf16.msra.mxu0 0
    %4862 = vmatprep.subr.bf16.mxu0 0
    %4863 = vmatpush1.bf16.msra.mxu0 0
    %4864 = vmatprep.subr.bf16.mxu0 0
    %4865 = vmatpush1.bf16.msra.mxu0 0
    %4866 = vmatprep.subr.bf16.mxu0 0
    %4867 = vmatpush1.bf16.msra.mxu0 0
    %4868 = vmatprep.subr.bf16.mxu0 0
    %4869 = vmatpush1.bf16.msra.mxu0 0
    %4870 = vmatprep.subr.bf16.mxu0 0
    %4871 = vmatpush1.bf16.msra.mxu0 0
    %4872 = vmatprep.subr.bf16.mxu0 0
    %4873 = vmatpush1.bf16.msra.mxu0 0
    %4874 = vmatprep.subr.bf16.mxu0 0
    %4875 = vmatpush1.bf16.msra.mxu0 0
    %4876 = vmatprep.subr.bf16.mxu0 0
    %4877 = vmatpush1.bf16.msra.mxu0 0
    %4878 = vmatprep.subr.bf16.mxu0 0
    %4879 = vmatpush1.bf16.msra.mxu0 0
    %4880 = vmatprep.subr.bf16.mxu0 0
    %4881 = vmatpush1.bf16.msra.mxu0 0
    %4882 = vmatprep.subr.bf16.mxu0 0
    %4883 = vmatpush1.bf16.msra.mxu0 0
    %4884 = vmatprep.subr.bf16.mxu0 0
    %4885 = vmatpush1.bf16.msra.mxu0 0
    %4886 = vmatprep.mubr.bf16.mxu0 0
    %4887 = vmatmul.mubr.bf16.gmra.mrb[0].mxu0 %v4770
    %v4888 = vpop.f32.mrb[0].mxu0
    %v4889 = vadd.f32 0.0, %v4888
    %v4890 = vpop.f32.mrb[0].mxu0
    %v4891 = vadd.f32 0.0, %v4890
    %v4892 = vpop.f32.mrb[0].mxu0
    %v4893 = vpop.f32.mrb[0].mxu0
    %4894 = vdwg.mxu0
    %4895 = vmatprep.subr.bf16.mxu0 %v4764
    %4896 = vmatpush1.bf16.msra.mxu0 %v4763
    %4897 = vmatprep.subr.bf16.mxu0 0
    %4898 = vmatpush1.bf16.msra.mxu0 0
    %4899 = vmatprep.subr.bf16.mxu0 0
    %4900 = vmatpush1.bf16.msra.mxu0 0
    %4901 = vmatprep.subr.bf16.mxu0 0
    %4902 = vmatpush1.bf16.msra.mxu0 0
    %4903 = vmatprep.subr.bf16.mxu0 0
    %4904 = vmatpush1.bf16.msra.mxu0 0
    %4905 = vmatprep.subr.bf16.mxu0 0
    %4906 = vmatpush1.bf16.msra.mxu0 0
    %4907 = vmatprep.subr.bf16.mxu0 0
    %4908 = vmatpush1.bf16.msra.mxu0 0
    %4909 = vmatprep.subr.bf16.mxu0 0
    %4910 = vmatpush1.bf16.msra.mxu0 0
    %4911 = vmatprep.subr.bf16.mxu0 0
    %4912 = vmatpush1.bf16.msra.mxu0 0
    %4913 = vmatprep.subr.bf16.mxu0 0
    %4914 = vmatpush1.bf16.msra.mxu0 0
    %4915 = vmatprep.subr.bf16.mxu0 0
    %4916 = vmatpush1.bf16.msra.mxu0 0
    %4917 = vmatprep.subr.bf16.mxu0 0
    %4918 = vmatpush1.bf16.msra.mxu0 0
    %4919 = vmatprep.subr.bf16.mxu0 0
    %4920 = vmatpush1.bf16.msra.mxu0 0
    %4921 = vmatprep.subr.bf16.mxu0 0
    %4922 = vmatpush1.bf16.msra.mxu0 0
    %4923 = vmatprep.subr.bf16.mxu0 0
    %4924 = vmatpush1.bf16.msra.mxu0 0
    %4925 = vmatprep.subr.bf16.mxu0 0
    %4926 = vmatpush1.bf16.msra.mxu0 0
    %4927 = vmatprep.mubr.bf16.mxu0 0
    %4928 = vmatmul.mubr.bf16.gmra.mrb[0].mxu0 %v4770
    %v4929 = vpop.f32.mrb[0].mxu0
    %v4930 = vadd.f32 0.0, %v4929
    %v4931 = vpop.f32.mrb[0].mxu0
    %v4932 = vadd.f32 0.0, %v4931
    %v4933 = vpop.f32.mrb[0].mxu0
    %v4934 = vpop.f32.mrb[0].mxu0
    %4935 = vdwg.mxu0
    %v4936 = vadd.f32 %v4748, %v4807
    %v4937 = vadd.f32 %v4749, %v4809
    %v4938 = vadd.f32 %v4750, %v4848
    %v4939 = vadd.f32 %v4751, %v4850
    %v4940 = vadd.f32 %v4752, %v4889
    %v4941 = vadd.f32 %v4753, %v4891
    %v4942 = vadd.f32 %v4754, %v4930
    %v4943 = vadd.f32 %v4755, %v4932
    %v4944 = vpack.c.bf16 %v3440, %v3440
    %v4945 = vpack.c.bf16 %v3442, %v3442
    %s4946 = scalar_lea.vmem [#allocation10], 512
    %v4947 = vld [vmem:[%s4946] sm:$0xff]
    %v4948 = vld [vmem:[%s4946 + $0x8] sm:$0xff]
    %v4949 = vld [vmem:[%s4946 + $0x10] sm:$0xff]
    %v4950 = vld [vmem:[%s4946 + $0x18] sm:$0xff]
    %v4951 = vld [vmem:[%s4946 + $0x20] sm:$0xff]
    %v4952 = vld [vmem:[%s4946 + $0x28] sm:$0xff]
    %v4953 = vld [vmem:[%s4946 + $0x30] sm:$0xff]
    %v4954 = vld [vmem:[%s4946 + $0x38] sm:$0xff]
    %v4957 = vunpack.c.l.b16 %v4944
    %v4958 = vunpack.c.l.b16 %v4945
    %v4959 = vrot.slane %v4958, 7
    %v4960 = vsel %vm3476, %v4959, %v4957
    %v4961 = vpack.c.b16 %v4960, %v4960
    %v4963 = vsel %vm2264, %v4961, 0
    %4965 = vmatprep.subr.bf16.mxu0 %v4948
    %4966 = vmatpush1.bf16.msra.mxu0 %v4947
    %4967 = vmatprep.subr.bf16.mxu0 0
    %4968 = vmatpush1.bf16.msra.mxu0 0
    %4969 = vmatprep.subr.bf16.mxu0 0
    %4970 = vmatpush1.bf16.msra.mxu0 0
    %4971 = vmatprep.subr.bf16.mxu0 0
    %4972 = vmatpush1.bf16.msra.mxu0 0
    %4973 = vmatprep.subr.bf16.mxu0 0
    %4974 = vmatpush1.bf16.msra.mxu0 0
    %4975 = vmatprep.subr.bf16.mxu0 0
    %4976 = vmatpush1.bf16.msra.mxu0 0
    %4977 = vmatprep.subr.bf16.mxu0 0
    %4978 = vmatpush1.bf16.msra.mxu0 0
    %4979 = vmatprep.subr.bf16.mxu0 0
    %4980 = vmatpush1.bf16.msra.mxu0 0
    %4981 = vmatprep.subr.bf16.mxu0 0
    %4982 = vmatpush1.bf16.msra.mxu0 0
    %4983 = vmatprep.subr.bf16.mxu0 0
    %4984 = vmatpush1.bf16.msra.mxu0 0
    %4985 = vmatprep.subr.bf16.mxu0 0
    %4986 = vmatpush1.bf16.msra.mxu0 0
    %4987 = vmatprep.subr.bf16.mxu0 0
    %4988 = vmatpush1.bf16.msra.mxu0 0
    %4989 = vmatprep.subr.bf16.mxu0 0
    %4990 = vmatpush1.bf16.msra.mxu0 0
    %4991 = vmatprep.subr.bf16.mxu0 0
    %4992 = vmatpush1.bf16.msra.mxu0 0
    %4993 = vmatprep.subr.bf16.mxu0 0
    %4994 = vmatpush1.bf16.msra.mxu0 0
    %4995 = vmatprep.subr.bf16.mxu0 0
    %4996 = vmatpush1.bf16.msra.mxu0 0
    %4997 = vmatprep.mubr.bf16.mxu0 0
    %4998 = vmatmul.mubr.bf16.gmra.mrb[0].mxu0 %v4963
    %v4999 = vpop.f32.mrb[0].mxu0
    %v5000 = vadd.f32 0.0, %v4999
    %v5001 = vpop.f32.mrb[0].mxu0
    %v5002 = vadd.f32 0.0, %v5001
    %v5003 = vpop.f32.mrb[0].mxu0
    %v5004 = vpop.f32.mrb[0].mxu0
    %5005 = vdwg.mxu0
    %5006 = vmatprep.subr.bf16.mxu0 %v4950
    %5007 = vmatpush1.bf16.msra.mxu0 %v4949
    %5008 = vmatprep.subr.bf16.mxu0 0
    %5009 = vmatpush1.bf16.msra.mxu0 0
    %5010 = vmatprep.subr.bf16.mxu0 0
    %5011 = vmatpush1.bf16.msra.mxu0 0
    %5012 = vmatprep.subr.bf16.mxu0 0
    %5013 = vmatpush1.bf16.msra.mxu0 0
    %5014 = vmatprep.subr.bf16.mxu0 0
    %5015 = vmatpush1.bf16.msra.mxu0 0
    %5016 = vmatprep.subr.bf16.mxu0 0
    %5017 = vmatpush1.bf16.msra.mxu0 0
    %5018 = vmatprep.subr.bf16.mxu0 0
    %5019 = vmatpush1.bf16.msra.mxu0 0
    %5020 = vmatprep.subr.bf16.mxu0 0
    %5021 = vmatpush1.bf16.msra.mxu0 0
    %5022 = vmatprep.subr.bf16.mxu0 0
    %5023 = vmatpush1.bf16.msra.mxu0 0
    %5024 = vmatprep.subr.bf16.mxu0 0
    %5025 = vmatpush1.bf16.msra.mxu0 0
    %5026 = vmatprep.subr.bf16.mxu0 0
    %5027 = vmatpush1.bf16.msra.mxu0 0
    %5028 = vmatprep.subr.bf16.mxu0 0
    %5029 = vmatpush1.bf16.msra.mxu0 0
    %5030 = vmatprep.subr.bf16.mxu0 0
    %5031 = vmatpush1.bf16.msra.mxu0 0
    %5032 = vmatprep.subr.bf16.mxu0 0
    %5033 = vmatpush1.bf16.msra.mxu0 0
    %5034 = vmatprep.subr.bf16.mxu0 0
    %5035 = vmatpush1.bf16.msra.mxu0 0
    %5036 = vmatprep.subr.bf16.mxu0 0
    %5037 = vmatpush1.bf16.msra.mxu0 0
    %5038 = vmatprep.mubr.bf16.mxu0 0
    %5039 = vmatmul.mubr.bf16.gmra.mrb[0].mxu0 %v4963
    %v5040 = vpop.f32.mrb[0].mxu0
    %v5041 = vadd.f32 0.0, %v5040
    %v5042 = vpop.f32.mrb[0].mxu0
    %v5043 = vadd.f32 0.0, %v5042
    %v5044 = vpop.f32.mrb[0].mxu0
    %v5045 = vpop.f32.mrb[0].mxu0
    %5046 = vdwg.mxu0
    %5047 = vmatprep.subr.bf16.mxu0 %v4952
    %5048 = vmatpush1.bf16.msra.mxu0 %v4951
    %5049 = vmatprep.subr.bf16.mxu0 0
    %5050 = vmatpush1.bf16.msra.mxu0 0
    %5051 = vmatprep.subr.bf16.mxu0 0
    %5052 = vmatpush1.bf16.msra.mxu0 0
    %5053 = vmatprep.subr.bf16.mxu0 0
    %5054 = vmatpush1.bf16.msra.mxu0 0
    %5055 = vmatprep.subr.bf16.mxu0 0
    %5056 = vmatpush1.bf16.msra.mxu0 0
    %5057 = vmatprep.subr.bf16.mxu0 0
    %5058 = vmatpush1.bf16.msra.mxu0 0
    %5059 = vmatprep.subr.bf16.mxu0 0
    %5060 = vmatpush1.bf16.msra.mxu0 0
    %5061 = vmatprep.subr.bf16.mxu0 0
    %5062 = vmatpush1.bf16.msra.mxu0 0
    %5063 = vmatprep.subr.bf16.mxu0 0
    %5064 = vmatpush1.bf16.msra.mxu0 0
    %5065 = vmatprep.subr.bf16.mxu0 0
    %5066 = vmatpush1.bf16.msra.mxu0 0
    %5067 = vmatprep.subr.bf16.mxu0 0
    %5068 = vmatpush1.bf16.msra.mxu0 0
    %5069 = vmatprep.subr.bf16.mxu0 0
    %5070 = vmatpush1.bf16.msra.mxu0 0
    %5071 = vmatprep.subr.bf16.mxu0 0
    %5072 = vmatpush1.bf16.msra.mxu0 0
    %5073 = vmatprep.subr.bf16.mxu0 0
    %5074 = vmatpush1.bf16.msra.mxu0 0
    %5075 = vmatprep.subr.bf16.mxu0 0
    %5076 = vmatpush1.bf16.msra.mxu0 0
    %5077 = vmatprep.subr.bf16.mxu0 0
    %5078 = vmatpush1.bf16.msra.mxu0 0
    %5079 = vmatprep.mubr.bf16.mxu0 0
    %5080 = vmatmul.mubr.bf16.gmra.mrb[0].mxu0 %v4963
    %v5081 = vpop.f32.mrb[0].mxu0
    %v5082 = vadd.f32 0.0, %v5081
    %v5083 = vpop.f32.mrb[0].mxu0
    %v5084 = vadd.f32 0.0, %v5083
    %v5085 = vpop.f32.mrb[0].mxu0
    %v5086 = vpop.f32.mrb[0].mxu0
    %5087 = vdwg.mxu0
    %5088 = vmatprep.subr.bf16.mxu0 %v4954
    %5089 = vmatpush1.bf16.msra.mxu0 %v4953
    %5090 = vmatprep.subr.bf16.mxu0 0
    %5091 = vmatpush1.bf16.msra.mxu0 0
    %5092 = vmatprep.subr.bf16.mxu0 0
    %5093 = vmatpush1.bf16.msra.mxu0 0
    %5094 = vmatprep.subr.bf16.mxu0 0
    %5095 = vmatpush1.bf16.msra.mxu0 0
    %5096 = vmatprep.subr.bf16.mxu0 0
    %5097 = vmatpush1.bf16.msra.mxu0 0
    %5098 = vmatprep.subr.bf16.mxu0 0
    %5099 = vmatpush1.bf16.msra.mxu0 0
    %5100 = vmatprep.subr.bf16.mxu0 0
    %5101 = vmatpush1.bf16.msra.mxu0 0
    %5102 = vmatprep.subr.bf16.mxu0 0
    %5103 = vmatpush1.bf16.msra.mxu0 0
    %5104 = vmatprep.subr.bf16.mxu0 0
    %5105 = vmatpush1.bf16.msra.mxu0 0
    %5106 = vmatprep.subr.bf16.mxu0 0
    %5107 = vmatpush1.bf16.msra.mxu0 0
    %5108 = vmatprep.subr.bf16.mxu0 0
    %5109 = vmatpush1.bf16.msra.mxu0 0
    %5110 = vmatprep.subr.bf16.mxu0 0
    %5111 = vmatpush1.bf16.msra.mxu0 0
    %5112 = vmatprep.subr.bf16.mxu0 0
    %5113 = vmatpush1.bf16.msra.mxu0 0
    %5114 = vmatprep.subr.bf16.mxu0 0
    %5115 = vmatpush1.bf16.msra.mxu0 0
    %5116 = vmatprep.subr.bf16.mxu0 0
    %5117 = vmatpush1.bf16.msra.mxu0 0
    %5118 = vmatprep.subr.bf16.mxu0 0
    %5119 = vmatpush1.bf16.msra.mxu0 0
    %5120 = vmatprep.mubr.bf16.mxu0 0
    %5121 = vmatmul.mubr.bf16.gmra.mrb[0].mxu0 %v4963
    %v5122 = vpop.f32.mrb[0].mxu0
    %v5123 = vadd.f32 0.0, %v5122
    %v5124 = vpop.f32.mrb[0].mxu0
    %v5125 = vadd.f32 0.0, %v5124
    %v5126 = vpop.f32.mrb[0].mxu0
    %v5127 = vpop.f32.mrb[0].mxu0
    %5128 = vdwg.mxu0
    %v5129 = vadd.f32 %v4936, %v5000
    %v5130 = vadd.f32 %v4937, %v5002
    %v5131 = vadd.f32 %v4938, %v5041
    %v5132 = vadd.f32 %v4939, %v5043
    %v5133 = vadd.f32 %v4940, %v5082
    %v5134 = vadd.f32 %v4941, %v5084
    %v5135 = vadd.f32 %v4942, %v5123
    %v5136 = vadd.f32 %v4943, %v5125
    %s5137 = scalar_lea.vmem [#allocation10], 576
    %v5138 = vld [vmem:[%s5137] sm:$0xff]
    %v5139 = vld [vmem:[%s5137 + $0x8] sm:$0xff]
    %v5140 = vld [vmem:[%s5137 + $0x10] sm:$0xff]
    %v5141 = vld [vmem:[%s5137 + $0x18] sm:$0xff]
    %v5142 = vld [vmem:[%s5137 + $0x20] sm:$0xff]
    %v5143 = vld [vmem:[%s5137 + $0x28] sm:$0xff]
    %v5144 = vld [vmem:[%s5137 + $0x30] sm:$0xff]
    %v5145 = vld [vmem:[%s5137 + $0x38] sm:$0xff]
    %v5146 = vrot.slane %v4957, 1
    %v5147 = vsel %vm3476, %v4958, %v5146
    %v5148 = vpack.c.b16 %v5147, %v5147
    %v5150 = vsel %vm2264, %v5148, 0
    %5152 = vmatprep.subr.bf16.mxu0 %v5139
    %5153 = vmatpush1.bf16.msra.mxu0 %v5138
    %5154 = vmatprep.subr.bf16.mxu0 0
    %5155 = vmatpush1.bf16.msra.mxu0 0
    %5156 = vmatprep.subr.bf16.mxu0 0
    %5157 = vmatpush1.bf16.msra.mxu0 0
    %5158 = vmatprep.subr.bf16.mxu0 0
    %5159 = vmatpush1.bf16.msra.mxu0 0
    %5160 = vmatprep.subr.bf16.mxu0 0
    %5161 = vmatpush1.bf16.msra.mxu0 0
    %5162 = vmatprep.subr.bf16.mxu0 0
    %5163 = vmatpush1.bf16.msra.mxu0 0
    %5164 = vmatprep.subr.bf16.mxu0 0
    %5165 = vmatpush1.bf16.msra.mxu0 0
    %5166 = vmatprep.subr.bf16.mxu0 0
    %5167 = vmatpush1.bf16.msra.mxu0 0
    %5168 = vmatprep.subr.bf16.mxu0 0
    %5169 = vmatpush1.bf16.msra.mxu0 0
    %5170 = vmatprep.subr.bf16.mxu0 0
    %5171 = vmatpush1.bf16.msra.mxu0 0
    %5172 = vmatprep.subr.bf16.mxu0 0
    %5173 = vmatpush1.bf16.msra.mxu0 0
    %5174 = vmatprep.subr.bf16.mxu0 0
    %5175 = vmatpush1.bf16.msra.mxu0 0
    %5176 = vmatprep.subr.bf16.mxu0 0
    %5177 = vmatpush1.bf16.msra.mxu0 0
    %5178 = vmatprep.subr.bf16.mxu0 0
    %5179 = vmatpush1.bf16.msra.mxu0 0
    %5180 = vmatprep.subr.bf16.mxu0 0
    %5181 = vmatpush1.bf16.msra.mxu0 0
    %5182 = vmatprep.subr.bf16.mxu0 0
    %5183 = vmatpush1.bf16.msra.mxu0 0
    %5184 = vmatprep.mubr.bf16.mxu0 0
    %5185 = vmatmul.mubr.bf16.gmra.mrb[0].mxu0 %v5150
    %v5186 = vpop.f32.mrb[0].mxu0
    %v5187 = vadd.f32 0.0, %v5186
    %v5188 = vpop.f32.mrb[0].mxu0
    %v5189 = vadd.f32 0.0, %v5188
    %v5190 = vpop.f32.mrb[0].mxu0
    %v5191 = vpop.f32.mrb[0].mxu0
    %5192 = vdwg.mxu0
    %5193 = vmatprep.subr.bf16.mxu0 %v5141
    %5194 = vmatpush1.bf16.msra.mxu0 %v5140
    %5195 = vmatprep.subr.bf16.mxu0 0
    %5196 = vmatpush1.bf16.msra.mxu0 0
    %5197 = vmatprep.subr.bf16.mxu0 0
    %5198 = vmatpush1.bf16.msra.mxu0 0
    %5199 = vmatprep.subr.bf16.mxu0 0
    %5200 = vmatpush1.bf16.msra.mxu0 0
    %5201 = vmatprep.subr.bf16.mxu0 0
    %5202 = vmatpush1.bf16.msra.mxu0 0
    %5203 = vmatprep.subr.bf16.mxu0 0
    %5204 = vmatpush1.bf16.msra.mxu0 0
    %5205 = vmatprep.subr.bf16.mxu0 0
    %5206 = vmatpush1.bf16.msra.mxu0 0
    %5207 = vmatprep.subr.bf16.mxu0 0
    %5208 = vmatpush1.bf16.msra.mxu0 0
    %5209 = vmatprep.subr.bf16.mxu0 0
    %5210 = vmatpush1.bf16.msra.mxu0 0
    %5211 = vmatprep.subr.bf16.mxu0 0
    %5212 = vmatpush1.bf16.msra.mxu0 0
    %5213 = vmatprep.subr.bf16.mxu0 0
    %5214 = vmatpush1.bf16.msra.mxu0 0
    %5215 = vmatprep.subr.bf16.mxu0 0
    %5216 = vmatpush1.bf16.msra.mxu0 0
    %5217 = vmatprep.subr.bf16.mxu0 0
    %5218 = vmatpush1.bf16.msra.mxu0 0
    %5219 = vmatprep.subr.bf16.mxu0 0
    %5220 = vmatpush1.bf16.msra.mxu0 0
    %5221 = vmatprep.subr.bf16.mxu0 0
    %5222 = vmatpush1.bf16.msra.mxu0 0
    %5223 = vmatprep.subr.bf16.mxu0 0
    %5224 = vmatpush1.bf16.msra.mxu0 0
    %5225 = vmatprep.mubr.bf16.mxu0 0
    %5226 = vmatmul.mubr.bf16.gmra.mrb[0].mxu0 %v5150
    %v5227 = vpop.f32.mrb[0].mxu0
    %v5228 = vadd.f32 0.0, %v5227
    %v5229 = vpop.f32.mrb[0].mxu0
    %v5230 = vadd.f32 0.0, %v5229
    %v5231 = vpop.f32.mrb[0].mxu0
    %v5232 = vpop.f32.mrb[0].mxu0
    %5233 = vdwg.mxu0
    %5234 = vmatprep.subr.bf16.mxu0 %v5143
    %5235 = vmatpush1.bf16.msra.mxu0 %v5142
    %5236 = vmatprep.subr.bf16.mxu0 0
    %5237 = vmatpush1.bf16.msra.mxu0 0
    %5238 = vmatprep.subr.bf16.mxu0 0
    %5239 = vmatpush1.bf16.msra.mxu0 0
    %5240 = vmatprep.subr.bf16.mxu0 0
    %5241 = vmatpush1.bf16.msra.mxu0 0
    %5242 = vmatprep.subr.bf16.mxu0 0
    %5243 = vmatpush1.bf16.msra.mxu0 0
    %5244 = vmatprep.subr.bf16.mxu0 0
    %5245 = vmatpush1.bf16.msra.mxu0 0
    %5246 = vmatprep.subr.bf16.mxu0 0
    %5247 = vmatpush1.bf16.msra.mxu0 0
    %5248 = vmatprep.subr.bf16.mxu0 0
    %5249 = vmatpush1.bf16.msra.mxu0 0
    %5250 = vmatprep.subr.bf16.mxu0 0
    %5251 = vmatpush1.bf16.msra.mxu0 0
    %5252 = vmatprep.subr.bf16.mxu0 0
    %5253 = vmatpush1.bf16.msra.mxu0 0
    %5254 = vmatprep.subr.bf16.mxu0 0
    %5255 = vmatpush1.bf16.msra.mxu0 0
    %5256 = vmatprep.subr.bf16.mxu0 0
    %5257 = vmatpush1.bf16.msra.mxu0 0
    %5258 = vmatprep.subr.bf16.mxu0 0
    %5259 = vmatpush1.bf16.msra.mxu0 0
    %5260 = vmatprep.subr.bf16.mxu0 0
    %5261 = vmatpush1.bf16.msra.mxu0 0
    %5262 = vmatprep.subr.bf16.mxu0 0
    %5263 = vmatpush1.bf16.msra.mxu0 0
    %5264 = vmatprep.subr.bf16.mxu0 0
    %5265 = vmatpush1.bf16.msra.mxu0 0
    %5266 = vmatprep.mubr.bf16.mxu0 0
    %5267 = vmatmul.mubr.bf16.gmra.mrb[0].mxu0 %v5150
    %v5268 = vpop.f32.mrb[0].mxu0
    %v5269 = vadd.f32 0.0, %v5268
    %v5270 = vpop.f32.mrb[0].mxu0
    %v5271 = vadd.f32 0.0, %v5270
    %v5272 = vpop.f32.mrb[0].mxu0
    %v5273 = vpop.f32.mrb[0].mxu0
    %5274 = vdwg.mxu0
    %5275 = vmatprep.subr.bf16.mxu0 %v5145
    %5276 = vmatpush1.bf16.msra.mxu0 %v5144
    %5277 = vmatprep.subr.bf16.mxu0 0
    %5278 = vmatpush1.bf16.msra.mxu0 0
    %5279 = vmatprep.subr.bf16.mxu0 0
    %5280 = vmatpush1.bf16.msra.mxu0 0
    %5281 = vmatprep.subr.bf16.mxu0 0
    %5282 = vmatpush1.bf16.msra.mxu0 0
    %5283 = vmatprep.subr.bf16.mxu0 0
    %5284 = vmatpush1.bf16.msra.mxu0 0
    %5285 = vmatprep.subr.bf16.mxu0 0
    %5286 = vmatpush1.bf16.msra.mxu0 0
    %5287 = vmatprep.subr.bf16.mxu0 0
    %5288 = vmatpush1.bf16.msra.mxu0 0
    %5289 = vmatprep.subr.bf16.mxu0 0
    %5290 = vmatpush1.bf16.msra.mxu0 0
    %5291 = vmatprep.subr.bf16.mxu0 0
    %5292 = vmatpush1.bf16.msra.mxu0 0
    %5293 = vmatprep.subr.bf16.mxu0 0
    %5294 = vmatpush1.bf16.msra.mxu0 0
    %5295 = vmatprep.subr.bf16.mxu0 0
    %5296 = vmatpush1.bf16.msra.mxu0 0
    %5297 = vmatprep.subr.bf16.mxu0 0
    %5298 = vmatpush1.bf16.msra.mxu0 0
    %5299 = vmatprep.subr.bf16.mxu0 0
    %5300 = vmatpush1.bf16.msra.mxu0 0
    %5301 = vmatprep.subr.bf16.mxu0 0
    %5302 = vmatpush1.bf16.msra.mxu0 0
    %5303 = vmatprep.subr.bf16.mxu0 0
    %5304 = vmatpush1.bf16.msra.mxu0 0
    %5305 = vmatprep.subr.bf16.mxu0 0
    %5306 = vmatpush1.bf16.msra.mxu0 0
    %5307 = vmatprep.mubr.bf16.mxu0 0
    %5308 = vmatmul.mubr.bf16.gmra.mrb[0].mxu0 %v5150
    %v5309 = vpop.f32.mrb[0].mxu0
    %v5310 = vadd.f32 0.0, %v5309
    %v5311 = vpop.f32.mrb[0].mxu0
    %v5312 = vadd.f32 0.0, %v5311
    %v5313 = vpop.f32.mrb[0].mxu0
    %v5314 = vpop.f32.mrb[0].mxu0
    %5315 = vdwg.mxu0
    %v5316 = vadd.f32 %v5129, %v5187
    %v5317 = vadd.f32 %v5130, %v5189
    %v5318 = vadd.f32 %v5131, %v5228
    %v5319 = vadd.f32 %v5132, %v5230
    %v5320 = vadd.f32 %v5133, %v5269
    %v5321 = vadd.f32 %v5134, %v5271
    %v5322 = vadd.f32 %v5135, %v5310
    %v5323 = vadd.f32 %v5136, %v5312
    %s5324 = scalar_lea.vmem [#allocation10], 640
    %v5325 = vld [vmem:[%s5324] sm:$0xff]
    %v5326 = vld [vmem:[%s5324 + $0x8] sm:$0xff]
    %v5327 = vld [vmem:[%s5324 + $0x10] sm:$0xff]
    %v5328 = vld [vmem:[%s5324 + $0x18] sm:$0xff]
    %v5329 = vld [vmem:[%s5324 + $0x20] sm:$0xff]
    %v5330 = vld [vmem:[%s5324 + $0x28] sm:$0xff]
    %v5331 = vld [vmem:[%s5324 + $0x30] sm:$0xff]
    %v5332 = vld [vmem:[%s5324 + $0x38] sm:$0xff]
    %v5333 = vrot.slane %v4957, 2
    %v5334 = vrot.slane %v4958, 1
    %v5335 = vsel %vm3476, %v5334, %v5333
    %v5336 = vpack.c.b16 %v5335, %v5335
    %v5338 = vsel %vm2264, %v5336, 0
    %5340 = vmatprep.subr.bf16.mxu0 %v5326
    %5341 = vmatpush1.bf16.msra.mxu0 %v5325
    %5342 = vmatprep.subr.bf16.mxu0 0
    %5343 = vmatpush1.bf16.msra.mxu0 0
    %5344 = vmatprep.subr.bf16.mxu0 0
    %5345 = vmatpush1.bf16.msra.mxu0 0
    %5346 = vmatprep.subr.bf16.mxu0 0
    %5347 = vmatpush1.bf16.msra.mxu0 0
    %5348 = vmatprep.subr.bf16.mxu0 0
    %5349 = vmatpush1.bf16.msra.mxu0 0
    %5350 = vmatprep.subr.bf16.mxu0 0
    %5351 = vmatpush1.bf16.msra.mxu0 0
    %5352 = vmatprep.subr.bf16.mxu0 0
    %5353 = vmatpush1.bf16.msra.mxu0 0
    %5354 = vmatprep.subr.bf16.mxu0 0
    %5355 = vmatpush1.bf16.msra.mxu0 0
    %5356 = vmatprep.subr.bf16.mxu0 0
    %5357 = vmatpush1.bf16.msra.mxu0 0
    %5358 = vmatprep.subr.bf16.mxu0 0
    %5359 = vmatpush1.bf16.msra.mxu0 0
    %5360 = vmatprep.subr.bf16.mxu0 0
    %5361 = vmatpush1.bf16.msra.mxu0 0
    %5362 = vmatprep.subr.bf16.mxu0 0
    %5363 = vmatpush1.bf16.msra.mxu0 0
    %5364 = vmatprep.subr.bf16.mxu0 0
    %5365 = vmatpush1.bf16.msra.mxu0 0
    %5366 = vmatprep.subr.bf16.mxu0 0
    %5367 = vmatpush1.bf16.msra.mxu0 0
    %5368 = vmatprep.subr.bf16.mxu0 0
    %5369 = vmatpush1.bf16.msra.mxu0 0
    %5370 = vmatprep.subr.bf16.mxu0 0
    %5371 = vmatpush1.bf16.msra.mxu0 0
    %5372 = vmatprep.mubr.bf16.mxu0 0
    %5373 = vmatmul.mubr.bf16.gmra.mrb[0].mxu0 %v5338
    %v5374 = vpop.f32.mrb[0].mxu0
    %v5375 = vadd.f32 0.0, %v5374
    %v5376 = vpop.f32.mrb[0].mxu0
    %v5377 = vadd.f32 0.0, %v5376
    %v5378 = vpop.f32.mrb[0].mxu0
    %v5379 = vpop.f32.mrb[0].mxu0
    %5380 = vdwg.mxu0
    %5381 = vmatprep.subr.bf16.mxu0 %v5328
    %5382 = vmatpush1.bf16.msra.mxu0 %v5327
    %5383 = vmatprep.subr.bf16.mxu0 0
    %5384 = vmatpush1.bf16.msra.mxu0 0
    %5385 = vmatprep.subr.bf16.mxu0 0
    %5386 = vmatpush1.bf16.msra.mxu0 0
    %5387 = vmatprep.subr.bf16.mxu0 0
    %5388 = vmatpush1.bf16.msra.mxu0 0
    %5389 = vmatprep.subr.bf16.mxu0 0
    %5390 = vmatpush1.bf16.msra.mxu0 0
    %5391 = vmatprep.subr.bf16.mxu0 0
    %5392 = vmatpush1.bf16.msra.mxu0 0
    %5393 = vmatprep.subr.bf16.mxu0 0
    %5394 = vmatpush1.bf16.msra.mxu0 0
    %5395 = vmatprep.subr.bf16.mxu0 0
    %5396 = vmatpush1.bf16.msra.mxu0 0
    %5397 = vmatprep.subr.bf16.mxu0 0
    %5398 = vmatpush1.bf16.msra.mxu0 0
    %5399 = vmatprep.subr.bf16.mxu0 0
    %5400 = vmatpush1.bf16.msra.mxu0 0
    %5401 = vmatprep.subr.bf16.mxu0 0
    %5402 = vmatpush1.bf16.msra.mxu0 0
    %5403 = vmatprep.subr.bf16.mxu0 0
    %5404 = vmatpush1.bf16.msra.mxu0 0
    %5405 = vmatprep.subr.bf16.mxu0 0
    %5406 = vmatpush1.bf16.msra.mxu0 0
    %5407 = vmatprep.subr.bf16.mxu0 0
    %5408 = vmatpush1.bf16.msra.mxu0 0
    %5409 = vmatprep.subr.bf16.mxu0 0
    %5410 = vmatpush1.bf16.msra.mxu0 0
    %5411 = vmatprep.subr.bf16.mxu0 0
    %5412 = vmatpush1.bf16.msra.mxu0 0
    %5413 = vmatprep.mubr.bf16.mxu0 0
    %5414 = vmatmul.mubr.bf16.gmra.mrb[0].mxu0 %v5338
    %v5415 = vpop.f32.mrb[0].mxu0
    %v5416 = vadd.f32 0.0, %v5415
    %v5417 = vpop.f32.mrb[0].mxu0
    %v5418 = vadd.f32 0.0, %v5417
    %v5419 = vpop.f32.mrb[0].mxu0
    %v5420 = vpop.f32.mrb[0].mxu0
    %5421 = vdwg.mxu0
    %5422 = vmatprep.subr.bf16.mxu0 %v5330
    %5423 = vmatpush1.bf16.msra.mxu0 %v5329
    %5424 = vmatprep.subr.bf16.mxu0 0
    %5425 = vmatpush1.bf16.msra.mxu0 0
    %5426 = vmatprep.subr.bf16.mxu0 0
    %5427 = vmatpush1.bf16.msra.mxu0 0
    %5428 = vmatprep.subr.bf16.mxu0 0
    %5429 = vmatpush1.bf16.msra.mxu0 0
    %5430 = vmatprep.subr.bf16.mxu0 0
    %5431 = vmatpush1.bf16.msra.mxu0 0
    %5432 = vmatprep.subr.bf16.mxu0 0
    %5433 = vmatpush1.bf16.msra.mxu0 0
    %5434 = vmatprep.subr.bf16.mxu0 0
    %5435 = vmatpush1.bf16.msra.mxu0 0
    %5436 = vmatprep.subr.bf16.mxu0 0
    %5437 = vmatpush1.bf16.msra.mxu0 0
    %5438 = vmatprep.subr.bf16.mxu0 0
    %5439 = vmatpush1.bf16.msra.mxu0 0
    %5440 = vmatprep.subr.bf16.mxu0 0
    %5441 = vmatpush1.bf16.msra.mxu0 0
    %5442 = vmatprep.subr.bf16.mxu0 0
    %5443 = vmatpush1.bf16.msra.mxu0 0
    %5444 = vmatprep.subr.bf16.mxu0 0
    %5445 = vmatpush1.bf16.msra.mxu0 0
    %5446 = vmatprep.subr.bf16.mxu0 0
    %5447 = vmatpush1.bf16.msra.mxu0 0
    %5448 = vmatprep.subr.bf16.mxu0 0
    %5449 = vmatpush1.bf16.msra.mxu0 0
    %5450 = vmatprep.subr.bf16.mxu0 0
    %5451 = vmatpush1.bf16.msra.mxu0 0
    %5452 = vmatprep.subr.bf16.mxu0 0
    %5453 = vmatpush1.bf16.msra.mxu0 0
    %5454 = vmatprep.mubr.bf16.mxu0 0
    %5455 = vmatmul.mubr.bf16.gmra.mrb[0].mxu0 %v5338
    %v5456 = vpop.f32.mrb[0].mxu0
    %v5457 = vadd.f32 0.0, %v5456
    %v5458 = vpop.f32.mrb[0].mxu0
    %v5459 = vadd.f32 0.0, %v5458
    %v5460 = vpop.f32.mrb[0].mxu0
    %v5461 = vpop.f32.mrb[0].mxu0
    %5462 = vdwg.mxu0
    %5463 = vmatprep.subr.bf16.mxu0 %v5332
    %5464 = vmatpush1.bf16.msra.mxu0 %v5331
    %5465 = vmatprep.subr.bf16.mxu0 0
    %5466 = vmatpush1.bf16.msra.mxu0 0
    %5467 = vmatprep.subr.bf16.mxu0 0
    %5468 = vmatpush1.bf16.msra.mxu0 0
    %5469 = vmatprep.subr.bf16.mxu0 0
    %5470 = vmatpush1.bf16.msra.mxu0 0
    %5471 = vmatprep.subr.bf16.mxu0 0
    %5472 = vmatpush1.bf16.msra.mxu0 0
    %5473 = vmatprep.subr.bf16.mxu0 0
    %5474 = vmatpush1.bf16.msra.mxu0 0
    %5475 = vmatprep.subr.bf16.mxu0 0
    %5476 = vmatpush1.bf16.msra.mxu0 0
    %5477 = vmatprep.subr.bf16.mxu0 0
    %5478 = vmatpush1.bf16.msra.mxu0 0
    %5479 = vmatprep.subr.bf16.mxu0 0
    %5480 = vmatpush1.bf16.msra.mxu0 0
    %5481 = vmatprep.subr.bf16.mxu0 0
    %5482 = vmatpush1.bf16.msra.mxu0 0
    %5483 = vmatprep.subr.bf16.mxu0 0
    %5484 = vmatpush1.bf16.msra.mxu0 0
    %5485 = vmatprep.subr.bf16.mxu0 0
    %5486 = vmatpush1.bf16.msra.mxu0 0
    %5487 = vmatprep.subr.bf16.mxu0 0
    %5488 = vmatpush1.bf16.msra.mxu0 0
    %5489 = vmatprep.subr.bf16.mxu0 0
    %5490 = vmatpush1.bf16.msra.mxu0 0
    %5491 = vmatprep.subr.bf16.mxu0 0
    %5492 = vmatpush1.bf16.msra.mxu0 0
    %5493 = vmatprep.subr.bf16.mxu0 0
    %5494 = vmatpush1.bf16.msra.mxu0 0
    %5495 = vmatprep.mubr.bf16.mxu0 0
    %5496 = vmatmul.mubr.bf16.gmra.mrb[0].mxu0 %v5338
    %v5497 = vpop.f32.mrb[0].mxu0
    %v5498 = vadd.f32 0.0, %v5497
    %v5499 = vpop.f32.mrb[0].mxu0
    %v5500 = vadd.f32 0.0, %v5499
    %v5501 = vpop.f32.mrb[0].mxu0
    %v5502 = vpop.f32.mrb[0].mxu0
    %5503 = vdwg.mxu0
    %v5504 = vadd.f32 %v5316, %v5375
    %v5505 = vadd.f32 %v5317, %v5377
    %v5506 = vadd.f32 %v5318, %v5416
    %v5507 = vadd.f32 %v5319, %v5418
    %v5508 = vadd.f32 %v5320, %v5457
    %v5509 = vadd.f32 %v5321, %v5459
    %v5510 = vadd.f32 %v5322, %v5498
    %v5511 = vadd.f32 %v5323, %v5500
    %s5512 = scalar_lea.vmem [#allocation10], 704
    %v5513 = vld [vmem:[%s5512] sm:$0xff]
    %v5514 = vld [vmem:[%s5512 + $0x8] sm:$0xff]
    %v5515 = vld [vmem:[%s5512 + $0x10] sm:$0xff]
    %v5516 = vld [vmem:[%s5512 + $0x18] sm:$0xff]
    %v5517 = vld [vmem:[%s5512 + $0x20] sm:$0xff]
    %v5518 = vld [vmem:[%s5512 + $0x28] sm:$0xff]
    %v5519 = vld [vmem:[%s5512 + $0x30] sm:$0xff]
    %v5520 = vld [vmem:[%s5512 + $0x38] sm:$0xff]
    %v5521 = vrot.slane %v4957, 3
    %v5522 = vrot.slane %v4958, 2
    %v5523 = vsel %vm3476, %v5522, %v5521
    %v5524 = vpack.c.b16 %v5523, %v5523
    %v5526 = vsel %vm2264, %v5524, 0
    %5528 = vmatprep.subr.bf16.mxu0 %v5514
    %5529 = vmatpush1.bf16.msra.mxu0 %v5513
    %5530 = vmatprep.subr.bf16.mxu0 0
    %5531 = vmatpush1.bf16.msra.mxu0 0
    %5532 = vmatprep.subr.bf16.mxu0 0
    %5533 = vmatpush1.bf16.msra.mxu0 0
    %5534 = vmatprep.subr.bf16.mxu0 0
    %5535 = vmatpush1.bf16.msra.mxu0 0
    %5536 = vmatprep.subr.bf16.mxu0 0
    %5537 = vmatpush1.bf16.msra.mxu0 0
    %5538 = vmatprep.subr.bf16.mxu0 0
    %5539 = vmatpush1.bf16.msra.mxu0 0
    %5540 = vmatprep.subr.bf16.mxu0 0
    %5541 = vmatpush1.bf16.msra.mxu0 0
    %5542 = vmatprep.subr.bf16.mxu0 0
    %5543 = vmatpush1.bf16.msra.mxu0 0
    %5544 = vmatprep.subr.bf16.mxu0 0
    %5545 = vmatpush1.bf16.msra.mxu0 0
    %5546 = vmatprep.subr.bf16.mxu0 0
    %5547 = vmatpush1.bf16.msra.mxu0 0
    %5548 = vmatprep.subr.bf16.mxu0 0
    %5549 = vmatpush1.bf16.msra.mxu0 0
    %5550 = vmatprep.subr.bf16.mxu0 0
    %5551 = vmatpush1.bf16.msra.mxu0 0
    %5552 = vmatprep.subr.bf16.mxu0 0
    %5553 = vmatpush1.bf16.msra.mxu0 0
    %5554 = vmatprep.subr.bf16.mxu0 0
    %5555 = vmatpush1.bf16.msra.mxu0 0
    %5556 = vmatprep.subr.bf16.mxu0 0
    %5557 = vmatpush1.bf16.msra.mxu0 0
    %5558 = vmatprep.subr.bf16.mxu0 0
    %5559 = vmatpush1.bf16.msra.mxu0 0
    %5560 = vmatprep.mubr.bf16.mxu0 0
    %5561 = vmatmul.mubr.bf16.gmra.mrb[0].mxu0 %v5526
    %v5562 = vpop.f32.mrb[0].mxu0
    %v5563 = vadd.f32 0.0, %v5562
    %v5564 = vpop.f32.mrb[0].mxu0
    %v5565 = vadd.f32 0.0, %v5564
    %v5566 = vpop.f32.mrb[0].mxu0
    %v5567 = vpop.f32.mrb[0].mxu0
    %5568 = vdwg.mxu0
    %5569 = vmatprep.subr.bf16.mxu0 %v5516
    %5570 = vmatpush1.bf16.msra.mxu0 %v5515
    %5571 = vmatprep.subr.bf16.mxu0 0
    %5572 = vmatpush1.bf16.msra.mxu0 0
    %5573 = vmatprep.subr.bf16.mxu0 0
    %5574 = vmatpush1.bf16.msra.mxu0 0
    %5575 = vmatprep.subr.bf16.mxu0 0
    %5576 = vmatpush1.bf16.msra.mxu0 0
    %5577 = vmatprep.subr.bf16.mxu0 0
    %5578 = vmatpush1.bf16.msra.mxu0 0
    %5579 = vmatprep.subr.bf16.mxu0 0
    %5580 = vmatpush1.bf16.msra.mxu0 0
    %5581 = vmatprep.subr.bf16.mxu0 0
    %5582 = vmatpush1.bf16.msra.mxu0 0
    %5583 = vmatprep.subr.bf16.mxu0 0
    %5584 = vmatpush1.bf16.msra.mxu0 0
    %5585 = vmatprep.subr.bf16.mxu0 0
    %5586 = vmatpush1.bf16.msra.mxu0 0
    %5587 = vmatprep.subr.bf16.mxu0 0
    %5588 = vmatpush1.bf16.msra.mxu0 0
    %5589 = vmatprep.subr.bf16.mxu0 0
    %5590 = vmatpush1.bf16.msra.mxu0 0
    %5591 = vmatprep.subr.bf16.mxu0 0
    %5592 = vmatpush1.bf16.msra.mxu0 0
    %5593 = vmatprep.subr.bf16.mxu0 0
    %5594 = vmatpush1.bf16.msra.mxu0 0
    %5595 = vmatprep.subr.bf16.mxu0 0
    %5596 = vmatpush1.bf16.msra.mxu0 0
    %5597 = vmatprep.subr.bf16.mxu0 0
    %5598 = vmatpush1.bf16.msra.mxu0 0
    %5599 = vmatprep.subr.bf16.mxu0 0
    %5600 = vmatpush1.bf16.msra.mxu0 0
    %5601 = vmatprep.mubr.bf16.mxu0 0
    %5602 = vmatmul.mubr.bf16.gmra.mrb[0].mxu0 %v5526
    %v5603 = vpop.f32.mrb[0].mxu0
    %v5604 = vadd.f32 0.0, %v5603
    %v5605 = vpop.f32.mrb[0].mxu0
    %v5606 = vadd.f32 0.0, %v5605
    %v5607 = vpop.f32.mrb[0].mxu0
    %v5608 = vpop.f32.mrb[0].mxu0
    %5609 = vdwg.mxu0
    %5610 = vmatprep.subr.bf16.mxu0 %v5518
    %5611 = vmatpush1.bf16.msra.mxu0 %v5517
    %5612 = vmatprep.subr.bf16.mxu0 0
    %5613 = vmatpush1.bf16.msra.mxu0 0
    %5614 = vmatprep.subr.bf16.mxu0 0
    %5615 = vmatpush1.bf16.msra.mxu0 0
    %5616 = vmatprep.subr.bf16.mxu0 0
    %5617 = vmatpush1.bf16.msra.mxu0 0
    %5618 = vmatprep.subr.bf16.mxu0 0
    %5619 = vmatpush1.bf16.msra.mxu0 0
    %5620 = vmatprep.subr.bf16.mxu0 0
    %5621 = vmatpush1.bf16.msra.mxu0 0
    %5622 = vmatprep.subr.bf16.mxu0 0
    %5623 = vmatpush1.bf16.msra.mxu0 0
    %5624 = vmatprep.subr.bf16.mxu0 0
    %5625 = vmatpush1.bf16.msra.mxu0 0
    %5626 = vmatprep.subr.bf16.mxu0 0
    %5627 = vmatpush1.bf16.msra.mxu0 0
    %5628 = vmatprep.subr.bf16.mxu0 0
    %5629 = vmatpush1.bf16.msra.mxu0 0
    %5630 = vmatprep.subr.bf16.mxu0 0
    %5631 = vmatpush1.bf16.msra.mxu0 0
    %5632 = vmatprep.subr.bf16.mxu0 0
    %5633 = vmatpush1.bf16.msra.mxu0 0
    %5634 = vmatprep.subr.bf16.mxu0 0
    %5635 = vmatpush1.bf16.msra.mxu0 0
    %5636 = vmatprep.subr.bf16.mxu0 0
    %5637 = vmatpush1.bf16.msra.mxu0 0
    %5638 = vmatprep.subr.bf16.mxu0 0
    %5639 = vmatpush1.bf16.msra.mxu0 0
    %5640 = vmatprep.subr.bf16.mxu0 0
    %5641 = vmatpush1.bf16.msra.mxu0 0
    %5642 = vmatprep.mubr.bf16.mxu0 0
    %5643 = vmatmul.mubr.bf16.gmra.mrb[0].mxu0 %v5526
    %v5644 = vpop.f32.mrb[0].mxu0
    %v5645 = vadd.f32 0.0, %v5644
    %v5646 = vpop.f32.mrb[0].mxu0
    %v5647 = vadd.f32 0.0, %v5646
    %v5648 = vpop.f32.mrb[0].mxu0
    %v5649 = vpop.f32.mrb[0].mxu0
    %5650 = vdwg.mxu0
    %5651 = vmatprep.subr.bf16.mxu0 %v5520
    %5652 = vmatpush1.bf16.msra.mxu0 %v5519
    %5653 = vmatprep.subr.bf16.mxu0 0
    %5654 = vmatpush1.bf16.msra.mxu0 0
    %5655 = vmatprep.subr.bf16.mxu0 0
    %5656 = vmatpush1.bf16.msra.mxu0 0
    %5657 = vmatprep.subr.bf16.mxu0 0
    %5658 = vmatpush1.bf16.msra.mxu0 0
    %5659 = vmatprep.subr.bf16.mxu0 0
    %5660 = vmatpush1.bf16.msra.mxu0 0
    %5661 = vmatprep.subr.bf16.mxu0 0
    %5662 = vmatpush1.bf16.msra.mxu0 0
    %5663 = vmatprep.subr.bf16.mxu0 0
    %5664 = vmatpush1.bf16.msra.mxu0 0
    %5665 = vmatprep.subr.bf16.mxu0 0
    %5666 = vmatpush1.bf16.msra.mxu0 0
    %5667 = vmatprep.subr.bf16.mxu0 0
    %5668 = vmatpush1.bf16.msra.mxu0 0
    %5669 = vmatprep.subr.bf16.mxu0 0
    %5670 = vmatpush1.bf16.msra.mxu0 0
    %5671 = vmatprep.subr.bf16.mxu0 0
    %5672 = vmatpush1.bf16.msra.mxu0 0
    %5673 = vmatprep.subr.bf16.mxu0 0
    %5674 = vmatpush1.bf16.msra.mxu0 0
    %5675 = vmatprep.subr.bf16.mxu0 0
    %5676 = vmatpush1.bf16.msra.mxu0 0
    %5677 = vmatprep.subr.bf16.mxu0 0
    %5678 = vmatpush1.bf16.msra.mxu0 0
    %5679 = vmatprep.subr.bf16.mxu0 0
    %5680 = vmatpush1.bf16.msra.mxu0 0
    %5681 = vmatprep.subr.bf16.mxu0 0
    %5682 = vmatpush1.bf16.msra.mxu0 0
    %5683 = vmatprep.mubr.bf16.mxu0 0
    %5684 = vmatmul.mubr.bf16.gmra.mrb[0].mxu0 %v5526
    %v5685 = vpop.f32.mrb[0].mxu0
    %v5686 = vadd.f32 0.0, %v5685
    %v5687 = vpop.f32.mrb[0].mxu0
    %v5688 = vadd.f32 0.0, %v5687
    %v5689 = vpop.f32.mrb[0].mxu0
    %v5690 = vpop.f32.mrb[0].mxu0
    %5691 = vdwg.mxu0
    %v5692 = vadd.f32 %v5504, %v5563
    %v5693 = vadd.f32 %v5505, %v5565
    %v5694 = vadd.f32 %v5506, %v5604
    %v5695 = vadd.f32 %v5507, %v5606
    %v5696 = vadd.f32 %v5508, %v5645
    %v5697 = vadd.f32 %v5509, %v5647
    %v5698 = vadd.f32 %v5510, %v5686
    %v5699 = vadd.f32 %v5511, %v5688
    %s5700 = scalar_lea.vmem [#allocation10], 768
    %v5701 = vld [vmem:[%s5700] sm:$0xff]
    %v5702 = vld [vmem:[%s5700 + $0x8] sm:$0xff]
    %v5703 = vld [vmem:[%s5700 + $0x10] sm:$0xff]
    %v5704 = vld [vmem:[%s5700 + $0x18] sm:$0xff]
    %v5705 = vld [vmem:[%s5700 + $0x20] sm:$0xff]
    %v5706 = vld [vmem:[%s5700 + $0x28] sm:$0xff]
    %v5707 = vld [vmem:[%s5700 + $0x30] sm:$0xff]
    %v5708 = vld [vmem:[%s5700 + $0x38] sm:$0xff]
    %v5709 = vrot.slane %v4957, 4
    %v5710 = vrot.slane %v4958, 3
    %v5711 = vsel %vm3476, %v5710, %v5709
    %v5712 = vpack.c.b16 %v5711, %v5711
    %v5714 = vsel %vm2264, %v5712, 0
    %5716 = vmatprep.subr.bf16.mxu0 %v5702
    %5717 = vmatpush1.bf16.msra.mxu0 %v5701
    %5718 = vmatprep.subr.bf16.mxu0 0
    %5719 = vmatpush1.bf16.msra.mxu0 0
    %5720 = vmatprep.subr.bf16.mxu0 0
    %5721 = vmatpush1.bf16.msra.mxu0 0
    %5722 = vmatprep.subr.bf16.mxu0 0
    %5723 = vmatpush1.bf16.msra.mxu0 0
    %5724 = vmatprep.subr.bf16.mxu0 0
    %5725 = vmatpush1.bf16.msra.mxu0 0
    %5726 = vmatprep.subr.bf16.mxu0 0
    %5727 = vmatpush1.bf16.msra.mxu0 0
    %5728 = vmatprep.subr.bf16.mxu0 0
    %5729 = vmatpush1.bf16.msra.mxu0 0
    %5730 = vmatprep.subr.bf16.mxu0 0
    %5731 = vmatpush1.bf16.msra.mxu0 0
    %5732 = vmatprep.subr.bf16.mxu0 0
    %5733 = vmatpush1.bf16.msra.mxu0 0
    %5734 = vmatprep.subr.bf16.mxu0 0
    %5735 = vmatpush1.bf16.msra.mxu0 0
    %5736 = vmatprep.subr.bf16.mxu0 0
    %5737 = vmatpush1.bf16.msra.mxu0 0
    %5738 = vmatprep.subr.bf16.mxu0 0
    %5739 = vmatpush1.bf16.msra.mxu0 0
    %5740 = vmatprep.subr.bf16.mxu0 0
    %5741 = vmatpush1.bf16.msra.mxu0 0
    %5742 = vmatprep.subr.bf16.mxu0 0
    %5743 = vmatpush1.bf16.msra.mxu0 0
    %5744 = vmatprep.subr.bf16.mxu0 0
    %5745 = vmatpush1.bf16.msra.mxu0 0
    %5746 = vmatprep.subr.bf16.mxu0 0
    %5747 = vmatpush1.bf16.msra.mxu0 0
    %5748 = vmatprep.mubr.bf16.mxu0 0
    %5749 = vmatmul.mubr.bf16.gmra.mrb[0].mxu0 %v5714
    %v5750 = vpop.f32.mrb[0].mxu0
    %v5751 = vadd.f32 0.0, %v5750
    %v5752 = vpop.f32.mrb[0].mxu0
    %v5753 = vadd.f32 0.0, %v5752
    %v5754 = vpop.f32.mrb[0].mxu0
    %v5755 = vpop.f32.mrb[0].mxu0
    %5756 = vdwg.mxu0
    %5757 = vmatprep.subr.bf16.mxu0 %v5704
    %5758 = vmatpush1.bf16.msra.mxu0 %v5703
    %5759 = vmatprep.subr.bf16.mxu0 0
    %5760 = vmatpush1.bf16.msra.mxu0 0
    %5761 = vmatprep.subr.bf16.mxu0 0
    %5762 = vmatpush1.bf16.msra.mxu0 0
    %5763 = vmatprep.subr.bf16.mxu0 0
    %5764 = vmatpush1.bf16.msra.mxu0 0
    %5765 = vmatprep.subr.bf16.mxu0 0
    %5766 = vmatpush1.bf16.msra.mxu0 0
    %5767 = vmatprep.subr.bf16.mxu0 0
    %5768 = vmatpush1.bf16.msra.mxu0 0
    %5769 = vmatprep.subr.bf16.mxu0 0
    %5770 = vmatpush1.bf16.msra.mxu0 0
    %5771 = vmatprep.subr.bf16.mxu0 0
    %5772 = vmatpush1.bf16.msra.mxu0 0
    %5773 = vmatprep.subr.bf16.mxu0 0
    %5774 = vmatpush1.bf16.msra.mxu0 0
    %5775 = vmatprep.subr.bf16.mxu0 0
    %5776 = vmatpush1.bf16.msra.mxu0 0
    %5777 = vmatprep.subr.bf16.mxu0 0
    %5778 = vmatpush1.bf16.msra.mxu0 0
    %5779 = vmatprep.subr.bf16.mxu0 0
    %5780 = vmatpush1.bf16.msra.mxu0 0
    %5781 = vmatprep.subr.bf16.mxu0 0
    %5782 = vmatpush1.bf16.msra.mxu0 0
    %5783 = vmatprep.subr.bf16.mxu0 0
    %5784 = vmatpush1.bf16.msra.mxu0 0
    %5785 = vmatprep.subr.bf16.mxu0 0
    %5786 = vmatpush1.bf16.msra.mxu0 0
    %5787 = vmatprep.subr.bf16.mxu0 0
    %5788 = vmatpush1.bf16.msra.mxu0 0
    %5789 = vmatprep.mubr.bf16.mxu0 0
    %5790 = vmatmul.mubr.bf16.gmra.mrb[0].mxu0 %v5714
    %v5791 = vpop.f32.mrb[0].mxu0
    %v5792 = vadd.f32 0.0, %v5791
    %v5793 = vpop.f32.mrb[0].mxu0
    %v5794 = vadd.f32 0.0, %v5793
    %v5795 = vpop.f32.mrb[0].mxu0
    %v5796 = vpop.f32.mrb[0].mxu0
    %5797 = vdwg.mxu0
    %5798 = vmatprep.subr.bf16.mxu0 %v5706
    %5799 = vmatpush1.bf16.msra.mxu0 %v5705
    %5800 = vmatprep.subr.bf16.mxu0 0
    %5801 = vmatpush1.bf16.msra.mxu0 0
    %5802 = vmatprep.subr.bf16.mxu0 0
    %5803 = vmatpush1.bf16.msra.mxu0 0
    %5804 = vmatprep.subr.bf16.mxu0 0
    %5805 = vmatpush1.bf16.msra.mxu0 0
    %5806 = vmatprep.subr.bf16.mxu0 0
    %5807 = vmatpush1.bf16.msra.mxu0 0
    %5808 = vmatprep.subr.bf16.mxu0 0
    %5809 = vmatpush1.bf16.msra.mxu0 0
    %5810 = vmatprep.subr.bf16.mxu0 0
    %5811 = vmatpush1.bf16.msra.mxu0 0
    %5812 = vmatprep.subr.bf16.mxu0 0
    %5813 = vmatpush1.bf16.msra.mxu0 0
    %5814 = vmatprep.subr.bf16.mxu0 0
    %5815 = vmatpush1.bf16.msra.mxu0 0
    %5816 = vmatprep.subr.bf16.mxu0 0
    %5817 = vmatpush1.bf16.msra.mxu0 0
    %5818 = vmatprep.subr.bf16.mxu0 0
    %5819 = vmatpush1.bf16.msra.mxu0 0
    %5820 = vmatprep.subr.bf16.mxu0 0
    %5821 = vmatpush1.bf16.msra.mxu0 0
    %5822 = vmatprep.subr.bf16.mxu0 0
    %5823 = vmatpush1.bf16.msra.mxu0 0
    %5824 = vmatprep.subr.bf16.mxu0 0
    %5825 = vmatpush1.bf16.msra.mxu0 0
    %5826 = vmatprep.subr.bf16.mxu0 0
    %5827 = vmatpush1.bf16.msra.mxu0 0
    %5828 = vmatprep.subr.bf16.mxu0 0
    %5829 = vmatpush1.bf16.msra.mxu0 0
    %5830 = vmatprep.mubr.bf16.mxu0 0
    %5831 = vmatmul.mubr.bf16.gmra.mrb[0].mxu0 %v5714
    %v5832 = vpop.f32.mrb[0].mxu0
    %v5833 = vadd.f32 0.0, %v5832
    %v5834 = vpop.f32.mrb[0].mxu0
    %v5835 = vadd.f32 0.0, %v5834
    %v5836 = vpop.f32.mrb[0].mxu0
    %v5837 = vpop.f32.mrb[0].mxu0
    %5838 = vdwg.mxu0
    %5839 = vmatprep.subr.bf16.mxu0 %v5708
    %5840 = vmatpush1.bf16.msra.mxu0 %v5707
    %5841 = vmatprep.subr.bf16.mxu0 0
    %5842 = vmatpush1.bf16.msra.mxu0 0
    %5843 = vmatprep.subr.bf16.mxu0 0
    %5844 = vmatpush1.bf16.msra.mxu0 0
    %5845 = vmatprep.subr.bf16.mxu0 0
    %5846 = vmatpush1.bf16.msra.mxu0 0
    %5847 = vmatprep.subr.bf16.mxu0 0
    %5848 = vmatpush1.bf16.msra.mxu0 0
    %5849 = vmatprep.subr.bf16.mxu0 0
    %5850 = vmatpush1.bf16.msra.mxu0 0
    %5851 = vmatprep.subr.bf16.mxu0 0
    %5852 = vmatpush1.bf16.msra.mxu0 0
    %5853 = vmatprep.subr.bf16.mxu0 0
    %5854 = vmatpush1.bf16.msra.mxu0 0
    %5855 = vmatprep.subr.bf16.mxu0 0
    %5856 = vmatpush1.bf16.msra.mxu0 0
    %5857 = vmatprep.subr.bf16.mxu0 0
    %5858 = vmatpush1.bf16.msra.mxu0 0
    %5859 = vmatprep.subr.bf16.mxu0 0
    %5860 = vmatpush1.bf16.msra.mxu0 0
    %5861 = vmatprep.subr.bf16.mxu0 0
    %5862 = vmatpush1.bf16.msra.mxu0 0
    %5863 = vmatprep.subr.bf16.mxu0 0
    %5864 = vmatpush1.bf16.msra.mxu0 0
    %5865 = vmatprep.subr.bf16.mxu0 0
    %5866 = vmatpush1.bf16.msra.mxu0 0
    %5867 = vmatprep.subr.bf16.mxu0 0
    %5868 = vmatpush1.bf16.msra.mxu0 0
    %5869 = vmatprep.subr.bf16.mxu0 0
    %5870 = vmatpush1.bf16.msra.mxu0 0
    %5871 = vmatprep.mubr.bf16.mxu0 0
    %5872 = vmatmul.mubr.bf16.gmra.mrb[0].mxu0 %v5714
    %v5873 = vpop.f32.mrb[0].mxu0
    %v5874 = vadd.f32 0.0, %v5873
    %v5875 = vpop.f32.mrb[0].mxu0
    %v5876 = vadd.f32 0.0, %v5875
    %v5877 = vpop.f32.mrb[0].mxu0
    %v5878 = vpop.f32.mrb[0].mxu0
    %5879 = vdwg.mxu0
    %v5880 = vadd.f32 %v5692, %v5751
    %v5881 = vadd.f32 %v5693, %v5753
    %v5882 = vadd.f32 %v5694, %v5792
    %v5883 = vadd.f32 %v5695, %v5794
    %v5884 = vadd.f32 %v5696, %v5833
    %v5885 = vadd.f32 %v5697, %v5835
    %v5886 = vadd.f32 %v5698, %v5874
    %v5887 = vadd.f32 %v5699, %v5876
    %s5888 = scalar_lea.vmem [#allocation10], 832
    %v5889 = vld [vmem:[%s5888] sm:$0xff]
    %v5890 = vld [vmem:[%s5888 + $0x8] sm:$0xff]
    %v5891 = vld [vmem:[%s5888 + $0x10] sm:$0xff]
    %v5892 = vld [vmem:[%s5888 + $0x18] sm:$0xff]
    %v5893 = vld [vmem:[%s5888 + $0x20] sm:$0xff]
    %v5894 = vld [vmem:[%s5888 + $0x28] sm:$0xff]
    %v5895 = vld [vmem:[%s5888 + $0x30] sm:$0xff]
    %v5896 = vld [vmem:[%s5888 + $0x38] sm:$0xff]
    %v5897 = vrot.slane %v4957, 5
    %v5898 = vrot.slane %v4958, 4
    %v5899 = vsel %vm3476, %v5898, %v5897
    %v5900 = vpack.c.b16 %v5899, %v5899
    %v5902 = vsel %vm2264, %v5900, 0
    %5904 = vmatprep.subr.bf16.mxu0 %v5890
    %5905 = vmatpush1.bf16.msra.mxu0 %v5889
    %5906 = vmatprep.subr.bf16.mxu0 0
    %5907 = vmatpush1.bf16.msra.mxu0 0
    %5908 = vmatprep.subr.bf16.mxu0 0
    %5909 = vmatpush1.bf16.msra.mxu0 0
    %5910 = vmatprep.subr.bf16.mxu0 0
    %5911 = vmatpush1.bf16.msra.mxu0 0
    %5912 = vmatprep.subr.bf16.mxu0 0
    %5913 = vmatpush1.bf16.msra.mxu0 0
    %5914 = vmatprep.subr.bf16.mxu0 0
    %5915 = vmatpush1.bf16.msra.mxu0 0
    %5916 = vmatprep.subr.bf16.mxu0 0
    %5917 = vmatpush1.bf16.msra.mxu0 0
    %5918 = vmatprep.subr.bf16.mxu0 0
    %5919 = vmatpush1.bf16.msra.mxu0 0
    %5920 = vmatprep.subr.bf16.mxu0 0
    %5921 = vmatpush1.bf16.msra.mxu0 0
    %5922 = vmatprep.subr.bf16.mxu0 0
    %5923 = vmatpush1.bf16.msra.mxu0 0
    %5924 = vmatprep.subr.bf16.mxu0 0
    %5925 = vmatpush1.bf16.msra.mxu0 0
    %5926 = vmatprep.subr.bf16.mxu0 0
    %5927 = vmatpush1.bf16.msra.mxu0 0
    %5928 = vmatprep.subr.bf16.mxu0 0
    %5929 = vmatpush1.bf16.msra.mxu0 0
    %5930 = vmatprep.subr.bf16.mxu0 0
    %5931 = vmatpush1.bf16.msra.mxu0 0
    %5932 = vmatprep.subr.bf16.mxu0 0
    %5933 = vmatpush1.bf16.msra.mxu0 0
    %5934 = vmatprep.subr.bf16.mxu0 0
    %5935 = vmatpush1.bf16.msra.mxu0 0
    %5936 = vmatprep.mubr.bf16.mxu0 0
    %5937 = vmatmul.mubr.bf16.gmra.mrb[0].mxu0 %v5902
    %v5938 = vpop.f32.mrb[0].mxu0
    %v5939 = vadd.f32 0.0, %v5938
    %v5940 = vpop.f32.mrb[0].mxu0
    %v5941 = vadd.f32 0.0, %v5940
    %v5942 = vpop.f32.mrb[0].mxu0
    %v5943 = vpop.f32.mrb[0].mxu0
    %5944 = vdwg.mxu0
    %5945 = vmatprep.subr.bf16.mxu0 %v5892
    %5946 = vmatpush1.bf16.msra.mxu0 %v5891
    %5947 = vmatprep.subr.bf16.mxu0 0
    %5948 = vmatpush1.bf16.msra.mxu0 0
    %5949 = vmatprep.subr.bf16.mxu0 0
    %5950 = vmatpush1.bf16.msra.mxu0 0
    %5951 = vmatprep.subr.bf16.mxu0 0
    %5952 = vmatpush1.bf16.msra.mxu0 0
    %5953 = vmatprep.subr.bf16.mxu0 0
    %5954 = vmatpush1.bf16.msra.mxu0 0
    %5955 = vmatprep.subr.bf16.mxu0 0
    %5956 = vmatpush1.bf16.msra.mxu0 0
    %5957 = vmatprep.subr.bf16.mxu0 0
    %5958 = vmatpush1.bf16.msra.mxu0 0
    %5959 = vmatprep.subr.bf16.mxu0 0
    %5960 = vmatpush1.bf16.msra.mxu0 0
    %5961 = vmatprep.subr.bf16.mxu0 0
    %5962 = vmatpush1.bf16.msra.mxu0 0
    %5963 = vmatprep.subr.bf16.mxu0 0
    %5964 = vmatpush1.bf16.msra.mxu0 0
    %5965 = vmatprep.subr.bf16.mxu0 0
    %5966 = vmatpush1.bf16.msra.mxu0 0
    %5967 = vmatprep.subr.bf16.mxu0 0
    %5968 = vmatpush1.bf16.msra.mxu0 0
    %5969 = vmatprep.subr.bf16.mxu0 0
    %5970 = vmatpush1.bf16.msra.mxu0 0
    %5971 = vmatprep.subr.bf16.mxu0 0
    %5972 = vmatpush1.bf16.msra.mxu0 0
    %5973 = vmatprep.subr.bf16.mxu0 0
    %5974 = vmatpush1.bf16.msra.mxu0 0
    %5975 = vmatprep.subr.bf16.mxu0 0
    %5976 = vmatpush1.bf16.msra.mxu0 0
    %5977 = vmatprep.mubr.bf16.mxu0 0
    %5978 = vmatmul.mubr.bf16.gmra.mrb[0].mxu0 %v5902
    %v5979 = vpop.f32.mrb[0].mxu0
    %v5980 = vadd.f32 0.0, %v5979
    %v5981 = vpop.f32.mrb[0].mxu0
    %v5982 = vadd.f32 0.0, %v5981
    %v5983 = vpop.f32.mrb[0].mxu0
    %v5984 = vpop.f32.mrb[0].mxu0
    %5985 = vdwg.mxu0
    %5986 = vmatprep.subr.bf16.mxu0 %v5894
    %5987 = vmatpush1.bf16.msra.mxu0 %v5893
    %5988 = vmatprep.subr.bf16.mxu0 0
    %5989 = vmatpush1.bf16.msra.mxu0 0
    %5990 = vmatprep.subr.bf16.mxu0 0
    %5991 = vmatpush1.bf16.msra.mxu0 0
    %5992 = vmatprep.subr.bf16.mxu0 0
    %5993 = vmatpush1.bf16.msra.mxu0 0
    %5994 = vmatprep.subr.bf16.mxu0 0
    %5995 = vmatpush1.bf16.msra.mxu0 0
    %5996 = vmatprep.subr.bf16.mxu0 0
    %5997 = vmatpush1.bf16.msra.mxu0 0
    %5998 = vmatprep.subr.bf16.mxu0 0
    %5999 = vmatpush1.bf16.msra.mxu0 0
    %6000 = vmatprep.subr.bf16.mxu0 0
    %6001 = vmatpush1.bf16.msra.mxu0 0
    %6002 = vmatprep.subr.bf16.mxu0 0
    %6003 = vmatpush1.bf16.msra.mxu0 0
    %6004 = vmatprep.subr.bf16.mxu0 0
    %6005 = vmatpush1.bf16.msra.mxu0 0
    %6006 = vmatprep.subr.bf16.mxu0 0
    %6007 = vmatpush1.bf16.msra.mxu0 0
    %6008 = vmatprep.subr.bf16.mxu0 0
    %6009 = vmatpush1.bf16.msra.mxu0 0
    %6010 = vmatprep.subr.bf16.mxu0 0
    %6011 = vmatpush1.bf16.msra.mxu0 0
    %6012 = vmatprep.subr.bf16.mxu0 0
    %6013 = vmatpush1.bf16.msra.mxu0 0
    %6014 = vmatprep.subr.bf16.mxu0 0
    %6015 = vmatpush1.bf16.msra.mxu0 0
    %6016 = vmatprep.subr.bf16.mxu0 0
    %6017 = vmatpush1.bf16.msra.mxu0 0
    %6018 = vmatprep.mubr.bf16.mxu0 0
    %6019 = vmatmul.mubr.bf16.gmra.mrb[0].mxu0 %v5902
    %v6020 = vpop.f32.mrb[0].mxu0
    %v6021 = vadd.f32 0.0, %v6020
    %v6022 = vpop.f32.mrb[0].mxu0
    %v6023 = vadd.f32 0.0, %v6022
    %v6024 = vpop.f32.mrb[0].mxu0
    %v6025 = vpop.f32.mrb[0].mxu0
    %6026 = vdwg.mxu0
    %6027 = vmatprep.subr.bf16.mxu0 %v5896
    %6028 = vmatpush1.bf16.msra.mxu0 %v5895
    %6029 = vmatprep.subr.bf16.mxu0 0
    %6030 = vmatpush1.bf16.msra.mxu0 0
    %6031 = vmatprep.subr.bf16.mxu0 0
    %6032 = vmatpush1.bf16.msra.mxu0 0
    %6033 = vmatprep.subr.bf16.mxu0 0
    %6034 = vmatpush1.bf16.msra.mxu0 0
    %6035 = vmatprep.subr.bf16.mxu0 0
    %6036 = vmatpush1.bf16.msra.mxu0 0
    %6037 = vmatprep.subr.bf16.mxu0 0
    %6038 = vmatpush1.bf16.msra.mxu0 0
    %6039 = vmatprep.subr.bf16.mxu0 0
    %6040 = vmatpush1.bf16.msra.mxu0 0
    %6041 = vmatprep.subr.bf16.mxu0 0
    %6042 = vmatpush1.bf16.msra.mxu0 0
    %6043 = vmatprep.subr.bf16.mxu0 0
    %6044 = vmatpush1.bf16.msra.mxu0 0
    %6045 = vmatprep.subr.bf16.mxu0 0
    %6046 = vmatpush1.bf16.msra.mxu0 0
    %6047 = vmatprep.subr.bf16.mxu0 0
    %6048 = vmatpush1.bf16.msra.mxu0 0
    %6049 = vmatprep.subr.bf16.mxu0 0
    %6050 = vmatpush1.bf16.msra.mxu0 0
    %6051 = vmatprep.subr.bf16.mxu0 0
    %6052 = vmatpush1.bf16.msra.mxu0 0
    %6053 = vmatprep.subr.bf16.mxu0 0
    %6054 = vmatpush1.bf16.msra.mxu0 0
    %6055 = vmatprep.subr.bf16.mxu0 0
    %6056 = vmatpush1.bf16.msra.mxu0 0
    %6057 = vmatprep.subr.bf16.mxu0 0
    %6058 = vmatpush1.bf16.msra.mxu0 0
    %6059 = vmatprep.mubr.bf16.mxu0 0
    %6060 = vmatmul.mubr.bf16.gmra.mrb[0].mxu0 %v5902
    %v6061 = vpop.f32.mrb[0].mxu0
    %v6062 = vadd.f32 0.0, %v6061
    %v6063 = vpop.f32.mrb[0].mxu0
    %v6064 = vadd.f32 0.0, %v6063
    %v6065 = vpop.f32.mrb[0].mxu0
    %v6066 = vpop.f32.mrb[0].mxu0
    %6067 = vdwg.mxu0
    %v6068 = vadd.f32 %v5880, %v5939
    %v6069 = vadd.f32 %v5881, %v5941
    %v6070 = vadd.f32 %v5882, %v5980
    %v6071 = vadd.f32 %v5883, %v5982
    %v6072 = vadd.f32 %v5884, %v6021
    %v6073 = vadd.f32 %v5885, %v6023
    %v6074 = vadd.f32 %v5886, %v6062
    %v6075 = vadd.f32 %v5887, %v6064
    %s6076 = scalar_lea.vmem [#allocation10], 896
    %v6077 = vld [vmem:[%s6076] sm:$0xff]
    %v6078 = vld [vmem:[%s6076 + $0x8] sm:$0xff]
    %v6079 = vld [vmem:[%s6076 + $0x10] sm:$0xff]
    %v6080 = vld [vmem:[%s6076 + $0x18] sm:$0xff]
    %v6081 = vld [vmem:[%s6076 + $0x20] sm:$0xff]
    %v6082 = vld [vmem:[%s6076 + $0x28] sm:$0xff]
    %v6083 = vld [vmem:[%s6076 + $0x30] sm:$0xff]
    %v6084 = vld [vmem:[%s6076 + $0x38] sm:$0xff]
    %v6085 = vrot.slane %v4957, 6
    %v6086 = vrot.slane %v4958, 5
    %v6087 = vsel %vm3476, %v6086, %v6085
    %v6088 = vpack.c.b16 %v6087, %v6087
    %v6090 = vsel %vm2264, %v6088, 0
    %6092 = vmatprep.subr.bf16.mxu0 %v6078
    %6093 = vmatpush1.bf16.msra.mxu0 %v6077
    %6094 = vmatprep.subr.bf16.mxu0 0
    %6095 = vmatpush1.bf16.msra.mxu0 0
    %6096 = vmatprep.subr.bf16.mxu0 0
    %6097 = vmatpush1.bf16.msra.mxu0 0
    %6098 = vmatprep.subr.bf16.mxu0 0
    %6099 = vmatpush1.bf16.msra.mxu0 0
    %6100 = vmatprep.subr.bf16.mxu0 0
    %6101 = vmatpush1.bf16.msra.mxu0 0
    %6102 = vmatprep.subr.bf16.mxu0 0
    %6103 = vmatpush1.bf16.msra.mxu0 0
    %6104 = vmatprep.subr.bf16.mxu0 0
    %6105 = vmatpush1.bf16.msra.mxu0 0
    %6106 = vmatprep.subr.bf16.mxu0 0
    %6107 = vmatpush1.bf16.msra.mxu0 0
    %6108 = vmatprep.subr.bf16.mxu0 0
    %6109 = vmatpush1.bf16.msra.mxu0 0
    %6110 = vmatprep.subr.bf16.mxu0 0
    %6111 = vmatpush1.bf16.msra.mxu0 0
    %6112 = vmatprep.subr.bf16.mxu0 0
    %6113 = vmatpush1.bf16.msra.mxu0 0
    %6114 = vmatprep.subr.bf16.mxu0 0
    %6115 = vmatpush1.bf16.msra.mxu0 0
    %6116 = vmatprep.subr.bf16.mxu0 0
    %6117 = vmatpush1.bf16.msra.mxu0 0
    %6118 = vmatprep.subr.bf16.mxu0 0
    %6119 = vmatpush1.bf16.msra.mxu0 0
    %6120 = vmatprep.subr.bf16.mxu0 0
    %6121 = vmatpush1.bf16.msra.mxu0 0
    %6122 = vmatprep.subr.bf16.mxu0 0
    %6123 = vmatpush1.bf16.msra.mxu0 0
    %6124 = vmatprep.mubr.bf16.mxu0 0
    %6125 = vmatmul.mubr.bf16.gmra.mrb[0].mxu0 %v6090
    %v6126 = vpop.f32.mrb[0].mxu0
    %v6127 = vadd.f32 0.0, %v6126
    %v6128 = vpop.f32.mrb[0].mxu0
    %v6129 = vadd.f32 0.0, %v6128
    %v6130 = vpop.f32.mrb[0].mxu0
    %v6131 = vpop.f32.mrb[0].mxu0
    %6132 = vdwg.mxu0
    %6133 = vmatprep.subr.bf16.mxu0 %v6080
    %6134 = vmatpush1.bf16.msra.mxu0 %v6079
    %6135 = vmatprep.subr.bf16.mxu0 0
    %6136 = vmatpush1.bf16.msra.mxu0 0
    %6137 = vmatprep.subr.bf16.mxu0 0
    %6138 = vmatpush1.bf16.msra.mxu0 0
    %6139 = vmatprep.subr.bf16.mxu0 0
    %6140 = vmatpush1.bf16.msra.mxu0 0
    %6141 = vmatprep.subr.bf16.mxu0 0
    %6142 = vmatpush1.bf16.msra.mxu0 0
    %6143 = vmatprep.subr.bf16.mxu0 0
    %6144 = vmatpush1.bf16.msra.mxu0 0
    %6145 = vmatprep.subr.bf16.mxu0 0
    %6146 = vmatpush1.bf16.msra.mxu0 0
    %6147 = vmatprep.subr.bf16.mxu0 0
    %6148 = vmatpush1.bf16.msra.mxu0 0
    %6149 = vmatprep.subr.bf16.mxu0 0
    %6150 = vmatpush1.bf16.msra.mxu0 0
    %6151 = vmatprep.subr.bf16.mxu0 0
    %6152 = vmatpush1.bf16.msra.mxu0 0
    %6153 = vmatprep.subr.bf16.mxu0 0
    %6154 = vmatpush1.bf16.msra.mxu0 0
    %6155 = vmatprep.subr.bf16.mxu0 0
    %6156 = vmatpush1.bf16.msra.mxu0 0
    %6157 = vmatprep.subr.bf16.mxu0 0
    %6158 = vmatpush1.bf16.msra.mxu0 0
    %6159 = vmatprep.subr.bf16.mxu0 0
    %6160 = vmatpush1.bf16.msra.mxu0 0
    %6161 = vmatprep.subr.bf16.mxu0 0
    %6162 = vmatpush1.bf16.msra.mxu0 0
    %6163 = vmatprep.subr.bf16.mxu0 0
    %6164 = vmatpush1.bf16.msra.mxu0 0
    %6165 = vmatprep.mubr.bf16.mxu0 0
    %6166 = vmatmul.mubr.bf16.gmra.mrb[0].mxu0 %v6090
    %v6167 = vpop.f32.mrb[0].mxu0
    %v6168 = vadd.f32 0.0, %v6167
    %v6169 = vpop.f32.mrb[0].mxu0
    %v6170 = vadd.f32 0.0, %v6169
    %v6171 = vpop.f32.mrb[0].mxu0
    %v6172 = vpop.f32.mrb[0].mxu0
    %6173 = vdwg.mxu0
    %6174 = vmatprep.subr.bf16.mxu0 %v6082
    %6175 = vmatpush1.bf16.msra.mxu0 %v6081
    %6176 = vmatprep.subr.bf16.mxu0 0
    %6177 = vmatpush1.bf16.msra.mxu0 0
    %6178 = vmatprep.subr.bf16.mxu0 0
    %6179 = vmatpush1.bf16.msra.mxu0 0
    %6180 = vmatprep.subr.bf16.mxu0 0
    %6181 = vmatpush1.bf16.msra.mxu0 0
    %6182 = vmatprep.subr.bf16.mxu0 0
    %6183 = vmatpush1.bf16.msra.mxu0 0
    %6184 = vmatprep.subr.bf16.mxu0 0
    %6185 = vmatpush1.bf16.msra.mxu0 0
    %6186 = vmatprep.subr.bf16.mxu0 0
    %6187 = vmatpush1.bf16.msra.mxu0 0
    %6188 = vmatprep.subr.bf16.mxu0 0
    %6189 = vmatpush1.bf16.msra.mxu0 0
    %6190 = vmatprep.subr.bf16.mxu0 0
    %6191 = vmatpush1.bf16.msra.mxu0 0
    %6192 = vmatprep.subr.bf16.mxu0 0
    %6193 = vmatpush1.bf16.msra.mxu0 0
    %6194 = vmatprep.subr.bf16.mxu0 0
    %6195 = vmatpush1.bf16.msra.mxu0 0
    %6196 = vmatprep.subr.bf16.mxu0 0
    %6197 = vmatpush1.bf16.msra.mxu0 0
    %6198 = vmatprep.subr.bf16.mxu0 0
    %6199 = vmatpush1.bf16.msra.mxu0 0
    %6200 = vmatprep.subr.bf16.mxu0 0
    %6201 = vmatpush1.bf16.msra.mxu0 0
    %6202 = vmatprep.subr.bf16.mxu0 0
    %6203 = vmatpush1.bf16.msra.mxu0 0
    %6204 = vmatprep.subr.bf16.mxu0 0
    %6205 = vmatpush1.bf16.msra.mxu0 0
    %6206 = vmatprep.mubr.bf16.mxu0 0
    %6207 = vmatmul.mubr.bf16.gmra.mrb[0].mxu0 %v6090
    %v6208 = vpop.f32.mrb[0].mxu0
    %v6209 = vadd.f32 0.0, %v6208
    %v6210 = vpop.f32.mrb[0].mxu0
    %v6211 = vadd.f32 0.0, %v6210
    %v6212 = vpop.f32.mrb[0].mxu0
    %v6213 = vpop.f32.mrb[0].mxu0
    %6214 = vdwg.mxu0
    %6215 = vmatprep.subr.bf16.mxu0 %v6084
    %6216 = vmatpush1.bf16.msra.mxu0 %v6083
    %6217 = vmatprep.subr.bf16.mxu0 0
    %6218 = vmatpush1.bf16.msra.mxu0 0
    %6219 = vmatprep.subr.bf16.mxu0 0
    %6220 = vmatpush1.bf16.msra.mxu0 0
    %6221 = vmatprep.subr.bf16.mxu0 0
    %6222 = vmatpush1.bf16.msra.mxu0 0
    %6223 = vmatprep.subr.bf16.mxu0 0
    %6224 = vmatpush1.bf16.msra.mxu0 0
    %6225 = vmatprep.subr.bf16.mxu0 0
    %6226 = vmatpush1.bf16.msra.mxu0 0
    %6227 = vmatprep.subr.bf16.mxu0 0
    %6228 = vmatpush1.bf16.msra.mxu0 0
    %6229 = vmatprep.subr.bf16.mxu0 0
    %6230 = vmatpush1.bf16.msra.mxu0 0
    %6231 = vmatprep.subr.bf16.mxu0 0
    %6232 = vmatpush1.bf16.msra.mxu0 0
    %6233 = vmatprep.subr.bf16.mxu0 0
    %6234 = vmatpush1.bf16.msra.mxu0 0
    %6235 = vmatprep.subr.bf16.mxu0 0
    %6236 = vmatpush1.bf16.msra.mxu0 0
    %6237 = vmatprep.subr.bf16.mxu0 0
    %6238 = vmatpush1.bf16.msra.mxu0 0
    %6239 = vmatprep.subr.bf16.mxu0 0
    %6240 = vmatpush1.bf16.msra.mxu0 0
    %6241 = vmatprep.subr.bf16.mxu0 0
    %6242 = vmatpush1.bf16.msra.mxu0 0
    %6243 = vmatprep.subr.bf16.mxu0 0
    %6244 = vmatpush1.bf16.msra.mxu0 0
    %6245 = vmatprep.subr.bf16.mxu0 0
    %6246 = vmatpush1.bf16.msra.mxu0 0
    %6247 = vmatprep.mubr.bf16.mxu0 0
    %6248 = vmatmul.mubr.bf16.gmra.mrb[0].mxu0 %v6090
    %v6249 = vpop.f32.mrb[0].mxu0
    %v6250 = vadd.f32 0.0, %v6249
    %v6251 = vpop.f32.mrb[0].mxu0
    %v6252 = vadd.f32 0.0, %v6251
    %v6253 = vpop.f32.mrb[0].mxu0
    %v6254 = vpop.f32.mrb[0].mxu0
    %6255 = vdwg.mxu0
    %v6256 = vadd.f32 %v6068, %v6127
    %v6257 = vadd.f32 %v6069, %v6129
    %v6258 = vadd.f32 %v6070, %v6168
    %v6259 = vadd.f32 %v6071, %v6170
    %v6260 = vadd.f32 %v6072, %v6209
    %v6261 = vadd.f32 %v6073, %v6211
    %v6262 = vadd.f32 %v6074, %v6250
    %v6263 = vadd.f32 %v6075, %v6252
    %s6264 = scalar_lea.vmem [#allocation10], 960
    %v6265 = vld [vmem:[%s6264] sm:$0xff]
    %v6266 = vld [vmem:[%s6264 + $0x8] sm:$0xff]
    %v6267 = vld [vmem:[%s6264 + $0x10] sm:$0xff]
    %v6268 = vld [vmem:[%s6264 + $0x18] sm:$0xff]
    %v6269 = vld [vmem:[%s6264 + $0x20] sm:$0xff]
    %v6270 = vld [vmem:[%s6264 + $0x28] sm:$0xff]
    %v6271 = vld [vmem:[%s6264 + $0x30] sm:$0xff]
    %v6272 = vld [vmem:[%s6264 + $0x38] sm:$0xff]
    %v6273 = vrot.slane %v4957, 7
    %v6274 = vrot.slane %v4958, 6
    %v6275 = vsel %vm3476, %v6274, %v6273
    %v6276 = vpack.c.b16 %v6275, %v6275
    %v6278 = vsel %vm2264, %v6276, 0
    %6280 = vmatprep.subr.bf16.mxu0 %v6266
    %6281 = vmatpush1.bf16.msra.mxu0 %v6265
    %6282 = vmatprep.subr.bf16.mxu0 0
    %6283 = vmatpush1.bf16.msra.mxu0 0
    %6284 = vmatprep.subr.bf16.mxu0 0
    %6285 = vmatpush1.bf16.msra.mxu0 0
    %6286 = vmatprep.subr.bf16.mxu0 0
    %6287 = vmatpush1.bf16.msra.mxu0 0
    %6288 = vmatprep.subr.bf16.mxu0 0
    %6289 = vmatpush1.bf16.msra.mxu0 0
    %6290 = vmatprep.subr.bf16.mxu0 0
    %6291 = vmatpush1.bf16.msra.mxu0 0
    %6292 = vmatprep.subr.bf16.mxu0 0
    %6293 = vmatpush1.bf16.msra.mxu0 0
    %6294 = vmatprep.subr.bf16.mxu0 0
    %6295 = vmatpush1.bf16.msra.mxu0 0
    %6296 = vmatprep.subr.bf16.mxu0 0
    %6297 = vmatpush1.bf16.msra.mxu0 0
    %6298 = vmatprep.subr.bf16.mxu0 0
    %6299 = vmatpush1.bf16.msra.mxu0 0
    %6300 = vmatprep.subr.bf16.mxu0 0
    %6301 = vmatpush1.bf16.msra.mxu0 0
    %6302 = vmatprep.subr.bf16.mxu0 0
    %6303 = vmatpush1.bf16.msra.mxu0 0
    %6304 = vmatprep.subr.bf16.mxu0 0
    %6305 = vmatpush1.bf16.msra.mxu0 0
    %6306 = vmatprep.subr.bf16.mxu0 0
    %6307 = vmatpush1.bf16.msra.mxu0 0
    %6308 = vmatprep.subr.bf16.mxu0 0
    %6309 = vmatpush1.bf16.msra.mxu0 0
    %6310 = vmatprep.subr.bf16.mxu0 0
    %6311 = vmatpush1.bf16.msra.mxu0 0
    %6312 = vmatprep.mubr.bf16.mxu0 0
    %6313 = vmatmul.mubr.bf16.gmra.mrb[0].mxu0 %v6278
    %v6314 = vpop.f32.mrb[0].mxu0
    %v6315 = vadd.f32 0.0, %v6314
    %v6316 = vpop.f32.mrb[0].mxu0
    %v6317 = vadd.f32 0.0, %v6316
    %v6318 = vpop.f32.mrb[0].mxu0
    %v6319 = vpop.f32.mrb[0].mxu0
    %6320 = vdwg.mxu0
    %6321 = vmatprep.subr.bf16.mxu0 %v6268
    %6322 = vmatpush1.bf16.msra.mxu0 %v6267
    %6323 = vmatprep.subr.bf16.mxu0 0
    %6324 = vmatpush1.bf16.msra.mxu0 0
    %6325 = vmatprep.subr.bf16.mxu0 0
    %6326 = vmatpush1.bf16.msra.mxu0 0
    %6327 = vmatprep.subr.bf16.mxu0 0
    %6328 = vmatpush1.bf16.msra.mxu0 0
    %6329 = vmatprep.subr.bf16.mxu0 0
    %6330 = vmatpush1.bf16.msra.mxu0 0
    %6331 = vmatprep.subr.bf16.mxu0 0
    %6332 = vmatpush1.bf16.msra.mxu0 0
    %6333 = vmatprep.subr.bf16.mxu0 0
    %6334 = vmatpush1.bf16.msra.mxu0 0
    %6335 = vmatprep.subr.bf16.mxu0 0
    %6336 = vmatpush1.bf16.msra.mxu0 0
    %6337 = vmatprep.subr.bf16.mxu0 0
    %6338 = vmatpush1.bf16.msra.mxu0 0
    %6339 = vmatprep.subr.bf16.mxu0 0
    %6340 = vmatpush1.bf16.msra.mxu0 0
    %6341 = vmatprep.subr.bf16.mxu0 0
    %6342 = vmatpush1.bf16.msra.mxu0 0
    %6343 = vmatprep.subr.bf16.mxu0 0
    %6344 = vmatpush1.bf16.msra.mxu0 0
    %6345 = vmatprep.subr.bf16.mxu0 0
    %6346 = vmatpush1.bf16.msra.mxu0 0
    %6347 = vmatprep.subr.bf16.mxu0 0
    %6348 = vmatpush1.bf16.msra.mxu0 0
    %6349 = vmatprep.subr.bf16.mxu0 0
    %6350 = vmatpush1.bf16.msra.mxu0 0
    %6351 = vmatprep.subr.bf16.mxu0 0
    %6352 = vmatpush1.bf16.msra.mxu0 0
    %6353 = vmatprep.mubr.bf16.mxu0 0
    %6354 = vmatmul.mubr.bf16.gmra.mrb[0].mxu0 %v6278
    %v6355 = vpop.f32.mrb[0].mxu0
    %v6356 = vadd.f32 0.0, %v6355
    %v6357 = vpop.f32.mrb[0].mxu0
    %v6358 = vadd.f32 0.0, %v6357
    %v6359 = vpop.f32.mrb[0].mxu0
    %v6360 = vpop.f32.mrb[0].mxu0
    %6361 = vdwg.mxu0
    %6362 = vmatprep.subr.bf16.mxu0 %v6270
    %6363 = vmatpush1.bf16.msra.mxu0 %v6269
    %6364 = vmatprep.subr.bf16.mxu0 0
    %6365 = vmatpush1.bf16.msra.mxu0 0
    %6366 = vmatprep.subr.bf16.mxu0 0
    %6367 = vmatpush1.bf16.msra.mxu0 0
    %6368 = vmatprep.subr.bf16.mxu0 0
    %6369 = vmatpush1.bf16.msra.mxu0 0
    %6370 = vmatprep.subr.bf16.mxu0 0
    %6371 = vmatpush1.bf16.msra.mxu0 0
    %6372 = vmatprep.subr.bf16.mxu0 0
    %6373 = vmatpush1.bf16.msra.mxu0 0
    %6374 = vmatprep.subr.bf16.mxu0 0
    %6375 = vmatpush1.bf16.msra.mxu0 0
    %6376 = vmatprep.subr.bf16.mxu0 0
    %6377 = vmatpush1.bf16.msra.mxu0 0
    %6378 = vmatprep.subr.bf16.mxu0 0
    %6379 = vmatpush1.bf16.msra.mxu0 0
    %6380 = vmatprep.subr.bf16.mxu0 0
    %6381 = vmatpush1.bf16.msra.mxu0 0
    %6382 = vmatprep.subr.bf16.mxu0 0
    %6383 = vmatpush1.bf16.msra.mxu0 0
    %6384 = vmatprep.subr.bf16.mxu0 0
    %6385 = vmatpush1.bf16.msra.mxu0 0
    %6386 = vmatprep.subr.bf16.mxu0 0
    %6387 = vmatpush1.bf16.msra.mxu0 0
    %6388 = vmatprep.subr.bf16.mxu0 0
    %6389 = vmatpush1.bf16.msra.mxu0 0
    %6390 = vmatprep.subr.bf16.mxu0 0
    %6391 = vmatpush1.bf16.msra.mxu0 0
    %6392 = vmatprep.subr.bf16.mxu0 0
    %6393 = vmatpush1.bf16.msra.mxu0 0
    %6394 = vmatprep.mubr.bf16.mxu0 0
    %6395 = vmatmul.mubr.bf16.gmra.mrb[0].mxu0 %v6278
    %v6396 = vpop.f32.mrb[0].mxu0
    %v6397 = vadd.f32 0.0, %v6396
    %v6398 = vpop.f32.mrb[0].mxu0
    %v6399 = vadd.f32 0.0, %v6398
    %v6400 = vpop.f32.mrb[0].mxu0
    %v6401 = vpop.f32.mrb[0].mxu0
    %6402 = vdwg.mxu0
    %6403 = vmatprep.subr.bf16.mxu0 %v6272
    %6404 = vmatpush1.bf16.msra.mxu0 %v6271
    %6405 = vmatprep.subr.bf16.mxu0 0
    %6406 = vmatpush1.bf16.msra.mxu0 0
    %6407 = vmatprep.subr.bf16.mxu0 0
    %6408 = vmatpush1.bf16.msra.mxu0 0
    %6409 = vmatprep.subr.bf16.mxu0 0
    %6410 = vmatpush1.bf16.msra.mxu0 0
    %6411 = vmatprep.subr.bf16.mxu0 0
    %6412 = vmatpush1.bf16.msra.mxu0 0
    %6413 = vmatprep.subr.bf16.mxu0 0
    %6414 = vmatpush1.bf16.msra.mxu0 0
    %6415 = vmatprep.subr.bf16.mxu0 0
    %6416 = vmatpush1.bf16.msra.mxu0 0
    %6417 = vmatprep.subr.bf16.mxu0 0
    %6418 = vmatpush1.bf16.msra.mxu0 0
    %6419 = vmatprep.subr.bf16.mxu0 0
    %6420 = vmatpush1.bf16.msra.mxu0 0
    %6421 = vmatprep.subr.bf16.mxu0 0
    %6422 = vmatpush1.bf16.msra.mxu0 0
    %6423 = vmatprep.subr.bf16.mxu0 0
    %6424 = vmatpush1.bf16.msra.mxu0 0
    %6425 = vmatprep.subr.bf16.mxu0 0
    %6426 = vmatpush1.bf16.msra.mxu0 0
    %6427 = vmatprep.subr.bf16.mxu0 0
    %6428 = vmatpush1.bf16.msra.mxu0 0
    %6429 = vmatprep.subr.bf16.mxu0 0
    %6430 = vmatpush1.bf16.msra.mxu0 0
    %6431 = vmatprep.subr.bf16.mxu0 0
    %6432 = vmatpush1.bf16.msra.mxu0 0
    %6433 = vmatprep.subr.bf16.mxu0 0
    %6434 = vmatpush1.bf16.msra.mxu0 0
    %6435 = vmatprep.mubr.bf16.mxu0 0
    %6436 = vmatmul.mubr.bf16.gmra.mrb[0].mxu0 %v6278
    %v6437 = vpop.f32.mrb[0].mxu0
    %v6438 = vadd.f32 0.0, %v6437
    %v6439 = vpop.f32.mrb[0].mxu0
    %v6440 = vadd.f32 0.0, %v6439
    %v6441 = vpop.f32.mrb[0].mxu0
    %v6442 = vpop.f32.mrb[0].mxu0
    %6443 = vdwg.mxu0
    %v6444 = vadd.f32 %v6256, %v6315
    %v6445 = vadd.f32 %v6257, %v6317
    %v6446 = vadd.f32 %v6258, %v6356
    %v6447 = vadd.f32 %v6259, %v6358
    %v6448 = vadd.f32 %v6260, %v6397
    %v6449 = vadd.f32 %v6261, %v6399
    %v6450 = vadd.f32 %v6262, %v6438
    %v6451 = vadd.f32 %v6263, %v6440
    %v6452 = vld [vmem:[%s4] sm:$0xff]
    %v6454 = vlaneseq
    %v6455 = vshrl.u32 %v6454, 7
    %v6456 = vsub.s32 0, %v6455
    %v6457 = vrot.slane %v6452, %v6456
    %v6458 = vlaneseq
    %v6459 = vshrl.u32 %v6458, 7
    %v6460 = vsub.s32 1, %v6459
    %v6461 = vrot.slane %v6452, %v6460
    %v6462 = vlaneseq
    %v6463 = vshrl.u32 %v6462, 7
    %v6464 = vsub.s32 2, %v6463
    %v6465 = vrot.slane %v6452, %v6464
    %v6466 = vlaneseq
    %v6467 = vshrl.u32 %v6466, 7
    %v6468 = vsub.s32 3, %v6467
    %v6469 = vrot.slane %v6452, %v6468
    %v6470 = vlaneseq
    %v6471 = vshrl.u32 %v6470, 7
    %v6472 = vsub.s32 4, %v6471
    %v6473 = vrot.slane %v6452, %v6472
    %v6474 = vlaneseq
    %v6475 = vshrl.u32 %v6474, 7
    %v6476 = vsub.s32 5, %v6475
    %v6477 = vrot.slane %v6452, %v6476
    %v6478 = vlaneseq
    %v6479 = vshrl.u32 %v6478, 7
    %v6480 = vsub.s32 6, %v6479
    %v6481 = vrot.slane %v6452, %v6480
    %v6482 = vlaneseq
    %v6483 = vshrl.u32 %v6482, 7
    %v6484 = vsub.s32 7, %v6483
    %v6485 = vrot.slane %v6452, %v6484
    %v6494 = vadd.f32 %v6444, %v6457
    %v6495 = vadd.f32 %v6445, %v6461
    %v6496 = vadd.f32 %v6446, %v6465
    %v6497 = vadd.f32 %v6447, %v6469
    %v6498 = vadd.f32 %v6448, %v6473
    %v6499 = vadd.f32 %v6449, %v6477
    %v6500 = vadd.f32 %v6450, %v6481
    %v6501 = vadd.f32 %v6451, %v6485
    %v6502 = vpack.c.bf16 %v6494, %v6494
    %v6503 = vpack.c.bf16 %v6495, %v6495
    %v6504 = vpack.c.bf16 %v6496, %v6496
    %v6505 = vpack.c.bf16 %v6497, %v6497
    %v6506 = vpack.c.bf16 %v6498, %v6498
    %v6507 = vpack.c.bf16 %v6499, %v6499
    %v6508 = vpack.c.bf16 %v6500, %v6500
    %v6509 = vpack.c.bf16 %v6501, %v6501
    %v6510 = vld [vmem:[#allocation11] sm:$0xff]
    %v6511 = vld [vmem:[#allocation11 + $0x8] sm:$0xff]
    %v6512 = vld [vmem:[#allocation11 + $0x10] sm:$0xff]
    %v6513 = vld [vmem:[#allocation11 + $0x18] sm:$0xff]
    %v6514 = vld [vmem:[#allocation11 + $0x20] sm:$0xff]
    %v6515 = vld [vmem:[#allocation11 + $0x28] sm:$0xff]
    %v6516 = vld [vmem:[#allocation11 + $0x30] sm:$0xff]
    %v6517 = vld [vmem:[#allocation11 + $0x38] sm:$0xff]
    %v6518 = vld [vmem:[#allocation11 + $0x40] sm:$0xff]
    %v6519 = vld [vmem:[#allocation11 + $0x48] sm:$0xff]
    %v6520 = vld [vmem:[#allocation11 + $0x50] sm:$0xff]
    %v6521 = vld [vmem:[#allocation11 + $0x58] sm:$0xff]
    %v6522 = vld [vmem:[#allocation11 + $0x60] sm:$0xff]
    %v6523 = vld [vmem:[#allocation11 + $0x68] sm:$0xff]
    %v6524 = vld [vmem:[#allocation11 + $0x70] sm:$0xff]
    %v6525 = vld [vmem:[#allocation11 + $0x78] sm:$0xff]
    %v6526 = vld [vmem:[#allocation11 + $0x80] sm:$0xff]
    %v6527 = vld [vmem:[#allocation11 + $0x88] sm:$0xff]
    %v6528 = vld [vmem:[#allocation11 + $0x90] sm:$0xff]
    %v6529 = vld [vmem:[#allocation11 + $0x98] sm:$0xff]
    %v6530 = vld [vmem:[#allocation11 + $0xa0] sm:$0xff]
    %v6531 = vld [vmem:[#allocation11 + $0xa8] sm:$0xff]
    %v6532 = vld [vmem:[#allocation11 + $0xb0] sm:$0xff]
    %v6533 = vld [vmem:[#allocation11 + $0xb8] sm:$0xff]
    %v6534 = vld [vmem:[#allocation11 + $0xc0] sm:$0xff]
    %v6535 = vld [vmem:[#allocation11 + $0xc8] sm:$0xff]
    %v6536 = vld [vmem:[#allocation11 + $0xd0] sm:$0xff]
    %v6537 = vld [vmem:[#allocation11 + $0xd8] sm:$0xff]
    %v6538 = vld [vmem:[#allocation11 + $0xe0] sm:$0xff]
    %v6539 = vld [vmem:[#allocation11 + $0xe8] sm:$0xff]
    %v6540 = vld [vmem:[#allocation11 + $0xf0] sm:$0xff]
    %v6541 = vld [vmem:[#allocation11 + $0xf8] sm:$0xff]
    %v6542 = vld [vmem:[#allocation11 + $0x100] sm:$0xff]
    %v6543 = vld [vmem:[#allocation11 + $0x108] sm:$0xff]
    %v6544 = vld [vmem:[#allocation11 + $0x110] sm:$0xff]
    %v6545 = vld [vmem:[#allocation11 + $0x118] sm:$0xff]
    %v6546 = vld [vmem:[#allocation11 + $0x120] sm:$0xff]
    %v6547 = vld [vmem:[#allocation11 + $0x128] sm:$0xff]
    %v6548 = vld [vmem:[#allocation11 + $0x130] sm:$0xff]
    %v6549 = vld [vmem:[#allocation11 + $0x138] sm:$0xff]
    %v6550 = vld [vmem:[#allocation11 + $0x140] sm:$0xff]
    %v6551 = vld [vmem:[#allocation11 + $0x148] sm:$0xff]
    %v6552 = vld [vmem:[#allocation11 + $0x150] sm:$0xff]
    %v6553 = vld [vmem:[#allocation11 + $0x158] sm:$0xff]
    %v6554 = vld [vmem:[#allocation11 + $0x160] sm:$0xff]
    %v6555 = vld [vmem:[#allocation11 + $0x168] sm:$0xff]
    %v6556 = vld [vmem:[#allocation11 + $0x170] sm:$0xff]
    %v6557 = vld [vmem:[#allocation11 + $0x178] sm:$0xff]
    %v6558 = vld [vmem:[#allocation11 + $0x180] sm:$0xff]
    %v6559 = vld [vmem:[#allocation11 + $0x188] sm:$0xff]
    %v6560 = vld [vmem:[#allocation11 + $0x190] sm:$0xff]
    %v6561 = vld [vmem:[#allocation11 + $0x198] sm:$0xff]
    %v6562 = vld [vmem:[#allocation11 + $0x1a0] sm:$0xff]
    %v6563 = vld [vmem:[#allocation11 + $0x1a8] sm:$0xff]
    %v6564 = vld [vmem:[#allocation11 + $0x1b0] sm:$0xff]
    %v6565 = vld [vmem:[#allocation11 + $0x1b8] sm:$0xff]
    %v6566 = vld [vmem:[#allocation11 + $0x1c0] sm:$0xff]
    %v6567 = vld [vmem:[#allocation11 + $0x1c8] sm:$0xff]
    %v6568 = vld [vmem:[#allocation11 + $0x1d0] sm:$0xff]
    %v6569 = vld [vmem:[#allocation11 + $0x1d8] sm:$0xff]
    %v6570 = vld [vmem:[#allocation11 + $0x1e0] sm:$0xff]
    %v6571 = vld [vmem:[#allocation11 + $0x1e8] sm:$0xff]
    %v6572 = vld [vmem:[#allocation11 + $0x1f0] sm:$0xff]
    %v6573 = vld [vmem:[#allocation11 + $0x1f8] sm:$0xff]
    %v6574 = vld [vmem:[#allocation11 + $0x200] sm:$0xff]
    %v6575 = vld [vmem:[#allocation11 + $0x208] sm:$0xff]
    %v6576 = vld [vmem:[#allocation11 + $0x210] sm:$0xff]
    %v6577 = vld [vmem:[#allocation11 + $0x218] sm:$0xff]
    %v6578 = vld [vmem:[#allocation11 + $0x220] sm:$0xff]
    %v6579 = vld [vmem:[#allocation11 + $0x228] sm:$0xff]
    %v6580 = vld [vmem:[#allocation11 + $0x230] sm:$0xff]
    %v6581 = vld [vmem:[#allocation11 + $0x238] sm:$0xff]
    %v6582 = vld [vmem:[#allocation11 + $0x240] sm:$0xff]
    %v6583 = vld [vmem:[#allocation11 + $0x248] sm:$0xff]
    %v6584 = vld [vmem:[#allocation11 + $0x250] sm:$0xff]
    %v6585 = vld [vmem:[#allocation11 + $0x258] sm:$0xff]
    %v6586 = vld [vmem:[#allocation11 + $0x260] sm:$0xff]
    %v6587 = vld [vmem:[#allocation11 + $0x268] sm:$0xff]
    %v6588 = vld [vmem:[#allocation11 + $0x270] sm:$0xff]
    %v6589 = vld [vmem:[#allocation11 + $0x278] sm:$0xff]
    %v6590 = vld [vmem:[#allocation11 + $0x280] sm:$0xff]
    %v6591 = vld [vmem:[#allocation11 + $0x288] sm:$0xff]
    %v6592 = vld [vmem:[#allocation11 + $0x290] sm:$0xff]
    %v6593 = vld [vmem:[#allocation11 + $0x298] sm:$0xff]
    %v6594 = vld [vmem:[#allocation11 + $0x2a0] sm:$0xff]
    %v6595 = vld [vmem:[#allocation11 + $0x2a8] sm:$0xff]
    %v6596 = vld [vmem:[#allocation11 + $0x2b0] sm:$0xff]
    %v6597 = vld [vmem:[#allocation11 + $0x2b8] sm:$0xff]
    %v6598 = vld [vmem:[#allocation11 + $0x2c0] sm:$0xff]
    %v6599 = vld [vmem:[#allocation11 + $0x2c8] sm:$0xff]
    %v6600 = vld [vmem:[#allocation11 + $0x2d0] sm:$0xff]
    %v6601 = vld [vmem:[#allocation11 + $0x2d8] sm:$0xff]
    %v6602 = vld [vmem:[#allocation11 + $0x2e0] sm:$0xff]
    %v6603 = vld [vmem:[#allocation11 + $0x2e8] sm:$0xff]
    %v6604 = vld [vmem:[#allocation11 + $0x2f0] sm:$0xff]
    %v6605 = vld [vmem:[#allocation11 + $0x2f8] sm:$0xff]
    %v6606 = vld [vmem:[#allocation11 + $0x300] sm:$0xff]
    %v6607 = vld [vmem:[#allocation11 + $0x308] sm:$0xff]
    %v6608 = vld [vmem:[#allocation11 + $0x310] sm:$0xff]
    %v6609 = vld [vmem:[#allocation11 + $0x318] sm:$0xff]
    %v6610 = vld [vmem:[#allocation11 + $0x320] sm:$0xff]
    %v6611 = vld [vmem:[#allocation11 + $0x328] sm:$0xff]
    %v6612 = vld [vmem:[#allocation11 + $0x330] sm:$0xff]
    %v6613 = vld [vmem:[#allocation11 + $0x338] sm:$0xff]
    %v6614 = vld [vmem:[#allocation11 + $0x340] sm:$0xff]
    %v6615 = vld [vmem:[#allocation11 + $0x348] sm:$0xff]
    %v6616 = vld [vmem:[#allocation11 + $0x350] sm:$0xff]
    %v6617 = vld [vmem:[#allocation11 + $0x358] sm:$0xff]
    %v6618 = vld [vmem:[#allocation11 + $0x360] sm:$0xff]
    %v6619 = vld [vmem:[#allocation11 + $0x368] sm:$0xff]
    %v6620 = vld [vmem:[#allocation11 + $0x370] sm:$0xff]
    %v6621 = vld [vmem:[#allocation11 + $0x378] sm:$0xff]
    %v6622 = vld [vmem:[#allocation11 + $0x380] sm:$0xff]
    %v6623 = vld [vmem:[#allocation11 + $0x388] sm:$0xff]
    %v6624 = vld [vmem:[#allocation11 + $0x390] sm:$0xff]
    %v6625 = vld [vmem:[#allocation11 + $0x398] sm:$0xff]
    %v6626 = vld [vmem:[#allocation11 + $0x3a0] sm:$0xff]
    %v6627 = vld [vmem:[#allocation11 + $0x3a8] sm:$0xff]
    %v6628 = vld [vmem:[#allocation11 + $0x3b0] sm:$0xff]
    %v6629 = vld [vmem:[#allocation11 + $0x3b8] sm:$0xff]
    %v6630 = vld [vmem:[#allocation11 + $0x3c0] sm:$0xff]
    %v6631 = vld [vmem:[#allocation11 + $0x3c8] sm:$0xff]
    %v6632 = vld [vmem:[#allocation11 + $0x3d0] sm:$0xff]
    %v6633 = vld [vmem:[#allocation11 + $0x3d8] sm:$0xff]
    %v6634 = vld [vmem:[#allocation11 + $0x3e0] sm:$0xff]
    %v6635 = vld [vmem:[#allocation11 + $0x3e8] sm:$0xff]
    %v6636 = vld [vmem:[#allocation11 + $0x3f0] sm:$0xff]
    %v6637 = vld [vmem:[#allocation11 + $0x3f8] sm:$0xff]
    %v6638 = vld [vmem:[%s5] sm:$0x3]
    %v6640 = vlaneseq
    %v6641 = vshrl.u32 %v6640, 7
    %v6642 = vsub.s32 0, %v6641
    %v6643 = vrot.slane %v6638, %v6642
    %v6644 = vlaneseq
    %v6645 = vshrl.u32 %v6644, 7
    %v6646 = vsub.s32 1, %v6645
    %v6647 = vrot.slane %v6638, %v6646
    %6650 = vmatprep.subr.bf16.mxu0 %v6511
    %6651 = vmatpush1.bf16.msra.mxu0 %v6510
    %6652 = vmatprep.subr.bf16.mxu0 %v6513
    %6653 = vmatpush1.bf16.msra.mxu0 %v6512
    %6654 = vmatprep.subr.bf16.mxu0 %v6515
    %6655 = vmatpush1.bf16.msra.mxu0 %v6514
    %6656 = vmatprep.subr.bf16.mxu0 %v6517
    %6657 = vmatpush1.bf16.msra.mxu0 %v6516
    %6658 = vmatprep.subr.bf16.mxu0 %v6519
    %6659 = vmatpush1.bf16.msra.mxu0 %v6518
    %6660 = vmatprep.subr.bf16.mxu0 %v6521
    %6661 = vmatpush1.bf16.msra.mxu0 %v6520
    %6662 = vmatprep.subr.bf16.mxu0 %v6523
    %6663 = vmatpush1.bf16.msra.mxu0 %v6522
    %6664 = vmatprep.subr.bf16.mxu0 %v6525
    %6665 = vmatpush1.bf16.msra.mxu0 %v6524
    %6666 = vmatprep.subr.bf16.mxu0 %v6527
    %6667 = vmatpush1.bf16.msra.mxu0 %v6526
    %6668 = vmatprep.subr.bf16.mxu0 %v6529
    %6669 = vmatpush1.bf16.msra.mxu0 %v6528
    %6670 = vmatprep.subr.bf16.mxu0 %v6531
    %6671 = vmatpush1.bf16.msra.mxu0 %v6530
    %6672 = vmatprep.subr.bf16.mxu0 %v6533
    %6673 = vmatpush1.bf16.msra.mxu0 %v6532
    %6674 = vmatprep.subr.bf16.mxu0 %v6535
    %6675 = vmatpush1.bf16.msra.mxu0 %v6534
    %6676 = vmatprep.subr.bf16.mxu0 %v6537
    %6677 = vmatpush1.bf16.msra.mxu0 %v6536
    %6678 = vmatprep.subr.bf16.mxu0 %v6539
    %6679 = vmatpush1.bf16.msra.mxu0 %v6538
    %6680 = vmatprep.subr.bf16.mxu0 %v6541
    %6681 = vmatpush1.bf16.msra.mxu0 %v6540
    %6682 = vmatprep.mubr.bf16.mxu0 %v6503
    %6683 = vmatmul.mubr.bf16.gmra.mrb[0].mxu0 %v6502
    %v6684 = vpop.f32.mrb[0].mxu0
    %v6685 = vadd.f32 %v6643, %v6684
    %v6686 = vpop.f32.mrb[0].mxu0
    %v6687 = vadd.f32 %v6647, %v6686
    %v6688 = vpop.f32.mrb[0].mxu0
    %v6689 = vpop.f32.mrb[0].mxu0
    %6690 = vdwg.mxu0
    %6691 = vmatprep.subr.bf16.mxu0 %v6543
    %6692 = vmatpush1.bf16.msra.mxu0 %v6542
    %6693 = vmatprep.subr.bf16.mxu0 %v6545
    %6694 = vmatpush1.bf16.msra.mxu0 %v6544
    %6695 = vmatprep.subr.bf16.mxu0 %v6547
    %6696 = vmatpush1.bf16.msra.mxu0 %v6546
    %6697 = vmatprep.subr.bf16.mxu0 %v6549
    %6698 = vmatpush1.bf16.msra.mxu0 %v6548
    %6699 = vmatprep.subr.bf16.mxu0 %v6551
    %6700 = vmatpush1.bf16.msra.mxu0 %v6550
    %6701 = vmatprep.subr.bf16.mxu0 %v6553
    %6702 = vmatpush1.bf16.msra.mxu0 %v6552
    %6703 = vmatprep.subr.bf16.mxu0 %v6555
    %6704 = vmatpush1.bf16.msra.mxu0 %v6554
    %6705 = vmatprep.subr.bf16.mxu0 %v6557
    %6706 = vmatpush1.bf16.msra.mxu0 %v6556
    %6707 = vmatprep.subr.bf16.mxu0 %v6559
    %6708 = vmatpush1.bf16.msra.mxu0 %v6558
    %6709 = vmatprep.subr.bf16.mxu0 %v6561
    %6710 = vmatpush1.bf16.msra.mxu0 %v6560
    %6711 = vmatprep.subr.bf16.mxu0 %v6563
    %6712 = vmatpush1.bf16.msra.mxu0 %v6562
    %6713 = vmatprep.subr.bf16.mxu0 %v6565
    %6714 = vmatpush1.bf16.msra.mxu0 %v6564
    %6715 = vmatprep.subr.bf16.mxu0 %v6567
    %6716 = vmatpush1.bf16.msra.mxu0 %v6566
    %6717 = vmatprep.subr.bf16.mxu0 %v6569
    %6718 = vmatpush1.bf16.msra.mxu0 %v6568
    %6719 = vmatprep.subr.bf16.mxu0 %v6571
    %6720 = vmatpush1.bf16.msra.mxu0 %v6570
    %6721 = vmatprep.subr.bf16.mxu0 %v6573
    %6722 = vmatpush1.bf16.msra.mxu0 %v6572
    %6723 = vmatprep.mubr.bf16.mxu0 %v6505
    %6724 = vmatmul.mubr.bf16.gmra.mrb[0].mxu0 %v6504
    %v6725 = vpop.f32.mrb[0].mxu0
    %v6726 = vadd.f32 %v6685, %v6725
    %v6727 = vpop.f32.mrb[0].mxu0
    %v6728 = vadd.f32 %v6687, %v6727
    %v6729 = vpop.f32.mrb[0].mxu0
    %v6730 = vpop.f32.mrb[0].mxu0
    %6731 = vdwg.mxu0
    %6732 = vmatprep.subr.bf16.mxu0 %v6575
    %6733 = vmatpush1.bf16.msra.mxu0 %v6574
    %6734 = vmatprep.subr.bf16.mxu0 %v6577
    %6735 = vmatpush1.bf16.msra.mxu0 %v6576
    %6736 = vmatprep.subr.bf16.mxu0 %v6579
    %6737 = vmatpush1.bf16.msra.mxu0 %v6578
    %6738 = vmatprep.subr.bf16.mxu0 %v6581
    %6739 = vmatpush1.bf16.msra.mxu0 %v6580
    %6740 = vmatprep.subr.bf16.mxu0 %v6583
    %6741 = vmatpush1.bf16.msra.mxu0 %v6582
    %6742 = vmatprep.subr.bf16.mxu0 %v6585
    %6743 = vmatpush1.bf16.msra.mxu0 %v6584
    %6744 = vmatprep.subr.bf16.mxu0 %v6587
    %6745 = vmatpush1.bf16.msra.mxu0 %v6586
    %6746 = vmatprep.subr.bf16.mxu0 %v6589
    %6747 = vmatpush1.bf16.msra.mxu0 %v6588
    %6748 = vmatprep.subr.bf16.mxu0 %v6591
    %6749 = vmatpush1.bf16.msra.mxu0 %v6590
    %6750 = vmatprep.subr.bf16.mxu0 %v6593
    %6751 = vmatpush1.bf16.msra.mxu0 %v6592
    %6752 = vmatprep.subr.bf16.mxu0 %v6595
    %6753 = vmatpush1.bf16.msra.mxu0 %v6594
    %6754 = vmatprep.subr.bf16.mxu0 %v6597
    %6755 = vmatpush1.bf16.msra.mxu0 %v6596
    %6756 = vmatprep.subr.bf16.mxu0 %v6599
    %6757 = vmatpush1.bf16.msra.mxu0 %v6598
    %6758 = vmatprep.subr.bf16.mxu0 %v6601
    %6759 = vmatpush1.bf16.msra.mxu0 %v6600
    %6760 = vmatprep.subr.bf16.mxu0 %v6603
    %6761 = vmatpush1.bf16.msra.mxu0 %v6602
    %6762 = vmatprep.subr.bf16.mxu0 %v6605
    %6763 = vmatpush1.bf16.msra.mxu0 %v6604
    %6764 = vmatprep.mubr.bf16.mxu0 %v6507
    %6765 = vmatmul.mubr.bf16.gmra.mrb[0].mxu0 %v6506
    %v6766 = vpop.f32.mrb[0].mxu0
    %v6767 = vadd.f32 %v6726, %v6766
    %v6768 = vpop.f32.mrb[0].mxu0
    %v6769 = vadd.f32 %v6728, %v6768
    %v6770 = vpop.f32.mrb[0].mxu0
    %v6771 = vpop.f32.mrb[0].mxu0
    %6772 = vdwg.mxu0
    %6773 = vmatprep.subr.bf16.mxu0 %v6607
    %6774 = vmatpush1.bf16.msra.mxu0 %v6606
    %6775 = vmatprep.subr.bf16.mxu0 %v6609
    %6776 = vmatpush1.bf16.msra.mxu0 %v6608
    %6777 = vmatprep.subr.bf16.mxu0 %v6611
    %6778 = vmatpush1.bf16.msra.mxu0 %v6610
    %6779 = vmatprep.subr.bf16.mxu0 %v6613
    %6780 = vmatpush1.bf16.msra.mxu0 %v6612
    %6781 = vmatprep.subr.bf16.mxu0 %v6615
    %6782 = vmatpush1.bf16.msra.mxu0 %v6614
    %6783 = vmatprep.subr.bf16.mxu0 %v6617
    %6784 = vmatpush1.bf16.msra.mxu0 %v6616
    %6785 = vmatprep.subr.bf16.mxu0 %v6619
    %6786 = vmatpush1.bf16.msra.mxu0 %v6618
    %6787 = vmatprep.subr.bf16.mxu0 %v6621
    %6788 = vmatpush1.bf16.msra.mxu0 %v6620
    %6789 = vmatprep.subr.bf16.mxu0 %v6623
    %6790 = vmatpush1.bf16.msra.mxu0 %v6622
    %6791 = vmatprep.subr.bf16.mxu0 %v6625
    %6792 = vmatpush1.bf16.msra.mxu0 %v6624
    %6793 = vmatprep.subr.bf16.mxu0 %v6627
    %6794 = vmatpush1.bf16.msra.mxu0 %v6626
    %6795 = vmatprep.subr.bf16.mxu0 %v6629
    %6796 = vmatpush1.bf16.msra.mxu0 %v6628
    %6797 = vmatprep.subr.bf16.mxu0 %v6631
    %6798 = vmatpush1.bf16.msra.mxu0 %v6630
    %6799 = vmatprep.subr.bf16.mxu0 %v6633
    %6800 = vmatpush1.bf16.msra.mxu0 %v6632
    %6801 = vmatprep.subr.bf16.mxu0 %v6635
    %6802 = vmatpush1.bf16.msra.mxu0 %v6634
    %6803 = vmatprep.subr.bf16.mxu0 %v6637
    %6804 = vmatpush1.bf16.msra.mxu0 %v6636
    %6805 = vmatprep.mubr.bf16.mxu0 %v6509
    %6806 = vmatmul.mubr.bf16.gmra.mrb[0].mxu0 %v6508
    %v6807 = vpop.f32.mrb[0].mxu0
    %v6808 = vadd.f32 %v6767, %v6807
    %v6809 = vpop.f32.mrb[0].mxu0
    %v6810 = vadd.f32 %v6769, %v6809
    %v6811 = vpop.f32.mrb[0].mxu0
    %v6812 = vpop.f32.mrb[0].mxu0
    %6813 = vdwg.mxu0
    %v6814 = vld [vmem:[%s7] sm:$0xff]
    %v6815 = vld [vmem:[%s7 + $0x8] sm:$0xff]
    %v6816 = vld [vmem:[%s7 + $0x10] sm:$0xff]
    %v6817 = vld [vmem:[%s7 + $0x18] sm:$0xff]
    %v6818 = vld [vmem:[%s7 + $0x20] sm:$0xff]
    %v6819 = vld [vmem:[%s7 + $0x28] sm:$0xff]
    %v6820 = vld [vmem:[%s7 + $0x30] sm:$0xff]
    %v6821 = vld [vmem:[%s7 + $0x38] sm:$0xff]
    %v6822 = vld [vmem:[%s7 + $0x40] sm:$0xff]
    %v6823 = vld [vmem:[%s7 + $0x48] sm:$0xff]
    %v6824 = vld [vmem:[%s7 + $0x50] sm:$0xff]
    %v6825 = vld [vmem:[%s7 + $0x58] sm:$0xff]
    %v6826 = vld [vmem:[%s7 + $0x60] sm:$0xff]
    %v6827 = vld [vmem:[%s7 + $0x68] sm:$0xff]
    %v6828 = vld [vmem:[%s7 + $0x70] sm:$0xff]
    %v6829 = vld [vmem:[%s7 + $0x78] sm:$0xff]
    %v6830 = vld [vmem:[%s7 + $0x80] sm:$0xff]
    %v6831 = vld [vmem:[%s7 + $0x88] sm:$0xff]
    %v6832 = vld [vmem:[%s7 + $0x90] sm:$0xff]
    %v6833 = vld [vmem:[%s7 + $0x98] sm:$0xff]
    %v6834 = vld [vmem:[%s7 + $0xa0] sm:$0xff]
    %v6835 = vld [vmem:[%s7 + $0xa8] sm:$0xff]
    %v6836 = vld [vmem:[%s7 + $0xb0] sm:$0xff]
    %v6837 = vld [vmem:[%s7 + $0xb8] sm:$0xff]
    %v6838 = vld [vmem:[%s7 + $0xc0] sm:$0xff]
    %v6839 = vld [vmem:[%s7 + $0xc8] sm:$0xff]
    %v6840 = vld [vmem:[%s7 + $0xd0] sm:$0xff]
    %v6841 = vld [vmem:[%s7 + $0xd8] sm:$0xff]
    %v6842 = vld [vmem:[%s7 + $0xe0] sm:$0xff]
    %v6843 = vld [vmem:[%s7 + $0xe8] sm:$0xff]
    %v6844 = vld [vmem:[%s7 + $0xf0] sm:$0xff]
    %v6845 = vld [vmem:[%s7 + $0xf8] sm:$0xff]
    %v6846 = vld [vmem:[%s6] sm:$0x1]
    %v6848 = vlaneseq
    %v6849 = vshrl.u32 %v6848, 7
    %v6850 = vsub.s32 0, %v6849
    %v6851 = vrot.slane %v6846, %v6850
    %6853 = vmatprep.subr.mxu0 0.0
    %6854 = vmatpush1.msra.mxu0 %v6814
    %6855 = vmatprep.subr.mxu0 0.0
    %6856 = vmatpush1.msra.mxu0 %v6815
    %6857 = vmatprep.subr.mxu0 0.0
    %6858 = vmatpush1.msra.mxu0 %v6816
    %6859 = vmatprep.subr.mxu0 0.0
    %6860 = vmatpush1.msra.mxu0 %v6817
    %6861 = vmatprep.subr.mxu0 0.0
    %6862 = vmatpush1.msra.mxu0 %v6818
    %6863 = vmatprep.subr.mxu0 0.0
    %6864 = vmatpush1.msra.mxu0 %v6819
    %6865 = vmatprep.subr.mxu0 0.0
    %6866 = vmatpush1.msra.mxu0 %v6820
    %6867 = vmatprep.subr.mxu0 0.0
    %6868 = vmatpush1.msra.mxu0 %v6821
    %6869 = vmatprep.subr.mxu0 0.0
    %6870 = vmatpush1.msra.mxu0 %v6822
    %6871 = vmatprep.subr.mxu0 0.0
    %6872 = vmatpush1.msra.mxu0 %v6823
    %6873 = vmatprep.subr.mxu0 0.0
    %6874 = vmatpush1.msra.mxu0 %v6824
    %6875 = vmatprep.subr.mxu0 0.0
    %6876 = vmatpush1.msra.mxu0 %v6825
    %6877 = vmatprep.subr.mxu0 0.0
    %6878 = vmatpush1.msra.mxu0 %v6826
    %6879 = vmatprep.subr.mxu0 0.0
    %6880 = vmatpush1.msra.mxu0 %v6827
    %6881 = vmatprep.subr.mxu0 0.0
    %6882 = vmatpush1.msra.mxu0 %v6828
    %6883 = vmatprep.subr.mxu0 0.0
    %6884 = vmatpush1.msra.mxu0 %v6829
    %6885 = vmatprep.subr.mxu0 0.0
    %6886 = vmatpush1.msra.mxu0 %v6830
    %6887 = vmatprep.subr.mxu0 0.0
    %6888 = vmatpush1.msra.mxu0 %v6831
    %6889 = vmatprep.subr.mxu0 0.0
    %6890 = vmatpush1.msra.mxu0 %v6832
    %6891 = vmatprep.subr.mxu0 0.0
    %6892 = vmatpush1.msra.mxu0 %v6833
    %6893 = vmatprep.subr.mxu0 0.0
    %6894 = vmatpush1.msra.mxu0 %v6834
    %6895 = vmatprep.subr.mxu0 0.0
    %6896 = vmatpush1.msra.mxu0 %v6835
    %6897 = vmatprep.subr.mxu0 0.0
    %6898 = vmatpush1.msra.mxu0 %v6836
    %6899 = vmatprep.subr.mxu0 0.0
    %6900 = vmatpush1.msra.mxu0 %v6837
    %6901 = vmatprep.subr.mxu0 0.0
    %6902 = vmatpush1.msra.mxu0 %v6838
    %6903 = vmatprep.subr.mxu0 0.0
    %6904 = vmatpush1.msra.mxu0 %v6839
    %6905 = vmatprep.subr.mxu0 0.0
    %6906 = vmatpush1.msra.mxu0 %v6840
    %6907 = vmatprep.subr.mxu0 0.0
    %6908 = vmatpush1.msra.mxu0 %v6841
    %6909 = vmatprep.subr.mxu0 0.0
    %6910 = vmatpush1.msra.mxu0 %v6842
    %6911 = vmatprep.subr.mxu0 0.0
    %6912 = vmatpush1.msra.mxu0 %v6843
    %6913 = vmatprep.subr.mxu0 0.0
    %6914 = vmatpush1.msra.mxu0 %v6844
    %6915 = vmatprep.subr.mxu0 0.0
    %6916 = vmatpush1.msra.mxu0 %v6845
    %6917 = vmatprep.mubr.f32.mxu0 %v6810
    %6918 = vmatmul.mubr.f32.gmra.mrb[0].mxu0 %v6808
    %v6919 = vpop.f32.mrb[0].mxu0
    %v6920 = vadd.f32 %v6851, %v6919
    %v6921 = vpop.f32.mrb[0].mxu0
    %6922 = vdwg.mxu0
    %vm6923 = vcmask 33792
    %6924 = vst.msk [vmem:[#allocation13] sm:$0x3] %vm6923, %v6920
    // Predicated region
    $region34: #{tpu_custom_call.1} parent=1 // pred_check
      _
    $region35: #{tpu_custom_call.1} parent=1 // pred_check_branch
      %6926 = sbr.rel (0) target = $region37
    $region36: #{tpu_custom_call.1} parent=1 // pred_region
      %s6928 = ssub.s32 32, 32
      %6929 = vsyncadd [#allocation14], %s6928
      %s6931 = sshll.u32 [#allocation13], 4
      %s6932 = int_to_ptr.vmem [resolvable:$true] %s6931
      %6934 = dma.vmem_to_hbm [thread:$0]  %s6932, 32, %s10, [#allocation14]
    $region37: #{tpu_custom_call.1} parent=1 // pred_fallthru
      _
    // Predicated region
    $region38: #{tpu_custom_call.1} parent=1 // pred_check
      _
    $region39: #{tpu_custom_call.1} parent=1 // pred_check_branch
      %6936 = sbr.rel (0) target = $region41
    $region40: #{tpu_custom_call.1} parent=1 // pred_region
      %6937 = dma.done [#allocation14], 32
    $region41: #{tpu_custom_call.1} parent=1 // pred_fallthru
      _
    %6938 = vsyncpa [#allocation14], 1
  %6939 = vsyncmov [#allocation12]
  %s6940 = vpop.sfrf %6939
  %p6941 = scmp.eq.s32.totalorder %s6940, 0
  %p6942 = pneg %p6941
  %6944 = shalt.err (%p6942)
  %s6945 = scalar_lea.sflag [#allocation12], 1
  %6946 = vsyncmov %s6945
  %s6947 = vpop.sfrf %6946
  %p6948 = scmp.eq.s32.totalorder %s6947, 0
  %p6949 = pneg %p6948
  %6951 = shalt.err (%p6949)

</llo_original>
